<compile_context>
chip_gen: v6e
topology: v6e:2x2x1
jax: 0.10.0
libtpu: 0.0.40
codegen_flags: <defaults>
</compile_context>

<pallas_src>
import functools

import jax
import jax.numpy as jnp
from jax.experimental import pallas as pl
from jax.experimental.pallas import tpu as pltpu


# ---------------------------------------------------------------------------
# Pallas kernel: tiled fused matmul (+ bias + ReLU + BN affine + 2x2 max-pool)
#
#   for j in range(P):  acc[j] += x[j] @ w          (K-tiled, f32 accumulate)
#   last K step:        z[j] = relu?(acc[j] + bias) * scale + shift
#                       out  = max_j z[j]
#
#   P == 1 -> plain Linear(+ReLU+BN) layer
#   P == 4 -> conv via im2col with the 4 members of each 2x2 pooling window
#             split across the leading axis, so the max over j IS the pool.
# ---------------------------------------------------------------------------
def _fused_matmul_kernel(x_ref, w_ref, b_ref, s_ref, t_ref, o_ref, acc_ref,
                         *, relu):
    k = pl.program_id(2)

    @pl.when(k == 0)
    def _init():
        acc_ref[...] = jnp.zeros_like(acc_ref)

    num_variants = acc_ref.shape[0]
    w = w_ref[...]
    for j in range(num_variants):
        acc_ref[j] = acc_ref[j] + jnp.dot(
            x_ref[j], w, preferred_element_type=jnp.float32)

    @pl.when(k == pl.num_programs(2) - 1)
    def _finalize():
        b = b_ref[...]
        s = s_ref[...]
        t = t_ref[...]
        out = None
        for j in range(num_variants):
            z = acc_ref[j] + b                       # bias
            if relu:
                z = jnp.maximum(z, 0.0)              # ReLU (before BN, as in spec)
            z = z * s + t                            # folded BatchNorm (eval mode)
            out = z if out is None else jnp.maximum(out, z)   # fused 2x2 max-pool
        o_ref[...] = out.astype(o_ref.dtype)


def _pick_tile(dim, candidates):
    for c in candidates:
        if dim % c == 0:
            return c
    return dim  # fall back to the full (always legal) extent


def fused_matmul(x, w, b, scale, shift, *, relu, out_dtype=jnp.float32):
    """out[m, n] = max_j of relu?(x[j] @ w + b)[m, n] * scale[n] + shift[n]."""
    if x.ndim == 2:
        x = x[None]                                   # P == 1 (no pooling)
    P, M, K = x.shape
    K2, N = w.shape
    assert K == K2

    x = x.astype(jnp.bfloat16)                        # bf16 MXU inputs
    w = w.astype(jnp.bfloat16)
    b = b.reshape(1, N).astype(jnp.float32)
    scale = scale.reshape(1, N).astype(jnp.float32)
    shift = shift.reshape(1, N).astype(jnp.float32)

    # Tile selection: N tile of 128 (lane-dense, matches v5e's 128-wide MXU and
    # is fine on v6e/v7x), M tile a multiple of 8, K tile a multiple of 128
    # when the reduction is big enough to be worth an accumulated K axis.
    tm = _pick_tile(M, (256, 128, 96, 64, 32, 16, 8))
    tn = _pick_tile(N, (128,))
    tk = _pick_tile(K, (512, 256, 128))
    grid = (M // tm, N // tn, K // tk)

    flops = 2 * P * M * N * K
    bytes_accessed = (P * M * K + K * N) * 2 + M * N * jnp.dtype(out_dtype).itemsize + 3 * N * 4

    kernel = functools.partial(_fused_matmul_kernel, relu=relu)
    return pl.pallas_call(
        kernel,
        out_shape=jax.ShapeDtypeStruct((M, N), out_dtype),
        grid=grid,
        in_specs=[
            pl.BlockSpec((P, tm, tk), lambda i, j, k: (0, i, k)),
            pl.BlockSpec((tk, tn), lambda i, j, k: (k, j)),
            pl.BlockSpec((1, tn), lambda i, j, k: (0, j)),
            pl.BlockSpec((1, tn), lambda i, j, k: (0, j)),
            pl.BlockSpec((1, tn), lambda i, j, k: (0, j)),
        ],
        out_specs=pl.BlockSpec((tm, tn), lambda i, j, k: (i, j)),
        scratch_shapes=[pltpu.VMEM((P, tm, tn), jnp.float32)],
        compiler_params=pltpu.CompilerParams(
            dimension_semantics=("parallel", "parallel", "arbitrary"),
            vmem_limit_bytes=48 * 1024 * 1024,        # fits v7x's 64 MiB VMEM
        ),
        cost_estimate=pl.CostEstimate(
            flops=flops, transcendentals=0, bytes_accessed=bytes_accessed),
    )(x, w, b, scale, shift)


# ---------------------------------------------------------------------------
# Plain-JAX glue: pooled im2col, BN folding, parameter init
# ---------------------------------------------------------------------------
def im2col_pooled(x, ksize=5):
    """Valid ksize x ksize conv + 2x2 max-pool im2col.

    x: (B, H, W, C) -> (patches (4, B*OHp*OWp, ksize*ksize*C), (OHp, OWp)).
    The leading axis indexes the 4 conv-output positions feeding each 2x2
    pooling window, so the pool can be fused into the matmul epilogue.
    """
    B, H, W, C = x.shape
    OH, OW = H - ksize + 1, W - ksize + 1
    OHp, OWp = OH // 2, OW // 2
    planes = []
    for r in range(2):
        for c in range(2):
            cols = []
            for dh in range(ksize):
                for dw in range(ksize):
                    sl = x[:, r + dh: r + dh + 2 * OHp: 2,
                              c + dw: c + dw + 2 * OWp: 2, :]   # (B,OHp,OWp,C)
                    cols.append(sl)
            p = jnp.concatenate(cols, axis=-1)                  # (B,OHp,OWp,25*C)
            planes.append(p.reshape(B * OHp * OWp, ksize * ksize * C))
    return jnp.stack(planes, axis=0), (OHp, OWp)


def conv_relu_bn_pool(x, w, b, scale, shift, out_dtype=jnp.bfloat16):
    """x: (B,H,W,Cin) NHWC, w: (KH,KW,Cin,Cout). valid conv->ReLU->BN->2x2 pool."""
    B = x.shape[0]
    KH, KW, Cin, Cout = w.shape
    patches, (OHp, OWp) = im2col_pooled(x, KH)
    w_mat = w.reshape(KH * KW * Cin, Cout)      # tap-major rows, matches im2col
    out = fused_matmul(patches, w_mat, b, scale, shift, relu=True,
                       out_dtype=out_dtype)
    return out.reshape(B, OHp, OWp, Cout)


def bn_fold(gamma, beta, mean, var, eps=1e-5):
    scale = gamma / jnp.sqrt(var + eps)
    shift = beta - mean * scale
    return scale, shift


def init_params(key):
    ks = jax.random.split(key, 16)

    def rnd(k, shape, s=0.05):
        return (s * jax.random.normal(k, shape)).astype(jnp.float32)

    def bn(k, n):
        k0, k1, k2, k3 = jax.random.split(k, 4)
        gamma = 1.0 + rnd(k0, (n,), 0.1)
        beta = rnd(k1, (n,), 0.1)
        mean = rnd(k2, (n,), 0.1)
        var = 1.0 + 0.1 * jnp.abs(jax.random.normal(k3, (n,))).astype(jnp.float32)
        return gamma, beta, mean, var

    # Conv weights kept as (KH, KW, Cin, Cout) (PyTorch's (Cout,Cin,KH,KW)
    # permuted once at init).  fc1 weight rows are in NHWC (h, w, c) flatten
    # order — a one-time row permutation of the PyTorch (128*4*4, 512) weight
    # — so the classifier consumes the NHWC activation with no transpose.
    wfc3 = rnd(ks[12], (256, 10))
    bfc3 = rnd(ks[13], (10,))
    p = {
        "w1": rnd(ks[0], (5, 5, 1, 64)),    "b1": rnd(ks[1], (64,)),
        "bn1": bn(ks[2], 64),
        "w2": rnd(ks[3], (5, 5, 64, 128)),  "b2": rnd(ks[4], (128,)),
        "bn2": bn(ks[5], 128),
        "wfc1": rnd(ks[6], (4 * 4 * 128, 512)), "bfc1": rnd(ks[7], (512,)),
        "bn3": bn(ks[8], 512),
        "wfc2": rnd(ks[9], (512, 256)), "bfc2": rnd(ks[10], (256,)),
        "bn4": bn(ks[11], 256),
        # Final Linear(256, 10): pad N 10 -> 128 once at init (lane-dense
        # stores); the wrapper slices the logits back to 10 columns.
        "wfc3": jnp.zeros((256, 128), jnp.float32).at[:, :10].set(wfc3),
        "bfc3": jnp.zeros((128,), jnp.float32).at[:10].set(bfc3),
    }
    return p


def forward(params, x_nchw):
    """x_nchw: (B, 1, 28, 28) float32 -> logits (B, 10). Mirrors BasicLeNet."""
    x = jnp.transpose(x_nchw, (0, 2, 3, 1)).astype(jnp.bfloat16)   # NHWC, bf16
    B = x.shape[0]

    # features: (Conv -> ReLU -> BN -> MaxPool2) x 2, each block fully fused
    s1, t1 = bn_fold(*params["bn1"])
    x = conv_relu_bn_pool(x, params["w1"], params["b1"], s1, t1)   # (B,12,12,64)
    s2, t2 = bn_fold(*params["bn2"])
    x = conv_relu_bn_pool(x, params["w2"], params["b2"], s2, t2)   # (B,4,4,128)

    # flatten in NHWC order (fc1 rows pre-permuted -> no runtime transpose)
    x = x.reshape(B, 4 * 4 * 128)

    # classifier: Linear -> ReLU -> BN (x2), then Linear (padded to 128 cols)
    s3, t3 = bn_fold(*params["bn3"])
    x = fused_matmul(x, params["wfc1"], params["bfc1"], s3, t3, relu=True,
                     out_dtype=jnp.bfloat16)
    s4, t4 = bn_fold(*params["bn4"])
    x = fused_matmul(x, params["wfc2"], params["bfc2"], s4, t4, relu=True,
                     out_dtype=jnp.bfloat16)
    ones128 = jnp.ones((128,), jnp.float32)
    zeros128 = jnp.zeros((128,), jnp.float32)
    logits = fused_matmul(x, params["wfc3"], params["bfc3"], ones128, zeros128,
                          relu=False, out_dtype=jnp.float32)
    return logits[:, :10]


if __name__ == "__main__":
    root = jax.random.PRNGKey(0)
    k_in, k_par = jax.random.split(root)

    # 28x28 input implied by the classifier's 128*4*4: 28 -conv5-> 24 -pool->
    # 12 -conv5-> 8 -pool-> 4.
    x = jax.random.normal(k_in, (2, 1, 28, 28), dtype=jnp.float32)
    params = init_params(k_par)

    fwd = jax.jit(forward)
    logits = jax.block_until_ready(fwd(params, x))

    assert logits.shape == (2, 10), logits.shape
    assert bool(jnp.all(jnp.isfinite(logits)))
    print("KERNEL_OK")
</pallas_src>

<mosaic_0001>
module attributes {stable_mosaic.version = 11 : i64} {
  func.func @_fused_matmul_kernel(%arg0: i32, %arg1: i32, %arg2: i32, %arg3: memref<4x96x25xbf16, #tpu.memory_space<vmem>>, %arg4: memref<25x64xbf16, #tpu.memory_space<vmem>>, %arg5: memref<1x64xf32, #tpu.memory_space<vmem>>, %arg6: memref<1x64xf32, #tpu.memory_space<vmem>>, %arg7: memref<1x64xf32, #tpu.memory_space<vmem>>, %arg8: memref<96x64xbf16, #tpu.memory_space<vmem>>, %arg9: memref<4x96x64xf32, #tpu.memory_space<vmem>>) attributes {dimension_semantics = [#tpu.dimension_semantics<parallel>, #tpu.dimension_semantics<parallel>, #tpu.dimension_semantics<arbitrary>], iteration_bounds = array<i64: 3, 1, 1>, scalar_prefetch = 0 : i64, scratch_operands = 1 : i64, tpu.core_type = #tpu.core_type<tc>, window_params = [{transform_indices = @transform_0, window_bounds = array<i64: 4, 96, 25>}, {transform_indices = @transform_1, window_bounds = array<i64: 25, 64>}, {transform_indices = @transform_2, window_bounds = array<i64: 1, 64>}, {transform_indices = @transform_3, window_bounds = array<i64: 1, 64>}, {transform_indices = @transform_4, window_bounds = array<i64: 1, 64>}, {transform_indices = @transform_5, window_bounds = array<i64: 96, 64>}]} {
    %c0_i32 = arith.constant 0 : i32
    %0 = arith.cmpi eq, %arg2, %c0_i32 : i32
    %1 = arith.extui %0 : i1 to i32
    %c0_i32_0 = arith.constant 0 : i32
    %2 = arith.cmpi ne, %1, %c0_i32_0 : i32
    scf.if %2 {
      %cst_40 = arith.constant 0.000000e+00 : f32
      %43 = vector.broadcast %cst_40 : f32 to vector<4x96x64xf32>
      %c0_41 = arith.constant 0 : index
      %c0_42 = arith.constant 0 : index
      %c0_43 = arith.constant 0 : index
      %44 = vector.load %arg9[%c0_41, %c0_42, %c0_43] : memref<4x96x64xf32, #tpu.memory_space<vmem>>, vector<4x96x64xf32>
      tpu.vector_store %arg9[%c0_41, %c0_42, %c0_43], %43 {strides = array<i32>} : memref<4x96x64xf32, #tpu.memory_space<vmem>>, vector<4x96x64xf32>,
    } else {
    }
    %c0 = arith.constant 0 : index
    %c0_1 = arith.constant 0 : index
    %3 = vector.load %arg4[%c0, %c0_1] : memref<25x64xbf16, #tpu.memory_space<vmem>>, vector<25x64xbf16>
    %c0_2 = arith.constant 0 : index
    %c0_3 = arith.constant 0 : index
    %c0_4 = arith.constant 0 : index
    %4 = vector.load %arg9[%c0_2, %c0_3, %c0_4] : memref<4x96x64xf32, #tpu.memory_space<vmem>>, vector<1x96x64xf32>
    %5 = vector.shape_cast %4 : vector<1x96x64xf32> to vector<96x64xf32>
    %c0_5 = arith.constant 0 : index
    %c0_6 = arith.constant 0 : index
    %c0_7 = arith.constant 0 : index
    %6 = vector.load %arg3[%c0_5, %c0_6, %c0_7] : memref<4x96x25xbf16, #tpu.memory_space<vmem>>, vector<1x96x25xbf16>
    %7 = vector.shape_cast %6 : vector<1x96x25xbf16> to vector<96x25xbf16>
    %cst = arith.constant dense<0.000000e+00> : vector<96x64xf32>
    %8 = tpu.matmul %7, %3, %cst {dimension_numbers = #tpu.dot_dimension_numbers<[1], [0], [0], [1], [0, 0, 1, 1], [], []>} : vector<96x25xbf16>, vector<25x64xbf16>, vector<96x64xf32> -> vector<96x64xf32>
    %9 = arith.addf %5, %8 : vector<96x64xf32>
    %c0_8 = arith.constant 0 : index
    %c0_9 = arith.constant 0 : index
    %c0_10 = arith.constant 0 : index
    %10 = vector.load %arg9[%c0_8, %c0_9, %c0_10] : memref<4x96x64xf32, #tpu.memory_space<vmem>>, vector<1x96x64xf32>
    %11 = vector.shape_cast %10 : vector<1x96x64xf32> to vector<96x64xf32>
    %12 = vector.shape_cast %9 : vector<96x64xf32> to vector<1x96x64xf32>
    tpu.vector_store %arg9[%c0_8, %c0_9, %c0_10], %12 {strides = array<i32>} : memref<4x96x64xf32, #tpu.memory_space<vmem>>, vector<1x96x64xf32>,
    %c1 = arith.constant 1 : index
    %c0_11 = arith.constant 0 : index
    %c0_12 = arith.constant 0 : index
    %13 = vector.load %arg9[%c1, %c0_11, %c0_12] : memref<4x96x64xf32, #tpu.memory_space<vmem>>, vector<1x96x64xf32>
    %14 = vector.shape_cast %13 : vector<1x96x64xf32> to vector<96x64xf32>
    %c1_13 = arith.constant 1 : index
    %c0_14 = arith.constant 0 : index
    %c0_15 = arith.constant 0 : index
    %15 = vector.load %arg3[%c1_13, %c0_14, %c0_15] : memref<4x96x25xbf16, #tpu.memory_space<vmem>>, vector<1x96x25xbf16>
    %16 = vector.shape_cast %15 : vector<1x96x25xbf16> to vector<96x25xbf16>
    %cst_16 = arith.constant dense<0.000000e+00> : vector<96x64xf32>
    %17 = tpu.matmul %16, %3, %cst_16 {dimension_numbers = #tpu.dot_dimension_numbers<[1], [0], [0], [1], [0, 0, 1, 1], [], []>} : vector<96x25xbf16>, vector<25x64xbf16>, vector<96x64xf32> -> vector<96x64xf32>
    %18 = arith.addf %14, %17 : vector<96x64xf32>
    %c1_17 = arith.constant 1 : index
    %c0_18 = arith.constant 0 : index
    %c0_19 = arith.constant 0 : index
    %19 = vector.load %arg9[%c1_17, %c0_18, %c0_19] : memref<4x96x64xf32, #tpu.memory_space<vmem>>, vector<1x96x64xf32>
    %20 = vector.shape_cast %19 : vector<1x96x64xf32> to vector<96x64xf32>
    %21 = vector.shape_cast %18 : vector<96x64xf32> to vector<1x96x64xf32>
    tpu.vector_store %arg9[%c1_17, %c0_18, %c0_19], %21 {strides = array<i32>} : memref<4x96x64xf32, #tpu.memory_space<vmem>>, vector<1x96x64xf32>,
    %c2 = arith.constant 2 : index
    %c0_20 = arith.constant 0 : index
    %c0_21 = arith.constant 0 : index
    %22 = vector.load %arg9[%c2, %c0_20, %c0_21] : memref<4x96x64xf32, #tpu.memory_space<vmem>>, vector<1x96x64xf32>
    %23 = vector.shape_cast %22 : vector<1x96x64xf32> to vector<96x64xf32>
    %c2_22 = arith.constant 2 : index
    %c0_23 = arith.constant 0 : index
    %c0_24 = arith.constant 0 : index
    %24 = vector.load %arg3[%c2_22, %c0_23, %c0_24] : memref<4x96x25xbf16, #tpu.memory_space<vmem>>, vector<1x96x25xbf16>
    %25 = vector.shape_cast %24 : vector<1x96x25xbf16> to vector<96x25xbf16>
    %cst_25 = arith.constant dense<0.000000e+00> : vector<96x64xf32>
    %26 = tpu.matmul %25, %3, %cst_25 {dimension_numbers = #tpu.dot_dimension_numbers<[1], [0], [0], [1], [0, 0, 1, 1], [], []>} : vector<96x25xbf16>, vector<25x64xbf16>, vector<96x64xf32> -> vector<96x64xf32>
    %27 = arith.addf %23, %26 : vector<96x64xf32>
    %c2_26 = arith.constant 2 : index
    %c0_27 = arith.constant 0 : index
    %c0_28 = arith.constant 0 : index
    %28 = vector.load %arg9[%c2_26, %c0_27, %c0_28] : memref<4x96x64xf32, #tpu.memory_space<vmem>>, vector<1x96x64xf32>
    %29 = vector.shape_cast %28 : vector<1x96x64xf32> to vector<96x64xf32>
    %30 = vector.shape_cast %27 : vector<96x64xf32> to vector<1x96x64xf32>
    tpu.vector_store %arg9[%c2_26, %c0_27, %c0_28], %30 {strides = array<i32>} : memref<4x96x64xf32, #tpu.memory_space<vmem>>, vector<1x96x64xf32>,
    %c3 = arith.constant 3 : index
    %c0_29 = arith.constant 0 : index
    %c0_30 = arith.constant 0 : index
    %31 = vector.load %arg9[%c3, %c0_29, %c0_30] : memref<4x96x64xf32, #tpu.memory_space<vmem>>, vector<1x96x64xf32>
    %32 = vector.shape_cast %31 : vector<1x96x64xf32> to vector<96x64xf32>
    %c3_31 = arith.constant 3 : index
    %c0_32 = arith.constant 0 : index
    %c0_33 = arith.constant 0 : index
    %33 = vector.load %arg3[%c3_31, %c0_32, %c0_33] : memref<4x96x25xbf16, #tpu.memory_space<vmem>>, vector<1x96x25xbf16>
    %34 = vector.shape_cast %33 : vector<1x96x25xbf16> to vector<96x25xbf16>
    %cst_34 = arith.constant dense<0.000000e+00> : vector<96x64xf32>
    %35 = tpu.matmul %34, %3, %cst_34 {dimension_numbers = #tpu.dot_dimension_numbers<[1], [0], [0], [1], [0, 0, 1, 1], [], []>} : vector<96x25xbf16>, vector<25x64xbf16>, vector<96x64xf32> -> vector<96x64xf32>
    %36 = arith.addf %32, %35 : vector<96x64xf32>
    %c3_35 = arith.constant 3 : index
    %c0_36 = arith.constant 0 : index
    %c0_37 = arith.constant 0 : index
    %37 = vector.load %arg9[%c3_35, %c0_36, %c0_37] : memref<4x96x64xf32, #tpu.memory_space<vmem>>, vector<1x96x64xf32>
    %38 = vector.shape_cast %37 : vector<1x96x64xf32> to vector<96x64xf32>
    %39 = vector.shape_cast %36 : vector<96x64xf32> to vector<1x96x64xf32>
    tpu.vector_store %arg9[%c3_35, %c0_36, %c0_37], %39 {strides = array<i32>} : memref<4x96x64xf32, #tpu.memory_space<vmem>>, vector<1x96x64xf32>,
    %c0_i32_38 = arith.constant 0 : i32
    %40 = arith.cmpi eq, %arg2, %c0_i32_38 : i32
    %41 = arith.extui %40 : i1 to i32
    %c0_i32_39 = arith.constant 0 : i32
    %42 = arith.cmpi ne, %41, %c0_i32_39 : i32
    scf.if %42 {
      %c0_40 = arith.constant 0 : index
      %c0_41 = arith.constant 0 : index
      %43 = vector.load %arg5[%c0_40, %c0_41] : memref<1x64xf32, #tpu.memory_space<vmem>>, vector<1x64xf32>
      %c0_42 = arith.constant 0 : index
      %c0_43 = arith.constant 0 : index
      %44 = vector.load %arg6[%c0_42, %c0_43] : memref<1x64xf32, #tpu.memory_space<vmem>>, vector<1x64xf32>
      %c0_44 = arith.constant 0 : index
      %c0_45 = arith.constant 0 : index
      %45 = vector.load %arg7[%c0_44, %c0_45] : memref<1x64xf32, #tpu.memory_space<vmem>>, vector<1x64xf32>
      %c0_46 = arith.constant 0 : index
      %c0_47 = arith.constant 0 : index
      %c0_48 = arith.constant 0 : index
      %46 = vector.load %arg9[%c0_46, %c0_47, %c0_48] : memref<4x96x64xf32, #tpu.memory_space<vmem>>, vector<1x96x64xf32>
      %47 = vector.shape_cast %46 : vector<1x96x64xf32> to vector<96x64xf32>
      %48 = vector.broadcast %43 : vector<1x64xf32> to vector<96x64xf32>
      %49 = arith.addf %47, %48 : vector<96x64xf32>
      %cst_49 = arith.constant 0.000000e+00 : f32
      %50 = vector.broadcast %cst_49 : f32 to vector<96x64xf32>
      %51 = arith.maximumf %49, %50 : vector<96x64xf32>
      %52 = vector.broadcast %44 : vector<1x64xf32> to vector<96x64xf32>
      %53 = arith.mulf %51, %52 : vector<96x64xf32>
      %54 = vector.broadcast %45 : vector<1x64xf32> to vector<96x64xf32>
      %55 = arith.addf %53, %54 : vector<96x64xf32>
      %c1_50 = arith.constant 1 : index
      %c0_51 = arith.constant 0 : index
      %c0_52 = arith.constant 0 : index
      %56 = vector.load %arg9[%c1_50, %c0_51, %c0_52] : memref<4x96x64xf32, #tpu.memory_space<vmem>>, vector<1x96x64xf32>
      %57 = vector.shape_cast %56 : vector<1x96x64xf32> to vector<96x64xf32>
      %58 = vector.broadcast %43 : vector<1x64xf32> to vector<96x64xf32>
      %59 = arith.addf %57, %58 : vector<96x64xf32>
      %cst_53 = arith.constant 0.000000e+00 : f32
      %60 = vector.broadcast %cst_53 : f32 to vector<96x64xf32>
      %61 = arith.maximumf %59, %60 : vector<96x64xf32>
      %62 = vector.broadcast %44 : vector<1x64xf32> to vector<96x64xf32>
      %63 = arith.mulf %61, %62 : vector<96x64xf32>
      %64 = vector.broadcast %45 : vector<1x64xf32> to vector<96x64xf32>
      %65 = arith.addf %63, %64 : vector<96x64xf32>
      %66 = arith.maximumf %55, %65 : vector<96x64xf32>
      %c2_54 = arith.constant 2 : index
      %c0_55 = arith.constant 0 : index
      %c0_56 = arith.constant 0 : index
      %67 = vector.load %arg9[%c2_54, %c0_55, %c0_56] : memref<4x96x64xf32, #tpu.memory_space<vmem>>, vector<1x96x64xf32>
      %68 = vector.shape_cast %67 : vector<1x96x64xf32> to vector<96x64xf32>
      %69 = vector.broadcast %43 : vector<1x64xf32> to vector<96x64xf32>
      %70 = arith.addf %68, %69 : vector<96x64xf32>
      %cst_57 = arith.constant 0.000000e+00 : f32
      %71 = vector.broadcast %cst_57 : f32 to vector<96x64xf32>
      %72 = arith.maximumf %70, %71 : vector<96x64xf32>
      %73 = vector.broadcast %44 : vector<1x64xf32> to vector<96x64xf32>
      %74 = arith.mulf %72, %73 : vector<96x64xf32>
      %75 = vector.broadcast %45 : vector<1x64xf32> to vector<96x64xf32>
      %76 = arith.addf %74, %75 : vector<96x64xf32>
      %77 = arith.maximumf %66, %76 : vector<96x64xf32>
      %c3_58 = arith.constant 3 : index
      %c0_59 = arith.constant 0 : index
      %c0_60 = arith.constant 0 : index
      %78 = vector.load %arg9[%c3_58, %c0_59, %c0_60] : memref<4x96x64xf32, #tpu.memory_space<vmem>>, vector<1x96x64xf32>
      %79 = vector.shape_cast %78 : vector<1x96x64xf32> to vector<96x64xf32>
      %80 = vector.broadcast %43 : vector<1x64xf32> to vector<96x64xf32>
      %81 = arith.addf %79, %80 : vector<96x64xf32>
      %cst_61 = arith.constant 0.000000e+00 : f32
      %82 = vector.broadcast %cst_61 : f32 to vector<96x64xf32>
      %83 = arith.maximumf %81, %82 : vector<96x64xf32>
      %84 = vector.broadcast %44 : vector<1x64xf32> to vector<96x64xf32>
      %85 = arith.mulf %83, %84 : vector<96x64xf32>
      %86 = vector.broadcast %45 : vector<1x64xf32> to vector<96x64xf32>
      %87 = arith.addf %85, %86 : vector<96x64xf32>
      %88 = arith.maximumf %77, %87 : vector<96x64xf32>
      %89 = arith.truncf %88 : vector<96x64xf32> to vector<96x64xbf16>
      %c0_62 = arith.constant 0 : index
      %c0_63 = arith.constant 0 : index
      %90 = vector.load %arg8[%c0_62, %c0_63] : memref<96x64xbf16, #tpu.memory_space<vmem>>, vector<96x64xbf16>
      tpu.vector_store %arg8[%c0_62, %c0_63], %89 {strides = array<i32>} : memref<96x64xbf16, #tpu.memory_space<vmem>>, vector<96x64xbf16>,
    } else {
    }
    return
  }
  func.func @transform_0(%arg0: i32, %arg1: i32, %arg2: i32) -> (i32, i32, i32) {
    %c0_i32 = arith.constant 0 : i32
    %c0_i32_0 = arith.constant 0 : i32
    return %c0_i32, %arg0, %arg2 : i32, i32, i32
  }
  func.func @transform_1(%arg0: i32, %arg1: i32, %arg2: i32) -> (i32, i32) {
    %c0_i32 = arith.constant 0 : i32
    return %arg2, %arg1 : i32, i32
  }
  func.func @transform_2(%arg0: i32, %arg1: i32, %arg2: i32) -> (i32, i32) {
    %c0_i32 = arith.constant 0 : i32
    %c0_i32_0 = arith.constant 0 : i32
    return %c0_i32, %arg1 : i32, i32
  }
  func.func @transform_3(%arg0: i32, %arg1: i32, %arg2: i32) -> (i32, i32) {
    %c0_i32 = arith.constant 0 : i32
    %c0_i32_0 = arith.constant 0 : i32
    return %c0_i32, %arg1 : i32, i32
  }
  func.func @transform_4(%arg0: i32, %arg1: i32, %arg2: i32) -> (i32, i32) {
    %c0_i32 = arith.constant 0 : i32
    %c0_i32_0 = arith.constant 0 : i32
    return %c0_i32, %arg1 : i32, i32
  }
  func.func @transform_5(%arg0: i32, %arg1: i32, %arg2: i32) -> (i32, i32) {
    %c0_i32 = arith.constant 0 : i32
    return %arg0, %arg1 : i32, i32
  }
}

module attributes {stable_mosaic.version = 11 : i64} {
  func.func @_fused_matmul_kernel(%arg0: i32, %arg1: i32, %arg2: i32, %arg3: memref<4x32x1600xbf16, #tpu.memory_space<vmem>>, %arg4: memref<1600x128xbf16, #tpu.memory_space<vmem>>, %arg5: memref<1x128xf32, #tpu.memory_space<vmem>>, %arg6: memref<1x128xf32, #tpu.memory_space<vmem>>, %arg7: memref<1x128xf32, #tpu.memory_space<vmem>>, %arg8: memref<32x128xbf16, #tpu.memory_space<vmem>>, %arg9: memref<4x32x128xf32, #tpu.memory_space<vmem>>) attributes {dimension_semantics = [#tpu.dimension_semantics<parallel>, #tpu.dimension_semantics<parallel>, #tpu.dimension_semantics<arbitrary>], iteration_bounds = array<i64: 1, 1, 1>, scalar_prefetch = 0 : i64, scratch_operands = 1 : i64, tpu.core_type = #tpu.core_type<tc>, window_params = [{transform_indices = @transform_0, window_bounds = array<i64: 4, 32, 1600>}, {transform_indices = @transform_1, window_bounds = array<i64: 1600, 128>}, {transform_indices = @transform_2, window_bounds = array<i64: 1, 128>}, {transform_indices = @transform_3, window_bounds = array<i64: 1, 128>}, {transform_indices = @transform_4, window_bounds = array<i64: 1, 128>}, {transform_indices = @transform_5, window_bounds = array<i64: 32, 128>}]} {
    %c0_i32 = arith.constant 0 : i32
    %0 = arith.cmpi eq, %arg2, %c0_i32 : i32
    %1 = arith.extui %0 : i1 to i32
    %c0_i32_0 = arith.constant 0 : i32
    %2 = arith.cmpi ne, %1, %c0_i32_0 : i32
    scf.if %2 {
      %cst_40 = arith.constant 0.000000e+00 : f32
      %43 = vector.broadcast %cst_40 : f32 to vector<4x32x128xf32>
      %c0_41 = arith.constant 0 : index
      %c0_42 = arith.constant 0 : index
      %c0_43 = arith.constant 0 : index
      %44 = vector.load %arg9[%c0_41, %c0_42, %c0_43] : memref<4x32x128xf32, #tpu.memory_space<vmem>>, vector<4x32x128xf32>
      tpu.vector_store %arg9[%c0_41, %c0_42, %c0_43], %43 {strides = array<i32>} : memref<4x32x128xf32, #tpu.memory_space<vmem>>, vector<4x32x128xf32>,
    } else {
    }
    %c0 = arith.constant 0 : index
    %c0_1 = arith.constant 0 : index
    %3 = vector.load %arg4[%c0, %c0_1] : memref<1600x128xbf16, #tpu.memory_space<vmem>>, vector<1600x128xbf16>
    %c0_2 = arith.constant 0 : index
    %c0_3 = arith.constant 0 : index
    %c0_4 = arith.constant 0 : index
    %4 = vector.load %arg9[%c0_2, %c0_3, %c0_4] : memref<4x32x128xf32, #tpu.memory_space<vmem>>, vector<1x32x128xf32>
    %5 = vector.shape_cast %4 : vector<1x32x128xf32> to vector<32x128xf32>
    %c0_5 = arith.constant 0 : index
    %c0_6 = arith.constant 0 : index
    %c0_7 = arith.constant 0 : index
    %6 = vector.load %arg3[%c0_5, %c0_6, %c0_7] : memref<4x32x1600xbf16, #tpu.memory_space<vmem>>, vector<1x32x1600xbf16>
    %7 = vector.shape_cast %6 : vector<1x32x1600xbf16> to vector<32x1600xbf16>
    %cst = arith.constant dense<0.000000e+00> : vector<32x128xf32>
    %8 = tpu.matmul %7, %3, %cst {dimension_numbers = #tpu.dot_dimension_numbers<[1], [0], [0], [1], [0, 0, 1, 1], [], []>} : vector<32x1600xbf16>, vector<1600x128xbf16>, vector<32x128xf32> -> vector<32x128xf32>
    %9 = arith.addf %5, %8 : vector<32x128xf32>
    %c0_8 = arith.constant 0 : index
    %c0_9 = arith.constant 0 : index
    %c0_10 = arith.constant 0 : index
    %10 = vector.load %arg9[%c0_8, %c0_9, %c0_10] : memref<4x32x128xf32, #tpu.memory_space<vmem>>, vector<1x32x128xf32>
    %11 = vector.shape_cast %10 : vector<1x32x128xf32> to vector<32x128xf32>
    %12 = vector.shape_cast %9 : vector<32x128xf32> to vector<1x32x128xf32>
    tpu.vector_store %arg9[%c0_8, %c0_9, %c0_10], %12 {strides = array<i32>} : memref<4x32x128xf32, #tpu.memory_space<vmem>>, vector<1x32x128xf32>,
    %c1 = arith.constant 1 : index
    %c0_11 = arith.constant 0 : index
    %c0_12 = arith.constant 0 : index
    %13 = vector.load %arg9[%c1, %c0_11, %c0_12] : memref<4x32x128xf32, #tpu.memory_space<vmem>>, vector<1x32x128xf32>
    %14 = vector.shape_cast %13 : vector<1x32x128xf32> to vector<32x128xf32>
    %c1_13 = arith.constant 1 : index
    %c0_14 = arith.constant 0 : index
    %c0_15 = arith.constant 0 : index
    %15 = vector.load %arg3[%c1_13, %c0_14, %c0_15] : memref<4x32x1600xbf16, #tpu.memory_space<vmem>>, vector<1x32x1600xbf16>
    %16 = vector.shape_cast %15 : vector<1x32x1600xbf16> to vector<32x1600xbf16>
    %cst_16 = arith.constant dense<0.000000e+00> : vector<32x128xf32>
    %17 = tpu.matmul %16, %3, %cst_16 {dimension_numbers = #tpu.dot_dimension_numbers<[1], [0], [0], [1], [0, 0, 1, 1], [], []>} : vector<32x1600xbf16>, vector<1600x128xbf16>, vector<32x128xf32> -> vector<32x128xf32>
    %18 = arith.addf %14, %17 : vector<32x128xf32>
    %c1_17 = arith.constant 1 : index
    %c0_18 = arith.constant 0 : index
    %c0_19 = arith.constant 0 : index
    %19 = vector.load %arg9[%c1_17, %c0_18, %c0_19] : memref<4x32x128xf32, #tpu.memory_space<vmem>>, vector<1x32x128xf32>
    %20 = vector.shape_cast %19 : vector<1x32x128xf32> to vector<32x128xf32>
    %21 = vector.shape_cast %18 : vector<32x128xf32> to vector<1x32x128xf32>
    tpu.vector_store %arg9[%c1_17, %c0_18, %c0_19], %21 {strides = array<i32>} : memref<4x32x128xf32, #tpu.memory_space<vmem>>, vector<1x32x128xf32>,
    %c2 = arith.constant 2 : index
    %c0_20 = arith.constant 0 : index
    %c0_21 = arith.constant 0 : index
    %22 = vector.load %arg9[%c2, %c0_20, %c0_21] : memref<4x32x128xf32, #tpu.memory_space<vmem>>, vector<1x32x128xf32>
    %23 = vector.shape_cast %22 : vector<1x32x128xf32> to vector<32x128xf32>
    %c2_22 = arith.constant 2 : index
    %c0_23 = arith.constant 0 : index
    %c0_24 = arith.constant 0 : index
    %24 = vector.load %arg3[%c2_22, %c0_23, %c0_24] : memref<4x32x1600xbf16, #tpu.memory_space<vmem>>, vector<1x32x1600xbf16>
    %25 = vector.shape_cast %24 : vector<1x32x1600xbf16> to vector<32x1600xbf16>
    %cst_25 = arith.constant dense<0.000000e+00> : vector<32x128xf32>
    %26 = tpu.matmul %25, %3, %cst_25 {dimension_numbers = #tpu.dot_dimension_numbers<[1], [0], [0], [1], [0, 0, 1, 1], [], []>} : vector<32x1600xbf16>, vector<1600x128xbf16>, vector<32x128xf32> -> vector<32x128xf32>
    %27 = arith.addf %23, %26 : vector<32x128xf32>
    %c2_26 = arith.constant 2 : index
    %c0_27 = arith.constant 0 : index
    %c0_28 = arith.constant 0 : index
    %28 = vector.load %arg9[%c2_26, %c0_27, %c0_28] : memref<4x32x128xf32, #tpu.memory_space<vmem>>, vector<1x32x128xf32>
    %29 = vector.shape_cast %28 : vector<1x32x128xf32> to vector<32x128xf32>
    %30 = vector.shape_cast %27 : vector<32x128xf32> to vector<1x32x128xf32>
    tpu.vector_store %arg9[%c2_26, %c0_27, %c0_28], %30 {strides = array<i32>} : memref<4x32x128xf32, #tpu.memory_space<vmem>>, vector<1x32x128xf32>,
    %c3 = arith.constant 3 : index
    %c0_29 = arith.constant 0 : index
    %c0_30 = arith.constant 0 : index
    %31 = vector.load %arg9[%c3, %c0_29, %c0_30] : memref<4x32x128xf32, #tpu.memory_space<vmem>>, vector<1x32x128xf32>
    %32 = vector.shape_cast %31 : vector<1x32x128xf32> to vector<32x128xf32>
    %c3_31 = arith.constant 3 : index
    %c0_32 = arith.constant 0 : index
    %c0_33 = arith.constant 0 : index
    %33 = vector.load %arg3[%c3_31, %c0_32, %c0_33] : memref<4x32x1600xbf16, #tpu.memory_space<vmem>>, vector<1x32x1600xbf16>
    %34 = vector.shape_cast %33 : vector<1x32x1600xbf16> to vector<32x1600xbf16>
    %cst_34 = arith.constant dense<0.000000e+00> : vector<32x128xf32>
    %35 = tpu.matmul %34, %3, %cst_34 {dimension_numbers = #tpu.dot_dimension_numbers<[1], [0], [0], [1], [0, 0, 1, 1], [], []>} : vector<32x1600xbf16>, vector<1600x128xbf16>, vector<32x128xf32> -> vector<32x128xf32>
    %36 = arith.addf %32, %35 : vector<32x128xf32>
    %c3_35 = arith.constant 3 : index
    %c0_36 = arith.constant 0 : index
    %c0_37 = arith.constant 0 : index
    %37 = vector.load %arg9[%c3_35, %c0_36, %c0_37] : memref<4x32x128xf32, #tpu.memory_space<vmem>>, vector<1x32x128xf32>
    %38 = vector.shape_cast %37 : vector<1x32x128xf32> to vector<32x128xf32>
    %39 = vector.shape_cast %36 : vector<32x128xf32> to vector<1x32x128xf32>
    tpu.vector_store %arg9[%c3_35, %c0_36, %c0_37], %39 {strides = array<i32>} : memref<4x32x128xf32, #tpu.memory_space<vmem>>, vector<1x32x128xf32>,
    %c0_i32_38 = arith.constant 0 : i32
    %40 = arith.cmpi eq, %arg2, %c0_i32_38 : i32
    %41 = arith.extui %40 : i1 to i32
    %c0_i32_39 = arith.constant 0 : i32
    %42 = arith.cmpi ne, %41, %c0_i32_39 : i32
    scf.if %42 {
      %c0_40 = arith.constant 0 : index
      %c0_41 = arith.constant 0 : index
      %43 = vector.load %arg5[%c0_40, %c0_41] : memref<1x128xf32, #tpu.memory_space<vmem>>, vector<1x128xf32>
      %c0_42 = arith.constant 0 : index
      %c0_43 = arith.constant 0 : index
      %44 = vector.load %arg6[%c0_42, %c0_43] : memref<1x128xf32, #tpu.memory_space<vmem>>, vector<1x128xf32>
      %c0_44 = arith.constant 0 : index
      %c0_45 = arith.constant 0 : index
      %45 = vector.load %arg7[%c0_44, %c0_45] : memref<1x128xf32, #tpu.memory_space<vmem>>, vector<1x128xf32>
      %c0_46 = arith.constant 0 : index
      %c0_47 = arith.constant 0 : index
      %c0_48 = arith.constant 0 : index
      %46 = vector.load %arg9[%c0_46, %c0_47, %c0_48] : memref<4x32x128xf32, #tpu.memory_space<vmem>>, vector<1x32x128xf32>
      %47 = vector.shape_cast %46 : vector<1x32x128xf32> to vector<32x128xf32>
      %48 = vector.broadcast %43 : vector<1x128xf32> to vector<32x128xf32>
      %49 = arith.addf %47, %48 : vector<32x128xf32>
      %cst_49 = arith.constant 0.000000e+00 : f32
      %50 = vector.broadcast %cst_49 : f32 to vector<32x128xf32>
      %51 = arith.maximumf %49, %50 : vector<32x128xf32>
      %52 = vector.broadcast %44 : vector<1x128xf32> to vector<32x128xf32>
      %53 = arith.mulf %51, %52 : vector<32x128xf32>
      %54 = vector.broadcast %45 : vector<1x128xf32> to vector<32x128xf32>
      %55 = arith.addf %53, %54 : vector<32x128xf32>
      %c1_50 = arith.constant 1 : index
      %c0_51 = arith.constant 0 : index
      %c0_52 = arith.constant 0 : index
      %56 = vector.load %arg9[%c1_50, %c0_51, %c0_52] : memref<4x32x128xf32, #tpu.memory_space<vmem>>, vector<1x32x128xf32>
      %57 = vector.shape_cast %56 : vector<1x32x128xf32> to vector<32x128xf32>
      %58 = vector.broadcast %43 : vector<1x128xf32> to vector<32x128xf32>
      %59 = arith.addf %57, %58 : vector<32x128xf32>
      %cst_53 = arith.constant 0.000000e+00 : f32
      %60 = vector.broadcast %cst_53 : f32 to vector<32x128xf32>
      %61 = arith.maximumf %59, %60 : vector<32x128xf32>
      %62 = vector.broadcast %44 : vector<1x128xf32> to vector<32x128xf32>
      %63 = arith.mulf %61, %62 : vector<32x128xf32>
      %64 = vector.broadcast %45 : vector<1x128xf32> to vector<32x128xf32>
      %65 = arith.addf %63, %64 : vector<32x128xf32>
      %66 = arith.maximumf %55, %65 : vector<32x128xf32>
      %c2_54 = arith.constant 2 : index
      %c0_55 = arith.constant 0 : index
      %c0_56 = arith.constant 0 : index
      %67 = vector.load %arg9[%c2_54, %c0_55, %c0_56] : memref<4x32x128xf32, #tpu.memory_space<vmem>>, vector<1x32x128xf32>
      %68 = vector.shape_cast %67 : vector<1x32x128xf32> to vector<32x128xf32>
      %69 = vector.broadcast %43 : vector<1x128xf32> to vector<32x128xf32>
      %70 = arith.addf %68, %69 : vector<32x128xf32>
      %cst_57 = arith.constant 0.000000e+00 : f32
      %71 = vector.broadcast %cst_57 : f32 to vector<32x128xf32>
      %72 = arith.maximumf %70, %71 : vector<32x128xf32>
      %73 = vector.broadcast %44 : vector<1x128xf32> to vector<32x128xf32>
      %74 = arith.mulf %72, %73 : vector<32x128xf32>
      %75 = vector.broadcast %45 : vector<1x128xf32> to vector<32x128xf32>
      %76 = arith.addf %74, %75 : vector<32x128xf32>
      %77 = arith.maximumf %66, %76 : vector<32x128xf32>
      %c3_58 = arith.constant 3 : index
      %c0_59 = arith.constant 0 : index
      %c0_60 = arith.constant 0 : index
      %78 = vector.load %arg9[%c3_58, %c0_59, %c0_60] : memref<4x32x128xf32, #tpu.memory_space<vmem>>, vector<1x32x128xf32>
      %79 = vector.shape_cast %78 : vector<1x32x128xf32> to vector<32x128xf32>
      %80 = vector.broadcast %43 : vector<1x128xf32> to vector<32x128xf32>
      %81 = arith.addf %79, %80 : vector<32x128xf32>
      %cst_61 = arith.constant 0.000000e+00 : f32
      %82 = vector.broadcast %cst_61 : f32 to vector<32x128xf32>
      %83 = arith.maximumf %81, %82 : vector<32x128xf32>
      %84 = vector.broadcast %44 : vector<1x128xf32> to vector<32x128xf32>
      %85 = arith.mulf %83, %84 : vector<32x128xf32>
      %86 = vector.broadcast %45 : vector<1x128xf32> to vector<32x128xf32>
      %87 = arith.addf %85, %86 : vector<32x128xf32>
      %88 = arith.maximumf %77, %87 : vector<32x128xf32>
      %89 = arith.truncf %88 : vector<32x128xf32> to vector<32x128xbf16>
      %c0_62 = arith.constant 0 : index
      %c0_63 = arith.constant 0 : index
      %90 = vector.load %arg8[%c0_62, %c0_63] : memref<32x128xbf16, #tpu.memory_space<vmem>>, vector<32x128xbf16>
      tpu.vector_store %arg8[%c0_62, %c0_63], %89 {strides = array<i32>} : memref<32x128xbf16, #tpu.memory_space<vmem>>, vector<32x128xbf16>,
    } else {
    }
    return
  }
  func.func @transform_0(%arg0: i32, %arg1: i32, %arg2: i32) -> (i32, i32, i32) {
    %c0_i32 = arith.constant 0 : i32
    %c0_i32_0 = arith.constant 0 : i32
    return %c0_i32, %arg0, %arg2 : i32, i32, i32
  }
  func.func @transform_1(%arg0: i32, %arg1: i32, %arg2: i32) -> (i32, i32) {
    %c0_i32 = arith.constant 0 : i32
    return %arg2, %arg1 : i32, i32
  }
  func.func @transform_2(%arg0: i32, %arg1: i32, %arg2: i32) -> (i32, i32) {
    %c0_i32 = arith.constant 0 : i32
    %c0_i32_0 = arith.constant 0 : i32
    return %c0_i32, %arg1 : i32, i32
  }
  func.func @transform_3(%arg0: i32, %arg1: i32, %arg2: i32) -> (i32, i32) {
    %c0_i32 = arith.constant 0 : i32
    %c0_i32_0 = arith.constant 0 : i32
    return %c0_i32, %arg1 : i32, i32
  }
  func.func @transform_4(%arg0: i32, %arg1: i32, %arg2: i32) -> (i32, i32) {
    %c0_i32 = arith.constant 0 : i32
    %c0_i32_0 = arith.constant 0 : i32
    return %c0_i32, %arg1 : i32, i32
  }
  func.func @transform_5(%arg0: i32, %arg1: i32, %arg2: i32) -> (i32, i32) {
    %c0_i32 = arith.constant 0 : i32
    return %arg0, %arg1 : i32, i32
  }
}

module attributes {stable_mosaic.version = 11 : i64} {
  func.func @_fused_matmul_kernel(%arg0: i32, %arg1: i32, %arg2: i32, %arg3: memref<1x2x512xbf16, #tpu.memory_space<vmem>>, %arg4: memref<512x128xbf16, #tpu.memory_space<vmem>>, %arg5: memref<1x128xf32, #tpu.memory_space<vmem>>, %arg6: memref<1x128xf32, #tpu.memory_space<vmem>>, %arg7: memref<1x128xf32, #tpu.memory_space<vmem>>, %arg8: memref<2x128xbf16, #tpu.memory_space<vmem>>, %arg9: memref<1x2x128xf32, #tpu.memory_space<vmem>>) attributes {dimension_semantics = [#tpu.dimension_semantics<parallel>, #tpu.dimension_semantics<parallel>, #tpu.dimension_semantics<arbitrary>], iteration_bounds = array<i64: 1, 4, 4>, scalar_prefetch = 0 : i64, scratch_operands = 1 : i64, tpu.core_type = #tpu.core_type<tc>, window_params = [{transform_indices = @transform_0, window_bounds = array<i64: 1, 2, 512>}, {transform_indices = @transform_1, window_bounds = array<i64: 512, 128>}, {transform_indices = @transform_2, window_bounds = array<i64: 1, 128>}, {transform_indices = @transform_3, window_bounds = array<i64: 1, 128>}, {transform_indices = @transform_4, window_bounds = array<i64: 1, 128>}, {transform_indices = @transform_5, window_bounds = array<i64: 2, 128>}]} {
    %c0_i32 = arith.constant 0 : i32
    %0 = arith.cmpi eq, %arg2, %c0_i32 : i32
    %1 = arith.extui %0 : i1 to i32
    %c0_i32_0 = arith.constant 0 : i32
    %2 = arith.cmpi ne, %1, %c0_i32_0 : i32
    scf.if %2 {
      %cst_12 = arith.constant 0.000000e+00 : f32
      %16 = vector.broadcast %cst_12 : f32 to vector<1x2x128xf32>
      %c0_13 = arith.constant 0 : index
      %c0_14 = arith.constant 0 : index
      %c0_15 = arith.constant 0 : index
      %17 = vector.load %arg9[%c0_13, %c0_14, %c0_15] : memref<1x2x128xf32, #tpu.memory_space<vmem>>, vector<1x2x128xf32>
      tpu.vector_store %arg9[%c0_13, %c0_14, %c0_15], %16 {strides = array<i32>} : memref<1x2x128xf32, #tpu.memory_space<vmem>>, vector<1x2x128xf32>,
    } else {
    }
    %c0 = arith.constant 0 : index
    %c0_1 = arith.constant 0 : index
    %3 = vector.load %arg4[%c0, %c0_1] : memref<512x128xbf16, #tpu.memory_space<vmem>>, vector<512x128xbf16>
    %c0_2 = arith.constant 0 : index
    %c0_3 = arith.constant 0 : index
    %c0_4 = arith.constant 0 : index
    %4 = vector.load %arg9[%c0_2, %c0_3, %c0_4] : memref<1x2x128xf32, #tpu.memory_space<vmem>>, vector<1x2x128xf32>
    %5 = vector.shape_cast %4 : vector<1x2x128xf32> to vector<2x128xf32>
    %c0_5 = arith.constant 0 : index
    %c0_6 = arith.constant 0 : index
    %c0_7 = arith.constant 0 : index
    %6 = vector.load %arg3[%c0_5, %c0_6, %c0_7] : memref<1x2x512xbf16, #tpu.memory_space<vmem>>, vector<1x2x512xbf16>
    %7 = vector.shape_cast %6 : vector<1x2x512xbf16> to vector<2x512xbf16>
    %cst = arith.constant dense<0.000000e+00> : vector<2x128xf32>
    %8 = tpu.matmul %7, %3, %cst {dimension_numbers = #tpu.dot_dimension_numbers<[1], [0], [0], [1], [0, 0, 1, 1], [], []>} : vector<2x512xbf16>, vector<512x128xbf16>, vector<2x128xf32> -> vector<2x128xf32>
    %9 = arith.addf %5, %8 : vector<2x128xf32>
    %c0_8 = arith.constant 0 : index
    %c0_9 = arith.constant 0 : index
    %c0_10 = arith.constant 0 : index
    %10 = vector.load %arg9[%c0_8, %c0_9, %c0_10] : memref<1x2x128xf32, #tpu.memory_space<vmem>>, vector<1x2x128xf32>
    %11 = vector.shape_cast %10 : vector<1x2x128xf32> to vector<2x128xf32>
    %12 = vector.shape_cast %9 : vector<2x128xf32> to vector<1x2x128xf32>
    tpu.vector_store %arg9[%c0_8, %c0_9, %c0_10], %12 {strides = array<i32>} : memref<1x2x128xf32, #tpu.memory_space<vmem>>, vector<1x2x128xf32>,
    %c3_i32 = arith.constant 3 : i32
    %13 = arith.cmpi eq, %arg2, %c3_i32 : i32
    %14 = arith.extui %13 : i1 to i32
    %c0_i32_11 = arith.constant 0 : i32
    %15 = arith.cmpi ne, %14, %c0_i32_11 : i32
    scf.if %15 {
      %c0_12 = arith.constant 0 : index
      %c0_13 = arith.constant 0 : index
      %16 = vector.load %arg5[%c0_12, %c0_13] : memref<1x128xf32, #tpu.memory_space<vmem>>, vector<1x128xf32>
      %c0_14 = arith.constant 0 : index
      %c0_15 = arith.constant 0 : index
      %17 = vector.load %arg6[%c0_14, %c0_15] : memref<1x128xf32, #tpu.memory_space<vmem>>, vector<1x128xf32>
      %c0_16 = arith.constant 0 : index
      %c0_17 = arith.constant 0 : index
      %18 = vector.load %arg7[%c0_16, %c0_17] : memref<1x128xf32, #tpu.memory_space<vmem>>, vector<1x128xf32>
      %c0_18 = arith.constant 0 : index
      %c0_19 = arith.constant 0 : index
      %c0_20 = arith.constant 0 : index
      %19 = vector.load %arg9[%c0_18, %c0_19, %c0_20] : memref<1x2x128xf32, #tpu.memory_space<vmem>>, vector<1x2x128xf32>
      %20 = vector.shape_cast %19 : vector<1x2x128xf32> to vector<2x128xf32>
      %21 = vector.broadcast %16 : vector<1x128xf32> to vector<2x128xf32>
      %22 = arith.addf %20, %21 : vector<2x128xf32>
      %cst_21 = arith.constant 0.000000e+00 : f32
      %23 = vector.broadcast %cst_21 : f32 to vector<2x128xf32>
      %24 = arith.maximumf %22, %23 : vector<2x128xf32>
      %25 = vector.broadcast %17 : vector<1x128xf32> to vector<2x128xf32>
      %26 = arith.mulf %24, %25 : vector<2x128xf32>
      %27 = vector.broadcast %18 : vector<1x128xf32> to vector<2x128xf32>
      %28 = arith.addf %26, %27 : vector<2x128xf32>
      %29 = arith.truncf %28 : vector<2x128xf32> to vector<2x128xbf16>
      %c0_22 = arith.constant 0 : index
      %c0_23 = arith.constant 0 : index
      %30 = vector.load %arg8[%c0_22, %c0_23] : memref<2x128xbf16, #tpu.memory_space<vmem>>, vector<2x128xbf16>
      tpu.vector_store %arg8[%c0_22, %c0_23], %29 {strides = array<i32>} : memref<2x128xbf16, #tpu.memory_space<vmem>>, vector<2x128xbf16>,
    } else {
    }
    return
  }
  func.func @transform_0(%arg0: i32, %arg1: i32, %arg2: i32) -> (i32, i32, i32) {
    %c0_i32 = arith.constant 0 : i32
    %c0_i32_0 = arith.constant 0 : i32
    return %c0_i32, %arg0, %arg2 : i32, i32, i32
  }
  func.func @transform_1(%arg0: i32, %arg1: i32, %arg2: i32) -> (i32, i32) {
    %c0_i32 = arith.constant 0 : i32
    return %arg2, %arg1 : i32, i32
  }
  func.func @transform_2(%arg0: i32, %arg1: i32, %arg2: i32) -> (i32, i32) {
    %c0_i32 = arith.constant 0 : i32
    %c0_i32_0 = arith.constant 0 : i32
    return %c0_i32, %arg1 : i32, i32
  }
  func.func @transform_3(%arg0: i32, %arg1: i32, %arg2: i32) -> (i32, i32) {
    %c0_i32 = arith.constant 0 : i32
    %c0_i32_0 = arith.constant 0 : i32
    return %c0_i32, %arg1 : i32, i32
  }
  func.func @transform_4(%arg0: i32, %arg1: i32, %arg2: i32) -> (i32, i32) {
    %c0_i32 = arith.constant 0 : i32
    %c0_i32_0 = arith.constant 0 : i32
    return %c0_i32, %arg1 : i32, i32
  }
  func.func @transform_5(%arg0: i32, %arg1: i32, %arg2: i32) -> (i32, i32) {
    %c0_i32 = arith.constant 0 : i32
    return %arg0, %arg1 : i32, i32
  }
}

module attributes {stable_mosaic.version = 11 : i64} {
  func.func @_fused_matmul_kernel(%arg0: i32, %arg1: i32, %arg2: i32, %arg3: memref<1x2x512xbf16, #tpu.memory_space<vmem>>, %arg4: memref<512x128xbf16, #tpu.memory_space<vmem>>, %arg5: memref<1x128xf32, #tpu.memory_space<vmem>>, %arg6: memref<1x128xf32, #tpu.memory_space<vmem>>, %arg7: memref<1x128xf32, #tpu.memory_space<vmem>>, %arg8: memref<2x128xbf16, #tpu.memory_space<vmem>>, %arg9: memref<1x2x128xf32, #tpu.memory_space<vmem>>) attributes {dimension_semantics = [#tpu.dimension_semantics<parallel>, #tpu.dimension_semantics<parallel>, #tpu.dimension_semantics<arbitrary>], iteration_bounds = array<i64: 1, 2, 1>, scalar_prefetch = 0 : i64, scratch_operands = 1 : i64, tpu.core_type = #tpu.core_type<tc>, window_params = [{transform_indices = @transform_0, window_bounds = array<i64: 1, 2, 512>}, {transform_indices = @transform_1, window_bounds = array<i64: 512, 128>}, {transform_indices = @transform_2, window_bounds = array<i64: 1, 128>}, {transform_indices = @transform_3, window_bounds = array<i64: 1, 128>}, {transform_indices = @transform_4, window_bounds = array<i64: 1, 128>}, {transform_indices = @transform_5, window_bounds = array<i64: 2, 128>}]} {
    %c0_i32 = arith.constant 0 : i32
    %0 = arith.cmpi eq, %arg2, %c0_i32 : i32
    %1 = arith.extui %0 : i1 to i32
    %c0_i32_0 = arith.constant 0 : i32
    %2 = arith.cmpi ne, %1, %c0_i32_0 : i32
    scf.if %2 {
      %cst_13 = arith.constant 0.000000e+00 : f32
      %16 = vector.broadcast %cst_13 : f32 to vector<1x2x128xf32>
      %c0_14 = arith.constant 0 : index
      %c0_15 = arith.constant 0 : index
      %c0_16 = arith.constant 0 : index
      %17 = vector.load %arg9[%c0_14, %c0_15, %c0_16] : memref<1x2x128xf32, #tpu.memory_space<vmem>>, vector<1x2x128xf32>
      tpu.vector_store %arg9[%c0_14, %c0_15, %c0_16], %16 {strides = array<i32>} : memref<1x2x128xf32, #tpu.memory_space<vmem>>, vector<1x2x128xf32>,
    } else {
    }
    %c0 = arith.constant 0 : index
    %c0_1 = arith.constant 0 : index
    %3 = vector.load %arg4[%c0, %c0_1] : memref<512x128xbf16, #tpu.memory_space<vmem>>, vector<512x128xbf16>
    %c0_2 = arith.constant 0 : index
    %c0_3 = arith.constant 0 : index
    %c0_4 = arith.constant 0 : index
    %4 = vector.load %arg9[%c0_2, %c0_3, %c0_4] : memref<1x2x128xf32, #tpu.memory_space<vmem>>, vector<1x2x128xf32>
    %5 = vector.shape_cast %4 : vector<1x2x128xf32> to vector<2x128xf32>
    %c0_5 = arith.constant 0 : index
    %c0_6 = arith.constant 0 : index
    %c0_7 = arith.constant 0 : index
    %6 = vector.load %arg3[%c0_5, %c0_6, %c0_7] : memref<1x2x512xbf16, #tpu.memory_space<vmem>>, vector<1x2x512xbf16>
    %7 = vector.shape_cast %6 : vector<1x2x512xbf16> to vector<2x512xbf16>
    %cst = arith.constant dense<0.000000e+00> : vector<2x128xf32>
    %8 = tpu.matmul %7, %3, %cst {dimension_numbers = #tpu.dot_dimension_numbers<[1], [0], [0], [1], [0, 0, 1, 1], [], []>} : vector<2x512xbf16>, vector<512x128xbf16>, vector<2x128xf32> -> vector<2x128xf32>
    %9 = arith.addf %5, %8 : vector<2x128xf32>
    %c0_8 = arith.constant 0 : index
    %c0_9 = arith.constant 0 : index
    %c0_10 = arith.constant 0 : index
    %10 = vector.load %arg9[%c0_8, %c0_9, %c0_10] : memref<1x2x128xf32, #tpu.memory_space<vmem>>, vector<1x2x128xf32>
    %11 = vector.shape_cast %10 : vector<1x2x128xf32> to vector<2x128xf32>
    %12 = vector.shape_cast %9 : vector<2x128xf32> to vector<1x2x128xf32>
    tpu.vector_store %arg9[%c0_8, %c0_9, %c0_10], %12 {strides = array<i32>} : memref<1x2x128xf32, #tpu.memory_space<vmem>>, vector<1x2x128xf32>,
    %c0_i32_11 = arith.constant 0 : i32
    %13 = arith.cmpi eq, %arg2, %c0_i32_11 : i32
    %14 = arith.extui %13 : i1 to i32
    %c0_i32_12 = arith.constant 0 : i32
    %15 = arith.cmpi ne, %14, %c0_i32_12 : i32
    scf.if %15 {
      %c0_13 = arith.constant 0 : index
      %c0_14 = arith.constant 0 : index
      %16 = vector.load %arg5[%c0_13, %c0_14] : memref<1x128xf32, #tpu.memory_space<vmem>>, vector<1x128xf32>
      %c0_15 = arith.constant 0 : index
      %c0_16 = arith.constant 0 : index
      %17 = vector.load %arg6[%c0_15, %c0_16] : memref<1x128xf32, #tpu.memory_space<vmem>>, vector<1x128xf32>
      %c0_17 = arith.constant 0 : index
      %c0_18 = arith.constant 0 : index
      %18 = vector.load %arg7[%c0_17, %c0_18] : memref<1x128xf32, #tpu.memory_space<vmem>>, vector<1x128xf32>
      %c0_19 = arith.constant 0 : index
      %c0_20 = arith.constant 0 : index
      %c0_21 = arith.constant 0 : index
      %19 = vector.load %arg9[%c0_19, %c0_20, %c0_21] : memref<1x2x128xf32, #tpu.memory_space<vmem>>, vector<1x2x128xf32>
      %20 = vector.shape_cast %19 : vector<1x2x128xf32> to vector<2x128xf32>
      %21 = vector.broadcast %16 : vector<1x128xf32> to vector<2x128xf32>
      %22 = arith.addf %20, %21 : vector<2x128xf32>
      %cst_22 = arith.constant 0.000000e+00 : f32
      %23 = vector.broadcast %cst_22 : f32 to vector<2x128xf32>
      %24 = arith.maximumf %22, %23 : vector<2x128xf32>
      %25 = vector.broadcast %17 : vector<1x128xf32> to vector<2x128xf32>
      %26 = arith.mulf %24, %25 : vector<2x128xf32>
      %27 = vector.broadcast %18 : vector<1x128xf32> to vector<2x128xf32>
      %28 = arith.addf %26, %27 : vector<2x128xf32>
      %29 = arith.truncf %28 : vector<2x128xf32> to vector<2x128xbf16>
      %c0_23 = arith.constant 0 : index
      %c0_24 = arith.constant 0 : index
      %30 = vector.load %arg8[%c0_23, %c0_24] : memref<2x128xbf16, #tpu.memory_space<vmem>>, vector<2x128xbf16>
      tpu.vector_store %arg8[%c0_23, %c0_24], %29 {strides = array<i32>} : memref<2x128xbf16, #tpu.memory_space<vmem>>, vector<2x128xbf16>,
    } else {
    }
    return
  }
  func.func @transform_0(%arg0: i32, %arg1: i32, %arg2: i32) -> (i32, i32, i32) {
    %c0_i32 = arith.constant 0 : i32
    %c0_i32_0 = arith.constant 0 : i32
    return %c0_i32, %arg0, %arg2 : i32, i32, i32
  }
  func.func @transform_1(%arg0: i32, %arg1: i32, %arg2: i32) -> (i32, i32) {
    %c0_i32 = arith.constant 0 : i32
    return %arg2, %arg1 : i32, i32
  }
  func.func @transform_2(%arg0: i32, %arg1: i32, %arg2: i32) -> (i32, i32) {
    %c0_i32 = arith.constant 0 : i32
    %c0_i32_0 = arith.constant 0 : i32
    return %c0_i32, %arg1 : i32, i32
  }
  func.func @transform_3(%arg0: i32, %arg1: i32, %arg2: i32) -> (i32, i32) {
    %c0_i32 = arith.constant 0 : i32
    %c0_i32_0 = arith.constant 0 : i32
    return %c0_i32, %arg1 : i32, i32
  }
  func.func @transform_4(%arg0: i32, %arg1: i32, %arg2: i32) -> (i32, i32) {
    %c0_i32 = arith.constant 0 : i32
    %c0_i32_0 = arith.constant 0 : i32
    return %c0_i32, %arg1 : i32, i32
  }
  func.func @transform_5(%arg0: i32, %arg1: i32, %arg2: i32) -> (i32, i32) {
    %c0_i32 = arith.constant 0 : i32
    return %arg0, %arg1 : i32, i32
  }
}

module attributes {stable_mosaic.version = 11 : i64} {
  func.func @_fused_matmul_kernel(%arg0: i32, %arg1: i32, %arg2: i32, %arg3: memref<1x2x256xbf16, #tpu.memory_space<vmem>>, %arg4: memref<256x128xbf16, #tpu.memory_space<vmem>>, %arg5: memref<1x128xf32, #tpu.memory_space<vmem>>, %arg6: memref<1x128xf32, #tpu.memory_space<vmem>>, %arg7: memref<1x128xf32, #tpu.memory_space<vmem>>, %arg8: memref<2x128xf32, #tpu.memory_space<vmem>>, %arg9: memref<1x2x128xf32, #tpu.memory_space<vmem>>) attributes {dimension_semantics = [#tpu.dimension_semantics<parallel>, #tpu.dimension_semantics<parallel>, #tpu.dimension_semantics<arbitrary>], iteration_bounds = array<i64: 1, 1, 1>, scalar_prefetch = 0 : i64, scratch_operands = 1 : i64, tpu.core_type = #tpu.core_type<tc>, window_params = [{transform_indices = @transform_0, window_bounds = array<i64: 1, 2, 256>}, {transform_indices = @transform_1, window_bounds = array<i64: 256, 128>}, {transform_indices = @transform_2, window_bounds = array<i64: 1, 128>}, {transform_indices = @transform_3, window_bounds = array<i64: 1, 128>}, {transform_indices = @transform_4, window_bounds = array<i64: 1, 128>}, {transform_indices = @transform_5, window_bounds = array<i64: 2, 128>}]} {
    %c0_i32 = arith.constant 0 : i32
    %0 = arith.cmpi eq, %arg2, %c0_i32 : i32
    %1 = arith.extui %0 : i1 to i32
    %c0_i32_0 = arith.constant 0 : i32
    %2 = arith.cmpi ne, %1, %c0_i32_0 : i32
    scf.if %2 {
      %cst_13 = arith.constant 0.000000e+00 : f32
      %16 = vector.broadcast %cst_13 : f32 to vector<1x2x128xf32>
      %c0_14 = arith.constant 0 : index
      %c0_15 = arith.constant 0 : index
      %c0_16 = arith.constant 0 : index
      %17 = vector.load %arg9[%c0_14, %c0_15, %c0_16] : memref<1x2x128xf32, #tpu.memory_space<vmem>>, vector<1x2x128xf32>
      tpu.vector_store %arg9[%c0_14, %c0_15, %c0_16], %16 {strides = array<i32>} : memref<1x2x128xf32, #tpu.memory_space<vmem>>, vector<1x2x128xf32>,
    } else {
    }
    %c0 = arith.constant 0 : index
    %c0_1 = arith.constant 0 : index
    %3 = vector.load %arg4[%c0, %c0_1] : memref<256x128xbf16, #tpu.memory_space<vmem>>, vector<256x128xbf16>
    %c0_2 = arith.constant 0 : index
    %c0_3 = arith.constant 0 : index
    %c0_4 = arith.constant 0 : index
    %4 = vector.load %arg9[%c0_2, %c0_3, %c0_4] : memref<1x2x128xf32, #tpu.memory_space<vmem>>, vector<1x2x128xf32>
    %5 = vector.shape_cast %4 : vector<1x2x128xf32> to vector<2x128xf32>
    %c0_5 = arith.constant 0 : index
    %c0_6 = arith.constant 0 : index
    %c0_7 = arith.constant 0 : index
    %6 = vector.load %arg3[%c0_5, %c0_6, %c0_7] : memref<1x2x256xbf16, #tpu.memory_space<vmem>>, vector<1x2x256xbf16>
    %7 = vector.shape_cast %6 : vector<1x2x256xbf16> to vector<2x256xbf16>
    %cst = arith.constant dense<0.000000e+00> : vector<2x128xf32>
    %8 = tpu.matmul %7, %3, %cst {dimension_numbers = #tpu.dot_dimension_numbers<[1], [0], [0], [1], [0, 0, 1, 1], [], []>} : vector<2x256xbf16>, vector<256x128xbf16>, vector<2x128xf32> -> vector<2x128xf32>
    %9 = arith.addf %5, %8 : vector<2x128xf32>
    %c0_8 = arith.constant 0 : index
    %c0_9 = arith.constant 0 : index
    %c0_10 = arith.constant 0 : index
    %10 = vector.load %arg9[%c0_8, %c0_9, %c0_10] : memref<1x2x128xf32, #tpu.memory_space<vmem>>, vector<1x2x128xf32>
    %11 = vector.shape_cast %10 : vector<1x2x128xf32> to vector<2x128xf32>
    %12 = vector.shape_cast %9 : vector<2x128xf32> to vector<1x2x128xf32>
    tpu.vector_store %arg9[%c0_8, %c0_9, %c0_10], %12 {strides = array<i32>} : memref<1x2x128xf32, #tpu.memory_space<vmem>>, vector<1x2x128xf32>,
    %c0_i32_11 = arith.constant 0 : i32
    %13 = arith.cmpi eq, %arg2, %c0_i32_11 : i32
    %14 = arith.extui %13 : i1 to i32
    %c0_i32_12 = arith.constant 0 : i32
    %15 = arith.cmpi ne, %14, %c0_i32_12 : i32
    scf.if %15 {
      %c0_13 = arith.constant 0 : index
      %c0_14 = arith.constant 0 : index
      %16 = vector.load %arg5[%c0_13, %c0_14] : memref<1x128xf32, #tpu.memory_space<vmem>>, vector<1x128xf32>
      %c0_15 = arith.constant 0 : index
      %c0_16 = arith.constant 0 : index
      %17 = vector.load %arg6[%c0_15, %c0_16] : memref<1x128xf32, #tpu.memory_space<vmem>>, vector<1x128xf32>
      %c0_17 = arith.constant 0 : index
      %c0_18 = arith.constant 0 : index
      %18 = vector.load %arg7[%c0_17, %c0_18] : memref<1x128xf32, #tpu.memory_space<vmem>>, vector<1x128xf32>
      %c0_19 = arith.constant 0 : index
      %c0_20 = arith.constant 0 : index
      %c0_21 = arith.constant 0 : index
      %19 = vector.load %arg9[%c0_19, %c0_20, %c0_21] : memref<1x2x128xf32, #tpu.memory_space<vmem>>, vector<1x2x128xf32>
      %20 = vector.shape_cast %19 : vector<1x2x128xf32> to vector<2x128xf32>
      %21 = vector.broadcast %16 : vector<1x128xf32> to vector<2x128xf32>
      %22 = arith.addf %20, %21 : vector<2x128xf32>
      %23 = vector.broadcast %17 : vector<1x128xf32> to vector<2x128xf32>
      %24 = arith.mulf %22, %23 : vector<2x128xf32>
      %25 = vector.broadcast %18 : vector<1x128xf32> to vector<2x128xf32>
      %26 = arith.addf %24, %25 : vector<2x128xf32>
      %c0_22 = arith.constant 0 : index
      %c0_23 = arith.constant 0 : index
      %27 = vector.load %arg8[%c0_22, %c0_23] : memref<2x128xf32, #tpu.memory_space<vmem>>, vector<2x128xf32>
      tpu.vector_store %arg8[%c0_22, %c0_23], %26 {strides = array<i32>} : memref<2x128xf32, #tpu.memory_space<vmem>>, vector<2x128xf32>,
    } else {
    }
    return
  }
  func.func @transform_0(%arg0: i32, %arg1: i32, %arg2: i32) -> (i32, i32, i32) {
    %c0_i32 = arith.constant 0 : i32
    %c0_i32_0 = arith.constant 0 : i32
    return %c0_i32, %arg0, %arg2 : i32, i32, i32
  }
  func.func @transform_1(%arg0: i32, %arg1: i32, %arg2: i32) -> (i32, i32) {
    %c0_i32 = arith.constant 0 : i32
    return %arg2, %arg1 : i32, i32
  }
  func.func @transform_2(%arg0: i32, %arg1: i32, %arg2: i32) -> (i32, i32) {
    %c0_i32 = arith.constant 0 : i32
    %c0_i32_0 = arith.constant 0 : i32
    return %c0_i32, %arg1 : i32, i32
  }
  func.func @transform_3(%arg0: i32, %arg1: i32, %arg2: i32) -> (i32, i32) {
    %c0_i32 = arith.constant 0 : i32
    %c0_i32_0 = arith.constant 0 : i32
    return %c0_i32, %arg1 : i32, i32
  }
  func.func @transform_4(%arg0: i32, %arg1: i32, %arg2: i32) -> (i32, i32) {
    %c0_i32 = arith.constant 0 : i32
    %c0_i32_0 = arith.constant 0 : i32
    return %c0_i32, %arg1 : i32, i32
  }
  func.func @transform_5(%arg0: i32, %arg1: i32, %arg2: i32) -> (i32, i32) {
    %c0_i32 = arith.constant 0 : i32
    return %arg0, %arg1 : i32, i32
  }
}

</mosaic_0001>

<llo_original>
// kernel: forward.5
$region0: #{forward.5}
  #allocation0 [shape = 'u32[]', space=smem, size = 0x4, offset = 0x4, fixed_abs, tag = 'smem constant byte address 0x4 - core index']
  #allocation1 [shape = 'u32[144,128]{1,0:T(1,128)}', space=vmem, size = 0x12000, scoped, tag = 'internal scratch']
  #allocation2 [shape = 'f32[4,96,64]{2,1,0:T(8,128)}', space=vmem, size = 0x30000, scoped, tag = 'scratch operand']
  %s0 = inlined_call_operand.vmem [shape: bf16[4,288,25], index: 0, kind: input, shape index: {}]
  %s1 = inlined_call_operand.vmem [shape: bf16[25,64], index: 1, kind: input, shape index: {}]
  %s2 = inlined_call_operand.hbm [shape: f32[1,64], index: 2, kind: input, shape index: {}]
  %s3 = inlined_call_operand.vmem [shape: f32[1,64], index: 3, kind: input, shape index: {}]
  %s4 = inlined_call_operand.vmem [shape: f32[1,64], index: 4, kind: input, shape index: {}]
  %s5 = inlined_call_operand.vmem [shape: bf16[288,64], index: 5, kind: output, shape index: {}]
  %s6 = sld [smem:[#allocation0]]
  $region106: #{forward.5} parent=0
    _
  %s8 = ssub.s32 1, %s6
  %s9 = scalar_select 0, %s8, %s6
  $region1: #{forward.5} parent=0
    #allocation3 [shape = 'u8[196608]{0}', space=vmem, size = 0x30000, scoped, tag = 'input window, operand 0']
    #allocation4 [shape = 'u8[512]{0}', space=vmem, size = 0x400, scoped, tag = 'input window, operand 2, single buffered']
    #allocation5 [shape = 's32[2]{0}', space=sflag, size = 0x8, scoped, tag = 'scoped memory for forward.5']
    %10 = vsyncpa [#allocation5], 0
    loop: start=0, step=1, limit=5
    $region2: #{forward.5} parent=1 // loop_pre_header
      _
    $region3: #{forward.5} parent=1 // loop_header
      %s12 = sphi 0, %s16
      %p13 = scmp.ge.s32.totalorder %s12, 5
      %s19 = sphi 0, %s38
      %s20 = sphi 0, %s34
      %s21 = sphi 0, %s30
      %s22 = sphi 0, %s19
      %s23 = sphi 0, %s20
      %s24 = sphi 0, %s21
      %s25 = sphi 0, %s22
      %s26 = sphi 0, %s23
      %s27 = sphi 0, %s24
      %s43 = sphi 0, %s45
      %s46 = sphi 0, %s43
      %s47 = sphi 0, %s46
      %s63 = sphi 0, %s47
      %s71 = sphi 0, %s73
      %s74 = sphi 0, %s71
      %s75 = sphi 0, %s74
      %s91 = sphi 0, %s75
      %s97 = sphi 0, %s99
      %s100 = sphi 0, %s97
      %s101 = sphi 0, %s100
      %s117 = sphi 0, %s101
      %s123 = sphi 0, %s125
      %s126 = sphi 0, %s123
      %s127 = sphi 0, %s126
      %s143 = sphi 0, %s127
      %s149 = sphi 0, %s151
      %s152 = sphi 0, %s149
      %s153 = sphi 0, %s152
      %s169 = sphi 0, %s153
      %s177 = sphi 0, %s179
      %s180 = sphi 0, %s177
      %s181 = sphi 0, %s180
      %s197 = sphi 0, %s181
    $region4: #{forward.5} parent=1 // loop_header_branch
      %15 = sbr.rel (%p13) target = $region8
    $region5: #{forward.5} parent=1 // loop_body
      %s17 = ssub.s32 %s12, 1
      %s18 = ssub.s32 %s12, 2
      %s28 = sadd.s32 1, %s21
      %p29 = scmp.ge.s32.totalorder %s28, 1
      %s30 = scalar_select %p29, 0, %s28
      %s31 = sadd.s32 1, %s20
      %s32 = scalar_select %p29, %s31, %s20
      %p33 = scmp.ge.s32.totalorder %s32, 1
      %s34 = scalar_select %p33, 0, %s32
      %s35 = sadd.s32 1, %s19
      %s36 = scalar_select %p33, %s35, %s19
      %p37 = scmp.ge.s32.totalorder %s36, 3
      %s38 = scalar_select %p37, 0, %s36
      %s39 = ssub.s32 %s19, %s38
      %s40 = ssub.s32 %s21, %s30
      %s41 = sor.u32 %s39, %s40
      %p42 = scmp.eq.s32.totalorder %s41, 0
      %s44 = sadd.s32 %s43, 1
      %s45 = scalar_select %p42, %s43, %s44
      %p48 = pneg %p42
      %p49 = scmp.eq.s32.totalorder %s12, 2
      %p50 = por %p48, %p49
      %p51 = scmp.ne.s32.totalorder %s43, %s46
      %p52 = scmp.eq.s32.totalorder %s12, 0
      %p53 = por %p51, %p52
      %p54 = scmp.ne.s32.totalorder %s43, %s46
      %p55 = scmp.eq.s32.totalorder %s17, 2
      %p56 = por %p54, %p55
      %p57 = scmp.ne.s32.totalorder %s46, %s47
      %p58 = scmp.eq.s32.totalorder %s17, 0
      %p59 = por %p57, %p58
      %p60 = scmp.ne.s32.totalorder %s46, %s47
      %p61 = scmp.eq.s32.totalorder %s18, 2
      %p62 = por %p60, %p61
      %p64 = scmp.ne.s32.totalorder %s47, %s63
      %p65 = scmp.eq.s32.totalorder %s18, 0
      %p66 = por %p64, %p65
      %s67 = ssub.s32 %s21, %s30
      %s68 = ssub.s32 %s20, %s34
      %s69 = sor.u32 %s67, %s68
      %p70 = scmp.eq.s32.totalorder %s69, 0
      %s72 = sadd.s32 %s71, 1
      %s73 = scalar_select %p70, %s71, %s72
      %p76 = pneg %p70
      %p77 = scmp.eq.s32.totalorder %s12, 2
      %p78 = por %p76, %p77
      %p79 = scmp.ne.s32.totalorder %s71, %s74
      %p80 = scmp.eq.s32.totalorder %s12, 0
      %p81 = por %p79, %p80
      %p82 = scmp.ne.s32.totalorder %s71, %s74
      %p83 = scmp.eq.s32.totalorder %s17, 2
      %p84 = por %p82, %p83
      %p85 = scmp.ne.s32.totalorder %s74, %s75
      %p86 = scmp.eq.s32.totalorder %s17, 0
      %p87 = por %p85, %p86
      %p88 = scmp.ne.s32.totalorder %s74, %s75
      %p89 = scmp.eq.s32.totalorder %s18, 2
      %p90 = por %p88, %p89
      %p92 = scmp.ne.s32.totalorder %s75, %s91
      %p93 = scmp.eq.s32.totalorder %s18, 0
      %p94 = por %p92, %p93
      %s95 = ssub.s32 %s20, %s34
      %p96 = scmp.eq.s32.totalorder %s95, 0
      %s98 = sadd.s32 %s97, 1
      %s99 = scalar_select %p96, %s97, %s98
      %p102 = pneg %p96
      %p103 = scmp.eq.s32.totalorder %s12, 2
      %p104 = por %p102, %p103
      %p105 = scmp.ne.s32.totalorder %s97, %s100
      %p106 = scmp.eq.s32.totalorder %s12, 0
      %p107 = por %p105, %p106
      %p108 = scmp.ne.s32.totalorder %s97, %s100
      %p109 = scmp.eq.s32.totalorder %s17, 2
      %p110 = por %p108, %p109
      %p111 = scmp.ne.s32.totalorder %s100, %s101
      %p112 = scmp.eq.s32.totalorder %s17, 0
      %p113 = por %p111, %p112
      %p114 = scmp.ne.s32.totalorder %s100, %s101
      %p115 = scmp.eq.s32.totalorder %s18, 2
      %p116 = por %p114, %p115
      %p118 = scmp.ne.s32.totalorder %s101, %s117
      %p119 = scmp.eq.s32.totalorder %s18, 0
      %p120 = por %p118, %p119
      %s121 = ssub.s32 %s20, %s34
      %p122 = scmp.eq.s32.totalorder %s121, 0
      %s124 = sadd.s32 %s123, 1
      %s125 = scalar_select %p122, %s123, %s124
      %p128 = pneg %p122
      %p129 = scmp.eq.s32.totalorder %s12, 2
      %p130 = por %p128, %p129
      %p131 = scmp.ne.s32.totalorder %s123, %s126
      %p132 = scmp.eq.s32.totalorder %s12, 0
      %p133 = por %p131, %p132
      %p134 = scmp.ne.s32.totalorder %s123, %s126
      %p135 = scmp.eq.s32.totalorder %s17, 2
      %p136 = por %p134, %p135
      %p137 = scmp.ne.s32.totalorder %s126, %s127
      %p138 = scmp.eq.s32.totalorder %s17, 0
      %p139 = por %p137, %p138
      %p140 = scmp.ne.s32.totalorder %s126, %s127
      %p141 = scmp.eq.s32.totalorder %s18, 2
      %p142 = por %p140, %p141
      %p144 = scmp.ne.s32.totalorder %s127, %s143
      %p145 = scmp.eq.s32.totalorder %s18, 0
      %p146 = por %p144, %p145
      %s147 = ssub.s32 %s20, %s34
      %p148 = scmp.eq.s32.totalorder %s147, 0
      %s150 = sadd.s32 %s149, 1
      %s151 = scalar_select %p148, %s149, %s150
      %p154 = pneg %p148
      %p155 = scmp.eq.s32.totalorder %s12, 2
      %p156 = por %p154, %p155
      %p157 = scmp.ne.s32.totalorder %s149, %s152
      %p158 = scmp.eq.s32.totalorder %s12, 0
      %p159 = por %p157, %p158
      %p160 = scmp.ne.s32.totalorder %s149, %s152
      %p161 = scmp.eq.s32.totalorder %s17, 2
      %p162 = por %p160, %p161
      %p163 = scmp.ne.s32.totalorder %s152, %s153
      %p164 = scmp.eq.s32.totalorder %s17, 0
      %p165 = por %p163, %p164
      %p166 = scmp.ne.s32.totalorder %s152, %s153
      %p167 = scmp.eq.s32.totalorder %s18, 2
      %p168 = por %p166, %p167
      %p170 = scmp.ne.s32.totalorder %s153, %s169
      %p171 = scmp.eq.s32.totalorder %s18, 0
      %p172 = por %p170, %p171
      %s173 = ssub.s32 %s19, %s38
      %s174 = ssub.s32 %s20, %s34
      %s175 = sor.u32 %s173, %s174
      %p176 = scmp.eq.s32.totalorder %s175, 0
      %s178 = sadd.s32 %s177, 1
      %s179 = scalar_select %p176, %s177, %s178
      %p182 = pneg %p176
      %p183 = scmp.eq.s32.totalorder %s12, 2
      %p184 = por %p182, %p183
      %p185 = scmp.ne.s32.totalorder %s177, %s180
      %p186 = scmp.eq.s32.totalorder %s12, 0
      %p187 = por %p185, %p186
      %p188 = scmp.ne.s32.totalorder %s177, %s180
      %p189 = scmp.eq.s32.totalorder %s17, 2
      %p190 = por %p188, %p189
      %p191 = scmp.ne.s32.totalorder %s180, %s181
      %p192 = scmp.eq.s32.totalorder %s17, 0
      %p193 = por %p191, %p192
      %p194 = scmp.ne.s32.totalorder %s180, %s181
      %p195 = scmp.eq.s32.totalorder %s18, 2
      %p196 = por %p194, %p195
      %p198 = scmp.ne.s32.totalorder %s181, %s197
      %p199 = scmp.eq.s32.totalorder %s18, 0
      %p200 = por %p198, %p199
      %p201 = scmp.le.s32.totalorder 1, %s12
      %p202 = scmp.lt.s32.totalorder %s12, 4
      %p203 = pnand %p201, %p202
      %p204 = pneg %p203
      // Predicated region
      $region9: #{forward.5} parent=5 // pred_check
        _
      $region10: #{forward.5} parent=5 // pred_check_branch
        %206 = sbr.rel (%p203) target = $region12
      $region11: #{forward.5} parent=5 // pred_region
        %s207 = ssub.s32 %s12, 1
        // Predicated region
        $region13: #{forward.5} parent=11 // pred_check
          %p208 = pneg %p87
        $region14: #{forward.5} parent=11 // pred_check_branch
          %210 = sbr.rel (%p208) target = $region16
        $region15: #{forward.5} parent=11 // pred_region
          %s211 = smul.u32 4, %s24
          %p212 = scmp.lt.s32.totalorder %s211, 3
          %s213 = scalar_select %p212, %s211, 3
          %p214 = scmp.lt.s32.totalorder %s23, 0
          %s215 = scalar_select %p214, %s23, 0
          %s216 = sadd.s32 %s215, %s213
          %s217 = smul.addr %s216, 4
          %s218 = scalar_lea.vmem %s1, %s217
          %s219 = smul.u32 4, %s24
        $region16: #{forward.5} parent=11 // pred_fallthru
          _
        // Predicated region
        $region17: #{forward.5} parent=11 // pred_check
          %p220 = pneg %p113
        $region18: #{forward.5} parent=11 // pred_check_branch
          %222 = sbr.rel (%p220) target = $region20
        $region19: #{forward.5} parent=11 // pred_region
          %s224 = ssub.s32 16, 16
          %225 = vsyncadd [#allocation5], %s224
          %s226 = smul.addr %s23, 16
          %s227 = scalar_lea.hbm %s2, %s226
          %s229 = sshll.u32 [#allocation4], 4
          %s230 = int_to_ptr.vmem [resolvable:$true] %s229
          %232 = dma.hbm_to_vmem [thread:$0]  %s227, 16, %s230, [#allocation5]
        $region20: #{forward.5} parent=11 // pred_fallthru
          _
        // Predicated region
        $region21: #{forward.5} parent=11 // pred_check
          %p233 = pneg %p139
        $region22: #{forward.5} parent=11 // pred_check_branch
          %235 = sbr.rel (%p233) target = $region24
        $region23: #{forward.5} parent=11 // pred_region
          %p236 = scmp.lt.s32.totalorder %s23, 0
          %s237 = scalar_select %p236, %s23, 0
          %s238 = scalar_lea.vmem %s3, %s237
        $region24: #{forward.5} parent=11 // pred_fallthru
          _
        // Predicated region
        $region25: #{forward.5} parent=11 // pred_check
          %p239 = pneg %p165
        $region26: #{forward.5} parent=11 // pred_check_branch
          %241 = sbr.rel (%p239) target = $region28
        $region27: #{forward.5} parent=11 // pred_region
          %p242 = scmp.lt.s32.totalorder %s23, 0
          %s243 = scalar_select %p242, %s23, 0
          %s244 = scalar_lea.vmem %s4, %s243
        $region28: #{forward.5} parent=11 // pred_fallthru
          _
      $region12: #{forward.5} parent=5 // pred_fallthru
        _
      %p245 = scmp.lt.s32.totalorder %s12, 3
      // Predicated region
      $region29: #{forward.5} parent=5 // pred_check
        %p246 = pneg %p245
      $region30: #{forward.5} parent=5 // pred_check_branch
        %248 = sbr.rel (%p246) target = $region32
      $region31: #{forward.5} parent=5 // pred_region
        // Predicated region
        $region33: #{forward.5} parent=31 // pred_check
          %p249 = pneg %p53
        $region34: #{forward.5} parent=31 // pred_check_branch
          %251 = sbr.rel (%p249) target = $region36
        $region35: #{forward.5} parent=31 // pred_region
          %s252 = sand.u32 %s43, 1
          %s253 = sand.u32 %s43, 1
          %s254 = smul.addr %s253, 192
          %s255 = scalar_lea.vmem [#allocation3], %s254
          %s256 = smul.u32 12, %s19
          %s257 = sadd.s32 %s21, %s256
          %s258 = smul.addr %s257, 4
          %s259 = scalar_lea.vmem %s0, %s258
          // Predicated region
          $region37: #{forward.5} parent=35 // pred_check
            _
          $region38: #{forward.5} parent=35 // pred_check_branch
            %261 = sbr.rel (0) target = $region40
          $region39: #{forward.5} parent=35 // pred_region
            // Predicated region
            $region41: #{forward.5} parent=39 // pred_check
              _
            $region42: #{forward.5} parent=39 // pred_check_branch
              %263 = sbr.rel target = $region44
            $region43: #{forward.5} parent=39 // pred_region
              // Predicated region
              $region56: #{forward.5} parent=43 // pred_check
                _
              $region57: #{forward.5} parent=43 // pred_check_branch
                %373 = sbr.rel (0) target = $region59
              $region58: #{forward.5} parent=43 // pred_region
                loop: start=0, step=1, limit=1
                $region60: #{forward.5} parent=58 // loop_pre_header
                  _
                $region61: #{forward.5} parent=58 // loop_header
                  %s375 = sphi 0, %s379
                  %p376 = scmp.ge.s32.totalorder %s375, 1
                  %s380 = sphi %s259, %s259
                  %s381 = sphi %s255, %s255
                $region62: #{forward.5} parent=58 // loop_header_branch
                  %378 = sbr.rel (%p376) target = $region66
                $region63: #{forward.5} parent=58 // loop_body
                  _
                $region64: #{forward.5} parent=58 // loop_footer
                  %s379 = sadd.s32 1, %s375
                $region65: #{forward.5} parent=58 // loop_footer_branch
                  %374 = sbr.rel target = $region61
                $region66: #{forward.5} parent=58 // loop_exit
                  _
                %s383 = ssub.s32 16, 1
                loop: start=0, step=1, limit=1
                $region67: #{forward.5} parent=58 // loop_pre_header
                  _
                $region68: #{forward.5} parent=58 // loop_header
                  %s385 = sphi 0, %s389
                  %p386 = scmp.ge.s32.totalorder %s385, 1
                  %s390 = sphi %s259, %s259
                  %s391 = sphi %s255, %s255
                $region69: #{forward.5} parent=58 // loop_header_branch
                  %388 = sbr.rel (%p386) target = $region73
                $region70: #{forward.5} parent=58 // loop_body
                  %v392 = vld [vmem:[%s390] sm:%s383]
                  %393 = vst [vmem:[%s391] sm:%s383] %v392
                  %v394 = vld [vmem:[%s390 + $0x4] sm:%s383]
                  %395 = vst [vmem:[%s391 + $0x4] sm:%s383] %v394
                  %v396 = vld [vmem:[%s390 + $0x8] sm:%s383]
                  %397 = vst [vmem:[%s391 + $0x8] sm:%s383] %v396
                  %v398 = vld [vmem:[%s390 + $0xc] sm:%s383]
                  %399 = vst [vmem:[%s391 + $0xc] sm:%s383] %v398
                  %v400 = vld [vmem:[%s390 + $0x10] sm:%s383]
                  %401 = vst [vmem:[%s391 + $0x10] sm:%s383] %v400
                  %v402 = vld [vmem:[%s390 + $0x14] sm:%s383]
                  %403 = vst [vmem:[%s391 + $0x14] sm:%s383] %v402
                  %v404 = vld [vmem:[%s390 + $0x18] sm:%s383]
                  %405 = vst [vmem:[%s391 + $0x18] sm:%s383] %v404
                  %v406 = vld [vmem:[%s390 + $0x1c] sm:%s383]
                  %407 = vst [vmem:[%s391 + $0x1c] sm:%s383] %v406
                  %v408 = vld [vmem:[%s390 + $0x20] sm:%s383]
                  %409 = vst [vmem:[%s391 + $0x20] sm:%s383] %v408
                  %v410 = vld [vmem:[%s390 + $0x24] sm:%s383]
                  %411 = vst [vmem:[%s391 + $0x24] sm:%s383] %v410
                  %v412 = vld [vmem:[%s390 + $0x28] sm:%s383]
                  %413 = vst [vmem:[%s391 + $0x28] sm:%s383] %v412
                  %v414 = vld [vmem:[%s390 + $0x2c] sm:%s383]
                  %415 = vst [vmem:[%s391 + $0x2c] sm:%s383] %v414
                  %v416 = vld [vmem:[%s390 + $0x90] sm:%s383]
                  %417 = vst [vmem:[%s391 + $0x30] sm:%s383] %v416
                  %v418 = vld [vmem:[%s390 + $0x94] sm:%s383]
                  %419 = vst [vmem:[%s391 + $0x34] sm:%s383] %v418
                  %v420 = vld [vmem:[%s390 + $0x98] sm:%s383]
                  %421 = vst [vmem:[%s391 + $0x38] sm:%s383] %v420
                  %v422 = vld [vmem:[%s390 + $0x9c] sm:%s383]
                  %423 = vst [vmem:[%s391 + $0x3c] sm:%s383] %v422
                  %v424 = vld [vmem:[%s390 + $0xa0] sm:%s383]
                  %425 = vst [vmem:[%s391 + $0x40] sm:%s383] %v424
                  %v426 = vld [vmem:[%s390 + $0xa4] sm:%s383]
                  %427 = vst [vmem:[%s391 + $0x44] sm:%s383] %v426
                  %v428 = vld [vmem:[%s390 + $0xa8] sm:%s383]
                  %429 = vst [vmem:[%s391 + $0x48] sm:%s383] %v428
                  %v430 = vld [vmem:[%s390 + $0xac] sm:%s383]
                  %431 = vst [vmem:[%s391 + $0x4c] sm:%s383] %v430
                  %v432 = vld [vmem:[%s390 + $0xb0] sm:%s383]
                  %433 = vst [vmem:[%s391 + $0x50] sm:%s383] %v432
                  %v434 = vld [vmem:[%s390 + $0xb4] sm:%s383]
                  %435 = vst [vmem:[%s391 + $0x54] sm:%s383] %v434
                  %v436 = vld [vmem:[%s390 + $0xb8] sm:%s383]
                  %437 = vst [vmem:[%s391 + $0x58] sm:%s383] %v436
                  %v438 = vld [vmem:[%s390 + $0xbc] sm:%s383]
                  %439 = vst [vmem:[%s391 + $0x5c] sm:%s383] %v438
                  %v440 = vld [vmem:[%s390 + $0x120] sm:%s383]
                  %441 = vst [vmem:[%s391 + $0x60] sm:%s383] %v440
                  %v442 = vld [vmem:[%s390 + $0x124] sm:%s383]
                  %443 = vst [vmem:[%s391 + $0x64] sm:%s383] %v442
                  %v444 = vld [vmem:[%s390 + $0x128] sm:%s383]
                  %445 = vst [vmem:[%s391 + $0x68] sm:%s383] %v444
                  %v446 = vld [vmem:[%s390 + $0x12c] sm:%s383]
                  %447 = vst [vmem:[%s391 + $0x6c] sm:%s383] %v446
                  %v448 = vld [vmem:[%s390 + $0x130] sm:%s383]
                  %449 = vst [vmem:[%s391 + $0x70] sm:%s383] %v448
                  %v450 = vld [vmem:[%s390 + $0x134] sm:%s383]
                  %451 = vst [vmem:[%s391 + $0x74] sm:%s383] %v450
                  %v452 = vld [vmem:[%s390 + $0x138] sm:%s383]
                  %453 = vst [vmem:[%s391 + $0x78] sm:%s383] %v452
                  %v454 = vld [vmem:[%s390 + $0x13c] sm:%s383]
                  %455 = vst [vmem:[%s391 + $0x7c] sm:%s383] %v454
                  %v456 = vld [vmem:[%s390 + $0x140] sm:%s383]
                  %457 = vst [vmem:[%s391 + $0x80] sm:%s383] %v456
                  %v458 = vld [vmem:[%s390 + $0x144] sm:%s383]
                  %459 = vst [vmem:[%s391 + $0x84] sm:%s383] %v458
                  %v460 = vld [vmem:[%s390 + $0x148] sm:%s383]
                  %461 = vst [vmem:[%s391 + $0x88] sm:%s383] %v460
                  %v462 = vld [vmem:[%s390 + $0x14c] sm:%s383]
                  %463 = vst [vmem:[%s391 + $0x8c] sm:%s383] %v462
                  %v464 = vld [vmem:[%s390 + $0x1b0] sm:%s383]
                  %465 = vst [vmem:[%s391 + $0x90] sm:%s383] %v464
                  %v466 = vld [vmem:[%s390 + $0x1b4] sm:%s383]
                  %467 = vst [vmem:[%s391 + $0x94] sm:%s383] %v466
                  %v468 = vld [vmem:[%s390 + $0x1b8] sm:%s383]
                  %469 = vst [vmem:[%s391 + $0x98] sm:%s383] %v468
                  %v470 = vld [vmem:[%s390 + $0x1bc] sm:%s383]
                  %471 = vst [vmem:[%s391 + $0x9c] sm:%s383] %v470
                  %v472 = vld [vmem:[%s390 + $0x1c0] sm:%s383]
                  %473 = vst [vmem:[%s391 + $0xa0] sm:%s383] %v472
                  %v474 = vld [vmem:[%s390 + $0x1c4] sm:%s383]
                  %475 = vst [vmem:[%s391 + $0xa4] sm:%s383] %v474
                  %v476 = vld [vmem:[%s390 + $0x1c8] sm:%s383]
                  %477 = vst [vmem:[%s391 + $0xa8] sm:%s383] %v476
                  %v478 = vld [vmem:[%s390 + $0x1cc] sm:%s383]
                  %479 = vst [vmem:[%s391 + $0xac] sm:%s383] %v478
                  %v480 = vld [vmem:[%s390 + $0x1d0] sm:%s383]
                  %481 = vst [vmem:[%s391 + $0xb0] sm:%s383] %v480
                  %v482 = vld [vmem:[%s390 + $0x1d4] sm:%s383]
                  %483 = vst [vmem:[%s391 + $0xb4] sm:%s383] %v482
                  %v484 = vld [vmem:[%s390 + $0x1d8] sm:%s383]
                  %485 = vst [vmem:[%s391 + $0xb8] sm:%s383] %v484
                  %v486 = vld [vmem:[%s390 + $0x1dc] sm:%s383]
                  %487 = vst [vmem:[%s391 + $0xbc] sm:%s383] %v486
                $region71: #{forward.5} parent=58 // loop_footer
                  %s389 = sadd.s32 1, %s385
                $region72: #{forward.5} parent=58 // loop_footer_branch
                  %384 = sbr.rel target = $region68
                $region73: #{forward.5} parent=58 // loop_exit
                  _
              $region59: #{forward.5} parent=43 // pred_fallthru
                _
            $region44: #{forward.5} parent=39 // pred_fallthru
              _
            // Predicated region
            $region45: #{forward.5} parent=39 // pred_check
              _
            $region46: #{forward.5} parent=39 // pred_check_branch
              %265 = sbr.rel (0) target = $region48
            $region47: #{forward.5} parent=39 // pred_region
              %s267 = ssub.s32 16, 1
              loop: start=0, step=1, limit=1
              $region49: #{forward.5} parent=47 // loop_pre_header
                _
              $region50: #{forward.5} parent=47 // loop_header
                %s269 = sphi 0, %s273
                %p270 = scmp.ge.s32.totalorder %s269, 1
                %s274 = sphi %s259, %s259
                %s275 = sphi %s255, %s255
              $region51: #{forward.5} parent=47 // loop_header_branch
                %272 = sbr.rel (%p270) target = $region55
              $region52: #{forward.5} parent=47 // loop_body
                %v276 = vld [vmem:[%s274] sm:%s267]
                %277 = vst [vmem:[%s275] sm:%s267] %v276
                %v278 = vld [vmem:[%s274 + $0x4] sm:%s267]
                %279 = vst [vmem:[%s275 + $0x4] sm:%s267] %v278
                %v280 = vld [vmem:[%s274 + $0x8] sm:%s267]
                %281 = vst [vmem:[%s275 + $0x8] sm:%s267] %v280
                %v282 = vld [vmem:[%s274 + $0xc] sm:%s267]
                %283 = vst [vmem:[%s275 + $0xc] sm:%s267] %v282
                %v284 = vld [vmem:[%s274 + $0x10] sm:%s267]
                %285 = vst [vmem:[%s275 + $0x10] sm:%s267] %v284
                %v286 = vld [vmem:[%s274 + $0x14] sm:%s267]
                %287 = vst [vmem:[%s275 + $0x14] sm:%s267] %v286
                %v288 = vld [vmem:[%s274 + $0x18] sm:%s267]
                %289 = vst [vmem:[%s275 + $0x18] sm:%s267] %v288
                %v290 = vld [vmem:[%s274 + $0x1c] sm:%s267]
                %291 = vst [vmem:[%s275 + $0x1c] sm:%s267] %v290
                %v292 = vld [vmem:[%s274 + $0x20] sm:%s267]
                %293 = vst [vmem:[%s275 + $0x20] sm:%s267] %v292
                %v294 = vld [vmem:[%s274 + $0x24] sm:%s267]
                %295 = vst [vmem:[%s275 + $0x24] sm:%s267] %v294
                %v296 = vld [vmem:[%s274 + $0x28] sm:%s267]
                %297 = vst [vmem:[%s275 + $0x28] sm:%s267] %v296
                %v298 = vld [vmem:[%s274 + $0x2c] sm:%s267]
                %299 = vst [vmem:[%s275 + $0x2c] sm:%s267] %v298
                %v300 = vld [vmem:[%s274 + $0x90] sm:%s267]
                %301 = vst [vmem:[%s275 + $0x30] sm:%s267] %v300
                %v302 = vld [vmem:[%s274 + $0x94] sm:%s267]
                %303 = vst [vmem:[%s275 + $0x34] sm:%s267] %v302
                %v304 = vld [vmem:[%s274 + $0x98] sm:%s267]
                %305 = vst [vmem:[%s275 + $0x38] sm:%s267] %v304
                %v306 = vld [vmem:[%s274 + $0x9c] sm:%s267]
                %307 = vst [vmem:[%s275 + $0x3c] sm:%s267] %v306
                %v308 = vld [vmem:[%s274 + $0xa0] sm:%s267]
                %309 = vst [vmem:[%s275 + $0x40] sm:%s267] %v308
                %v310 = vld [vmem:[%s274 + $0xa4] sm:%s267]
                %311 = vst [vmem:[%s275 + $0x44] sm:%s267] %v310
                %v312 = vld [vmem:[%s274 + $0xa8] sm:%s267]
                %313 = vst [vmem:[%s275 + $0x48] sm:%s267] %v312
                %v314 = vld [vmem:[%s274 + $0xac] sm:%s267]
                %315 = vst [vmem:[%s275 + $0x4c] sm:%s267] %v314
                %v316 = vld [vmem:[%s274 + $0xb0] sm:%s267]
                %317 = vst [vmem:[%s275 + $0x50] sm:%s267] %v316
                %v318 = vld [vmem:[%s274 + $0xb4] sm:%s267]
                %319 = vst [vmem:[%s275 + $0x54] sm:%s267] %v318
                %v320 = vld [vmem:[%s274 + $0xb8] sm:%s267]
                %321 = vst [vmem:[%s275 + $0x58] sm:%s267] %v320
                %v322 = vld [vmem:[%s274 + $0xbc] sm:%s267]
                %323 = vst [vmem:[%s275 + $0x5c] sm:%s267] %v322
                %v324 = vld [vmem:[%s274 + $0x120] sm:%s267]
                %325 = vst [vmem:[%s275 + $0x60] sm:%s267] %v324
                %v326 = vld [vmem:[%s274 + $0x124] sm:%s267]
                %327 = vst [vmem:[%s275 + $0x64] sm:%s267] %v326
                %v328 = vld [vmem:[%s274 + $0x128] sm:%s267]
                %329 = vst [vmem:[%s275 + $0x68] sm:%s267] %v328
                %v330 = vld [vmem:[%s274 + $0x12c] sm:%s267]
                %331 = vst [vmem:[%s275 + $0x6c] sm:%s267] %v330
                %v332 = vld [vmem:[%s274 + $0x130] sm:%s267]
                %333 = vst [vmem:[%s275 + $0x70] sm:%s267] %v332
                %v334 = vld [vmem:[%s274 + $0x134] sm:%s267]
                %335 = vst [vmem:[%s275 + $0x74] sm:%s267] %v334
                %v336 = vld [vmem:[%s274 + $0x138] sm:%s267]
                %337 = vst [vmem:[%s275 + $0x78] sm:%s267] %v336
                %v338 = vld [vmem:[%s274 + $0x13c] sm:%s267]
                %339 = vst [vmem:[%s275 + $0x7c] sm:%s267] %v338
                %v340 = vld [vmem:[%s274 + $0x140] sm:%s267]
                %341 = vst [vmem:[%s275 + $0x80] sm:%s267] %v340
                %v342 = vld [vmem:[%s274 + $0x144] sm:%s267]
                %343 = vst [vmem:[%s275 + $0x84] sm:%s267] %v342
                %v344 = vld [vmem:[%s274 + $0x148] sm:%s267]
                %345 = vst [vmem:[%s275 + $0x88] sm:%s267] %v344
                %v346 = vld [vmem:[%s274 + $0x14c] sm:%s267]
                %347 = vst [vmem:[%s275 + $0x8c] sm:%s267] %v346
                %v348 = vld [vmem:[%s274 + $0x1b0] sm:%s267]
                %349 = vst [vmem:[%s275 + $0x90] sm:%s267] %v348
                %v350 = vld [vmem:[%s274 + $0x1b4] sm:%s267]
                %351 = vst [vmem:[%s275 + $0x94] sm:%s267] %v350
                %v352 = vld [vmem:[%s274 + $0x1b8] sm:%s267]
                %353 = vst [vmem:[%s275 + $0x98] sm:%s267] %v352
                %v354 = vld [vmem:[%s274 + $0x1bc] sm:%s267]
                %355 = vst [vmem:[%s275 + $0x9c] sm:%s267] %v354
                %v356 = vld [vmem:[%s274 + $0x1c0] sm:%s267]
                %357 = vst [vmem:[%s275 + $0xa0] sm:%s267] %v356
                %v358 = vld [vmem:[%s274 + $0x1c4] sm:%s267]
                %359 = vst [vmem:[%s275 + $0xa4] sm:%s267] %v358
                %v360 = vld [vmem:[%s274 + $0x1c8] sm:%s267]
                %361 = vst [vmem:[%s275 + $0xa8] sm:%s267] %v360
                %v362 = vld [vmem:[%s274 + $0x1cc] sm:%s267]
                %363 = vst [vmem:[%s275 + $0xac] sm:%s267] %v362
                %v364 = vld [vmem:[%s274 + $0x1d0] sm:%s267]
                %365 = vst [vmem:[%s275 + $0xb0] sm:%s267] %v364
                %v366 = vld [vmem:[%s274 + $0x1d4] sm:%s267]
                %367 = vst [vmem:[%s275 + $0xb4] sm:%s267] %v366
                %v368 = vld [vmem:[%s274 + $0x1d8] sm:%s267]
                %369 = vst [vmem:[%s275 + $0xb8] sm:%s267] %v368
                %v370 = vld [vmem:[%s274 + $0x1dc] sm:%s267]
                %371 = vst [vmem:[%s275 + $0xbc] sm:%s267] %v370
              $region53: #{forward.5} parent=47 // loop_footer
                %s273 = sadd.s32 1, %s269
              $region54: #{forward.5} parent=47 // loop_footer_branch
                %268 = sbr.rel target = $region50
              $region55: #{forward.5} parent=47 // loop_exit
                _
            $region48: #{forward.5} parent=39 // pred_fallthru
              _
          $region40: #{forward.5} parent=35 // pred_fallthru
            _
          %488 = vnop
        $region36: #{forward.5} parent=31 // pred_fallthru
          _
      $region32: #{forward.5} parent=5 // pred_fallthru
        _
      %p489 = scmp.le.s32.totalorder 1, %s12
      %p490 = scmp.lt.s32.totalorder %s12, 4
      %p491 = pnand %p489, %p490
      %p492 = pneg %p491
      // Predicated region
      $region74: #{forward.5} parent=5 // pred_check
        _
      $region75: #{forward.5} parent=5 // pred_check_branch
        %494 = sbr.rel (%p491) target = $region77
      $region76: #{forward.5} parent=5 // pred_region
        %s495 = ssub.s32 %s12, 1
        %s496 = sand.u32 %s46, 1
        %s497 = sand.u32 %s46, 1
        %s498 = smul.addr %s497, 192
        %s499 = scalar_lea.vmem [#allocation3], %s498
        // Predicated region
        $region78: #{forward.5} parent=76 // pred_check
          %p500 = pneg %p59
        $region79: #{forward.5} parent=76 // pred_check_branch
          %502 = sbr.rel (%p500) target = $region81
        $region80: #{forward.5} parent=76 // pred_region
          _
        $region81: #{forward.5} parent=76 // pred_fallthru
          _
        // Predicated region
        $region82: #{forward.5} parent=76 // pred_check
          %p503 = pneg %p113
        $region83: #{forward.5} parent=76 // pred_check_branch
          %505 = sbr.rel (%p503) target = $region85
        $region84: #{forward.5} parent=76 // pred_region
          %506 = dma.done [#allocation5], 16
        $region85: #{forward.5} parent=76 // pred_fallthru
          _
        %s507 = sand.u32 %s46, 1
        %s508 = sand.u32 %s46, 1
        %s509 = smul.addr %s508, 192
        %s510 = scalar_lea.vmem [#allocation3], %s509
        %p511 = pneg %p59
        %p512 = pneg %p56
        %s513 = smul.u32 4, %s24
        %p514 = scmp.lt.s32.totalorder %s513, 3
        %s515 = scalar_select %p514, %s513, 3
        %p516 = scmp.lt.s32.totalorder %s23, 0
        %s517 = scalar_select %p516, %s23, 0
        %s518 = sadd.s32 %s517, %s515
        %s519 = smul.addr %s518, 4
        %s520 = scalar_lea.vmem %s1, %s519
        %p521 = pneg %p87
        %p522 = pneg %p84
        %p523 = pneg %p113
        %p524 = pneg %p110
        %p525 = scmp.lt.s32.totalorder %s23, 0
        %s526 = scalar_select %p525, %s23, 0
        %s527 = scalar_lea.vmem %s3, %s526
        %p528 = pneg %p139
        %p529 = pneg %p136
        %p530 = scmp.lt.s32.totalorder %s23, 0
        %s531 = scalar_select %p530, %s23, 0
        %s532 = scalar_lea.vmem %s4, %s531
        %p533 = pneg %p165
        %p534 = pneg %p162
        %p535 = pneg %p193
        %p536 = pneg %p190
        %s537 = smul.u32 12, %s22
        %p538 = scmp.lt.s32.totalorder %s537, 35
        %s539 = scalar_select %p538, %s537, 35
        %p540 = scmp.lt.s32.totalorder %s23, 0
        %s541 = scalar_select %p540, %s23, 0
        %s542 = sadd.s32 %s541, %s539
        %s543 = smul.addr %s542, 4
        %s544 = scalar_lea.vmem %s5, %s543
        %s545 = smul.u32 12, %s22
        %s546 = smul.u32 4, %s24
        %p547 = scmp.lt.s32.totalorder %s546, 3
        %s548 = scalar_select %p547, %s546, 3
        %p549 = scmp.lt.s32.totalorder %s23, 0
        %s550 = scalar_select %p549, %s23, 0
        %s551 = sadd.s32 %s550, %s548
        %s552 = smul.addr %s551, 4
        %s553 = scalar_lea.vmem %s1, %s552
        %s554 = smul.u32 4, %s24
        %p555 = scmp.lt.s32.totalorder %s23, 0
        %s556 = scalar_select %p555, %s23, 0
        %s557 = scalar_lea.vmem %s3, %s556
        %p558 = scmp.lt.s32.totalorder %s23, 0
        %s559 = scalar_select %p558, %s23, 0
        %s560 = scalar_lea.vmem %s4, %s559
        %s561 = smul.u32 12, %s22
        %p562 = scmp.lt.s32.totalorder %s561, 35
        %s563 = scalar_select %p562, %s561, 35
        %p564 = scmp.lt.s32.totalorder %s23, 0
        %s565 = scalar_select %p564, %s23, 0
        %s566 = sadd.s32 %s565, %s563
        %s567 = smul.addr %s566, 4
        %s568 = scalar_lea.vmem %s5, %s567
        %s569 = smul.u32 12, %s22
        %p571 = scmp.eq.s32.totalorder %s24, 0
        // Predicated region
        $region86: #{forward.5} parent=76 // pred_check
          %p572 = pneg %p571
        $region87: #{forward.5} parent=76 // pred_check_branch
          %574 = sbr.rel (%p572) target = $region89
        $region88: #{forward.5} parent=76 // pred_region
          %vm575 = vcmask 523264
          %576 = vst.msk [vmem:[#allocation2] sm:$0xff] %vm575, 0.0
          %577 = vst.msk [vmem:[#allocation2 + $0x8] sm:$0xff] %vm575, 0.0
          %578 = vst.msk [vmem:[#allocation2 + $0x10] sm:$0xff] %vm575, 0.0
          %579 = vst.msk [vmem:[#allocation2 + $0x18] sm:$0xff] %vm575, 0.0
          %580 = vst.msk [vmem:[#allocation2 + $0x20] sm:$0xff] %vm575, 0.0
          %581 = vst.msk [vmem:[#allocation2 + $0x28] sm:$0xff] %vm575, 0.0
          %582 = vst.msk [vmem:[#allocation2 + $0x30] sm:$0xff] %vm575, 0.0
          %583 = vst.msk [vmem:[#allocation2 + $0x38] sm:$0xff] %vm575, 0.0
          %584 = vst.msk [vmem:[#allocation2 + $0x40] sm:$0xff] %vm575, 0.0
          %585 = vst.msk [vmem:[#allocation2 + $0x48] sm:$0xff] %vm575, 0.0
          %586 = vst.msk [vmem:[#allocation2 + $0x50] sm:$0xff] %vm575, 0.0
          %587 = vst.msk [vmem:[#allocation2 + $0x58] sm:$0xff] %vm575, 0.0
          %588 = vst.msk [vmem:[#allocation2 + $0x60] sm:$0xff] %vm575, 0.0
          %589 = vst.msk [vmem:[#allocation2 + $0x68] sm:$0xff] %vm575, 0.0
          %590 = vst.msk [vmem:[#allocation2 + $0x70] sm:$0xff] %vm575, 0.0
          %591 = vst.msk [vmem:[#allocation2 + $0x78] sm:$0xff] %vm575, 0.0
          %592 = vst.msk [vmem:[#allocation2 + $0x80] sm:$0xff] %vm575, 0.0
          %593 = vst.msk [vmem:[#allocation2 + $0x88] sm:$0xff] %vm575, 0.0
          %594 = vst.msk [vmem:[#allocation2 + $0x90] sm:$0xff] %vm575, 0.0
          %595 = vst.msk [vmem:[#allocation2 + $0x98] sm:$0xff] %vm575, 0.0
          %596 = vst.msk [vmem:[#allocation2 + $0xa0] sm:$0xff] %vm575, 0.0
          %597 = vst.msk [vmem:[#allocation2 + $0xa8] sm:$0xff] %vm575, 0.0
          %598 = vst.msk [vmem:[#allocation2 + $0xb0] sm:$0xff] %vm575, 0.0
          %599 = vst.msk [vmem:[#allocation2 + $0xb8] sm:$0xff] %vm575, 0.0
          %600 = vst.msk [vmem:[#allocation2 + $0xc0] sm:$0xff] %vm575, 0.0
          %601 = vst.msk [vmem:[#allocation2 + $0xc8] sm:$0xff] %vm575, 0.0
          %602 = vst.msk [vmem:[#allocation2 + $0xd0] sm:$0xff] %vm575, 0.0
          %603 = vst.msk [vmem:[#allocation2 + $0xd8] sm:$0xff] %vm575, 0.0
          %604 = vst.msk [vmem:[#allocation2 + $0xe0] sm:$0xff] %vm575, 0.0
          %605 = vst.msk [vmem:[#allocation2 + $0xe8] sm:$0xff] %vm575, 0.0
          %606 = vst.msk [vmem:[#allocation2 + $0xf0] sm:$0xff] %vm575, 0.0
          %607 = vst.msk [vmem:[#allocation2 + $0xf8] sm:$0xff] %vm575, 0.0
          %608 = vst.msk [vmem:[#allocation2 + $0x100] sm:$0xff] %vm575, 0.0
          %609 = vst.msk [vmem:[#allocation2 + $0x108] sm:$0xff] %vm575, 0.0
          %610 = vst.msk [vmem:[#allocation2 + $0x110] sm:$0xff] %vm575, 0.0
          %611 = vst.msk [vmem:[#allocation2 + $0x118] sm:$0xff] %vm575, 0.0
          %612 = vst.msk [vmem:[#allocation2 + $0x120] sm:$0xff] %vm575, 0.0
          %613 = vst.msk [vmem:[#allocation2 + $0x128] sm:$0xff] %vm575, 0.0
          %614 = vst.msk [vmem:[#allocation2 + $0x130] sm:$0xff] %vm575, 0.0
          %615 = vst.msk [vmem:[#allocation2 + $0x138] sm:$0xff] %vm575, 0.0
          %616 = vst.msk [vmem:[#allocation2 + $0x140] sm:$0xff] %vm575, 0.0
          %617 = vst.msk [vmem:[#allocation2 + $0x148] sm:$0xff] %vm575, 0.0
          %618 = vst.msk [vmem:[#allocation2 + $0x150] sm:$0xff] %vm575, 0.0
          %619 = vst.msk [vmem:[#allocation2 + $0x158] sm:$0xff] %vm575, 0.0
          %620 = vst.msk [vmem:[#allocation2 + $0x160] sm:$0xff] %vm575, 0.0
          %621 = vst.msk [vmem:[#allocation2 + $0x168] sm:$0xff] %vm575, 0.0
          %622 = vst.msk [vmem:[#allocation2 + $0x170] sm:$0xff] %vm575, 0.0
          %623 = vst.msk [vmem:[#allocation2 + $0x178] sm:$0xff] %vm575, 0.0
        $region89: #{forward.5} parent=76 // pred_fallthru
          _
        %v624 = vld [vmem:[%s553] sm:$0xf]
        %v625 = vld [vmem:[%s553 + $0x4] sm:$0xf]
        %v626 = vld [vmem:[%s553 + $0x8] sm:$0xf]
        %v627 = vld [vmem:[%s553 + $0xc] sm:$0x1]
        %v628 = vld [vmem:[#allocation2] sm:$0xff]
        %v629 = vld [vmem:[#allocation2 + $0x8] sm:$0xff]
        %v630 = vld [vmem:[#allocation2 + $0x10] sm:$0xff]
        %v631 = vld [vmem:[#allocation2 + $0x18] sm:$0xff]
        %v632 = vld [vmem:[#allocation2 + $0x20] sm:$0xff]
        %v633 = vld [vmem:[#allocation2 + $0x28] sm:$0xff]
        %v634 = vld [vmem:[#allocation2 + $0x30] sm:$0xff]
        %v635 = vld [vmem:[#allocation2 + $0x38] sm:$0xff]
        %v636 = vld [vmem:[#allocation2 + $0x40] sm:$0xff]
        %v637 = vld [vmem:[#allocation2 + $0x48] sm:$0xff]
        %v638 = vld [vmem:[#allocation2 + $0x50] sm:$0xff]
        %v639 = vld [vmem:[#allocation2 + $0x58] sm:$0xff]
        %v640 = vld [vmem:[%s499] sm:$0xf]
        %v641 = vld [vmem:[%s499 + $0x4] sm:$0xf]
        %v642 = vld [vmem:[%s499 + $0x8] sm:$0xf]
        %v643 = vld [vmem:[%s499 + $0xc] sm:$0xf]
        %v644 = vld [vmem:[%s499 + $0x10] sm:$0xf]
        %v645 = vld [vmem:[%s499 + $0x14] sm:$0xf]
        %v646 = vld [vmem:[%s499 + $0x18] sm:$0xf]
        %v647 = vld [vmem:[%s499 + $0x1c] sm:$0xf]
        %v648 = vld [vmem:[%s499 + $0x20] sm:$0xf]
        %v649 = vld [vmem:[%s499 + $0x24] sm:$0xf]
        %v650 = vld [vmem:[%s499 + $0x28] sm:$0xf]
        %v651 = vld [vmem:[%s499 + $0x2c] sm:$0xf]
        %v664 = vunpack.c.l.b16 %v640
        %v665 = vunpack.c.l.b16 %v641
        %v666 = vunpack.c.l.b16 %v642
        %v667 = vunpack.c.l.b16 %v643
        %v668 = vunpack.c.l.b16 %v644
        %v669 = vunpack.c.l.b16 %v645
        %v670 = vunpack.c.l.b16 %v646
        %v671 = vunpack.c.l.b16 %v647
        %v672 = vunpack.c.l.b16 %v648
        %v673 = vunpack.c.l.b16 %v649
        %v674 = vunpack.c.l.b16 %v650
        %v675 = vunpack.c.l.b16 %v651
        %v676 = vpack.c.b16 %v665, %v664
        %v677 = vpack.c.b16 %v667, %v666
        %v678 = vpack.c.b16 %v669, %v668
        %v679 = vpack.c.b16 %v671, %v670
        %v680 = vpack.c.b16 %v673, %v672
        %v681 = vpack.c.b16 %v675, %v674
        %v686 = vunpack.c.l.b16 %v624
        %v687 = vunpack.c.l.b16 %v625
        %v688 = vunpack.c.l.b16 %v626
        %v689 = vunpack.c.l.b16 %v627
        %v690 = vpack.c.b16 %v687, %v686
        %v691 = vpack.c.b16 %v689, %v688
        %vm693 = vcmask 203776
        %v695 = vsel %vm693, %v676, 0
        %v698 = vsel %vm693, %v677, 0
        %v701 = vsel %vm693, %v678, 0
        %v704 = vsel %vm693, %v679, 0
        %v707 = vsel %vm693, %v680, 0
        %v710 = vsel %vm693, %v681, 0
        %vm712 = vcmask 1043456
        %vm713 = vcmask 1044480
        %v714 = vsel %vm712, 4294967295, 65535
        %v715 = vsel %vm713, %v714, 0
        %v717 = vand.u32 %v691, %v715
        %719 = vmatprep.subr.bf16.mxu0 0
        %720 = vmatpush1.bf16.msra.mxu0 0
        %721 = vmatprep.subr.bf16.mxu0 0
        %722 = vmatpush1.bf16.msra.mxu0 0
        %723 = vmatprep.subr.bf16.mxu0 0
        %724 = vmatpush1.bf16.msra.mxu0 0
        %725 = vmatprep.subr.bf16.mxu0 0
        %726 = vmatpush1.bf16.msra.mxu0 0
        %727 = vmatprep.subr.bf16.mxu0 0
        %728 = vmatpush1.bf16.msra.mxu0 0
        %729 = vmatprep.subr.bf16.mxu0 0
        %730 = vmatpush1.bf16.msra.mxu0 0
        %731 = vmatprep.subr.bf16.mxu0 0
        %732 = vmatpush1.bf16.msra.mxu0 %v717
        %733 = vmatprep.subr.bf16.mxu0 0
        %734 = vmatpush1.bf16.msra.mxu0 %v690
        %735 = vmatprep.subr.bf16.mxu0 0
        %736 = vmatpush2.bf16.msra.mxu0 0
        %737 = vmatprep.subr.bf16.mxu0 0
        %738 = vmatpush2.bf16.msra.mxu0 0
        %739 = vmatprep.subr.bf16.mxu0 0
        %740 = vmatpush2.bf16.msra.mxu0 0
        %741 = vmatprep.subr.bf16.mxu0 0
        %742 = vmatpush2.bf16.msra.mxu0 0
        %743 = vmatprep.subr.bf16.mxu0 0
        %744 = vmatpush2.bf16.msra.mxu0 0
        %745 = vmatprep.subr.bf16.mxu0 0
        %746 = vmatpush2.bf16.msra.mxu0 0
        %747 = vmatprep.subr.bf16.mxu0 0
        %748 = vmatpush2.bf16.msra.mxu0 0
        %749 = vmatprep.subr.bf16.mxu0 0
        %750 = vmatpush2.bf16.msra.mxu0 0
        %751 = vmatprep.mubr.bf16.mxu0 0
        %752 = vmatmul.mubr.bf16.gmra.mxu0 %v695
        %v753 = vpop.f32.mrf.mxu0
        %v754 = vadd.f32 0.0, %v753
        %v755 = vpop.f32.mrf.mxu0
        %v756 = vpop.f32.mrf.mxu0
        %v757 = vadd.f32 0.0, %v756
        %v758 = vpop.f32.mrf.mxu0
        %759 = vmatprep.mubr.bf16.mxu0 0
        %760 = vmatmul.mubr.bf16.gmra.mxu0 %v698
        %v761 = vpop.f32.mrf.mxu0
        %v762 = vadd.f32 0.0, %v761
        %v763 = vpop.f32.mrf.mxu0
        %v764 = vpop.f32.mrf.mxu0
        %v765 = vadd.f32 0.0, %v764
        %v766 = vpop.f32.mrf.mxu0
        %767 = vmatprep.mubr.bf16.mxu0 0
        %768 = vmatmul.mubr.bf16.gmra.mxu0 %v701
        %v769 = vpop.f32.mrf.mxu0
        %v770 = vadd.f32 0.0, %v769
        %v771 = vpop.f32.mrf.mxu0
        %v772 = vpop.f32.mrf.mxu0
        %v773 = vadd.f32 0.0, %v772
        %v774 = vpop.f32.mrf.mxu0
        %775 = vmatprep.mubr.bf16.mxu0 0
        %776 = vmatmul.mubr.bf16.gmra.mxu0 %v704
        %v777 = vpop.f32.mrf.mxu0
        %v778 = vadd.f32 0.0, %v777
        %v779 = vpop.f32.mrf.mxu0
        %v780 = vpop.f32.mrf.mxu0
        %v781 = vadd.f32 0.0, %v780
        %v782 = vpop.f32.mrf.mxu0
        %783 = vmatprep.mubr.bf16.mxu0 0
        %784 = vmatmul.mubr.bf16.gmra.mxu0 %v707
        %v785 = vpop.f32.mrf.mxu0
        %v786 = vadd.f32 0.0, %v785
        %v787 = vpop.f32.mrf.mxu0
        %v788 = vpop.f32.mrf.mxu0
        %v789 = vadd.f32 0.0, %v788
        %v790 = vpop.f32.mrf.mxu0
        %791 = vmatprep.mubr.bf16.mxu0 0
        %792 = vmatmul.mubr.bf16.gmra.mxu0 %v710
        %v793 = vpop.f32.mrf.mxu0
        %v794 = vadd.f32 0.0, %v793
        %v795 = vpop.f32.mrf.mxu0
        %v796 = vpop.f32.mrf.mxu0
        %v797 = vadd.f32 0.0, %v796
        %v798 = vpop.f32.mrf.mxu0
        %799 = vdwg.mxu0
        %v800 = vadd.f32 %v628, %v754
        %v801 = vadd.f32 %v629, %v757
        %v802 = vadd.f32 %v630, %v762
        %v803 = vadd.f32 %v631, %v765
        %v804 = vadd.f32 %v632, %v770
        %v805 = vadd.f32 %v633, %v773
        %v806 = vadd.f32 %v634, %v778
        %v807 = vadd.f32 %v635, %v781
        %v808 = vadd.f32 %v636, %v786
        %v809 = vadd.f32 %v637, %v789
        %v810 = vadd.f32 %v638, %v794
        %v811 = vadd.f32 %v639, %v797
        %vm812 = vcmask 523264
        %813 = vst.msk [vmem:[#allocation2] sm:$0xff] %vm812, %v800
        %814 = vst.msk [vmem:[#allocation2 + $0x8] sm:$0xff] %vm812, %v801
        %815 = vst.msk [vmem:[#allocation2 + $0x10] sm:$0xff] %vm812, %v802
        %816 = vst.msk [vmem:[#allocation2 + $0x18] sm:$0xff] %vm812, %v803
        %817 = vst.msk [vmem:[#allocation2 + $0x20] sm:$0xff] %vm812, %v804
        %818 = vst.msk [vmem:[#allocation2 + $0x28] sm:$0xff] %vm812, %v805
        %819 = vst.msk [vmem:[#allocation2 + $0x30] sm:$0xff] %vm812, %v806
        %820 = vst.msk [vmem:[#allocation2 + $0x38] sm:$0xff] %vm812, %v807
        %821 = vst.msk [vmem:[#allocation2 + $0x40] sm:$0xff] %vm812, %v808
        %822 = vst.msk [vmem:[#allocation2 + $0x48] sm:$0xff] %vm812, %v809
        %823 = vst.msk [vmem:[#allocation2 + $0x50] sm:$0xff] %vm812, %v810
        %824 = vst.msk [vmem:[#allocation2 + $0x58] sm:$0xff] %vm812, %v811
        %s825 = scalar_lea.vmem [#allocation2], 96
        %v826 = vld [vmem:[%s825] sm:$0xff]
        %v827 = vld [vmem:[%s825 + $0x8] sm:$0xff]
        %v828 = vld [vmem:[%s825 + $0x10] sm:$0xff]
        %v829 = vld [vmem:[%s825 + $0x18] sm:$0xff]
        %v830 = vld [vmem:[%s825 + $0x20] sm:$0xff]
        %v831 = vld [vmem:[%s825 + $0x28] sm:$0xff]
        %v832 = vld [vmem:[%s825 + $0x30] sm:$0xff]
        %v833 = vld [vmem:[%s825 + $0x38] sm:$0xff]
        %v834 = vld [vmem:[%s825 + $0x40] sm:$0xff]
        %v835 = vld [vmem:[%s825 + $0x48] sm:$0xff]
        %v836 = vld [vmem:[%s825 + $0x50] sm:$0xff]
        %v837 = vld [vmem:[%s825 + $0x58] sm:$0xff]
        %s838 = scalar_lea.vmem %s499, 48 [#allocation3]
        %v839 = vld [vmem:[%s838] sm:$0xf]
        %v840 = vld [vmem:[%s838 + $0x4] sm:$0xf]
        %v841 = vld [vmem:[%s838 + $0x8] sm:$0xf]
        %v842 = vld [vmem:[%s838 + $0xc] sm:$0xf]
        %v843 = vld [vmem:[%s838 + $0x10] sm:$0xf]
        %v844 = vld [vmem:[%s838 + $0x14] sm:$0xf]
        %v845 = vld [vmem:[%s838 + $0x18] sm:$0xf]
        %v846 = vld [vmem:[%s838 + $0x1c] sm:$0xf]
        %v847 = vld [vmem:[%s838 + $0x20] sm:$0xf]
        %v848 = vld [vmem:[%s838 + $0x24] sm:$0xf]
        %v849 = vld [vmem:[%s838 + $0x28] sm:$0xf]
        %v850 = vld [vmem:[%s838 + $0x2c] sm:$0xf]
        %v863 = vunpack.c.l.b16 %v839
        %v864 = vunpack.c.l.b16 %v840
        %v865 = vunpack.c.l.b16 %v841
        %v866 = vunpack.c.l.b16 %v842
        %v867 = vunpack.c.l.b16 %v843
        %v868 = vunpack.c.l.b16 %v844
        %v869 = vunpack.c.l.b16 %v845
        %v870 = vunpack.c.l.b16 %v846
        %v871 = vunpack.c.l.b16 %v847
        %v872 = vunpack.c.l.b16 %v848
        %v873 = vunpack.c.l.b16 %v849
        %v874 = vunpack.c.l.b16 %v850
        %v875 = vpack.c.b16 %v864, %v863
        %v876 = vpack.c.b16 %v866, %v865
        %v877 = vpack.c.b16 %v868, %v867
        %v878 = vpack.c.b16 %v870, %v869
        %v879 = vpack.c.b16 %v872, %v871
        %v880 = vpack.c.b16 %v874, %v873
        %v882 = vsel %vm693, %v875, 0
        %v885 = vsel %vm693, %v876, 0
        %v888 = vsel %vm693, %v877, 0
        %v891 = vsel %vm693, %v878, 0
        %v894 = vsel %vm693, %v879, 0
        %v897 = vsel %vm693, %v880, 0
        %899 = vmatprep.subr.bf16.mxu0 0
        %900 = vmatpush1.bf16.msra.mxu0 0
        %901 = vmatprep.subr.bf16.mxu0 0
        %902 = vmatpush1.bf16.msra.mxu0 0
        %903 = vmatprep.subr.bf16.mxu0 0
        %904 = vmatpush1.bf16.msra.mxu0 0
        %905 = vmatprep.subr.bf16.mxu0 0
        %906 = vmatpush1.bf16.msra.mxu0 0
        %907 = vmatprep.subr.bf16.mxu0 0
        %908 = vmatpush1.bf16.msra.mxu0 0
        %909 = vmatprep.subr.bf16.mxu0 0
        %910 = vmatpush1.bf16.msra.mxu0 0
        %911 = vmatprep.subr.bf16.mxu0 0
        %912 = vmatpush1.bf16.msra.mxu0 %v717
        %913 = vmatprep.subr.bf16.mxu0 0
        %914 = vmatpush1.bf16.msra.mxu0 %v690
        %915 = vmatprep.subr.bf16.mxu0 0
        %916 = vmatpush2.bf16.msra.mxu0 0
        %917 = vmatprep.subr.bf16.mxu0 0
        %918 = vmatpush2.bf16.msra.mxu0 0
        %919 = vmatprep.subr.bf16.mxu0 0
        %920 = vmatpush2.bf16.msra.mxu0 0
        %921 = vmatprep.subr.bf16.mxu0 0
        %922 = vmatpush2.bf16.msra.mxu0 0
        %923 = vmatprep.subr.bf16.mxu0 0
        %924 = vmatpush2.bf16.msra.mxu0 0
        %925 = vmatprep.subr.bf16.mxu0 0
        %926 = vmatpush2.bf16.msra.mxu0 0
        %927 = vmatprep.subr.bf16.mxu0 0
        %928 = vmatpush2.bf16.msra.mxu0 0
        %929 = vmatprep.subr.bf16.mxu0 0
        %930 = vmatpush2.bf16.msra.mxu0 0
        %931 = vmatprep.mubr.bf16.mxu0 0
        %932 = vmatmul.mubr.bf16.gmra.mxu0 %v882
        %v933 = vpop.f32.mrf.mxu0
        %v934 = vadd.f32 0.0, %v933
        %v935 = vpop.f32.mrf.mxu0
        %v936 = vpop.f32.mrf.mxu0
        %v937 = vadd.f32 0.0, %v936
        %v938 = vpop.f32.mrf.mxu0
        %939 = vmatprep.mubr.bf16.mxu0 0
        %940 = vmatmul.mubr.bf16.gmra.mxu0 %v885
        %v941 = vpop.f32.mrf.mxu0
        %v942 = vadd.f32 0.0, %v941
        %v943 = vpop.f32.mrf.mxu0
        %v944 = vpop.f32.mrf.mxu0
        %v945 = vadd.f32 0.0, %v944
        %v946 = vpop.f32.mrf.mxu0
        %947 = vmatprep.mubr.bf16.mxu0 0
        %948 = vmatmul.mubr.bf16.gmra.mxu0 %v888
        %v949 = vpop.f32.mrf.mxu0
        %v950 = vadd.f32 0.0, %v949
        %v951 = vpop.f32.mrf.mxu0
        %v952 = vpop.f32.mrf.mxu0
        %v953 = vadd.f32 0.0, %v952
        %v954 = vpop.f32.mrf.mxu0
        %955 = vmatprep.mubr.bf16.mxu0 0
        %956 = vmatmul.mubr.bf16.gmra.mxu0 %v891
        %v957 = vpop.f32.mrf.mxu0
        %v958 = vadd.f32 0.0, %v957
        %v959 = vpop.f32.mrf.mxu0
        %v960 = vpop.f32.mrf.mxu0
        %v961 = vadd.f32 0.0, %v960
        %v962 = vpop.f32.mrf.mxu0
        %963 = vmatprep.mubr.bf16.mxu0 0
        %964 = vmatmul.mubr.bf16.gmra.mxu0 %v894
        %v965 = vpop.f32.mrf.mxu0
        %v966 = vadd.f32 0.0, %v965
        %v967 = vpop.f32.mrf.mxu0
        %v968 = vpop.f32.mrf.mxu0
        %v969 = vadd.f32 0.0, %v968
        %v970 = vpop.f32.mrf.mxu0
        %971 = vmatprep.mubr.bf16.mxu0 0
        %972 = vmatmul.mubr.bf16.gmra.mxu0 %v897
        %v973 = vpop.f32.mrf.mxu0
        %v974 = vadd.f32 0.0, %v973
        %v975 = vpop.f32.mrf.mxu0
        %v976 = vpop.f32.mrf.mxu0
        %v977 = vadd.f32 0.0, %v976
        %v978 = vpop.f32.mrf.mxu0
        %979 = vdwg.mxu0
        %v980 = vadd.f32 %v826, %v934
        %v981 = vadd.f32 %v827, %v937
        %v982 = vadd.f32 %v828, %v942
        %v983 = vadd.f32 %v829, %v945
        %v984 = vadd.f32 %v830, %v950
        %v985 = vadd.f32 %v831, %v953
        %v986 = vadd.f32 %v832, %v958
        %v987 = vadd.f32 %v833, %v961
        %v988 = vadd.f32 %v834, %v966
        %v989 = vadd.f32 %v835, %v969
        %v990 = vadd.f32 %v836, %v974
        %v991 = vadd.f32 %v837, %v977
        %992 = vst.msk [vmem:[%s825] sm:$0xff] %vm812, %v980
        %993 = vst.msk [vmem:[%s825 + $0x8] sm:$0xff] %vm812, %v981
        %994 = vst.msk [vmem:[%s825 + $0x10] sm:$0xff] %vm812, %v982
        %995 = vst.msk [vmem:[%s825 + $0x18] sm:$0xff] %vm812, %v983
        %996 = vst.msk [vmem:[%s825 + $0x20] sm:$0xff] %vm812, %v984
        %997 = vst.msk [vmem:[%s825 + $0x28] sm:$0xff] %vm812, %v985
        %998 = vst.msk [vmem:[%s825 + $0x30] sm:$0xff] %vm812, %v986
        %999 = vst.msk [vmem:[%s825 + $0x38] sm:$0xff] %vm812, %v987
        %1000 = vst.msk [vmem:[%s825 + $0x40] sm:$0xff] %vm812, %v988
        %1001 = vst.msk [vmem:[%s825 + $0x48] sm:$0xff] %vm812, %v989
        %1002 = vst.msk [vmem:[%s825 + $0x50] sm:$0xff] %vm812, %v990
        %1003 = vst.msk [vmem:[%s825 + $0x58] sm:$0xff] %vm812, %v991
        %s1004 = scalar_lea.vmem [#allocation2], 192
        %v1005 = vld [vmem:[%s1004] sm:$0xff]
        %v1006 = vld [vmem:[%s1004 + $0x8] sm:$0xff]
        %v1007 = vld [vmem:[%s1004 + $0x10] sm:$0xff]
        %v1008 = vld [vmem:[%s1004 + $0x18] sm:$0xff]
        %v1009 = vld [vmem:[%s1004 + $0x20] sm:$0xff]
        %v1010 = vld [vmem:[%s1004 + $0x28] sm:$0xff]
        %v1011 = vld [vmem:[%s1004 + $0x30] sm:$0xff]
        %v1012 = vld [vmem:[%s1004 + $0x38] sm:$0xff]
        %v1013 = vld [vmem:[%s1004 + $0x40] sm:$0xff]
        %v1014 = vld [vmem:[%s1004 + $0x48] sm:$0xff]
        %v1015 = vld [vmem:[%s1004 + $0x50] sm:$0xff]
        %v1016 = vld [vmem:[%s1004 + $0x58] sm:$0xff]
        %s1017 = scalar_lea.vmem %s499, 96 [#allocation3]
        %v1018 = vld [vmem:[%s1017] sm:$0xf]
        %v1019 = vld [vmem:[%s1017 + $0x4] sm:$0xf]
        %v1020 = vld [vmem:[%s1017 + $0x8] sm:$0xf]
        %v1021 = vld [vmem:[%s1017 + $0xc] sm:$0xf]
        %v1022 = vld [vmem:[%s1017 + $0x10] sm:$0xf]
        %v1023 = vld [vmem:[%s1017 + $0x14] sm:$0xf]
        %v1024 = vld [vmem:[%s1017 + $0x18] sm:$0xf]
        %v1025 = vld [vmem:[%s1017 + $0x1c] sm:$0xf]
        %v1026 = vld [vmem:[%s1017 + $0x20] sm:$0xf]
        %v1027 = vld [vmem:[%s1017 + $0x24] sm:$0xf]
        %v1028 = vld [vmem:[%s1017 + $0x28] sm:$0xf]
        %v1029 = vld [vmem:[%s1017 + $0x2c] sm:$0xf]
        %v1042 = vunpack.c.l.b16 %v1018
        %v1043 = vunpack.c.l.b16 %v1019
        %v1044 = vunpack.c.l.b16 %v1020
        %v1045 = vunpack.c.l.b16 %v1021
        %v1046 = vunpack.c.l.b16 %v1022
        %v1047 = vunpack.c.l.b16 %v1023
        %v1048 = vunpack.c.l.b16 %v1024
        %v1049 = vunpack.c.l.b16 %v1025
        %v1050 = vunpack.c.l.b16 %v1026
        %v1051 = vunpack.c.l.b16 %v1027
        %v1052 = vunpack.c.l.b16 %v1028
        %v1053 = vunpack.c.l.b16 %v1029
        %v1054 = vpack.c.b16 %v1043, %v1042
        %v1055 = vpack.c.b16 %v1045, %v1044
        %v1056 = vpack.c.b16 %v1047, %v1046
        %v1057 = vpack.c.b16 %v1049, %v1048
        %v1058 = vpack.c.b16 %v1051, %v1050
        %v1059 = vpack.c.b16 %v1053, %v1052
        %v1061 = vsel %vm693, %v1054, 0
        %v1064 = vsel %vm693, %v1055, 0
        %v1067 = vsel %vm693, %v1056, 0
        %v1070 = vsel %vm693, %v1057, 0
        %v1073 = vsel %vm693, %v1058, 0
        %v1076 = vsel %vm693, %v1059, 0
        %1078 = vmatprep.subr.bf16.mxu0 0
        %1079 = vmatpush1.bf16.msra.mxu0 0
        %1080 = vmatprep.subr.bf16.mxu0 0
        %1081 = vmatpush1.bf16.msra.mxu0 0
        %1082 = vmatprep.subr.bf16.mxu0 0
        %1083 = vmatpush1.bf16.msra.mxu0 0
        %1084 = vmatprep.subr.bf16.mxu0 0
        %1085 = vmatpush1.bf16.msra.mxu0 0
        %1086 = vmatprep.subr.bf16.mxu0 0
        %1087 = vmatpush1.bf16.msra.mxu0 0
        %1088 = vmatprep.subr.bf16.mxu0 0
        %1089 = vmatpush1.bf16.msra.mxu0 0
        %1090 = vmatprep.subr.bf16.mxu0 0
        %1091 = vmatpush1.bf16.msra.mxu0 %v717
        %1092 = vmatprep.subr.bf16.mxu0 0
        %1093 = vmatpush1.bf16.msra.mxu0 %v690
        %1094 = vmatprep.subr.bf16.mxu0 0
        %1095 = vmatpush2.bf16.msra.mxu0 0
        %1096 = vmatprep.subr.bf16.mxu0 0
        %1097 = vmatpush2.bf16.msra.mxu0 0
        %1098 = vmatprep.subr.bf16.mxu0 0
        %1099 = vmatpush2.bf16.msra.mxu0 0
        %1100 = vmatprep.subr.bf16.mxu0 0
        %1101 = vmatpush2.bf16.msra.mxu0 0
        %1102 = vmatprep.subr.bf16.mxu0 0
        %1103 = vmatpush2.bf16.msra.mxu0 0
        %1104 = vmatprep.subr.bf16.mxu0 0
        %1105 = vmatpush2.bf16.msra.mxu0 0
        %1106 = vmatprep.subr.bf16.mxu0 0
        %1107 = vmatpush2.bf16.msra.mxu0 0
        %1108 = vmatprep.subr.bf16.mxu0 0
        %1109 = vmatpush2.bf16.msra.mxu0 0
        %1110 = vmatprep.mubr.bf16.mxu0 0
        %1111 = vmatmul.mubr.bf16.gmra.mxu0 %v1061
        %v1112 = vpop.f32.mrf.mxu0
        %v1113 = vadd.f32 0.0, %v1112
        %v1114 = vpop.f32.mrf.mxu0
        %v1115 = vpop.f32.mrf.mxu0
        %v1116 = vadd.f32 0.0, %v1115
        %v1117 = vpop.f32.mrf.mxu0
        %1118 = vmatprep.mubr.bf16.mxu0 0
        %1119 = vmatmul.mubr.bf16.gmra.mxu0 %v1064
        %v1120 = vpop.f32.mrf.mxu0
        %v1121 = vadd.f32 0.0, %v1120
        %v1122 = vpop.f32.mrf.mxu0
        %v1123 = vpop.f32.mrf.mxu0
        %v1124 = vadd.f32 0.0, %v1123
        %v1125 = vpop.f32.mrf.mxu0
        %1126 = vmatprep.mubr.bf16.mxu0 0
        %1127 = vmatmul.mubr.bf16.gmra.mxu0 %v1067
        %v1128 = vpop.f32.mrf.mxu0
        %v1129 = vadd.f32 0.0, %v1128
        %v1130 = vpop.f32.mrf.mxu0
        %v1131 = vpop.f32.mrf.mxu0
        %v1132 = vadd.f32 0.0, %v1131
        %v1133 = vpop.f32.mrf.mxu0
        %1134 = vmatprep.mubr.bf16.mxu0 0
        %1135 = vmatmul.mubr.bf16.gmra.mxu0 %v1070
        %v1136 = vpop.f32.mrf.mxu0
        %v1137 = vadd.f32 0.0, %v1136
        %v1138 = vpop.f32.mrf.mxu0
        %v1139 = vpop.f32.mrf.mxu0
        %v1140 = vadd.f32 0.0, %v1139
        %v1141 = vpop.f32.mrf.mxu0
        %1142 = vmatprep.mubr.bf16.mxu0 0
        %1143 = vmatmul.mubr.bf16.gmra.mxu0 %v1073
        %v1144 = vpop.f32.mrf.mxu0
        %v1145 = vadd.f32 0.0, %v1144
        %v1146 = vpop.f32.mrf.mxu0
        %v1147 = vpop.f32.mrf.mxu0
        %v1148 = vadd.f32 0.0, %v1147
        %v1149 = vpop.f32.mrf.mxu0
        %1150 = vmatprep.mubr.bf16.mxu0 0
        %1151 = vmatmul.mubr.bf16.gmra.mxu0 %v1076
        %v1152 = vpop.f32.mrf.mxu0
        %v1153 = vadd.f32 0.0, %v1152
        %v1154 = vpop.f32.mrf.mxu0
        %v1155 = vpop.f32.mrf.mxu0
        %v1156 = vadd.f32 0.0, %v1155
        %v1157 = vpop.f32.mrf.mxu0
        %1158 = vdwg.mxu0
        %v1159 = vadd.f32 %v1005, %v1113
        %v1160 = vadd.f32 %v1006, %v1116
        %v1161 = vadd.f32 %v1007, %v1121
        %v1162 = vadd.f32 %v1008, %v1124
        %v1163 = vadd.f32 %v1009, %v1129
        %v1164 = vadd.f32 %v1010, %v1132
        %v1165 = vadd.f32 %v1011, %v1137
        %v1166 = vadd.f32 %v1012, %v1140
        %v1167 = vadd.f32 %v1013, %v1145
        %v1168 = vadd.f32 %v1014, %v1148
        %v1169 = vadd.f32 %v1015, %v1153
        %v1170 = vadd.f32 %v1016, %v1156
        %1171 = vst.msk [vmem:[%s1004] sm:$0xff] %vm812, %v1159
        %1172 = vst.msk [vmem:[%s1004 + $0x8] sm:$0xff] %vm812, %v1160
        %1173 = vst.msk [vmem:[%s1004 + $0x10] sm:$0xff] %vm812, %v1161
        %1174 = vst.msk [vmem:[%s1004 + $0x18] sm:$0xff] %vm812, %v1162
        %1175 = vst.msk [vmem:[%s1004 + $0x20] sm:$0xff] %vm812, %v1163
        %1176 = vst.msk [vmem:[%s1004 + $0x28] sm:$0xff] %vm812, %v1164
        %1177 = vst.msk [vmem:[%s1004 + $0x30] sm:$0xff] %vm812, %v1165
        %1178 = vst.msk [vmem:[%s1004 + $0x38] sm:$0xff] %vm812, %v1166
        %1179 = vst.msk [vmem:[%s1004 + $0x40] sm:$0xff] %vm812, %v1167
        %1180 = vst.msk [vmem:[%s1004 + $0x48] sm:$0xff] %vm812, %v1168
        %1181 = vst.msk [vmem:[%s1004 + $0x50] sm:$0xff] %vm812, %v1169
        %1182 = vst.msk [vmem:[%s1004 + $0x58] sm:$0xff] %vm812, %v1170
        %s1183 = scalar_lea.vmem [#allocation2], 288
        %v1184 = vld [vmem:[%s1183] sm:$0xff]
        %v1185 = vld [vmem:[%s1183 + $0x8] sm:$0xff]
        %v1186 = vld [vmem:[%s1183 + $0x10] sm:$0xff]
        %v1187 = vld [vmem:[%s1183 + $0x18] sm:$0xff]
        %v1188 = vld [vmem:[%s1183 + $0x20] sm:$0xff]
        %v1189 = vld [vmem:[%s1183 + $0x28] sm:$0xff]
        %v1190 = vld [vmem:[%s1183 + $0x30] sm:$0xff]
        %v1191 = vld [vmem:[%s1183 + $0x38] sm:$0xff]
        %v1192 = vld [vmem:[%s1183 + $0x40] sm:$0xff]
        %v1193 = vld [vmem:[%s1183 + $0x48] sm:$0xff]
        %v1194 = vld [vmem:[%s1183 + $0x50] sm:$0xff]
        %v1195 = vld [vmem:[%s1183 + $0x58] sm:$0xff]
        %s1196 = scalar_lea.vmem %s499, 144 [#allocation3]
        %v1197 = vld [vmem:[%s1196] sm:$0xf]
        %v1198 = vld [vmem:[%s1196 + $0x4] sm:$0xf]
        %v1199 = vld [vmem:[%s1196 + $0x8] sm:$0xf]
        %v1200 = vld [vmem:[%s1196 + $0xc] sm:$0xf]
        %v1201 = vld [vmem:[%s1196 + $0x10] sm:$0xf]
        %v1202 = vld [vmem:[%s1196 + $0x14] sm:$0xf]
        %v1203 = vld [vmem:[%s1196 + $0x18] sm:$0xf]
        %v1204 = vld [vmem:[%s1196 + $0x1c] sm:$0xf]
        %v1205 = vld [vmem:[%s1196 + $0x20] sm:$0xf]
        %v1206 = vld [vmem:[%s1196 + $0x24] sm:$0xf]
        %v1207 = vld [vmem:[%s1196 + $0x28] sm:$0xf]
        %v1208 = vld [vmem:[%s1196 + $0x2c] sm:$0xf]
        %v1221 = vunpack.c.l.b16 %v1197
        %v1222 = vunpack.c.l.b16 %v1198
        %v1223 = vunpack.c.l.b16 %v1199
        %v1224 = vunpack.c.l.b16 %v1200
        %v1225 = vunpack.c.l.b16 %v1201
        %v1226 = vunpack.c.l.b16 %v1202
        %v1227 = vunpack.c.l.b16 %v1203
        %v1228 = vunpack.c.l.b16 %v1204
        %v1229 = vunpack.c.l.b16 %v1205
        %v1230 = vunpack.c.l.b16 %v1206
        %v1231 = vunpack.c.l.b16 %v1207
        %v1232 = vunpack.c.l.b16 %v1208
        %v1233 = vpack.c.b16 %v1222, %v1221
        %v1234 = vpack.c.b16 %v1224, %v1223
        %v1235 = vpack.c.b16 %v1226, %v1225
        %v1236 = vpack.c.b16 %v1228, %v1227
        %v1237 = vpack.c.b16 %v1230, %v1229
        %v1238 = vpack.c.b16 %v1232, %v1231
        %v1240 = vsel %vm693, %v1233, 0
        %v1243 = vsel %vm693, %v1234, 0
        %v1246 = vsel %vm693, %v1235, 0
        %v1249 = vsel %vm693, %v1236, 0
        %v1252 = vsel %vm693, %v1237, 0
        %v1255 = vsel %vm693, %v1238, 0
        %1257 = vmatprep.subr.bf16.mxu0 0
        %1258 = vmatpush1.bf16.msra.mxu0 0
        %1259 = vmatprep.subr.bf16.mxu0 0
        %1260 = vmatpush1.bf16.msra.mxu0 0
        %1261 = vmatprep.subr.bf16.mxu0 0
        %1262 = vmatpush1.bf16.msra.mxu0 0
        %1263 = vmatprep.subr.bf16.mxu0 0
        %1264 = vmatpush1.bf16.msra.mxu0 0
        %1265 = vmatprep.subr.bf16.mxu0 0
        %1266 = vmatpush1.bf16.msra.mxu0 0
        %1267 = vmatprep.subr.bf16.mxu0 0
        %1268 = vmatpush1.bf16.msra.mxu0 0
        %1269 = vmatprep.subr.bf16.mxu0 0
        %1270 = vmatpush1.bf16.msra.mxu0 %v717
        %1271 = vmatprep.subr.bf16.mxu0 0
        %1272 = vmatpush1.bf16.msra.mxu0 %v690
        %1273 = vmatprep.subr.bf16.mxu0 0
        %1274 = vmatpush2.bf16.msra.mxu0 0
        %1275 = vmatprep.subr.bf16.mxu0 0
        %1276 = vmatpush2.bf16.msra.mxu0 0
        %1277 = vmatprep.subr.bf16.mxu0 0
        %1278 = vmatpush2.bf16.msra.mxu0 0
        %1279 = vmatprep.subr.bf16.mxu0 0
        %1280 = vmatpush2.bf16.msra.mxu0 0
        %1281 = vmatprep.subr.bf16.mxu0 0
        %1282 = vmatpush2.bf16.msra.mxu0 0
        %1283 = vmatprep.subr.bf16.mxu0 0
        %1284 = vmatpush2.bf16.msra.mxu0 0
        %1285 = vmatprep.subr.bf16.mxu0 0
        %1286 = vmatpush2.bf16.msra.mxu0 0
        %1287 = vmatprep.subr.bf16.mxu0 0
        %1288 = vmatpush2.bf16.msra.mxu0 0
        %1289 = vmatprep.mubr.bf16.mxu0 0
        %1290 = vmatmul.mubr.bf16.gmra.mxu0 %v1240
        %v1291 = vpop.f32.mrf.mxu0
        %v1292 = vadd.f32 0.0, %v1291
        %v1293 = vpop.f32.mrf.mxu0
        %v1294 = vpop.f32.mrf.mxu0
        %v1295 = vadd.f32 0.0, %v1294
        %v1296 = vpop.f32.mrf.mxu0
        %1297 = vmatprep.mubr.bf16.mxu0 0
        %1298 = vmatmul.mubr.bf16.gmra.mxu0 %v1243
        %v1299 = vpop.f32.mrf.mxu0
        %v1300 = vadd.f32 0.0, %v1299
        %v1301 = vpop.f32.mrf.mxu0
        %v1302 = vpop.f32.mrf.mxu0
        %v1303 = vadd.f32 0.0, %v1302
        %v1304 = vpop.f32.mrf.mxu0
        %1305 = vmatprep.mubr.bf16.mxu0 0
        %1306 = vmatmul.mubr.bf16.gmra.mxu0 %v1246
        %v1307 = vpop.f32.mrf.mxu0
        %v1308 = vadd.f32 0.0, %v1307
        %v1309 = vpop.f32.mrf.mxu0
        %v1310 = vpop.f32.mrf.mxu0
        %v1311 = vadd.f32 0.0, %v1310
        %v1312 = vpop.f32.mrf.mxu0
        %1313 = vmatprep.mubr.bf16.mxu0 0
        %1314 = vmatmul.mubr.bf16.gmra.mxu0 %v1249
        %v1315 = vpop.f32.mrf.mxu0
        %v1316 = vadd.f32 0.0, %v1315
        %v1317 = vpop.f32.mrf.mxu0
        %v1318 = vpop.f32.mrf.mxu0
        %v1319 = vadd.f32 0.0, %v1318
        %v1320 = vpop.f32.mrf.mxu0
        %1321 = vmatprep.mubr.bf16.mxu0 0
        %1322 = vmatmul.mubr.bf16.gmra.mxu0 %v1252
        %v1323 = vpop.f32.mrf.mxu0
        %v1324 = vadd.f32 0.0, %v1323
        %v1325 = vpop.f32.mrf.mxu0
        %v1326 = vpop.f32.mrf.mxu0
        %v1327 = vadd.f32 0.0, %v1326
        %v1328 = vpop.f32.mrf.mxu0
        %1329 = vmatprep.mubr.bf16.mxu0 0
        %1330 = vmatmul.mubr.bf16.gmra.mxu0 %v1255
        %v1331 = vpop.f32.mrf.mxu0
        %v1332 = vadd.f32 0.0, %v1331
        %v1333 = vpop.f32.mrf.mxu0
        %v1334 = vpop.f32.mrf.mxu0
        %v1335 = vadd.f32 0.0, %v1334
        %v1336 = vpop.f32.mrf.mxu0
        %1337 = vdwg.mxu0
        %v1338 = vadd.f32 %v1184, %v1292
        %v1339 = vadd.f32 %v1185, %v1295
        %v1340 = vadd.f32 %v1186, %v1300
        %v1341 = vadd.f32 %v1187, %v1303
        %v1342 = vadd.f32 %v1188, %v1308
        %v1343 = vadd.f32 %v1189, %v1311
        %v1344 = vadd.f32 %v1190, %v1316
        %v1345 = vadd.f32 %v1191, %v1319
        %v1346 = vadd.f32 %v1192, %v1324
        %v1347 = vadd.f32 %v1193, %v1327
        %v1348 = vadd.f32 %v1194, %v1332
        %v1349 = vadd.f32 %v1195, %v1335
        %1350 = vst.msk [vmem:[%s1183] sm:$0xff] %vm812, %v1338
        %1351 = vst.msk [vmem:[%s1183 + $0x8] sm:$0xff] %vm812, %v1339
        %1352 = vst.msk [vmem:[%s1183 + $0x10] sm:$0xff] %vm812, %v1340
        %1353 = vst.msk [vmem:[%s1183 + $0x18] sm:$0xff] %vm812, %v1341
        %1354 = vst.msk [vmem:[%s1183 + $0x20] sm:$0xff] %vm812, %v1342
        %1355 = vst.msk [vmem:[%s1183 + $0x28] sm:$0xff] %vm812, %v1343
        %1356 = vst.msk [vmem:[%s1183 + $0x30] sm:$0xff] %vm812, %v1344
        %1357 = vst.msk [vmem:[%s1183 + $0x38] sm:$0xff] %vm812, %v1345
        %1358 = vst.msk [vmem:[%s1183 + $0x40] sm:$0xff] %vm812, %v1346
        %1359 = vst.msk [vmem:[%s1183 + $0x48] sm:$0xff] %vm812, %v1347
        %1360 = vst.msk [vmem:[%s1183 + $0x50] sm:$0xff] %vm812, %v1348
        %1361 = vst.msk [vmem:[%s1183 + $0x58] sm:$0xff] %vm812, %v1349
        // Predicated region
        $region90: #{forward.5} parent=76 // pred_check
          %p1362 = pneg %p571
        $region91: #{forward.5} parent=76 // pred_check_branch
          %1364 = sbr.rel (%p1362) target = $region93
        $region92: #{forward.5} parent=76 // pred_region
          %v1365 = vld [vmem:[#allocation4] sm:$0x1]
          %v1366 = vld [vmem:[%s557] sm:$0x1]
          %v1367 = vld [vmem:[%s560] sm:$0x1]
          %v1368 = vld [vmem:[#allocation2] sm:$0xff]
          %v1369 = vld [vmem:[#allocation2 + $0x8] sm:$0xff]
          %v1370 = vld [vmem:[#allocation2 + $0x10] sm:$0xff]
          %v1371 = vld [vmem:[#allocation2 + $0x18] sm:$0xff]
          %v1372 = vld [vmem:[#allocation2 + $0x20] sm:$0xff]
          %v1373 = vld [vmem:[#allocation2 + $0x28] sm:$0xff]
          %v1374 = vld [vmem:[#allocation2 + $0x30] sm:$0xff]
          %v1375 = vld [vmem:[#allocation2 + $0x38] sm:$0xff]
          %v1376 = vld [vmem:[#allocation2 + $0x40] sm:$0xff]
          %v1377 = vld [vmem:[#allocation2 + $0x48] sm:$0xff]
          %v1378 = vld [vmem:[#allocation2 + $0x50] sm:$0xff]
          %v1379 = vld [vmem:[#allocation2 + $0x58] sm:$0xff]
          %v1381 = vlaneseq
          %v1382 = vshrl.u32 %v1381, 7
          %v1383 = vsub.s32 0, %v1382
          %v1384 = vrot.slane %v1365, %v1383
          %v1386 = vadd.f32 %v1368, %v1384
          %v1387 = vadd.f32 %v1369, %v1384
          %v1388 = vadd.f32 %v1370, %v1384
          %v1389 = vadd.f32 %v1371, %v1384
          %v1390 = vadd.f32 %v1372, %v1384
          %v1391 = vadd.f32 %v1373, %v1384
          %v1392 = vadd.f32 %v1374, %v1384
          %v1393 = vadd.f32 %v1375, %v1384
          %v1394 = vadd.f32 %v1376, %v1384
          %v1395 = vadd.f32 %v1377, %v1384
          %v1396 = vadd.f32 %v1378, %v1384
          %v1397 = vadd.f32 %v1379, %v1384
          %v1398 = vmax.f32 %v1386, 0.0
          %v1399 = vmax.f32 %v1387, 0.0
          %v1400 = vmax.f32 %v1388, 0.0
          %v1401 = vmax.f32 %v1389, 0.0
          %v1402 = vmax.f32 %v1390, 0.0
          %v1403 = vmax.f32 %v1391, 0.0
          %v1404 = vmax.f32 %v1392, 0.0
          %v1405 = vmax.f32 %v1393, 0.0
          %v1406 = vmax.f32 %v1394, 0.0
          %v1407 = vmax.f32 %v1395, 0.0
          %v1408 = vmax.f32 %v1396, 0.0
          %v1409 = vmax.f32 %v1397, 0.0
          %v1411 = vlaneseq
          %v1412 = vshrl.u32 %v1411, 7
          %v1413 = vsub.s32 0, %v1412
          %v1414 = vrot.slane %v1366, %v1413
          %v1416 = vmul.f32 %v1398, %v1414
          %v1417 = vmul.f32 %v1399, %v1414
          %v1418 = vmul.f32 %v1400, %v1414
          %v1419 = vmul.f32 %v1401, %v1414
          %v1420 = vmul.f32 %v1402, %v1414
          %v1421 = vmul.f32 %v1403, %v1414
          %v1422 = vmul.f32 %v1404, %v1414
          %v1423 = vmul.f32 %v1405, %v1414
          %v1424 = vmul.f32 %v1406, %v1414
          %v1425 = vmul.f32 %v1407, %v1414
          %v1426 = vmul.f32 %v1408, %v1414
          %v1427 = vmul.f32 %v1409, %v1414
          %v1429 = vlaneseq
          %v1430 = vshrl.u32 %v1429, 7
          %v1431 = vsub.s32 0, %v1430
          %v1432 = vrot.slane %v1367, %v1431
          %v1434 = vadd.f32 %v1416, %v1432
          %v1435 = vadd.f32 %v1417, %v1432
          %v1436 = vadd.f32 %v1418, %v1432
          %v1437 = vadd.f32 %v1419, %v1432
          %v1438 = vadd.f32 %v1420, %v1432
          %v1439 = vadd.f32 %v1421, %v1432
          %v1440 = vadd.f32 %v1422, %v1432
          %v1441 = vadd.f32 %v1423, %v1432
          %v1442 = vadd.f32 %v1424, %v1432
          %v1443 = vadd.f32 %v1425, %v1432
          %v1444 = vadd.f32 %v1426, %v1432
          %v1445 = vadd.f32 %v1427, %v1432
          %v1446 = vld [vmem:[%s825] sm:$0xff]
          %v1447 = vld [vmem:[%s825 + $0x8] sm:$0xff]
          %v1448 = vld [vmem:[%s825 + $0x10] sm:$0xff]
          %v1449 = vld [vmem:[%s825 + $0x18] sm:$0xff]
          %v1450 = vld [vmem:[%s825 + $0x20] sm:$0xff]
          %v1451 = vld [vmem:[%s825 + $0x28] sm:$0xff]
          %v1452 = vld [vmem:[%s825 + $0x30] sm:$0xff]
          %v1453 = vld [vmem:[%s825 + $0x38] sm:$0xff]
          %v1454 = vld [vmem:[%s825 + $0x40] sm:$0xff]
          %v1455 = vld [vmem:[%s825 + $0x48] sm:$0xff]
          %v1456 = vld [vmem:[%s825 + $0x50] sm:$0xff]
          %v1457 = vld [vmem:[%s825 + $0x58] sm:$0xff]
          %v1458 = vadd.f32 %v1446, %v1384
          %v1459 = vadd.f32 %v1447, %v1384
          %v1460 = vadd.f32 %v1448, %v1384
          %v1461 = vadd.f32 %v1449, %v1384
          %v1462 = vadd.f32 %v1450, %v1384
          %v1463 = vadd.f32 %v1451, %v1384
          %v1464 = vadd.f32 %v1452, %v1384
          %v1465 = vadd.f32 %v1453, %v1384
          %v1466 = vadd.f32 %v1454, %v1384
          %v1467 = vadd.f32 %v1455, %v1384
          %v1468 = vadd.f32 %v1456, %v1384
          %v1469 = vadd.f32 %v1457, %v1384
          %v1470 = vmax.f32 %v1458, 0.0
          %v1471 = vmax.f32 %v1459, 0.0
          %v1472 = vmax.f32 %v1460, 0.0
          %v1473 = vmax.f32 %v1461, 0.0
          %v1474 = vmax.f32 %v1462, 0.0
          %v1475 = vmax.f32 %v1463, 0.0
          %v1476 = vmax.f32 %v1464, 0.0
          %v1477 = vmax.f32 %v1465, 0.0
          %v1478 = vmax.f32 %v1466, 0.0
          %v1479 = vmax.f32 %v1467, 0.0
          %v1480 = vmax.f32 %v1468, 0.0
          %v1481 = vmax.f32 %v1469, 0.0
          %v1482 = vmul.f32 %v1470, %v1414
          %v1483 = vmul.f32 %v1471, %v1414
          %v1484 = vmul.f32 %v1472, %v1414
          %v1485 = vmul.f32 %v1473, %v1414
          %v1486 = vmul.f32 %v1474, %v1414
          %v1487 = vmul.f32 %v1475, %v1414
          %v1488 = vmul.f32 %v1476, %v1414
          %v1489 = vmul.f32 %v1477, %v1414
          %v1490 = vmul.f32 %v1478, %v1414
          %v1491 = vmul.f32 %v1479, %v1414
          %v1492 = vmul.f32 %v1480, %v1414
          %v1493 = vmul.f32 %v1481, %v1414
          %v1494 = vadd.f32 %v1482, %v1432
          %v1495 = vadd.f32 %v1483, %v1432
          %v1496 = vadd.f32 %v1484, %v1432
          %v1497 = vadd.f32 %v1485, %v1432
          %v1498 = vadd.f32 %v1486, %v1432
          %v1499 = vadd.f32 %v1487, %v1432
          %v1500 = vadd.f32 %v1488, %v1432
          %v1501 = vadd.f32 %v1489, %v1432
          %v1502 = vadd.f32 %v1490, %v1432
          %v1503 = vadd.f32 %v1491, %v1432
          %v1504 = vadd.f32 %v1492, %v1432
          %v1505 = vadd.f32 %v1493, %v1432
          %v1506 = vmax.f32 %v1434, %v1494
          %v1507 = vmax.f32 %v1435, %v1495
          %v1508 = vmax.f32 %v1436, %v1496
          %v1509 = vmax.f32 %v1437, %v1497
          %v1510 = vmax.f32 %v1438, %v1498
          %v1511 = vmax.f32 %v1439, %v1499
          %v1512 = vmax.f32 %v1440, %v1500
          %v1513 = vmax.f32 %v1441, %v1501
          %v1514 = vmax.f32 %v1442, %v1502
          %v1515 = vmax.f32 %v1443, %v1503
          %v1516 = vmax.f32 %v1444, %v1504
          %v1517 = vmax.f32 %v1445, %v1505
          %v1518 = vld [vmem:[%s1004] sm:$0xff]
          %v1519 = vld [vmem:[%s1004 + $0x8] sm:$0xff]
          %v1520 = vld [vmem:[%s1004 + $0x10] sm:$0xff]
          %v1521 = vld [vmem:[%s1004 + $0x18] sm:$0xff]
          %v1522 = vld [vmem:[%s1004 + $0x20] sm:$0xff]
          %v1523 = vld [vmem:[%s1004 + $0x28] sm:$0xff]
          %v1524 = vld [vmem:[%s1004 + $0x30] sm:$0xff]
          %v1525 = vld [vmem:[%s1004 + $0x38] sm:$0xff]
          %v1526 = vld [vmem:[%s1004 + $0x40] sm:$0xff]
          %v1527 = vld [vmem:[%s1004 + $0x48] sm:$0xff]
          %v1528 = vld [vmem:[%s1004 + $0x50] sm:$0xff]
          %v1529 = vld [vmem:[%s1004 + $0x58] sm:$0xff]
          %v1530 = vadd.f32 %v1518, %v1384
          %v1531 = vadd.f32 %v1519, %v1384
          %v1532 = vadd.f32 %v1520, %v1384
          %v1533 = vadd.f32 %v1521, %v1384
          %v1534 = vadd.f32 %v1522, %v1384
          %v1535 = vadd.f32 %v1523, %v1384
          %v1536 = vadd.f32 %v1524, %v1384
          %v1537 = vadd.f32 %v1525, %v1384
          %v1538 = vadd.f32 %v1526, %v1384
          %v1539 = vadd.f32 %v1527, %v1384
          %v1540 = vadd.f32 %v1528, %v1384
          %v1541 = vadd.f32 %v1529, %v1384
          %v1542 = vmax.f32 %v1530, 0.0
          %v1543 = vmax.f32 %v1531, 0.0
          %v1544 = vmax.f32 %v1532, 0.0
          %v1545 = vmax.f32 %v1533, 0.0
          %v1546 = vmax.f32 %v1534, 0.0
          %v1547 = vmax.f32 %v1535, 0.0
          %v1548 = vmax.f32 %v1536, 0.0
          %v1549 = vmax.f32 %v1537, 0.0
          %v1550 = vmax.f32 %v1538, 0.0
          %v1551 = vmax.f32 %v1539, 0.0
          %v1552 = vmax.f32 %v1540, 0.0
          %v1553 = vmax.f32 %v1541, 0.0
          %v1554 = vmul.f32 %v1542, %v1414
          %v1555 = vmul.f32 %v1543, %v1414
          %v1556 = vmul.f32 %v1544, %v1414
          %v1557 = vmul.f32 %v1545, %v1414
          %v1558 = vmul.f32 %v1546, %v1414
          %v1559 = vmul.f32 %v1547, %v1414
          %v1560 = vmul.f32 %v1548, %v1414
          %v1561 = vmul.f32 %v1549, %v1414
          %v1562 = vmul.f32 %v1550, %v1414
          %v1563 = vmul.f32 %v1551, %v1414
          %v1564 = vmul.f32 %v1552, %v1414
          %v1565 = vmul.f32 %v1553, %v1414
          %v1566 = vadd.f32 %v1554, %v1432
          %v1567 = vadd.f32 %v1555, %v1432
          %v1568 = vadd.f32 %v1556, %v1432
          %v1569 = vadd.f32 %v1557, %v1432
          %v1570 = vadd.f32 %v1558, %v1432
          %v1571 = vadd.f32 %v1559, %v1432
          %v1572 = vadd.f32 %v1560, %v1432
          %v1573 = vadd.f32 %v1561, %v1432
          %v1574 = vadd.f32 %v1562, %v1432
          %v1575 = vadd.f32 %v1563, %v1432
          %v1576 = vadd.f32 %v1564, %v1432
          %v1577 = vadd.f32 %v1565, %v1432
          %v1578 = vmax.f32 %v1506, %v1566
          %v1579 = vmax.f32 %v1507, %v1567
          %v1580 = vmax.f32 %v1508, %v1568
          %v1581 = vmax.f32 %v1509, %v1569
          %v1582 = vmax.f32 %v1510, %v1570
          %v1583 = vmax.f32 %v1511, %v1571
          %v1584 = vmax.f32 %v1512, %v1572
          %v1585 = vmax.f32 %v1513, %v1573
          %v1586 = vmax.f32 %v1514, %v1574
          %v1587 = vmax.f32 %v1515, %v1575
          %v1588 = vmax.f32 %v1516, %v1576
          %v1589 = vmax.f32 %v1517, %v1577
          %v1590 = vld [vmem:[%s1183] sm:$0xff]
          %v1591 = vld [vmem:[%s1183 + $0x8] sm:$0xff]
          %v1592 = vld [vmem:[%s1183 + $0x10] sm:$0xff]
          %v1593 = vld [vmem:[%s1183 + $0x18] sm:$0xff]
          %v1594 = vld [vmem:[%s1183 + $0x20] sm:$0xff]
          %v1595 = vld [vmem:[%s1183 + $0x28] sm:$0xff]
          %v1596 = vld [vmem:[%s1183 + $0x30] sm:$0xff]
          %v1597 = vld [vmem:[%s1183 + $0x38] sm:$0xff]
          %v1598 = vld [vmem:[%s1183 + $0x40] sm:$0xff]
          %v1599 = vld [vmem:[%s1183 + $0x48] sm:$0xff]
          %v1600 = vld [vmem:[%s1183 + $0x50] sm:$0xff]
          %v1601 = vld [vmem:[%s1183 + $0x58] sm:$0xff]
          %v1602 = vadd.f32 %v1590, %v1384
          %v1603 = vadd.f32 %v1591, %v1384
          %v1604 = vadd.f32 %v1592, %v1384
          %v1605 = vadd.f32 %v1593, %v1384
          %v1606 = vadd.f32 %v1594, %v1384
          %v1607 = vadd.f32 %v1595, %v1384
          %v1608 = vadd.f32 %v1596, %v1384
          %v1609 = vadd.f32 %v1597, %v1384
          %v1610 = vadd.f32 %v1598, %v1384
          %v1611 = vadd.f32 %v1599, %v1384
          %v1612 = vadd.f32 %v1600, %v1384
          %v1613 = vadd.f32 %v1601, %v1384
          %v1614 = vmax.f32 %v1602, 0.0
          %v1615 = vmax.f32 %v1603, 0.0
          %v1616 = vmax.f32 %v1604, 0.0
          %v1617 = vmax.f32 %v1605, 0.0
          %v1618 = vmax.f32 %v1606, 0.0
          %v1619 = vmax.f32 %v1607, 0.0
          %v1620 = vmax.f32 %v1608, 0.0
          %v1621 = vmax.f32 %v1609, 0.0
          %v1622 = vmax.f32 %v1610, 0.0
          %v1623 = vmax.f32 %v1611, 0.0
          %v1624 = vmax.f32 %v1612, 0.0
          %v1625 = vmax.f32 %v1613, 0.0
          %v1626 = vmul.f32 %v1614, %v1414
          %v1627 = vmul.f32 %v1615, %v1414
          %v1628 = vmul.f32 %v1616, %v1414
          %v1629 = vmul.f32 %v1617, %v1414
          %v1630 = vmul.f32 %v1618, %v1414
          %v1631 = vmul.f32 %v1619, %v1414
          %v1632 = vmul.f32 %v1620, %v1414
          %v1633 = vmul.f32 %v1621, %v1414
          %v1634 = vmul.f32 %v1622, %v1414
          %v1635 = vmul.f32 %v1623, %v1414
          %v1636 = vmul.f32 %v1624, %v1414
          %v1637 = vmul.f32 %v1625, %v1414
          %v1638 = vadd.f32 %v1626, %v1432
          %v1639 = vadd.f32 %v1627, %v1432
          %v1640 = vadd.f32 %v1628, %v1432
          %v1641 = vadd.f32 %v1629, %v1432
          %v1642 = vadd.f32 %v1630, %v1432
          %v1643 = vadd.f32 %v1631, %v1432
          %v1644 = vadd.f32 %v1632, %v1432
          %v1645 = vadd.f32 %v1633, %v1432
          %v1646 = vadd.f32 %v1634, %v1432
          %v1647 = vadd.f32 %v1635, %v1432
          %v1648 = vadd.f32 %v1636, %v1432
          %v1649 = vadd.f32 %v1637, %v1432
          %v1650 = vmax.f32 %v1578, %v1638
          %v1651 = vmax.f32 %v1579, %v1639
          %v1652 = vmax.f32 %v1580, %v1640
          %v1653 = vmax.f32 %v1581, %v1641
          %v1654 = vmax.f32 %v1582, %v1642
          %v1655 = vmax.f32 %v1583, %v1643
          %v1656 = vmax.f32 %v1584, %v1644
          %v1657 = vmax.f32 %v1585, %v1645
          %v1658 = vmax.f32 %v1586, %v1646
          %v1659 = vmax.f32 %v1587, %v1647
          %v1660 = vmax.f32 %v1588, %v1648
          %v1661 = vmax.f32 %v1589, %v1649
          %v1662 = vpack.c.bf16 %v1651, %v1650
          %v1663 = vpack.c.bf16 %v1653, %v1652
          %v1664 = vpack.c.bf16 %v1655, %v1654
          %v1665 = vpack.c.bf16 %v1657, %v1656
          %v1666 = vpack.c.bf16 %v1659, %v1658
          %v1667 = vpack.c.bf16 %v1661, %v1660
          %v1674 = vunpack.c.l.b16 %v1662
          %v1675 = vunpack.c.h.b16 %v1662
          %v1676 = vunpack.c.l.b16 %v1663
          %v1677 = vunpack.c.h.b16 %v1663
          %v1678 = vunpack.c.l.b16 %v1664
          %v1679 = vunpack.c.h.b16 %v1664
          %v1680 = vunpack.c.l.b16 %v1665
          %v1681 = vunpack.c.h.b16 %v1665
          %v1682 = vunpack.c.l.b16 %v1666
          %v1683 = vunpack.c.h.b16 %v1666
          %v1684 = vunpack.c.l.b16 %v1667
          %v1685 = vunpack.c.h.b16 %v1667
          %v1686 = vpack.c.b16 %v1674, %v1674
          %v1687 = vpack.c.b16 %v1675, %v1675
          %v1688 = vpack.c.b16 %v1676, %v1676
          %v1689 = vpack.c.b16 %v1677, %v1677
          %v1690 = vpack.c.b16 %v1678, %v1678
          %v1691 = vpack.c.b16 %v1679, %v1679
          %v1692 = vpack.c.b16 %v1680, %v1680
          %v1693 = vpack.c.b16 %v1681, %v1681
          %v1694 = vpack.c.b16 %v1682, %v1682
          %v1695 = vpack.c.b16 %v1683, %v1683
          %v1696 = vpack.c.b16 %v1684, %v1684
          %v1697 = vpack.c.b16 %v1685, %v1685
          %vm1710 = vcmask 519168
          %1711 = vst.msk [vmem:[%s568] sm:$0xf] %vm1710, %v1686
          %1712 = vst.msk [vmem:[%s568 + $0x4] sm:$0xf] %vm1710, %v1687
          %1713 = vst.msk [vmem:[%s568 + $0x8] sm:$0xf] %vm1710, %v1688
          %1714 = vst.msk [vmem:[%s568 + $0xc] sm:$0xf] %vm1710, %v1689
          %1715 = vst.msk [vmem:[%s568 + $0x10] sm:$0xf] %vm1710, %v1690
          %1716 = vst.msk [vmem:[%s568 + $0x14] sm:$0xf] %vm1710, %v1691
          %1717 = vst.msk [vmem:[%s568 + $0x18] sm:$0xf] %vm1710, %v1692
          %1718 = vst.msk [vmem:[%s568 + $0x1c] sm:$0xf] %vm1710, %v1693
          %1719 = vst.msk [vmem:[%s568 + $0x20] sm:$0xf] %vm1710, %v1694
          %1720 = vst.msk [vmem:[%s568 + $0x24] sm:$0xf] %vm1710, %v1695
          %1721 = vst.msk [vmem:[%s568 + $0x28] sm:$0xf] %vm1710, %v1696
          %1722 = vst.msk [vmem:[%s568 + $0x2c] sm:$0xf] %vm1710, %v1697
        $region93: #{forward.5} parent=76 // pred_fallthru
          _
        %s1723 = smul.u32 12, %s22
        %p1724 = scmp.lt.s32.totalorder %s1723, 35
        %s1725 = scalar_select %p1724, %s1723, 35
        %p1726 = scmp.lt.s32.totalorder %s23, 0
        %s1727 = scalar_select %p1726, %s23, 0
        %s1728 = sadd.s32 %s1727, %s1725
        %s1729 = smul.addr %s1728, 4
        %s1730 = scalar_lea.vmem %s5, %s1729
        // Predicated region
        $region94: #{forward.5} parent=76 // pred_check
          %p1731 = pneg %p190
        $region95: #{forward.5} parent=76 // pred_check_branch
          %1733 = sbr.rel (%p1731) target = $region97
        $region96: #{forward.5} parent=76 // pred_region
          %s1734 = smul.u32 12, %s22
        $region97: #{forward.5} parent=76 // pred_fallthru
          _
      $region77: #{forward.5} parent=5 // pred_fallthru
        _
      %p1735 = scmp.le.s32.totalorder 2, %s12
      // Predicated region
      $region98: #{forward.5} parent=5 // pred_check
        %p1736 = pneg %p1735
      $region99: #{forward.5} parent=5 // pred_check_branch
        %1738 = sbr.rel (%p1736) target = $region101
      $region100: #{forward.5} parent=5 // pred_region
        %s1739 = ssub.s32 %s12, 2
        // Predicated region
        $region102: #{forward.5} parent=100 // pred_check
          %p1740 = pneg %p196
        $region103: #{forward.5} parent=100 // pred_check_branch
          %1742 = sbr.rel (%p1740) target = $region105
        $region104: #{forward.5} parent=100 // pred_region
          %s1743 = smul.u32 12, %s25
          %p1744 = scmp.lt.s32.totalorder %s1743, 35
          %s1745 = scalar_select %p1744, %s1743, 35
          %p1746 = scmp.lt.s32.totalorder %s26, 0
          %s1747 = scalar_select %p1746, %s26, 0
          %s1748 = sadd.s32 %s1747, %s1745
          %s1749 = smul.addr %s1748, 4
          %s1750 = scalar_lea.vmem %s5, %s1749
        $region105: #{forward.5} parent=100 // pred_fallthru
          _
      $region101: #{forward.5} parent=5 // pred_fallthru
        _
    $region6: #{forward.5} parent=1 // loop_footer
      %s16 = sadd.s32 1, %s12
    $region7: #{forward.5} parent=1 // loop_footer_branch
      %11 = sbr.rel target = $region3
    $region8: #{forward.5} parent=1 // loop_exit
      _
    %1751 = vsyncpa [#allocation5], 1
    %s1752 = scalar_lea.sflag [#allocation5], 1
    %1753 = vsyncpa %s1752, 1

// kernel: forward.7
$region0: #{forward.7}
  #allocation0 [shape = 'u32[]', space=smem, size = 0x4, offset = 0x4, fixed_abs, tag = 'smem constant byte address 0x4 - core index']
  #allocation1 [shape = 'u32[144,128]{1,0:T(1,128)}', space=vmem, size = 0x12000, scoped, tag = 'internal scratch']
  #allocation2 [shape = 'f32[1,2,128]{2,1,0:T(2,128)}', space=vmem, size = 0x400, scoped, tag = 'scratch operand']
  %s0 = inlined_call_operand.vmem [shape: bf16[1,2,2048], index: 0, kind: input, shape index: {}]
  %s1 = inlined_call_operand.vmem [shape: bf16[2048,512], index: 1, kind: input, shape index: {}]
  %s2 = inlined_call_operand.vmem [shape: f32[1,512], index: 2, kind: input, shape index: {}]
  %s3 = inlined_call_operand.vmem [shape: f32[1,512], index: 3, kind: input, shape index: {}]
  %s4 = inlined_call_operand.vmem [shape: f32[1,512], index: 4, kind: input, shape index: {}]
  %s5 = inlined_call_operand.vmem [shape: bf16[2,512], index: 5, kind: output, shape index: {}]
  %s6 = sld [smem:[#allocation0]]
  $region102: #{forward.7} parent=0
    _
  %s8 = ssub.s32 1, %s6
  %s9 = scalar_select 0, %s8, %s6
  $region1: #{forward.7} parent=0
    #allocation3 [shape = 'u8[262144]{0}', space=vmem, size = 0x40000, scoped, tag = 'input window, operand 1']
    loop: start=0, step=1, limit=18
    $region2: #{forward.7} parent=1 // loop_pre_header
      _
    $region3: #{forward.7} parent=1 // loop_header
      %s11 = sphi 0, %s15
      %p12 = scmp.ge.s32.totalorder %s11, 18
      %s18 = sphi 0, %s37
      %s19 = sphi 0, %s33
      %s20 = sphi 0, %s29
      %s21 = sphi 0, %s18
      %s22 = sphi 0, %s19
      %s23 = sphi 0, %s20
      %s24 = sphi 0, %s21
      %s25 = sphi 0, %s22
      %s26 = sphi 0, %s23
      %s42 = sphi 0, %s44
      %s45 = sphi 0, %s42
      %s46 = sphi 0, %s45
      %s62 = sphi 0, %s46
      %s70 = sphi 0, %s72
      %s73 = sphi 0, %s70
      %s74 = sphi 0, %s73
      %s90 = sphi 0, %s74
      %s96 = sphi 0, %s98
      %s99 = sphi 0, %s96
      %s100 = sphi 0, %s99
      %s116 = sphi 0, %s100
      %s122 = sphi 0, %s124
      %s125 = sphi 0, %s122
      %s126 = sphi 0, %s125
      %s142 = sphi 0, %s126
      %s148 = sphi 0, %s150
      %s151 = sphi 0, %s148
      %s152 = sphi 0, %s151
      %s168 = sphi 0, %s152
      %s176 = sphi 0, %s178
      %s179 = sphi 0, %s176
      %s180 = sphi 0, %s179
      %s196 = sphi 0, %s180
    $region4: #{forward.7} parent=1 // loop_header_branch
      %14 = sbr.rel (%p12) target = $region8
    $region5: #{forward.7} parent=1 // loop_body
      %s16 = ssub.s32 %s11, 1
      %s17 = ssub.s32 %s11, 2
      %s27 = sadd.s32 1, %s20
      %p28 = scmp.ge.s32.totalorder %s27, 4
      %s29 = scalar_select %p28, 0, %s27
      %s30 = sadd.s32 1, %s19
      %s31 = scalar_select %p28, %s30, %s19
      %p32 = scmp.ge.s32.totalorder %s31, 4
      %s33 = scalar_select %p32, 0, %s31
      %s34 = sadd.s32 1, %s18
      %s35 = scalar_select %p32, %s34, %s18
      %p36 = scmp.ge.s32.totalorder %s35, 1
      %s37 = scalar_select %p36, 0, %s35
      %s38 = ssub.s32 %s18, %s37
      %s39 = ssub.s32 %s20, %s29
      %s40 = sor.u32 %s38, %s39
      %p41 = scmp.eq.s32.totalorder %s40, 0
      %s43 = sadd.s32 %s42, 1
      %s44 = scalar_select %p41, %s42, %s43
      %p47 = pneg %p41
      %p48 = scmp.eq.s32.totalorder %s11, 15
      %p49 = por %p47, %p48
      %p50 = scmp.ne.s32.totalorder %s42, %s45
      %p51 = scmp.eq.s32.totalorder %s11, 0
      %p52 = por %p50, %p51
      %p53 = scmp.ne.s32.totalorder %s42, %s45
      %p54 = scmp.eq.s32.totalorder %s16, 15
      %p55 = por %p53, %p54
      %p56 = scmp.ne.s32.totalorder %s45, %s46
      %p57 = scmp.eq.s32.totalorder %s16, 0
      %p58 = por %p56, %p57
      %p59 = scmp.ne.s32.totalorder %s45, %s46
      %p60 = scmp.eq.s32.totalorder %s17, 15
      %p61 = por %p59, %p60
      %p63 = scmp.ne.s32.totalorder %s46, %s62
      %p64 = scmp.eq.s32.totalorder %s17, 0
      %p65 = por %p63, %p64
      %s66 = ssub.s32 %s20, %s29
      %s67 = ssub.s32 %s19, %s33
      %s68 = sor.u32 %s66, %s67
      %p69 = scmp.eq.s32.totalorder %s68, 0
      %s71 = sadd.s32 %s70, 1
      %s72 = scalar_select %p69, %s70, %s71
      %p75 = pneg %p69
      %p76 = scmp.eq.s32.totalorder %s11, 15
      %p77 = por %p75, %p76
      %p78 = scmp.ne.s32.totalorder %s70, %s73
      %p79 = scmp.eq.s32.totalorder %s11, 0
      %p80 = por %p78, %p79
      %p81 = scmp.ne.s32.totalorder %s70, %s73
      %p82 = scmp.eq.s32.totalorder %s16, 15
      %p83 = por %p81, %p82
      %p84 = scmp.ne.s32.totalorder %s73, %s74
      %p85 = scmp.eq.s32.totalorder %s16, 0
      %p86 = por %p84, %p85
      %p87 = scmp.ne.s32.totalorder %s73, %s74
      %p88 = scmp.eq.s32.totalorder %s17, 15
      %p89 = por %p87, %p88
      %p91 = scmp.ne.s32.totalorder %s74, %s90
      %p92 = scmp.eq.s32.totalorder %s17, 0
      %p93 = por %p91, %p92
      %s94 = ssub.s32 %s19, %s33
      %p95 = scmp.eq.s32.totalorder %s94, 0
      %s97 = sadd.s32 %s96, 1
      %s98 = scalar_select %p95, %s96, %s97
      %p101 = pneg %p95
      %p102 = scmp.eq.s32.totalorder %s11, 15
      %p103 = por %p101, %p102
      %p104 = scmp.ne.s32.totalorder %s96, %s99
      %p105 = scmp.eq.s32.totalorder %s11, 0
      %p106 = por %p104, %p105
      %p107 = scmp.ne.s32.totalorder %s96, %s99
      %p108 = scmp.eq.s32.totalorder %s16, 15
      %p109 = por %p107, %p108
      %p110 = scmp.ne.s32.totalorder %s99, %s100
      %p111 = scmp.eq.s32.totalorder %s16, 0
      %p112 = por %p110, %p111
      %p113 = scmp.ne.s32.totalorder %s99, %s100
      %p114 = scmp.eq.s32.totalorder %s17, 15
      %p115 = por %p113, %p114
      %p117 = scmp.ne.s32.totalorder %s100, %s116
      %p118 = scmp.eq.s32.totalorder %s17, 0
      %p119 = por %p117, %p118
      %s120 = ssub.s32 %s19, %s33
      %p121 = scmp.eq.s32.totalorder %s120, 0
      %s123 = sadd.s32 %s122, 1
      %s124 = scalar_select %p121, %s122, %s123
      %p127 = pneg %p121
      %p128 = scmp.eq.s32.totalorder %s11, 15
      %p129 = por %p127, %p128
      %p130 = scmp.ne.s32.totalorder %s122, %s125
      %p131 = scmp.eq.s32.totalorder %s11, 0
      %p132 = por %p130, %p131
      %p133 = scmp.ne.s32.totalorder %s122, %s125
      %p134 = scmp.eq.s32.totalorder %s16, 15
      %p135 = por %p133, %p134
      %p136 = scmp.ne.s32.totalorder %s125, %s126
      %p137 = scmp.eq.s32.totalorder %s16, 0
      %p138 = por %p136, %p137
      %p139 = scmp.ne.s32.totalorder %s125, %s126
      %p140 = scmp.eq.s32.totalorder %s17, 15
      %p141 = por %p139, %p140
      %p143 = scmp.ne.s32.totalorder %s126, %s142
      %p144 = scmp.eq.s32.totalorder %s17, 0
      %p145 = por %p143, %p144
      %s146 = ssub.s32 %s19, %s33
      %p147 = scmp.eq.s32.totalorder %s146, 0
      %s149 = sadd.s32 %s148, 1
      %s150 = scalar_select %p147, %s148, %s149
      %p153 = pneg %p147
      %p154 = scmp.eq.s32.totalorder %s11, 15
      %p155 = por %p153, %p154
      %p156 = scmp.ne.s32.totalorder %s148, %s151
      %p157 = scmp.eq.s32.totalorder %s11, 0
      %p158 = por %p156, %p157
      %p159 = scmp.ne.s32.totalorder %s148, %s151
      %p160 = scmp.eq.s32.totalorder %s16, 15
      %p161 = por %p159, %p160
      %p162 = scmp.ne.s32.totalorder %s151, %s152
      %p163 = scmp.eq.s32.totalorder %s16, 0
      %p164 = por %p162, %p163
      %p165 = scmp.ne.s32.totalorder %s151, %s152
      %p166 = scmp.eq.s32.totalorder %s17, 15
      %p167 = por %p165, %p166
      %p169 = scmp.ne.s32.totalorder %s152, %s168
      %p170 = scmp.eq.s32.totalorder %s17, 0
      %p171 = por %p169, %p170
      %s172 = ssub.s32 %s18, %s37
      %s173 = ssub.s32 %s19, %s33
      %s174 = sor.u32 %s172, %s173
      %p175 = scmp.eq.s32.totalorder %s174, 0
      %s177 = sadd.s32 %s176, 1
      %s178 = scalar_select %p175, %s176, %s177
      %p181 = pneg %p175
      %p182 = scmp.eq.s32.totalorder %s11, 15
      %p183 = por %p181, %p182
      %p184 = scmp.ne.s32.totalorder %s176, %s179
      %p185 = scmp.eq.s32.totalorder %s11, 0
      %p186 = por %p184, %p185
      %p187 = scmp.ne.s32.totalorder %s176, %s179
      %p188 = scmp.eq.s32.totalorder %s16, 15
      %p189 = por %p187, %p188
      %p190 = scmp.ne.s32.totalorder %s179, %s180
      %p191 = scmp.eq.s32.totalorder %s16, 0
      %p192 = por %p190, %p191
      %p193 = scmp.ne.s32.totalorder %s179, %s180
      %p194 = scmp.eq.s32.totalorder %s17, 15
      %p195 = por %p193, %p194
      %p197 = scmp.ne.s32.totalorder %s180, %s196
      %p198 = scmp.eq.s32.totalorder %s17, 0
      %p199 = por %p197, %p198
      %p200 = scmp.le.s32.totalorder 1, %s11
      %p201 = scmp.lt.s32.totalorder %s11, 17
      %p202 = pnand %p200, %p201
      %p203 = pneg %p202
      // Predicated region
      $region9: #{forward.7} parent=5 // pred_check
        _
      $region10: #{forward.7} parent=5 // pred_check_branch
        %205 = sbr.rel (%p202) target = $region12
      $region11: #{forward.7} parent=5 // pred_region
        %s206 = ssub.s32 %s11, 1
      $region12: #{forward.7} parent=5 // pred_fallthru
        _
      %p207 = scmp.lt.s32.totalorder %s11, 16
      // Predicated region
      $region13: #{forward.7} parent=5 // pred_check
        %p208 = pneg %p207
      $region14: #{forward.7} parent=5 // pred_check_branch
        %210 = sbr.rel (%p208) target = $region16
      $region15: #{forward.7} parent=5 // pred_region
        // Predicated region
        $region17: #{forward.7} parent=15 // pred_check
          %p211 = pneg %p52
        $region18: #{forward.7} parent=15 // pred_check_branch
          %213 = sbr.rel (%p211) target = $region20
        $region19: #{forward.7} parent=15 // pred_region
          %s214 = smul.u32 4, %s20
          %p215 = scmp.lt.s32.totalorder %s18, 0
          %s216 = scalar_select %p215, %s18, 0
          %p217 = scmp.lt.s32.totalorder %s214, 15
          %s218 = scalar_select %p217, %s214, 15
          %s219 = smul.addr %s216, 16
          %s220 = sadd.s32 %s218, %s219
          %s221 = scalar_lea.vmem %s0, %s220
          %s222 = smul.u32 4, %s20
        $region20: #{forward.7} parent=15 // pred_fallthru
          _
        // Predicated region
        $region21: #{forward.7} parent=15 // pred_check
          %p223 = pneg %p80
        $region22: #{forward.7} parent=15 // pred_check_branch
          %225 = sbr.rel (%p223) target = $region24
        $region23: #{forward.7} parent=15 // pred_region
          %s226 = sand.u32 %s70, 1
          %s227 = sand.u32 %s70, 1
          %s228 = smul.addr %s227, 256
          %s229 = scalar_lea.vmem [#allocation3], %s228
          %s230 = smul.u32 64, %s20
          %s231 = smul.addr %s230, 4
          %s232 = sadd.s32 %s19, %s231
          %s233 = smul.addr %s232, 4
          %s234 = scalar_lea.vmem %s1, %s233
          // Predicated region
          $region25: #{forward.7} parent=23 // pred_check
            _
          $region26: #{forward.7} parent=23 // pred_check_branch
            %236 = sbr.rel (0) target = $region28
          $region27: #{forward.7} parent=23 // pred_region
            // Predicated region
            $region29: #{forward.7} parent=27 // pred_check
              _
            $region30: #{forward.7} parent=27 // pred_check_branch
              %238 = sbr.rel target = $region32
            $region31: #{forward.7} parent=27 // pred_region
              // Predicated region
              $region44: #{forward.7} parent=31 // pred_check
                _
              $region45: #{forward.7} parent=31 // pred_check_branch
                %380 = sbr.rel (0) target = $region47
              $region46: #{forward.7} parent=31 // pred_region
                loop: start=0, step=1, limit=1
                $region48: #{forward.7} parent=46 // loop_pre_header
                  _
                $region49: #{forward.7} parent=46 // loop_header
                  %s382 = sphi 0, %s386
                  %p383 = scmp.ge.s32.totalorder %s382, 1
                  %s387 = sphi %s234, %s234
                  %s388 = sphi %s229, %s229
                $region50: #{forward.7} parent=46 // loop_header_branch
                  %385 = sbr.rel (%p383) target = $region54
                $region51: #{forward.7} parent=46 // loop_body
                  _
                $region52: #{forward.7} parent=46 // loop_footer
                  %s386 = sadd.s32 1, %s382
                $region53: #{forward.7} parent=46 // loop_footer_branch
                  %381 = sbr.rel target = $region49
                $region54: #{forward.7} parent=46 // loop_exit
                  _
                %s390 = ssub.s32 16, 1
                loop: start=0, step=1, limit=1
                $region55: #{forward.7} parent=46 // loop_pre_header
                  _
                $region56: #{forward.7} parent=46 // loop_header
                  %s392 = sphi 0, %s396
                  %p393 = scmp.ge.s32.totalorder %s392, 1
                  %s397 = sphi %s234, %s234
                  %s398 = sphi %s229, %s229
                $region57: #{forward.7} parent=46 // loop_header_branch
                  %395 = sbr.rel (%p393) target = $region61
                $region58: #{forward.7} parent=46 // loop_body
                  %v399 = vld [vmem:[%s397] sm:%s390]
                  %400 = vst [vmem:[%s398] sm:%s390] %v399
                  %v401 = vld [vmem:[%s397 + $0x10] sm:%s390]
                  %402 = vst [vmem:[%s398 + $0x4] sm:%s390] %v401
                  %v403 = vld [vmem:[%s397 + $0x20] sm:%s390]
                  %404 = vst [vmem:[%s398 + $0x8] sm:%s390] %v403
                  %v405 = vld [vmem:[%s397 + $0x30] sm:%s390]
                  %406 = vst [vmem:[%s398 + $0xc] sm:%s390] %v405
                  %v407 = vld [vmem:[%s397 + $0x40] sm:%s390]
                  %408 = vst [vmem:[%s398 + $0x10] sm:%s390] %v407
                  %v409 = vld [vmem:[%s397 + $0x50] sm:%s390]
                  %410 = vst [vmem:[%s398 + $0x14] sm:%s390] %v409
                  %v411 = vld [vmem:[%s397 + $0x60] sm:%s390]
                  %412 = vst [vmem:[%s398 + $0x18] sm:%s390] %v411
                  %v413 = vld [vmem:[%s397 + $0x70] sm:%s390]
                  %414 = vst [vmem:[%s398 + $0x1c] sm:%s390] %v413
                  %v415 = vld [vmem:[%s397 + $0x80] sm:%s390]
                  %416 = vst [vmem:[%s398 + $0x20] sm:%s390] %v415
                  %v417 = vld [vmem:[%s397 + $0x90] sm:%s390]
                  %418 = vst [vmem:[%s398 + $0x24] sm:%s390] %v417
                  %v419 = vld [vmem:[%s397 + $0xa0] sm:%s390]
                  %420 = vst [vmem:[%s398 + $0x28] sm:%s390] %v419
                  %v421 = vld [vmem:[%s397 + $0xb0] sm:%s390]
                  %422 = vst [vmem:[%s398 + $0x2c] sm:%s390] %v421
                  %v423 = vld [vmem:[%s397 + $0xc0] sm:%s390]
                  %424 = vst [vmem:[%s398 + $0x30] sm:%s390] %v423
                  %v425 = vld [vmem:[%s397 + $0xd0] sm:%s390]
                  %426 = vst [vmem:[%s398 + $0x34] sm:%s390] %v425
                  %v427 = vld [vmem:[%s397 + $0xe0] sm:%s390]
                  %428 = vst [vmem:[%s398 + $0x38] sm:%s390] %v427
                  %v429 = vld [vmem:[%s397 + $0xf0] sm:%s390]
                  %430 = vst [vmem:[%s398 + $0x3c] sm:%s390] %v429
                  %v431 = vld [vmem:[%s397 + $0x100] sm:%s390]
                  %432 = vst [vmem:[%s398 + $0x40] sm:%s390] %v431
                  %v433 = vld [vmem:[%s397 + $0x110] sm:%s390]
                  %434 = vst [vmem:[%s398 + $0x44] sm:%s390] %v433
                  %v435 = vld [vmem:[%s397 + $0x120] sm:%s390]
                  %436 = vst [vmem:[%s398 + $0x48] sm:%s390] %v435
                  %v437 = vld [vmem:[%s397 + $0x130] sm:%s390]
                  %438 = vst [vmem:[%s398 + $0x4c] sm:%s390] %v437
                  %v439 = vld [vmem:[%s397 + $0x140] sm:%s390]
                  %440 = vst [vmem:[%s398 + $0x50] sm:%s390] %v439
                  %v441 = vld [vmem:[%s397 + $0x150] sm:%s390]
                  %442 = vst [vmem:[%s398 + $0x54] sm:%s390] %v441
                  %v443 = vld [vmem:[%s397 + $0x160] sm:%s390]
                  %444 = vst [vmem:[%s398 + $0x58] sm:%s390] %v443
                  %v445 = vld [vmem:[%s397 + $0x170] sm:%s390]
                  %446 = vst [vmem:[%s398 + $0x5c] sm:%s390] %v445
                  %v447 = vld [vmem:[%s397 + $0x180] sm:%s390]
                  %448 = vst [vmem:[%s398 + $0x60] sm:%s390] %v447
                  %v449 = vld [vmem:[%s397 + $0x190] sm:%s390]
                  %450 = vst [vmem:[%s398 + $0x64] sm:%s390] %v449
                  %v451 = vld [vmem:[%s397 + $0x1a0] sm:%s390]
                  %452 = vst [vmem:[%s398 + $0x68] sm:%s390] %v451
                  %v453 = vld [vmem:[%s397 + $0x1b0] sm:%s390]
                  %454 = vst [vmem:[%s398 + $0x6c] sm:%s390] %v453
                  %v455 = vld [vmem:[%s397 + $0x1c0] sm:%s390]
                  %456 = vst [vmem:[%s398 + $0x70] sm:%s390] %v455
                  %v457 = vld [vmem:[%s397 + $0x1d0] sm:%s390]
                  %458 = vst [vmem:[%s398 + $0x74] sm:%s390] %v457
                  %v459 = vld [vmem:[%s397 + $0x1e0] sm:%s390]
                  %460 = vst [vmem:[%s398 + $0x78] sm:%s390] %v459
                  %v461 = vld [vmem:[%s397 + $0x1f0] sm:%s390]
                  %462 = vst [vmem:[%s398 + $0x7c] sm:%s390] %v461
                  %v463 = vld [vmem:[%s397 + $0x200] sm:%s390]
                  %464 = vst [vmem:[%s398 + $0x80] sm:%s390] %v463
                  %v465 = vld [vmem:[%s397 + $0x210] sm:%s390]
                  %466 = vst [vmem:[%s398 + $0x84] sm:%s390] %v465
                  %v467 = vld [vmem:[%s397 + $0x220] sm:%s390]
                  %468 = vst [vmem:[%s398 + $0x88] sm:%s390] %v467
                  %v469 = vld [vmem:[%s397 + $0x230] sm:%s390]
                  %470 = vst [vmem:[%s398 + $0x8c] sm:%s390] %v469
                  %v471 = vld [vmem:[%s397 + $0x240] sm:%s390]
                  %472 = vst [vmem:[%s398 + $0x90] sm:%s390] %v471
                  %v473 = vld [vmem:[%s397 + $0x250] sm:%s390]
                  %474 = vst [vmem:[%s398 + $0x94] sm:%s390] %v473
                  %v475 = vld [vmem:[%s397 + $0x260] sm:%s390]
                  %476 = vst [vmem:[%s398 + $0x98] sm:%s390] %v475
                  %v477 = vld [vmem:[%s397 + $0x270] sm:%s390]
                  %478 = vst [vmem:[%s398 + $0x9c] sm:%s390] %v477
                  %v479 = vld [vmem:[%s397 + $0x280] sm:%s390]
                  %480 = vst [vmem:[%s398 + $0xa0] sm:%s390] %v479
                  %v481 = vld [vmem:[%s397 + $0x290] sm:%s390]
                  %482 = vst [vmem:[%s398 + $0xa4] sm:%s390] %v481
                  %v483 = vld [vmem:[%s397 + $0x2a0] sm:%s390]
                  %484 = vst [vmem:[%s398 + $0xa8] sm:%s390] %v483
                  %v485 = vld [vmem:[%s397 + $0x2b0] sm:%s390]
                  %486 = vst [vmem:[%s398 + $0xac] sm:%s390] %v485
                  %v487 = vld [vmem:[%s397 + $0x2c0] sm:%s390]
                  %488 = vst [vmem:[%s398 + $0xb0] sm:%s390] %v487
                  %v489 = vld [vmem:[%s397 + $0x2d0] sm:%s390]
                  %490 = vst [vmem:[%s398 + $0xb4] sm:%s390] %v489
                  %v491 = vld [vmem:[%s397 + $0x2e0] sm:%s390]
                  %492 = vst [vmem:[%s398 + $0xb8] sm:%s390] %v491
                  %v493 = vld [vmem:[%s397 + $0x2f0] sm:%s390]
                  %494 = vst [vmem:[%s398 + $0xbc] sm:%s390] %v493
                  %v495 = vld [vmem:[%s397 + $0x300] sm:%s390]
                  %496 = vst [vmem:[%s398 + $0xc0] sm:%s390] %v495
                  %v497 = vld [vmem:[%s397 + $0x310] sm:%s390]
                  %498 = vst [vmem:[%s398 + $0xc4] sm:%s390] %v497
                  %v499 = vld [vmem:[%s397 + $0x320] sm:%s390]
                  %500 = vst [vmem:[%s398 + $0xc8] sm:%s390] %v499
                  %v501 = vld [vmem:[%s397 + $0x330] sm:%s390]
                  %502 = vst [vmem:[%s398 + $0xcc] sm:%s390] %v501
                  %v503 = vld [vmem:[%s397 + $0x340] sm:%s390]
                  %504 = vst [vmem:[%s398 + $0xd0] sm:%s390] %v503
                  %v505 = vld [vmem:[%s397 + $0x350] sm:%s390]
                  %506 = vst [vmem:[%s398 + $0xd4] sm:%s390] %v505
                  %v507 = vld [vmem:[%s397 + $0x360] sm:%s390]
                  %508 = vst [vmem:[%s398 + $0xd8] sm:%s390] %v507
                  %v509 = vld [vmem:[%s397 + $0x370] sm:%s390]
                  %510 = vst [vmem:[%s398 + $0xdc] sm:%s390] %v509
                  %v511 = vld [vmem:[%s397 + $0x380] sm:%s390]
                  %512 = vst [vmem:[%s398 + $0xe0] sm:%s390] %v511
                  %v513 = vld [vmem:[%s397 + $0x390] sm:%s390]
                  %514 = vst [vmem:[%s398 + $0xe4] sm:%s390] %v513
                  %v515 = vld [vmem:[%s397 + $0x3a0] sm:%s390]
                  %516 = vst [vmem:[%s398 + $0xe8] sm:%s390] %v515
                  %v517 = vld [vmem:[%s397 + $0x3b0] sm:%s390]
                  %518 = vst [vmem:[%s398 + $0xec] sm:%s390] %v517
                  %v519 = vld [vmem:[%s397 + $0x3c0] sm:%s390]
                  %520 = vst [vmem:[%s398 + $0xf0] sm:%s390] %v519
                  %v521 = vld [vmem:[%s397 + $0x3d0] sm:%s390]
                  %522 = vst [vmem:[%s398 + $0xf4] sm:%s390] %v521
                  %v523 = vld [vmem:[%s397 + $0x3e0] sm:%s390]
                  %524 = vst [vmem:[%s398 + $0xf8] sm:%s390] %v523
                  %v525 = vld [vmem:[%s397 + $0x3f0] sm:%s390]
                  %526 = vst [vmem:[%s398 + $0xfc] sm:%s390] %v525
                $region59: #{forward.7} parent=46 // loop_footer
                  %s396 = sadd.s32 1, %s392
                $region60: #{forward.7} parent=46 // loop_footer_branch
                  %391 = sbr.rel target = $region56
                $region61: #{forward.7} parent=46 // loop_exit
                  _
              $region47: #{forward.7} parent=31 // pred_fallthru
                _
            $region32: #{forward.7} parent=27 // pred_fallthru
              _
            // Predicated region
            $region33: #{forward.7} parent=27 // pred_check
              _
            $region34: #{forward.7} parent=27 // pred_check_branch
              %240 = sbr.rel (0) target = $region36
            $region35: #{forward.7} parent=27 // pred_region
              %s242 = ssub.s32 16, 1
              loop: start=0, step=1, limit=1
              $region37: #{forward.7} parent=35 // loop_pre_header
                _
              $region38: #{forward.7} parent=35 // loop_header
                %s244 = sphi 0, %s248
                %p245 = scmp.ge.s32.totalorder %s244, 1
                %s249 = sphi %s234, %s234
                %s250 = sphi %s229, %s229
              $region39: #{forward.7} parent=35 // loop_header_branch
                %247 = sbr.rel (%p245) target = $region43
              $region40: #{forward.7} parent=35 // loop_body
                %v251 = vld [vmem:[%s249] sm:%s242]
                %252 = vst [vmem:[%s250] sm:%s242] %v251
                %v253 = vld [vmem:[%s249 + $0x10] sm:%s242]
                %254 = vst [vmem:[%s250 + $0x4] sm:%s242] %v253
                %v255 = vld [vmem:[%s249 + $0x20] sm:%s242]
                %256 = vst [vmem:[%s250 + $0x8] sm:%s242] %v255
                %v257 = vld [vmem:[%s249 + $0x30] sm:%s242]
                %258 = vst [vmem:[%s250 + $0xc] sm:%s242] %v257
                %v259 = vld [vmem:[%s249 + $0x40] sm:%s242]
                %260 = vst [vmem:[%s250 + $0x10] sm:%s242] %v259
                %v261 = vld [vmem:[%s249 + $0x50] sm:%s242]
                %262 = vst [vmem:[%s250 + $0x14] sm:%s242] %v261
                %v263 = vld [vmem:[%s249 + $0x60] sm:%s242]
                %264 = vst [vmem:[%s250 + $0x18] sm:%s242] %v263
                %v265 = vld [vmem:[%s249 + $0x70] sm:%s242]
                %266 = vst [vmem:[%s250 + $0x1c] sm:%s242] %v265
                %v267 = vld [vmem:[%s249 + $0x80] sm:%s242]
                %268 = vst [vmem:[%s250 + $0x20] sm:%s242] %v267
                %v269 = vld [vmem:[%s249 + $0x90] sm:%s242]
                %270 = vst [vmem:[%s250 + $0x24] sm:%s242] %v269
                %v271 = vld [vmem:[%s249 + $0xa0] sm:%s242]
                %272 = vst [vmem:[%s250 + $0x28] sm:%s242] %v271
                %v273 = vld [vmem:[%s249 + $0xb0] sm:%s242]
                %274 = vst [vmem:[%s250 + $0x2c] sm:%s242] %v273
                %v275 = vld [vmem:[%s249 + $0xc0] sm:%s242]
                %276 = vst [vmem:[%s250 + $0x30] sm:%s242] %v275
                %v277 = vld [vmem:[%s249 + $0xd0] sm:%s242]
                %278 = vst [vmem:[%s250 + $0x34] sm:%s242] %v277
                %v279 = vld [vmem:[%s249 + $0xe0] sm:%s242]
                %280 = vst [vmem:[%s250 + $0x38] sm:%s242] %v279
                %v281 = vld [vmem:[%s249 + $0xf0] sm:%s242]
                %282 = vst [vmem:[%s250 + $0x3c] sm:%s242] %v281
                %v283 = vld [vmem:[%s249 + $0x100] sm:%s242]
                %284 = vst [vmem:[%s250 + $0x40] sm:%s242] %v283
                %v285 = vld [vmem:[%s249 + $0x110] sm:%s242]
                %286 = vst [vmem:[%s250 + $0x44] sm:%s242] %v285
                %v287 = vld [vmem:[%s249 + $0x120] sm:%s242]
                %288 = vst [vmem:[%s250 + $0x48] sm:%s242] %v287
                %v289 = vld [vmem:[%s249 + $0x130] sm:%s242]
                %290 = vst [vmem:[%s250 + $0x4c] sm:%s242] %v289
                %v291 = vld [vmem:[%s249 + $0x140] sm:%s242]
                %292 = vst [vmem:[%s250 + $0x50] sm:%s242] %v291
                %v293 = vld [vmem:[%s249 + $0x150] sm:%s242]
                %294 = vst [vmem:[%s250 + $0x54] sm:%s242] %v293
                %v295 = vld [vmem:[%s249 + $0x160] sm:%s242]
                %296 = vst [vmem:[%s250 + $0x58] sm:%s242] %v295
                %v297 = vld [vmem:[%s249 + $0x170] sm:%s242]
                %298 = vst [vmem:[%s250 + $0x5c] sm:%s242] %v297
                %v299 = vld [vmem:[%s249 + $0x180] sm:%s242]
                %300 = vst [vmem:[%s250 + $0x60] sm:%s242] %v299
                %v301 = vld [vmem:[%s249 + $0x190] sm:%s242]
                %302 = vst [vmem:[%s250 + $0x64] sm:%s242] %v301
                %v303 = vld [vmem:[%s249 + $0x1a0] sm:%s242]
                %304 = vst [vmem:[%s250 + $0x68] sm:%s242] %v303
                %v305 = vld [vmem:[%s249 + $0x1b0] sm:%s242]
                %306 = vst [vmem:[%s250 + $0x6c] sm:%s242] %v305
                %v307 = vld [vmem:[%s249 + $0x1c0] sm:%s242]
                %308 = vst [vmem:[%s250 + $0x70] sm:%s242] %v307
                %v309 = vld [vmem:[%s249 + $0x1d0] sm:%s242]
                %310 = vst [vmem:[%s250 + $0x74] sm:%s242] %v309
                %v311 = vld [vmem:[%s249 + $0x1e0] sm:%s242]
                %312 = vst [vmem:[%s250 + $0x78] sm:%s242] %v311
                %v313 = vld [vmem:[%s249 + $0x1f0] sm:%s242]
                %314 = vst [vmem:[%s250 + $0x7c] sm:%s242] %v313
                %v315 = vld [vmem:[%s249 + $0x200] sm:%s242]
                %316 = vst [vmem:[%s250 + $0x80] sm:%s242] %v315
                %v317 = vld [vmem:[%s249 + $0x210] sm:%s242]
                %318 = vst [vmem:[%s250 + $0x84] sm:%s242] %v317
                %v319 = vld [vmem:[%s249 + $0x220] sm:%s242]
                %320 = vst [vmem:[%s250 + $0x88] sm:%s242] %v319
                %v321 = vld [vmem:[%s249 + $0x230] sm:%s242]
                %322 = vst [vmem:[%s250 + $0x8c] sm:%s242] %v321
                %v323 = vld [vmem:[%s249 + $0x240] sm:%s242]
                %324 = vst [vmem:[%s250 + $0x90] sm:%s242] %v323
                %v325 = vld [vmem:[%s249 + $0x250] sm:%s242]
                %326 = vst [vmem:[%s250 + $0x94] sm:%s242] %v325
                %v327 = vld [vmem:[%s249 + $0x260] sm:%s242]
                %328 = vst [vmem:[%s250 + $0x98] sm:%s242] %v327
                %v329 = vld [vmem:[%s249 + $0x270] sm:%s242]
                %330 = vst [vmem:[%s250 + $0x9c] sm:%s242] %v329
                %v331 = vld [vmem:[%s249 + $0x280] sm:%s242]
                %332 = vst [vmem:[%s250 + $0xa0] sm:%s242] %v331
                %v333 = vld [vmem:[%s249 + $0x290] sm:%s242]
                %334 = vst [vmem:[%s250 + $0xa4] sm:%s242] %v333
                %v335 = vld [vmem:[%s249 + $0x2a0] sm:%s242]
                %336 = vst [vmem:[%s250 + $0xa8] sm:%s242] %v335
                %v337 = vld [vmem:[%s249 + $0x2b0] sm:%s242]
                %338 = vst [vmem:[%s250 + $0xac] sm:%s242] %v337
                %v339 = vld [vmem:[%s249 + $0x2c0] sm:%s242]
                %340 = vst [vmem:[%s250 + $0xb0] sm:%s242] %v339
                %v341 = vld [vmem:[%s249 + $0x2d0] sm:%s242]
                %342 = vst [vmem:[%s250 + $0xb4] sm:%s242] %v341
                %v343 = vld [vmem:[%s249 + $0x2e0] sm:%s242]
                %344 = vst [vmem:[%s250 + $0xb8] sm:%s242] %v343
                %v345 = vld [vmem:[%s249 + $0x2f0] sm:%s242]
                %346 = vst [vmem:[%s250 + $0xbc] sm:%s242] %v345
                %v347 = vld [vmem:[%s249 + $0x300] sm:%s242]
                %348 = vst [vmem:[%s250 + $0xc0] sm:%s242] %v347
                %v349 = vld [vmem:[%s249 + $0x310] sm:%s242]
                %350 = vst [vmem:[%s250 + $0xc4] sm:%s242] %v349
                %v351 = vld [vmem:[%s249 + $0x320] sm:%s242]
                %352 = vst [vmem:[%s250 + $0xc8] sm:%s242] %v351
                %v353 = vld [vmem:[%s249 + $0x330] sm:%s242]
                %354 = vst [vmem:[%s250 + $0xcc] sm:%s242] %v353
                %v355 = vld [vmem:[%s249 + $0x340] sm:%s242]
                %356 = vst [vmem:[%s250 + $0xd0] sm:%s242] %v355
                %v357 = vld [vmem:[%s249 + $0x350] sm:%s242]
                %358 = vst [vmem:[%s250 + $0xd4] sm:%s242] %v357
                %v359 = vld [vmem:[%s249 + $0x360] sm:%s242]
                %360 = vst [vmem:[%s250 + $0xd8] sm:%s242] %v359
                %v361 = vld [vmem:[%s249 + $0x370] sm:%s242]
                %362 = vst [vmem:[%s250 + $0xdc] sm:%s242] %v361
                %v363 = vld [vmem:[%s249 + $0x380] sm:%s242]
                %364 = vst [vmem:[%s250 + $0xe0] sm:%s242] %v363
                %v365 = vld [vmem:[%s249 + $0x390] sm:%s242]
                %366 = vst [vmem:[%s250 + $0xe4] sm:%s242] %v365
                %v367 = vld [vmem:[%s249 + $0x3a0] sm:%s242]
                %368 = vst [vmem:[%s250 + $0xe8] sm:%s242] %v367
                %v369 = vld [vmem:[%s249 + $0x3b0] sm:%s242]
                %370 = vst [vmem:[%s250 + $0xec] sm:%s242] %v369
                %v371 = vld [vmem:[%s249 + $0x3c0] sm:%s242]
                %372 = vst [vmem:[%s250 + $0xf0] sm:%s242] %v371
                %v373 = vld [vmem:[%s249 + $0x3d0] sm:%s242]
                %374 = vst [vmem:[%s250 + $0xf4] sm:%s242] %v373
                %v375 = vld [vmem:[%s249 + $0x3e0] sm:%s242]
                %376 = vst [vmem:[%s250 + $0xf8] sm:%s242] %v375
                %v377 = vld [vmem:[%s249 + $0x3f0] sm:%s242]
                %378 = vst [vmem:[%s250 + $0xfc] sm:%s242] %v377
              $region41: #{forward.7} parent=35 // loop_footer
                %s248 = sadd.s32 1, %s244
              $region42: #{forward.7} parent=35 // loop_footer_branch
                %243 = sbr.rel target = $region38
              $region43: #{forward.7} parent=35 // loop_exit
                _
            $region36: #{forward.7} parent=27 // pred_fallthru
              _
          $region28: #{forward.7} parent=23 // pred_fallthru
            _
          %527 = vnop
        $region24: #{forward.7} parent=15 // pred_fallthru
          _
        // Predicated region
        $region62: #{forward.7} parent=15 // pred_check
          %p528 = pneg %p106
        $region63: #{forward.7} parent=15 // pred_check_branch
          %530 = sbr.rel (%p528) target = $region65
        $region64: #{forward.7} parent=15 // pred_region
          %p531 = scmp.lt.s32.totalorder %s19, 3
          %s532 = scalar_select %p531, %s19, 3
          %s533 = scalar_lea.vmem %s2, %s532
        $region65: #{forward.7} parent=15 // pred_fallthru
          _
        // Predicated region
        $region66: #{forward.7} parent=15 // pred_check
          %p534 = pneg %p132
        $region67: #{forward.7} parent=15 // pred_check_branch
          %536 = sbr.rel (%p534) target = $region69
        $region68: #{forward.7} parent=15 // pred_region
          %p537 = scmp.lt.s32.totalorder %s19, 3
          %s538 = scalar_select %p537, %s19, 3
          %s539 = scalar_lea.vmem %s3, %s538
        $region69: #{forward.7} parent=15 // pred_fallthru
          _
        // Predicated region
        $region70: #{forward.7} parent=15 // pred_check
          %p540 = pneg %p158
        $region71: #{forward.7} parent=15 // pred_check_branch
          %542 = sbr.rel (%p540) target = $region73
        $region72: #{forward.7} parent=15 // pred_region
          %p543 = scmp.lt.s32.totalorder %s19, 3
          %s544 = scalar_select %p543, %s19, 3
          %s545 = scalar_lea.vmem %s4, %s544
        $region73: #{forward.7} parent=15 // pred_fallthru
          _
      $region16: #{forward.7} parent=5 // pred_fallthru
        _
      %p546 = scmp.le.s32.totalorder 1, %s11
      %p547 = scmp.lt.s32.totalorder %s11, 17
      %p548 = pnand %p546, %p547
      %p549 = pneg %p548
      // Predicated region
      $region74: #{forward.7} parent=5 // pred_check
        _
      $region75: #{forward.7} parent=5 // pred_check_branch
        %551 = sbr.rel (%p548) target = $region77
      $region76: #{forward.7} parent=5 // pred_region
        %s552 = ssub.s32 %s11, 1
        %s553 = sand.u32 %s73, 1
        %s554 = sand.u32 %s73, 1
        %s555 = smul.addr %s554, 256
        %s556 = scalar_lea.vmem [#allocation3], %s555
        // Predicated region
        $region78: #{forward.7} parent=76 // pred_check
          %p557 = pneg %p86
        $region79: #{forward.7} parent=76 // pred_check_branch
          %559 = sbr.rel (%p557) target = $region81
        $region80: #{forward.7} parent=76 // pred_region
          _
        $region81: #{forward.7} parent=76 // pred_fallthru
          _
        %s560 = smul.u32 4, %s23
        %p561 = scmp.lt.s32.totalorder %s21, 0
        %s562 = scalar_select %p561, %s21, 0
        %p563 = scmp.lt.s32.totalorder %s560, 15
        %s564 = scalar_select %p563, %s560, 15
        %s565 = smul.addr %s562, 16
        %s566 = sadd.s32 %s564, %s565
        %s567 = scalar_lea.vmem %s0, %s566
        %p568 = pneg %p58
        %p569 = pneg %p55
        %s570 = sand.u32 %s73, 1
        %s571 = sand.u32 %s73, 1
        %s572 = smul.addr %s571, 256
        %s573 = scalar_lea.vmem [#allocation3], %s572
        %p574 = pneg %p86
        %p575 = pneg %p83
        %p576 = scmp.lt.s32.totalorder %s22, 3
        %s577 = scalar_select %p576, %s22, 3
        %s578 = scalar_lea.vmem %s2, %s577
        %p579 = pneg %p112
        %p580 = pneg %p109
        %p581 = scmp.lt.s32.totalorder %s22, 3
        %s582 = scalar_select %p581, %s22, 3
        %s583 = scalar_lea.vmem %s3, %s582
        %p584 = pneg %p138
        %p585 = pneg %p135
        %p586 = scmp.lt.s32.totalorder %s22, 3
        %s587 = scalar_select %p586, %s22, 3
        %s588 = scalar_lea.vmem %s4, %s587
        %p589 = pneg %p164
        %p590 = pneg %p161
        %p591 = pneg %p192
        %p592 = pneg %p189
        %p593 = scmp.lt.s32.totalorder %s21, 0
        %s594 = scalar_select %p593, %s21, 0
        %p595 = scmp.lt.s32.totalorder %s22, 3
        %s596 = scalar_select %p595, %s22, 3
        %s597 = smul.addr %s594, 4
        %s598 = sadd.s32 %s596, %s597
        %s599 = scalar_lea.vmem %s5, %s598
        %s600 = smul.u32 4, %s23
        %p601 = scmp.lt.s32.totalorder %s21, 0
        %s602 = scalar_select %p601, %s21, 0
        %p603 = scmp.lt.s32.totalorder %s600, 15
        %s604 = scalar_select %p603, %s600, 15
        %s605 = smul.addr %s602, 16
        %s606 = sadd.s32 %s604, %s605
        %s607 = scalar_lea.vmem %s0, %s606
        %s608 = smul.u32 4, %s23
        %s609 = smul.u32 64, %s23
        %p610 = scmp.lt.s32.totalorder %s22, 3
        %s611 = scalar_select %p610, %s22, 3
        %s612 = scalar_lea.vmem %s2, %s611
        %p613 = scmp.lt.s32.totalorder %s22, 3
        %s614 = scalar_select %p613, %s22, 3
        %s615 = scalar_lea.vmem %s3, %s614
        %p616 = scmp.lt.s32.totalorder %s22, 3
        %s617 = scalar_select %p616, %s22, 3
        %s618 = scalar_lea.vmem %s4, %s617
        %p619 = scmp.lt.s32.totalorder %s21, 0
        %s620 = scalar_select %p619, %s21, 0
        %p621 = scmp.lt.s32.totalorder %s22, 3
        %s622 = scalar_select %p621, %s22, 3
        %s623 = smul.addr %s620, 4
        %s624 = sadd.s32 %s622, %s623
        %s625 = scalar_lea.vmem %s5, %s624
        %p627 = scmp.eq.s32.totalorder %s23, 0
        // Predicated region
        $region82: #{forward.7} parent=76 // pred_check
          %p628 = pneg %p627
        $region83: #{forward.7} parent=76 // pred_check_branch
          %630 = sbr.rel (%p628) target = $region85
        $region84: #{forward.7} parent=76 // pred_region
          %631 = vst [vmem:[#allocation2] sm:$0x3] 0.0
        $region85: #{forward.7} parent=76 // pred_fallthru
          _
        %v632 = vld [vmem:[%s556] sm:$0xf]
        %v633 = vld [vmem:[%s556 + $0x4] sm:$0xf]
        %v634 = vld [vmem:[%s556 + $0x8] sm:$0xf]
        %v635 = vld [vmem:[%s556 + $0xc] sm:$0xf]
        %v636 = vld [vmem:[%s556 + $0x10] sm:$0xf]
        %v637 = vld [vmem:[%s556 + $0x14] sm:$0xf]
        %v638 = vld [vmem:[%s556 + $0x18] sm:$0xf]
        %v639 = vld [vmem:[%s556 + $0x1c] sm:$0xf]
        %v640 = vld [vmem:[%s556 + $0x20] sm:$0xf]
        %v641 = vld [vmem:[%s556 + $0x24] sm:$0xf]
        %v642 = vld [vmem:[%s556 + $0x28] sm:$0xf]
        %v643 = vld [vmem:[%s556 + $0x2c] sm:$0xf]
        %v644 = vld [vmem:[%s556 + $0x30] sm:$0xf]
        %v645 = vld [vmem:[%s556 + $0x34] sm:$0xf]
        %v646 = vld [vmem:[%s556 + $0x38] sm:$0xf]
        %v647 = vld [vmem:[%s556 + $0x3c] sm:$0xf]
        %v648 = vld [vmem:[%s556 + $0x40] sm:$0xf]
        %v649 = vld [vmem:[%s556 + $0x44] sm:$0xf]
        %v650 = vld [vmem:[%s556 + $0x48] sm:$0xf]
        %v651 = vld [vmem:[%s556 + $0x4c] sm:$0xf]
        %v652 = vld [vmem:[%s556 + $0x50] sm:$0xf]
        %v653 = vld [vmem:[%s556 + $0x54] sm:$0xf]
        %v654 = vld [vmem:[%s556 + $0x58] sm:$0xf]
        %v655 = vld [vmem:[%s556 + $0x5c] sm:$0xf]
        %v656 = vld [vmem:[%s556 + $0x60] sm:$0xf]
        %v657 = vld [vmem:[%s556 + $0x64] sm:$0xf]
        %v658 = vld [vmem:[%s556 + $0x68] sm:$0xf]
        %v659 = vld [vmem:[%s556 + $0x6c] sm:$0xf]
        %v660 = vld [vmem:[%s556 + $0x70] sm:$0xf]
        %v661 = vld [vmem:[%s556 + $0x74] sm:$0xf]
        %v662 = vld [vmem:[%s556 + $0x78] sm:$0xf]
        %v663 = vld [vmem:[%s556 + $0x7c] sm:$0xf]
        %v664 = vld [vmem:[%s556 + $0x80] sm:$0xf]
        %v665 = vld [vmem:[%s556 + $0x84] sm:$0xf]
        %v666 = vld [vmem:[%s556 + $0x88] sm:$0xf]
        %v667 = vld [vmem:[%s556 + $0x8c] sm:$0xf]
        %v668 = vld [vmem:[%s556 + $0x90] sm:$0xf]
        %v669 = vld [vmem:[%s556 + $0x94] sm:$0xf]
        %v670 = vld [vmem:[%s556 + $0x98] sm:$0xf]
        %v671 = vld [vmem:[%s556 + $0x9c] sm:$0xf]
        %v672 = vld [vmem:[%s556 + $0xa0] sm:$0xf]
        %v673 = vld [vmem:[%s556 + $0xa4] sm:$0xf]
        %v674 = vld [vmem:[%s556 + $0xa8] sm:$0xf]
        %v675 = vld [vmem:[%s556 + $0xac] sm:$0xf]
        %v676 = vld [vmem:[%s556 + $0xb0] sm:$0xf]
        %v677 = vld [vmem:[%s556 + $0xb4] sm:$0xf]
        %v678 = vld [vmem:[%s556 + $0xb8] sm:$0xf]
        %v679 = vld [vmem:[%s556 + $0xbc] sm:$0xf]
        %v680 = vld [vmem:[%s556 + $0xc0] sm:$0xf]
        %v681 = vld [vmem:[%s556 + $0xc4] sm:$0xf]
        %v682 = vld [vmem:[%s556 + $0xc8] sm:$0xf]
        %v683 = vld [vmem:[%s556 + $0xcc] sm:$0xf]
        %v684 = vld [vmem:[%s556 + $0xd0] sm:$0xf]
        %v685 = vld [vmem:[%s556 + $0xd4] sm:$0xf]
        %v686 = vld [vmem:[%s556 + $0xd8] sm:$0xf]
        %v687 = vld [vmem:[%s556 + $0xdc] sm:$0xf]
        %v688 = vld [vmem:[%s556 + $0xe0] sm:$0xf]
        %v689 = vld [vmem:[%s556 + $0xe4] sm:$0xf]
        %v690 = vld [vmem:[%s556 + $0xe8] sm:$0xf]
        %v691 = vld [vmem:[%s556 + $0xec] sm:$0xf]
        %v692 = vld [vmem:[%s556 + $0xf0] sm:$0xf]
        %v693 = vld [vmem:[%s556 + $0xf4] sm:$0xf]
        %v694 = vld [vmem:[%s556 + $0xf8] sm:$0xf]
        %v695 = vld [vmem:[%s556 + $0xfc] sm:$0xf]
        %v696 = vld [vmem:[#allocation2] sm:$0x3]
        %v697 = vld [vmem:[%s607] sm:$0xf]
        %v700 = vunpack.c.l.s4 1966171168
        %v701 = vunpack.c.0.s8 %v700
        %v702 = vlaneseq
        %v703 = vshrl.u32 %v702, 7
        %v704 = vsub.s32 %v701, %v703
        %v705 = vrot.slane %v697, %v704
        %v706 = vcombine.high %v705, %v705
        %v708 = vunpack.c.l.s4 1966171168
        %v709 = vunpack.c.0.s8 %v708
        %v710 = vlaneseq
        %v711 = vshrl.u32 %v710, 7
        %v712 = vsub.s32 %v709, %v711
        %v713 = vrot.slane %v705, %v712
        %v715 = vunpack.c.l.s4 1966171168
        %v716 = vunpack.c.0.s8 %v715
        %v717 = vlaneseq
        %v718 = vshrl.u32 %v717, 7
        %v719 = vsub.s32 %v716, %v718
        %v720 = vrot.slane %v706, %v719
        %v721 = vcombine.high %v713, %v713
        %v722 = vcombine.high %v720, %v720
        %v791 = vunpack.c.l.b16 %v632
        %v792 = vunpack.c.l.b16 %v633
        %v793 = vunpack.c.l.b16 %v634
        %v794 = vunpack.c.l.b16 %v635
        %v795 = vunpack.c.l.b16 %v636
        %v796 = vunpack.c.l.b16 %v637
        %v797 = vunpack.c.l.b16 %v638
        %v798 = vunpack.c.l.b16 %v639
        %v799 = vunpack.c.l.b16 %v640
        %v800 = vunpack.c.l.b16 %v641
        %v801 = vunpack.c.l.b16 %v642
        %v802 = vunpack.c.l.b16 %v643
        %v803 = vunpack.c.l.b16 %v644
        %v804 = vunpack.c.l.b16 %v645
        %v805 = vunpack.c.l.b16 %v646
        %v806 = vunpack.c.l.b16 %v647
        %v807 = vunpack.c.l.b16 %v648
        %v808 = vunpack.c.l.b16 %v649
        %v809 = vunpack.c.l.b16 %v650
        %v810 = vunpack.c.l.b16 %v651
        %v811 = vunpack.c.l.b16 %v652
        %v812 = vunpack.c.l.b16 %v653
        %v813 = vunpack.c.l.b16 %v654
        %v814 = vunpack.c.l.b16 %v655
        %v815 = vunpack.c.l.b16 %v656
        %v816 = vunpack.c.l.b16 %v657
        %v817 = vunpack.c.l.b16 %v658
        %v818 = vunpack.c.l.b16 %v659
        %v819 = vunpack.c.l.b16 %v660
        %v820 = vunpack.c.l.b16 %v661
        %v821 = vunpack.c.l.b16 %v662
        %v822 = vunpack.c.l.b16 %v663
        %v823 = vunpack.c.l.b16 %v664
        %v824 = vunpack.c.l.b16 %v665
        %v825 = vunpack.c.l.b16 %v666
        %v826 = vunpack.c.l.b16 %v667
        %v827 = vunpack.c.l.b16 %v668
        %v828 = vunpack.c.l.b16 %v669
        %v829 = vunpack.c.l.b16 %v670
        %v830 = vunpack.c.l.b16 %v671
        %v831 = vunpack.c.l.b16 %v672
        %v832 = vunpack.c.l.b16 %v673
        %v833 = vunpack.c.l.b16 %v674
        %v834 = vunpack.c.l.b16 %v675
        %v835 = vunpack.c.l.b16 %v676
        %v836 = vunpack.c.l.b16 %v677
        %v837 = vunpack.c.l.b16 %v678
        %v838 = vunpack.c.l.b16 %v679
        %v839 = vunpack.c.l.b16 %v680
        %v840 = vunpack.c.l.b16 %v681
        %v841 = vunpack.c.l.b16 %v682
        %v842 = vunpack.c.l.b16 %v683
        %v843 = vunpack.c.l.b16 %v684
        %v844 = vunpack.c.l.b16 %v685
        %v845 = vunpack.c.l.b16 %v686
        %v846 = vunpack.c.l.b16 %v687
        %v847 = vunpack.c.l.b16 %v688
        %v848 = vunpack.c.l.b16 %v689
        %v849 = vunpack.c.l.b16 %v690
        %v850 = vunpack.c.l.b16 %v691
        %v851 = vunpack.c.l.b16 %v692
        %v852 = vunpack.c.l.b16 %v693
        %v853 = vunpack.c.l.b16 %v694
        %v854 = vunpack.c.l.b16 %v695
        %v855 = vpack.c.b16 %v792, %v791
        %v856 = vpack.c.b16 %v794, %v793
        %v857 = vpack.c.b16 %v796, %v795
        %v858 = vpack.c.b16 %v798, %v797
        %v859 = vpack.c.b16 %v800, %v799
        %v860 = vpack.c.b16 %v802, %v801
        %v861 = vpack.c.b16 %v804, %v803
        %v862 = vpack.c.b16 %v806, %v805
        %v863 = vpack.c.b16 %v808, %v807
        %v864 = vpack.c.b16 %v810, %v809
        %v865 = vpack.c.b16 %v812, %v811
        %v866 = vpack.c.b16 %v814, %v813
        %v867 = vpack.c.b16 %v816, %v815
        %v868 = vpack.c.b16 %v818, %v817
        %v869 = vpack.c.b16 %v820, %v819
        %v870 = vpack.c.b16 %v822, %v821
        %v871 = vpack.c.b16 %v824, %v823
        %v872 = vpack.c.b16 %v826, %v825
        %v873 = vpack.c.b16 %v828, %v827
        %v874 = vpack.c.b16 %v830, %v829
        %v875 = vpack.c.b16 %v832, %v831
        %v876 = vpack.c.b16 %v834, %v833
        %v877 = vpack.c.b16 %v836, %v835
        %v878 = vpack.c.b16 %v838, %v837
        %v879 = vpack.c.b16 %v840, %v839
        %v880 = vpack.c.b16 %v842, %v841
        %v881 = vpack.c.b16 %v844, %v843
        %v882 = vpack.c.b16 %v846, %v845
        %v883 = vpack.c.b16 %v848, %v847
        %v884 = vpack.c.b16 %v850, %v849
        %v885 = vpack.c.b16 %v852, %v851
        %v886 = vpack.c.b16 %v854, %v853
        %919 = vmatprep.subr.bf16.mxu0 0
        %920 = vmatpush1.bf16.msra.mxu0 %v862
        %921 = vmatprep.subr.bf16.mxu0 0
        %922 = vmatpush1.bf16.msra.mxu0 %v861
        %923 = vmatprep.subr.bf16.mxu0 0
        %924 = vmatpush1.bf16.msra.mxu0 %v860
        %925 = vmatprep.subr.bf16.mxu0 0
        %926 = vmatpush1.bf16.msra.mxu0 %v859
        %927 = vmatprep.subr.bf16.mxu0 0
        %928 = vmatpush1.bf16.msra.mxu0 %v858
        %929 = vmatprep.subr.bf16.mxu0 0
        %930 = vmatpush1.bf16.msra.mxu0 %v857
        %931 = vmatprep.subr.bf16.mxu0 0
        %932 = vmatpush1.bf16.msra.mxu0 %v856
        %933 = vmatprep.subr.bf16.mxu0 0
        %934 = vmatpush1.bf16.msra.mxu0 %v855
        %935 = vmatprep.subr.bf16.mxu0 0
        %936 = vmatpush2.bf16.msra.mxu0 %v870
        %937 = vmatprep.subr.bf16.mxu0 0
        %938 = vmatpush2.bf16.msra.mxu0 %v869
        %939 = vmatprep.subr.bf16.mxu0 0
        %940 = vmatpush2.bf16.msra.mxu0 %v868
        %941 = vmatprep.subr.bf16.mxu0 0
        %942 = vmatpush2.bf16.msra.mxu0 %v867
        %943 = vmatprep.subr.bf16.mxu0 0
        %944 = vmatpush2.bf16.msra.mxu0 %v866
        %945 = vmatprep.subr.bf16.mxu0 0
        %946 = vmatpush2.bf16.msra.mxu0 %v865
        %947 = vmatprep.subr.bf16.mxu0 0
        %948 = vmatpush2.bf16.msra.mxu0 %v864
        %949 = vmatprep.subr.bf16.mxu0 0
        %950 = vmatpush2.bf16.msra.mxu0 %v863
        %951 = vmatprep.mubr.bf16.mxu0 %v720
        %952 = vmatmul.mubr.bf16.gmra.mxu0 %v713
        %v953 = vpop.f32.mrf.mxu0
        %v954 = vadd.f32 0.0, %v953
        %v955 = vpop.f32.mrf.mxu0
        %v956 = vpop.f32.mrf.mxu0
        %v957 = vpop.f32.mrf.mxu0
        %958 = vdwg.mxu0
        %959 = vmatprep.subr.bf16.mxu0 0
        %960 = vmatpush1.bf16.msra.mxu0 %v878
        %961 = vmatprep.subr.bf16.mxu0 0
        %962 = vmatpush1.bf16.msra.mxu0 %v877
        %963 = vmatprep.subr.bf16.mxu0 0
        %964 = vmatpush1.bf16.msra.mxu0 %v876
        %965 = vmatprep.subr.bf16.mxu0 0
        %966 = vmatpush1.bf16.msra.mxu0 %v875
        %967 = vmatprep.subr.bf16.mxu0 0
        %968 = vmatpush1.bf16.msra.mxu0 %v874
        %969 = vmatprep.subr.bf16.mxu0 0
        %970 = vmatpush1.bf16.msra.mxu0 %v873
        %971 = vmatprep.subr.bf16.mxu0 0
        %972 = vmatpush1.bf16.msra.mxu0 %v872
        %973 = vmatprep.subr.bf16.mxu0 0
        %974 = vmatpush1.bf16.msra.mxu0 %v871
        %975 = vmatprep.subr.bf16.mxu0 0
        %976 = vmatpush2.bf16.msra.mxu0 %v886
        %977 = vmatprep.subr.bf16.mxu0 0
        %978 = vmatpush2.bf16.msra.mxu0 %v885
        %979 = vmatprep.subr.bf16.mxu0 0
        %980 = vmatpush2.bf16.msra.mxu0 %v884
        %981 = vmatprep.subr.bf16.mxu0 0
        %982 = vmatpush2.bf16.msra.mxu0 %v883
        %983 = vmatprep.subr.bf16.mxu0 0
        %984 = vmatpush2.bf16.msra.mxu0 %v882
        %985 = vmatprep.subr.bf16.mxu0 0
        %986 = vmatpush2.bf16.msra.mxu0 %v881
        %987 = vmatprep.subr.bf16.mxu0 0
        %988 = vmatpush2.bf16.msra.mxu0 %v880
        %989 = vmatprep.subr.bf16.mxu0 0
        %990 = vmatpush2.bf16.msra.mxu0 %v879
        %991 = vmatprep.mubr.bf16.mxu0 %v722
        %992 = vmatmul.mubr.bf16.gmra.mxu0 %v721
        %v993 = vpop.f32.mrf.mxu0
        %v994 = vadd.f32 %v954, %v993
        %v995 = vpop.f32.mrf.mxu0
        %v996 = vpop.f32.mrf.mxu0
        %v997 = vpop.f32.mrf.mxu0
        %998 = vdwg.mxu0
        %v999 = vadd.f32 %v696, %v994
        %1000 = vst [vmem:[#allocation2] sm:$0x3] %v999
        %p1001 = scmp.eq.s32.totalorder %s23, 3
        // Predicated region
        $region86: #{forward.7} parent=76 // pred_check
          %p1002 = pneg %p1001
        $region87: #{forward.7} parent=76 // pred_check_branch
          %1004 = sbr.rel (%p1002) target = $region89
        $region88: #{forward.7} parent=76 // pred_region
          %v1005 = vld [vmem:[%s612] sm:$0x1]
          %v1006 = vld [vmem:[%s615] sm:$0x1]
          %v1007 = vld [vmem:[%s618] sm:$0x1]
          %v1008 = vld [vmem:[#allocation2] sm:$0x3]
          %v1010 = vlaneseq
          %v1011 = vshrl.u32 %v1010, 7
          %v1012 = vsub.s32 0, %v1011
          %v1013 = vrot.slane %v1005, %v1012
          %v1015 = vadd.f32 %v1008, %v1013
          %v1016 = vmax.f32 %v1015, 0.0
          %v1018 = vlaneseq
          %v1019 = vshrl.u32 %v1018, 7
          %v1020 = vsub.s32 0, %v1019
          %v1021 = vrot.slane %v1006, %v1020
          %v1023 = vmul.f32 %v1016, %v1021
          %v1025 = vlaneseq
          %v1026 = vshrl.u32 %v1025, 7
          %v1027 = vsub.s32 0, %v1026
          %v1028 = vrot.slane %v1007, %v1027
          %v1030 = vadd.f32 %v1023, %v1028
          %v1031 = vpack.c.bf16 %v1030, %v1030
          %1032 = vst [vmem:[%s625] sm:$0x1] %v1031
        $region89: #{forward.7} parent=76 // pred_fallthru
          _
        %p1033 = scmp.lt.s32.totalorder %s21, 0
        %s1034 = scalar_select %p1033, %s21, 0
        %p1035 = scmp.lt.s32.totalorder %s22, 3
        %s1036 = scalar_select %p1035, %s22, 3
        %s1037 = smul.addr %s1034, 4
        %s1038 = sadd.s32 %s1036, %s1037
        %s1039 = scalar_lea.vmem %s5, %s1038
        // Predicated region
        $region90: #{forward.7} parent=76 // pred_check
          %p1040 = pneg %p189
        $region91: #{forward.7} parent=76 // pred_check_branch
          %1042 = sbr.rel (%p1040) target = $region93
        $region92: #{forward.7} parent=76 // pred_region
          _
        $region93: #{forward.7} parent=76 // pred_fallthru
          _
      $region77: #{forward.7} parent=5 // pred_fallthru
        _
      %p1043 = scmp.le.s32.totalorder 2, %s11
      // Predicated region
      $region94: #{forward.7} parent=5 // pred_check
        %p1044 = pneg %p1043
      $region95: #{forward.7} parent=5 // pred_check_branch
        %1046 = sbr.rel (%p1044) target = $region97
      $region96: #{forward.7} parent=5 // pred_region
        %s1047 = ssub.s32 %s11, 2
        // Predicated region
        $region98: #{forward.7} parent=96 // pred_check
          %p1048 = pneg %p195
        $region99: #{forward.7} parent=96 // pred_check_branch
          %1050 = sbr.rel (%p1048) target = $region101
        $region100: #{forward.7} parent=96 // pred_region
          %p1051 = scmp.lt.s32.totalorder %s24, 0
          %s1052 = scalar_select %p1051, %s24, 0
          %p1053 = scmp.lt.s32.totalorder %s25, 3
          %s1054 = scalar_select %p1053, %s25, 3
          %s1055 = smul.addr %s1052, 4
          %s1056 = sadd.s32 %s1054, %s1055
          %s1057 = scalar_lea.vmem %s5, %s1056
        $region101: #{forward.7} parent=96 // pred_fallthru
          _
      $region97: #{forward.7} parent=5 // pred_fallthru
        _
    $region6: #{forward.7} parent=1 // loop_footer
      %s15 = sadd.s32 1, %s11
    $region7: #{forward.7} parent=1 // loop_footer_branch
      %10 = sbr.rel target = $region3
    $region8: #{forward.7} parent=1 // loop_exit
      _

// kernel: forward.8
$region0: #{forward.8}
  #allocation0 [shape = 'u32[]', space=smem, size = 0x4, offset = 0x4, fixed_abs, tag = 'smem constant byte address 0x4 - core index']
  #allocation1 [shape = 'u32[144,128]{1,0:T(1,128)}', space=vmem, size = 0x12000, scoped, tag = 'internal scratch']
  #allocation2 [shape = 'f32[1,2,128]{2,1,0:T(2,128)}', space=vmem, size = 0x400, scoped, tag = 'scratch operand']
  %s0 = inlined_call_operand.vmem [shape: bf16[1,2,512], index: 0, kind: input, shape index: {}]
  %s1 = inlined_call_operand.vmem [shape: bf16[512,256], index: 1, kind: input, shape index: {}]
  %s2 = inlined_call_operand.vmem [shape: f32[1,256], index: 2, kind: input, shape index: {}]
  %s3 = inlined_call_operand.vmem [shape: f32[1,256], index: 3, kind: input, shape index: {}]
  %s4 = inlined_call_operand.vmem [shape: f32[1,256], index: 4, kind: input, shape index: {}]
  %s5 = inlined_call_operand.vmem [shape: bf16[2,256], index: 5, kind: output, shape index: {}]
  %s6 = sld [smem:[#allocation0]]
  $region102: #{forward.8} parent=0
    _
  %s8 = ssub.s32 1, %s6
  %s9 = scalar_select 0, %s8, %s6
  $region1: #{forward.8} parent=0
    #allocation3 [shape = 'u8[262144]{0}', space=vmem, size = 0x40000, scoped, tag = 'input window, operand 1']
    loop: start=0, step=1, limit=4
    $region2: #{forward.8} parent=1 // loop_pre_header
      _
    $region3: #{forward.8} parent=1 // loop_header
      %s11 = sphi 0, %s15
      %p12 = scmp.ge.s32.totalorder %s11, 4
      %s18 = sphi 0, %s37
      %s19 = sphi 0, %s33
      %s20 = sphi 0, %s29
      %s21 = sphi 0, %s18
      %s22 = sphi 0, %s19
      %s23 = sphi 0, %s20
      %s24 = sphi 0, %s21
      %s25 = sphi 0, %s22
      %s26 = sphi 0, %s23
      %s42 = sphi 0, %s44
      %s45 = sphi 0, %s42
      %s46 = sphi 0, %s45
      %s62 = sphi 0, %s46
      %s70 = sphi 0, %s72
      %s73 = sphi 0, %s70
      %s74 = sphi 0, %s73
      %s90 = sphi 0, %s74
      %s96 = sphi 0, %s98
      %s99 = sphi 0, %s96
      %s100 = sphi 0, %s99
      %s116 = sphi 0, %s100
      %s122 = sphi 0, %s124
      %s125 = sphi 0, %s122
      %s126 = sphi 0, %s125
      %s142 = sphi 0, %s126
      %s148 = sphi 0, %s150
      %s151 = sphi 0, %s148
      %s152 = sphi 0, %s151
      %s168 = sphi 0, %s152
      %s176 = sphi 0, %s178
      %s179 = sphi 0, %s176
      %s180 = sphi 0, %s179
      %s196 = sphi 0, %s180
    $region4: #{forward.8} parent=1 // loop_header_branch
      %14 = sbr.rel (%p12) target = $region8
    $region5: #{forward.8} parent=1 // loop_body
      %s16 = ssub.s32 %s11, 1
      %s17 = ssub.s32 %s11, 2
      %s27 = sadd.s32 1, %s20
      %p28 = scmp.ge.s32.totalorder %s27, 1
      %s29 = scalar_select %p28, 0, %s27
      %s30 = sadd.s32 1, %s19
      %s31 = scalar_select %p28, %s30, %s19
      %p32 = scmp.ge.s32.totalorder %s31, 2
      %s33 = scalar_select %p32, 0, %s31
      %s34 = sadd.s32 1, %s18
      %s35 = scalar_select %p32, %s34, %s18
      %p36 = scmp.ge.s32.totalorder %s35, 1
      %s37 = scalar_select %p36, 0, %s35
      %s38 = ssub.s32 %s18, %s37
      %s39 = ssub.s32 %s20, %s29
      %s40 = sor.u32 %s38, %s39
      %p41 = scmp.eq.s32.totalorder %s40, 0
      %s43 = sadd.s32 %s42, 1
      %s44 = scalar_select %p41, %s42, %s43
      %p47 = pneg %p41
      %p48 = scmp.eq.s32.totalorder %s11, 1
      %p49 = por %p47, %p48
      %p50 = scmp.ne.s32.totalorder %s42, %s45
      %p51 = scmp.eq.s32.totalorder %s11, 0
      %p52 = por %p50, %p51
      %p53 = scmp.ne.s32.totalorder %s42, %s45
      %p54 = scmp.eq.s32.totalorder %s16, 1
      %p55 = por %p53, %p54
      %p56 = scmp.ne.s32.totalorder %s45, %s46
      %p57 = scmp.eq.s32.totalorder %s16, 0
      %p58 = por %p56, %p57
      %p59 = scmp.ne.s32.totalorder %s45, %s46
      %p60 = scmp.eq.s32.totalorder %s17, 1
      %p61 = por %p59, %p60
      %p63 = scmp.ne.s32.totalorder %s46, %s62
      %p64 = scmp.eq.s32.totalorder %s17, 0
      %p65 = por %p63, %p64
      %s66 = ssub.s32 %s20, %s29
      %s67 = ssub.s32 %s19, %s33
      %s68 = sor.u32 %s66, %s67
      %p69 = scmp.eq.s32.totalorder %s68, 0
      %s71 = sadd.s32 %s70, 1
      %s72 = scalar_select %p69, %s70, %s71
      %p75 = pneg %p69
      %p76 = scmp.eq.s32.totalorder %s11, 1
      %p77 = por %p75, %p76
      %p78 = scmp.ne.s32.totalorder %s70, %s73
      %p79 = scmp.eq.s32.totalorder %s11, 0
      %p80 = por %p78, %p79
      %p81 = scmp.ne.s32.totalorder %s70, %s73
      %p82 = scmp.eq.s32.totalorder %s16, 1
      %p83 = por %p81, %p82
      %p84 = scmp.ne.s32.totalorder %s73, %s74
      %p85 = scmp.eq.s32.totalorder %s16, 0
      %p86 = por %p84, %p85
      %p87 = scmp.ne.s32.totalorder %s73, %s74
      %p88 = scmp.eq.s32.totalorder %s17, 1
      %p89 = por %p87, %p88
      %p91 = scmp.ne.s32.totalorder %s74, %s90
      %p92 = scmp.eq.s32.totalorder %s17, 0
      %p93 = por %p91, %p92
      %s94 = ssub.s32 %s19, %s33
      %p95 = scmp.eq.s32.totalorder %s94, 0
      %s97 = sadd.s32 %s96, 1
      %s98 = scalar_select %p95, %s96, %s97
      %p101 = pneg %p95
      %p102 = scmp.eq.s32.totalorder %s11, 1
      %p103 = por %p101, %p102
      %p104 = scmp.ne.s32.totalorder %s96, %s99
      %p105 = scmp.eq.s32.totalorder %s11, 0
      %p106 = por %p104, %p105
      %p107 = scmp.ne.s32.totalorder %s96, %s99
      %p108 = scmp.eq.s32.totalorder %s16, 1
      %p109 = por %p107, %p108
      %p110 = scmp.ne.s32.totalorder %s99, %s100
      %p111 = scmp.eq.s32.totalorder %s16, 0
      %p112 = por %p110, %p111
      %p113 = scmp.ne.s32.totalorder %s99, %s100
      %p114 = scmp.eq.s32.totalorder %s17, 1
      %p115 = por %p113, %p114
      %p117 = scmp.ne.s32.totalorder %s100, %s116
      %p118 = scmp.eq.s32.totalorder %s17, 0
      %p119 = por %p117, %p118
      %s120 = ssub.s32 %s19, %s33
      %p121 = scmp.eq.s32.totalorder %s120, 0
      %s123 = sadd.s32 %s122, 1
      %s124 = scalar_select %p121, %s122, %s123
      %p127 = pneg %p121
      %p128 = scmp.eq.s32.totalorder %s11, 1
      %p129 = por %p127, %p128
      %p130 = scmp.ne.s32.totalorder %s122, %s125
      %p131 = scmp.eq.s32.totalorder %s11, 0
      %p132 = por %p130, %p131
      %p133 = scmp.ne.s32.totalorder %s122, %s125
      %p134 = scmp.eq.s32.totalorder %s16, 1
      %p135 = por %p133, %p134
      %p136 = scmp.ne.s32.totalorder %s125, %s126
      %p137 = scmp.eq.s32.totalorder %s16, 0
      %p138 = por %p136, %p137
      %p139 = scmp.ne.s32.totalorder %s125, %s126
      %p140 = scmp.eq.s32.totalorder %s17, 1
      %p141 = por %p139, %p140
      %p143 = scmp.ne.s32.totalorder %s126, %s142
      %p144 = scmp.eq.s32.totalorder %s17, 0
      %p145 = por %p143, %p144
      %s146 = ssub.s32 %s19, %s33
      %p147 = scmp.eq.s32.totalorder %s146, 0
      %s149 = sadd.s32 %s148, 1
      %s150 = scalar_select %p147, %s148, %s149
      %p153 = pneg %p147
      %p154 = scmp.eq.s32.totalorder %s11, 1
      %p155 = por %p153, %p154
      %p156 = scmp.ne.s32.totalorder %s148, %s151
      %p157 = scmp.eq.s32.totalorder %s11, 0
      %p158 = por %p156, %p157
      %p159 = scmp.ne.s32.totalorder %s148, %s151
      %p160 = scmp.eq.s32.totalorder %s16, 1
      %p161 = por %p159, %p160
      %p162 = scmp.ne.s32.totalorder %s151, %s152
      %p163 = scmp.eq.s32.totalorder %s16, 0
      %p164 = por %p162, %p163
      %p165 = scmp.ne.s32.totalorder %s151, %s152
      %p166 = scmp.eq.s32.totalorder %s17, 1
      %p167 = por %p165, %p166
      %p169 = scmp.ne.s32.totalorder %s152, %s168
      %p170 = scmp.eq.s32.totalorder %s17, 0
      %p171 = por %p169, %p170
      %s172 = ssub.s32 %s18, %s37
      %s173 = ssub.s32 %s19, %s33
      %s174 = sor.u32 %s172, %s173
      %p175 = scmp.eq.s32.totalorder %s174, 0
      %s177 = sadd.s32 %s176, 1
      %s178 = scalar_select %p175, %s176, %s177
      %p181 = pneg %p175
      %p182 = scmp.eq.s32.totalorder %s11, 1
      %p183 = por %p181, %p182
      %p184 = scmp.ne.s32.totalorder %s176, %s179
      %p185 = scmp.eq.s32.totalorder %s11, 0
      %p186 = por %p184, %p185
      %p187 = scmp.ne.s32.totalorder %s176, %s179
      %p188 = scmp.eq.s32.totalorder %s16, 1
      %p189 = por %p187, %p188
      %p190 = scmp.ne.s32.totalorder %s179, %s180
      %p191 = scmp.eq.s32.totalorder %s16, 0
      %p192 = por %p190, %p191
      %p193 = scmp.ne.s32.totalorder %s179, %s180
      %p194 = scmp.eq.s32.totalorder %s17, 1
      %p195 = por %p193, %p194
      %p197 = scmp.ne.s32.totalorder %s180, %s196
      %p198 = scmp.eq.s32.totalorder %s17, 0
      %p199 = por %p197, %p198
      %p200 = scmp.le.s32.totalorder 1, %s11
      %p201 = scmp.lt.s32.totalorder %s11, 3
      %p202 = pnand %p200, %p201
      %p203 = pneg %p202
      // Predicated region
      $region9: #{forward.8} parent=5 // pred_check
        _
      $region10: #{forward.8} parent=5 // pred_check_branch
        %205 = sbr.rel (%p202) target = $region12
      $region11: #{forward.8} parent=5 // pred_region
        %s206 = ssub.s32 %s11, 1
        // Predicated region
        $region13: #{forward.8} parent=11 // pred_check
          %p207 = pneg %p58
        $region14: #{forward.8} parent=11 // pred_check_branch
          %209 = sbr.rel (%p207) target = $region16
        $region15: #{forward.8} parent=11 // pred_region
          %s210 = smul.u32 4, %s23
          %p211 = scmp.lt.s32.totalorder %s21, 0
          %s212 = scalar_select %p211, %s21, 0
          %p213 = scmp.lt.s32.totalorder %s210, 3
          %s214 = scalar_select %p213, %s210, 3
          %s215 = smul.addr %s212, 4
          %s216 = sadd.s32 %s214, %s215
          %s217 = scalar_lea.vmem %s0, %s216
          %s218 = smul.u32 4, %s23
        $region16: #{forward.8} parent=11 // pred_fallthru
          _
      $region12: #{forward.8} parent=5 // pred_fallthru
        _
      %p219 = scmp.lt.s32.totalorder %s11, 2
      // Predicated region
      $region17: #{forward.8} parent=5 // pred_check
        %p220 = pneg %p219
      $region18: #{forward.8} parent=5 // pred_check_branch
        %222 = sbr.rel (%p220) target = $region20
      $region19: #{forward.8} parent=5 // pred_region
        // Predicated region
        $region21: #{forward.8} parent=19 // pred_check
          %p223 = pneg %p80
        $region22: #{forward.8} parent=19 // pred_check_branch
          %225 = sbr.rel (%p223) target = $region24
        $region23: #{forward.8} parent=19 // pred_region
          %s226 = sand.u32 %s70, 1
          %s227 = sand.u32 %s70, 1
          %s228 = smul.addr %s227, 256
          %s229 = scalar_lea.vmem [#allocation3], %s228
          %s230 = smul.u32 64, %s20
          %s231 = smul.addr %s230, 2
          %s232 = sadd.s32 %s19, %s231
          %s233 = smul.addr %s232, 4
          %s234 = scalar_lea.vmem %s1, %s233
          // Predicated region
          $region25: #{forward.8} parent=23 // pred_check
            _
          $region26: #{forward.8} parent=23 // pred_check_branch
            %236 = sbr.rel (0) target = $region28
          $region27: #{forward.8} parent=23 // pred_region
            // Predicated region
            $region29: #{forward.8} parent=27 // pred_check
              _
            $region30: #{forward.8} parent=27 // pred_check_branch
              %238 = sbr.rel target = $region32
            $region31: #{forward.8} parent=27 // pred_region
              // Predicated region
              $region44: #{forward.8} parent=31 // pred_check
                _
              $region45: #{forward.8} parent=31 // pred_check_branch
                %380 = sbr.rel (0) target = $region47
              $region46: #{forward.8} parent=31 // pred_region
                loop: start=0, step=1, limit=1
                $region48: #{forward.8} parent=46 // loop_pre_header
                  _
                $region49: #{forward.8} parent=46 // loop_header
                  %s382 = sphi 0, %s386
                  %p383 = scmp.ge.s32.totalorder %s382, 1
                  %s387 = sphi %s234, %s234
                  %s388 = sphi %s229, %s229
                $region50: #{forward.8} parent=46 // loop_header_branch
                  %385 = sbr.rel (%p383) target = $region54
                $region51: #{forward.8} parent=46 // loop_body
                  _
                $region52: #{forward.8} parent=46 // loop_footer
                  %s386 = sadd.s32 1, %s382
                $region53: #{forward.8} parent=46 // loop_footer_branch
                  %381 = sbr.rel target = $region49
                $region54: #{forward.8} parent=46 // loop_exit
                  _
                %s390 = ssub.s32 16, 1
                loop: start=0, step=1, limit=1
                $region55: #{forward.8} parent=46 // loop_pre_header
                  _
                $region56: #{forward.8} parent=46 // loop_header
                  %s392 = sphi 0, %s396
                  %p393 = scmp.ge.s32.totalorder %s392, 1
                  %s397 = sphi %s234, %s234
                  %s398 = sphi %s229, %s229
                $region57: #{forward.8} parent=46 // loop_header_branch
                  %395 = sbr.rel (%p393) target = $region61
                $region58: #{forward.8} parent=46 // loop_body
                  %v399 = vld [vmem:[%s397] sm:%s390]
                  %400 = vst [vmem:[%s398] sm:%s390] %v399
                  %v401 = vld [vmem:[%s397 + $0x8] sm:%s390]
                  %402 = vst [vmem:[%s398 + $0x4] sm:%s390] %v401
                  %v403 = vld [vmem:[%s397 + $0x10] sm:%s390]
                  %404 = vst [vmem:[%s398 + $0x8] sm:%s390] %v403
                  %v405 = vld [vmem:[%s397 + $0x18] sm:%s390]
                  %406 = vst [vmem:[%s398 + $0xc] sm:%s390] %v405
                  %v407 = vld [vmem:[%s397 + $0x20] sm:%s390]
                  %408 = vst [vmem:[%s398 + $0x10] sm:%s390] %v407
                  %v409 = vld [vmem:[%s397 + $0x28] sm:%s390]
                  %410 = vst [vmem:[%s398 + $0x14] sm:%s390] %v409
                  %v411 = vld [vmem:[%s397 + $0x30] sm:%s390]
                  %412 = vst [vmem:[%s398 + $0x18] sm:%s390] %v411
                  %v413 = vld [vmem:[%s397 + $0x38] sm:%s390]
                  %414 = vst [vmem:[%s398 + $0x1c] sm:%s390] %v413
                  %v415 = vld [vmem:[%s397 + $0x40] sm:%s390]
                  %416 = vst [vmem:[%s398 + $0x20] sm:%s390] %v415
                  %v417 = vld [vmem:[%s397 + $0x48] sm:%s390]
                  %418 = vst [vmem:[%s398 + $0x24] sm:%s390] %v417
                  %v419 = vld [vmem:[%s397 + $0x50] sm:%s390]
                  %420 = vst [vmem:[%s398 + $0x28] sm:%s390] %v419
                  %v421 = vld [vmem:[%s397 + $0x58] sm:%s390]
                  %422 = vst [vmem:[%s398 + $0x2c] sm:%s390] %v421
                  %v423 = vld [vmem:[%s397 + $0x60] sm:%s390]
                  %424 = vst [vmem:[%s398 + $0x30] sm:%s390] %v423
                  %v425 = vld [vmem:[%s397 + $0x68] sm:%s390]
                  %426 = vst [vmem:[%s398 + $0x34] sm:%s390] %v425
                  %v427 = vld [vmem:[%s397 + $0x70] sm:%s390]
                  %428 = vst [vmem:[%s398 + $0x38] sm:%s390] %v427
                  %v429 = vld [vmem:[%s397 + $0x78] sm:%s390]
                  %430 = vst [vmem:[%s398 + $0x3c] sm:%s390] %v429
                  %v431 = vld [vmem:[%s397 + $0x80] sm:%s390]
                  %432 = vst [vmem:[%s398 + $0x40] sm:%s390] %v431
                  %v433 = vld [vmem:[%s397 + $0x88] sm:%s390]
                  %434 = vst [vmem:[%s398 + $0x44] sm:%s390] %v433
                  %v435 = vld [vmem:[%s397 + $0x90] sm:%s390]
                  %436 = vst [vmem:[%s398 + $0x48] sm:%s390] %v435
                  %v437 = vld [vmem:[%s397 + $0x98] sm:%s390]
                  %438 = vst [vmem:[%s398 + $0x4c] sm:%s390] %v437
                  %v439 = vld [vmem:[%s397 + $0xa0] sm:%s390]
                  %440 = vst [vmem:[%s398 + $0x50] sm:%s390] %v439
                  %v441 = vld [vmem:[%s397 + $0xa8] sm:%s390]
                  %442 = vst [vmem:[%s398 + $0x54] sm:%s390] %v441
                  %v443 = vld [vmem:[%s397 + $0xb0] sm:%s390]
                  %444 = vst [vmem:[%s398 + $0x58] sm:%s390] %v443
                  %v445 = vld [vmem:[%s397 + $0xb8] sm:%s390]
                  %446 = vst [vmem:[%s398 + $0x5c] sm:%s390] %v445
                  %v447 = vld [vmem:[%s397 + $0xc0] sm:%s390]
                  %448 = vst [vmem:[%s398 + $0x60] sm:%s390] %v447
                  %v449 = vld [vmem:[%s397 + $0xc8] sm:%s390]
                  %450 = vst [vmem:[%s398 + $0x64] sm:%s390] %v449
                  %v451 = vld [vmem:[%s397 + $0xd0] sm:%s390]
                  %452 = vst [vmem:[%s398 + $0x68] sm:%s390] %v451
                  %v453 = vld [vmem:[%s397 + $0xd8] sm:%s390]
                  %454 = vst [vmem:[%s398 + $0x6c] sm:%s390] %v453
                  %v455 = vld [vmem:[%s397 + $0xe0] sm:%s390]
                  %456 = vst [vmem:[%s398 + $0x70] sm:%s390] %v455
                  %v457 = vld [vmem:[%s397 + $0xe8] sm:%s390]
                  %458 = vst [vmem:[%s398 + $0x74] sm:%s390] %v457
                  %v459 = vld [vmem:[%s397 + $0xf0] sm:%s390]
                  %460 = vst [vmem:[%s398 + $0x78] sm:%s390] %v459
                  %v461 = vld [vmem:[%s397 + $0xf8] sm:%s390]
                  %462 = vst [vmem:[%s398 + $0x7c] sm:%s390] %v461
                  %v463 = vld [vmem:[%s397 + $0x100] sm:%s390]
                  %464 = vst [vmem:[%s398 + $0x80] sm:%s390] %v463
                  %v465 = vld [vmem:[%s397 + $0x108] sm:%s390]
                  %466 = vst [vmem:[%s398 + $0x84] sm:%s390] %v465
                  %v467 = vld [vmem:[%s397 + $0x110] sm:%s390]
                  %468 = vst [vmem:[%s398 + $0x88] sm:%s390] %v467
                  %v469 = vld [vmem:[%s397 + $0x118] sm:%s390]
                  %470 = vst [vmem:[%s398 + $0x8c] sm:%s390] %v469
                  %v471 = vld [vmem:[%s397 + $0x120] sm:%s390]
                  %472 = vst [vmem:[%s398 + $0x90] sm:%s390] %v471
                  %v473 = vld [vmem:[%s397 + $0x128] sm:%s390]
                  %474 = vst [vmem:[%s398 + $0x94] sm:%s390] %v473
                  %v475 = vld [vmem:[%s397 + $0x130] sm:%s390]
                  %476 = vst [vmem:[%s398 + $0x98] sm:%s390] %v475
                  %v477 = vld [vmem:[%s397 + $0x138] sm:%s390]
                  %478 = vst [vmem:[%s398 + $0x9c] sm:%s390] %v477
                  %v479 = vld [vmem:[%s397 + $0x140] sm:%s390]
                  %480 = vst [vmem:[%s398 + $0xa0] sm:%s390] %v479
                  %v481 = vld [vmem:[%s397 + $0x148] sm:%s390]
                  %482 = vst [vmem:[%s398 + $0xa4] sm:%s390] %v481
                  %v483 = vld [vmem:[%s397 + $0x150] sm:%s390]
                  %484 = vst [vmem:[%s398 + $0xa8] sm:%s390] %v483
                  %v485 = vld [vmem:[%s397 + $0x158] sm:%s390]
                  %486 = vst [vmem:[%s398 + $0xac] sm:%s390] %v485
                  %v487 = vld [vmem:[%s397 + $0x160] sm:%s390]
                  %488 = vst [vmem:[%s398 + $0xb0] sm:%s390] %v487
                  %v489 = vld [vmem:[%s397 + $0x168] sm:%s390]
                  %490 = vst [vmem:[%s398 + $0xb4] sm:%s390] %v489
                  %v491 = vld [vmem:[%s397 + $0x170] sm:%s390]
                  %492 = vst [vmem:[%s398 + $0xb8] sm:%s390] %v491
                  %v493 = vld [vmem:[%s397 + $0x178] sm:%s390]
                  %494 = vst [vmem:[%s398 + $0xbc] sm:%s390] %v493
                  %v495 = vld [vmem:[%s397 + $0x180] sm:%s390]
                  %496 = vst [vmem:[%s398 + $0xc0] sm:%s390] %v495
                  %v497 = vld [vmem:[%s397 + $0x188] sm:%s390]
                  %498 = vst [vmem:[%s398 + $0xc4] sm:%s390] %v497
                  %v499 = vld [vmem:[%s397 + $0x190] sm:%s390]
                  %500 = vst [vmem:[%s398 + $0xc8] sm:%s390] %v499
                  %v501 = vld [vmem:[%s397 + $0x198] sm:%s390]
                  %502 = vst [vmem:[%s398 + $0xcc] sm:%s390] %v501
                  %v503 = vld [vmem:[%s397 + $0x1a0] sm:%s390]
                  %504 = vst [vmem:[%s398 + $0xd0] sm:%s390] %v503
                  %v505 = vld [vmem:[%s397 + $0x1a8] sm:%s390]
                  %506 = vst [vmem:[%s398 + $0xd4] sm:%s390] %v505
                  %v507 = vld [vmem:[%s397 + $0x1b0] sm:%s390]
                  %508 = vst [vmem:[%s398 + $0xd8] sm:%s390] %v507
                  %v509 = vld [vmem:[%s397 + $0x1b8] sm:%s390]
                  %510 = vst [vmem:[%s398 + $0xdc] sm:%s390] %v509
                  %v511 = vld [vmem:[%s397 + $0x1c0] sm:%s390]
                  %512 = vst [vmem:[%s398 + $0xe0] sm:%s390] %v511
                  %v513 = vld [vmem:[%s397 + $0x1c8] sm:%s390]
                  %514 = vst [vmem:[%s398 + $0xe4] sm:%s390] %v513
                  %v515 = vld [vmem:[%s397 + $0x1d0] sm:%s390]
                  %516 = vst [vmem:[%s398 + $0xe8] sm:%s390] %v515
                  %v517 = vld [vmem:[%s397 + $0x1d8] sm:%s390]
                  %518 = vst [vmem:[%s398 + $0xec] sm:%s390] %v517
                  %v519 = vld [vmem:[%s397 + $0x1e0] sm:%s390]
                  %520 = vst [vmem:[%s398 + $0xf0] sm:%s390] %v519
                  %v521 = vld [vmem:[%s397 + $0x1e8] sm:%s390]
                  %522 = vst [vmem:[%s398 + $0xf4] sm:%s390] %v521
                  %v523 = vld [vmem:[%s397 + $0x1f0] sm:%s390]
                  %524 = vst [vmem:[%s398 + $0xf8] sm:%s390] %v523
                  %v525 = vld [vmem:[%s397 + $0x1f8] sm:%s390]
                  %526 = vst [vmem:[%s398 + $0xfc] sm:%s390] %v525
                $region59: #{forward.8} parent=46 // loop_footer
                  %s396 = sadd.s32 1, %s392
                $region60: #{forward.8} parent=46 // loop_footer_branch
                  %391 = sbr.rel target = $region56
                $region61: #{forward.8} parent=46 // loop_exit
                  _
              $region47: #{forward.8} parent=31 // pred_fallthru
                _
            $region32: #{forward.8} parent=27 // pred_fallthru
              _
            // Predicated region
            $region33: #{forward.8} parent=27 // pred_check
              _
            $region34: #{forward.8} parent=27 // pred_check_branch
              %240 = sbr.rel (0) target = $region36
            $region35: #{forward.8} parent=27 // pred_region
              %s242 = ssub.s32 16, 1
              loop: start=0, step=1, limit=1
              $region37: #{forward.8} parent=35 // loop_pre_header
                _
              $region38: #{forward.8} parent=35 // loop_header
                %s244 = sphi 0, %s248
                %p245 = scmp.ge.s32.totalorder %s244, 1
                %s249 = sphi %s234, %s234
                %s250 = sphi %s229, %s229
              $region39: #{forward.8} parent=35 // loop_header_branch
                %247 = sbr.rel (%p245) target = $region43
              $region40: #{forward.8} parent=35 // loop_body
                %v251 = vld [vmem:[%s249] sm:%s242]
                %252 = vst [vmem:[%s250] sm:%s242] %v251
                %v253 = vld [vmem:[%s249 + $0x8] sm:%s242]
                %254 = vst [vmem:[%s250 + $0x4] sm:%s242] %v253
                %v255 = vld [vmem:[%s249 + $0x10] sm:%s242]
                %256 = vst [vmem:[%s250 + $0x8] sm:%s242] %v255
                %v257 = vld [vmem:[%s249 + $0x18] sm:%s242]
                %258 = vst [vmem:[%s250 + $0xc] sm:%s242] %v257
                %v259 = vld [vmem:[%s249 + $0x20] sm:%s242]
                %260 = vst [vmem:[%s250 + $0x10] sm:%s242] %v259
                %v261 = vld [vmem:[%s249 + $0x28] sm:%s242]
                %262 = vst [vmem:[%s250 + $0x14] sm:%s242] %v261
                %v263 = vld [vmem:[%s249 + $0x30] sm:%s242]
                %264 = vst [vmem:[%s250 + $0x18] sm:%s242] %v263
                %v265 = vld [vmem:[%s249 + $0x38] sm:%s242]
                %266 = vst [vmem:[%s250 + $0x1c] sm:%s242] %v265
                %v267 = vld [vmem:[%s249 + $0x40] sm:%s242]
                %268 = vst [vmem:[%s250 + $0x20] sm:%s242] %v267
                %v269 = vld [vmem:[%s249 + $0x48] sm:%s242]
                %270 = vst [vmem:[%s250 + $0x24] sm:%s242] %v269
                %v271 = vld [vmem:[%s249 + $0x50] sm:%s242]
                %272 = vst [vmem:[%s250 + $0x28] sm:%s242] %v271
                %v273 = vld [vmem:[%s249 + $0x58] sm:%s242]
                %274 = vst [vmem:[%s250 + $0x2c] sm:%s242] %v273
                %v275 = vld [vmem:[%s249 + $0x60] sm:%s242]
                %276 = vst [vmem:[%s250 + $0x30] sm:%s242] %v275
                %v277 = vld [vmem:[%s249 + $0x68] sm:%s242]
                %278 = vst [vmem:[%s250 + $0x34] sm:%s242] %v277
                %v279 = vld [vmem:[%s249 + $0x70] sm:%s242]
                %280 = vst [vmem:[%s250 + $0x38] sm:%s242] %v279
                %v281 = vld [vmem:[%s249 + $0x78] sm:%s242]
                %282 = vst [vmem:[%s250 + $0x3c] sm:%s242] %v281
                %v283 = vld [vmem:[%s249 + $0x80] sm:%s242]
                %284 = vst [vmem:[%s250 + $0x40] sm:%s242] %v283
                %v285 = vld [vmem:[%s249 + $0x88] sm:%s242]
                %286 = vst [vmem:[%s250 + $0x44] sm:%s242] %v285
                %v287 = vld [vmem:[%s249 + $0x90] sm:%s242]
                %288 = vst [vmem:[%s250 + $0x48] sm:%s242] %v287
                %v289 = vld [vmem:[%s249 + $0x98] sm:%s242]
                %290 = vst [vmem:[%s250 + $0x4c] sm:%s242] %v289
                %v291 = vld [vmem:[%s249 + $0xa0] sm:%s242]
                %292 = vst [vmem:[%s250 + $0x50] sm:%s242] %v291
                %v293 = vld [vmem:[%s249 + $0xa8] sm:%s242]
                %294 = vst [vmem:[%s250 + $0x54] sm:%s242] %v293
                %v295 = vld [vmem:[%s249 + $0xb0] sm:%s242]
                %296 = vst [vmem:[%s250 + $0x58] sm:%s242] %v295
                %v297 = vld [vmem:[%s249 + $0xb8] sm:%s242]
                %298 = vst [vmem:[%s250 + $0x5c] sm:%s242] %v297
                %v299 = vld [vmem:[%s249 + $0xc0] sm:%s242]
                %300 = vst [vmem:[%s250 + $0x60] sm:%s242] %v299
                %v301 = vld [vmem:[%s249 + $0xc8] sm:%s242]
                %302 = vst [vmem:[%s250 + $0x64] sm:%s242] %v301
                %v303 = vld [vmem:[%s249 + $0xd0] sm:%s242]
                %304 = vst [vmem:[%s250 + $0x68] sm:%s242] %v303
                %v305 = vld [vmem:[%s249 + $0xd8] sm:%s242]
                %306 = vst [vmem:[%s250 + $0x6c] sm:%s242] %v305
                %v307 = vld [vmem:[%s249 + $0xe0] sm:%s242]
                %308 = vst [vmem:[%s250 + $0x70] sm:%s242] %v307
                %v309 = vld [vmem:[%s249 + $0xe8] sm:%s242]
                %310 = vst [vmem:[%s250 + $0x74] sm:%s242] %v309
                %v311 = vld [vmem:[%s249 + $0xf0] sm:%s242]
                %312 = vst [vmem:[%s250 + $0x78] sm:%s242] %v311
                %v313 = vld [vmem:[%s249 + $0xf8] sm:%s242]
                %314 = vst [vmem:[%s250 + $0x7c] sm:%s242] %v313
                %v315 = vld [vmem:[%s249 + $0x100] sm:%s242]
                %316 = vst [vmem:[%s250 + $0x80] sm:%s242] %v315
                %v317 = vld [vmem:[%s249 + $0x108] sm:%s242]
                %318 = vst [vmem:[%s250 + $0x84] sm:%s242] %v317
                %v319 = vld [vmem:[%s249 + $0x110] sm:%s242]
                %320 = vst [vmem:[%s250 + $0x88] sm:%s242] %v319
                %v321 = vld [vmem:[%s249 + $0x118] sm:%s242]
                %322 = vst [vmem:[%s250 + $0x8c] sm:%s242] %v321
                %v323 = vld [vmem:[%s249 + $0x120] sm:%s242]
                %324 = vst [vmem:[%s250 + $0x90] sm:%s242] %v323
                %v325 = vld [vmem:[%s249 + $0x128] sm:%s242]
                %326 = vst [vmem:[%s250 + $0x94] sm:%s242] %v325
                %v327 = vld [vmem:[%s249 + $0x130] sm:%s242]
                %328 = vst [vmem:[%s250 + $0x98] sm:%s242] %v327
                %v329 = vld [vmem:[%s249 + $0x138] sm:%s242]
                %330 = vst [vmem:[%s250 + $0x9c] sm:%s242] %v329
                %v331 = vld [vmem:[%s249 + $0x140] sm:%s242]
                %332 = vst [vmem:[%s250 + $0xa0] sm:%s242] %v331
                %v333 = vld [vmem:[%s249 + $0x148] sm:%s242]
                %334 = vst [vmem:[%s250 + $0xa4] sm:%s242] %v333
                %v335 = vld [vmem:[%s249 + $0x150] sm:%s242]
                %336 = vst [vmem:[%s250 + $0xa8] sm:%s242] %v335
                %v337 = vld [vmem:[%s249 + $0x158] sm:%s242]
                %338 = vst [vmem:[%s250 + $0xac] sm:%s242] %v337
                %v339 = vld [vmem:[%s249 + $0x160] sm:%s242]
                %340 = vst [vmem:[%s250 + $0xb0] sm:%s242] %v339
                %v341 = vld [vmem:[%s249 + $0x168] sm:%s242]
                %342 = vst [vmem:[%s250 + $0xb4] sm:%s242] %v341
                %v343 = vld [vmem:[%s249 + $0x170] sm:%s242]
                %344 = vst [vmem:[%s250 + $0xb8] sm:%s242] %v343
                %v345 = vld [vmem:[%s249 + $0x178] sm:%s242]
                %346 = vst [vmem:[%s250 + $0xbc] sm:%s242] %v345
                %v347 = vld [vmem:[%s249 + $0x180] sm:%s242]
                %348 = vst [vmem:[%s250 + $0xc0] sm:%s242] %v347
                %v349 = vld [vmem:[%s249 + $0x188] sm:%s242]
                %350 = vst [vmem:[%s250 + $0xc4] sm:%s242] %v349
                %v351 = vld [vmem:[%s249 + $0x190] sm:%s242]
                %352 = vst [vmem:[%s250 + $0xc8] sm:%s242] %v351
                %v353 = vld [vmem:[%s249 + $0x198] sm:%s242]
                %354 = vst [vmem:[%s250 + $0xcc] sm:%s242] %v353
                %v355 = vld [vmem:[%s249 + $0x1a0] sm:%s242]
                %356 = vst [vmem:[%s250 + $0xd0] sm:%s242] %v355
                %v357 = vld [vmem:[%s249 + $0x1a8] sm:%s242]
                %358 = vst [vmem:[%s250 + $0xd4] sm:%s242] %v357
                %v359 = vld [vmem:[%s249 + $0x1b0] sm:%s242]
                %360 = vst [vmem:[%s250 + $0xd8] sm:%s242] %v359
                %v361 = vld [vmem:[%s249 + $0x1b8] sm:%s242]
                %362 = vst [vmem:[%s250 + $0xdc] sm:%s242] %v361
                %v363 = vld [vmem:[%s249 + $0x1c0] sm:%s242]
                %364 = vst [vmem:[%s250 + $0xe0] sm:%s242] %v363
                %v365 = vld [vmem:[%s249 + $0x1c8] sm:%s242]
                %366 = vst [vmem:[%s250 + $0xe4] sm:%s242] %v365
                %v367 = vld [vmem:[%s249 + $0x1d0] sm:%s242]
                %368 = vst [vmem:[%s250 + $0xe8] sm:%s242] %v367
                %v369 = vld [vmem:[%s249 + $0x1d8] sm:%s242]
                %370 = vst [vmem:[%s250 + $0xec] sm:%s242] %v369
                %v371 = vld [vmem:[%s249 + $0x1e0] sm:%s242]
                %372 = vst [vmem:[%s250 + $0xf0] sm:%s242] %v371
                %v373 = vld [vmem:[%s249 + $0x1e8] sm:%s242]
                %374 = vst [vmem:[%s250 + $0xf4] sm:%s242] %v373
                %v375 = vld [vmem:[%s249 + $0x1f0] sm:%s242]
                %376 = vst [vmem:[%s250 + $0xf8] sm:%s242] %v375
                %v377 = vld [vmem:[%s249 + $0x1f8] sm:%s242]
                %378 = vst [vmem:[%s250 + $0xfc] sm:%s242] %v377
              $region41: #{forward.8} parent=35 // loop_footer
                %s248 = sadd.s32 1, %s244
              $region42: #{forward.8} parent=35 // loop_footer_branch
                %243 = sbr.rel target = $region38
              $region43: #{forward.8} parent=35 // loop_exit
                _
            $region36: #{forward.8} parent=27 // pred_fallthru
              _
          $region28: #{forward.8} parent=23 // pred_fallthru
            _
          %527 = vnop
        $region24: #{forward.8} parent=19 // pred_fallthru
          _
        // Predicated region
        $region62: #{forward.8} parent=19 // pred_check
          %p528 = pneg %p106
        $region63: #{forward.8} parent=19 // pred_check_branch
          %530 = sbr.rel (%p528) target = $region65
        $region64: #{forward.8} parent=19 // pred_region
          %p531 = scmp.lt.s32.totalorder %s19, 1
          %s532 = scalar_select %p531, %s19, 1
          %s533 = scalar_lea.vmem %s2, %s532
        $region65: #{forward.8} parent=19 // pred_fallthru
          _
        // Predicated region
        $region66: #{forward.8} parent=19 // pred_check
          %p534 = pneg %p132
        $region67: #{forward.8} parent=19 // pred_check_branch
          %536 = sbr.rel (%p534) target = $region69
        $region68: #{forward.8} parent=19 // pred_region
          %p537 = scmp.lt.s32.totalorder %s19, 1
          %s538 = scalar_select %p537, %s19, 1
          %s539 = scalar_lea.vmem %s3, %s538
        $region69: #{forward.8} parent=19 // pred_fallthru
          _
        // Predicated region
        $region70: #{forward.8} parent=19 // pred_check
          %p540 = pneg %p158
        $region71: #{forward.8} parent=19 // pred_check_branch
          %542 = sbr.rel (%p540) target = $region73
        $region72: #{forward.8} parent=19 // pred_region
          %p543 = scmp.lt.s32.totalorder %s19, 1
          %s544 = scalar_select %p543, %s19, 1
          %s545 = scalar_lea.vmem %s4, %s544
        $region73: #{forward.8} parent=19 // pred_fallthru
          _
      $region20: #{forward.8} parent=5 // pred_fallthru
        _
      %p546 = scmp.le.s32.totalorder 1, %s11
      %p547 = scmp.lt.s32.totalorder %s11, 3
      %p548 = pnand %p546, %p547
      %p549 = pneg %p548
      // Predicated region
      $region74: #{forward.8} parent=5 // pred_check
        _
      $region75: #{forward.8} parent=5 // pred_check_branch
        %551 = sbr.rel (%p548) target = $region77
      $region76: #{forward.8} parent=5 // pred_region
        %s552 = ssub.s32 %s11, 1
        %s553 = sand.u32 %s73, 1
        %s554 = sand.u32 %s73, 1
        %s555 = smul.addr %s554, 256
        %s556 = scalar_lea.vmem [#allocation3], %s555
        // Predicated region
        $region78: #{forward.8} parent=76 // pred_check
          %p557 = pneg %p86
        $region79: #{forward.8} parent=76 // pred_check_branch
          %559 = sbr.rel (%p557) target = $region81
        $region80: #{forward.8} parent=76 // pred_region
          _
        $region81: #{forward.8} parent=76 // pred_fallthru
          _
        %s560 = smul.u32 4, %s23
        %p561 = scmp.lt.s32.totalorder %s21, 0
        %s562 = scalar_select %p561, %s21, 0
        %p563 = scmp.lt.s32.totalorder %s560, 3
        %s564 = scalar_select %p563, %s560, 3
        %s565 = smul.addr %s562, 4
        %s566 = sadd.s32 %s564, %s565
        %s567 = scalar_lea.vmem %s0, %s566
        %p568 = pneg %p58
        %p569 = pneg %p55
        %s570 = sand.u32 %s73, 1
        %s571 = sand.u32 %s73, 1
        %s572 = smul.addr %s571, 256
        %s573 = scalar_lea.vmem [#allocation3], %s572
        %p574 = pneg %p86
        %p575 = pneg %p83
        %p576 = scmp.lt.s32.totalorder %s22, 1
        %s577 = scalar_select %p576, %s22, 1
        %s578 = scalar_lea.vmem %s2, %s577
        %p579 = pneg %p112
        %p580 = pneg %p109
        %p581 = scmp.lt.s32.totalorder %s22, 1
        %s582 = scalar_select %p581, %s22, 1
        %s583 = scalar_lea.vmem %s3, %s582
        %p584 = pneg %p138
        %p585 = pneg %p135
        %p586 = scmp.lt.s32.totalorder %s22, 1
        %s587 = scalar_select %p586, %s22, 1
        %s588 = scalar_lea.vmem %s4, %s587
        %p589 = pneg %p164
        %p590 = pneg %p161
        %p591 = pneg %p192
        %p592 = pneg %p189
        %p593 = scmp.lt.s32.totalorder %s21, 0
        %s594 = scalar_select %p593, %s21, 0
        %p595 = scmp.lt.s32.totalorder %s22, 1
        %s596 = scalar_select %p595, %s22, 1
        %s597 = smul.addr %s594, 2
        %s598 = sadd.s32 %s596, %s597
        %s599 = scalar_lea.vmem %s5, %s598
        %s600 = smul.u32 4, %s23
        %p601 = scmp.lt.s32.totalorder %s21, 0
        %s602 = scalar_select %p601, %s21, 0
        %p603 = scmp.lt.s32.totalorder %s600, 3
        %s604 = scalar_select %p603, %s600, 3
        %s605 = smul.addr %s602, 4
        %s606 = sadd.s32 %s604, %s605
        %s607 = scalar_lea.vmem %s0, %s606
        %s608 = smul.u32 4, %s23
        %s609 = smul.u32 64, %s23
        %p610 = scmp.lt.s32.totalorder %s22, 1
        %s611 = scalar_select %p610, %s22, 1
        %s612 = scalar_lea.vmem %s2, %s611
        %p613 = scmp.lt.s32.totalorder %s22, 1
        %s614 = scalar_select %p613, %s22, 1
        %s615 = scalar_lea.vmem %s3, %s614
        %p616 = scmp.lt.s32.totalorder %s22, 1
        %s617 = scalar_select %p616, %s22, 1
        %s618 = scalar_lea.vmem %s4, %s617
        %p619 = scmp.lt.s32.totalorder %s21, 0
        %s620 = scalar_select %p619, %s21, 0
        %p621 = scmp.lt.s32.totalorder %s22, 1
        %s622 = scalar_select %p621, %s22, 1
        %s623 = smul.addr %s620, 2
        %s624 = sadd.s32 %s622, %s623
        %s625 = scalar_lea.vmem %s5, %s624
        %p627 = scmp.eq.s32.totalorder %s23, 0
        // Predicated region
        $region82: #{forward.8} parent=76 // pred_check
          %p628 = pneg %p627
        $region83: #{forward.8} parent=76 // pred_check_branch
          %630 = sbr.rel (%p628) target = $region85
        $region84: #{forward.8} parent=76 // pred_region
          %631 = vst [vmem:[#allocation2] sm:$0x3] 0.0
        $region85: #{forward.8} parent=76 // pred_fallthru
          _
        %v632 = vld [vmem:[%s556] sm:$0xf]
        %v633 = vld [vmem:[%s556 + $0x4] sm:$0xf]
        %v634 = vld [vmem:[%s556 + $0x8] sm:$0xf]
        %v635 = vld [vmem:[%s556 + $0xc] sm:$0xf]
        %v636 = vld [vmem:[%s556 + $0x10] sm:$0xf]
        %v637 = vld [vmem:[%s556 + $0x14] sm:$0xf]
        %v638 = vld [vmem:[%s556 + $0x18] sm:$0xf]
        %v639 = vld [vmem:[%s556 + $0x1c] sm:$0xf]
        %v640 = vld [vmem:[%s556 + $0x20] sm:$0xf]
        %v641 = vld [vmem:[%s556 + $0x24] sm:$0xf]
        %v642 = vld [vmem:[%s556 + $0x28] sm:$0xf]
        %v643 = vld [vmem:[%s556 + $0x2c] sm:$0xf]
        %v644 = vld [vmem:[%s556 + $0x30] sm:$0xf]
        %v645 = vld [vmem:[%s556 + $0x34] sm:$0xf]
        %v646 = vld [vmem:[%s556 + $0x38] sm:$0xf]
        %v647 = vld [vmem:[%s556 + $0x3c] sm:$0xf]
        %v648 = vld [vmem:[%s556 + $0x40] sm:$0xf]
        %v649 = vld [vmem:[%s556 + $0x44] sm:$0xf]
        %v650 = vld [vmem:[%s556 + $0x48] sm:$0xf]
        %v651 = vld [vmem:[%s556 + $0x4c] sm:$0xf]
        %v652 = vld [vmem:[%s556 + $0x50] sm:$0xf]
        %v653 = vld [vmem:[%s556 + $0x54] sm:$0xf]
        %v654 = vld [vmem:[%s556 + $0x58] sm:$0xf]
        %v655 = vld [vmem:[%s556 + $0x5c] sm:$0xf]
        %v656 = vld [vmem:[%s556 + $0x60] sm:$0xf]
        %v657 = vld [vmem:[%s556 + $0x64] sm:$0xf]
        %v658 = vld [vmem:[%s556 + $0x68] sm:$0xf]
        %v659 = vld [vmem:[%s556 + $0x6c] sm:$0xf]
        %v660 = vld [vmem:[%s556 + $0x70] sm:$0xf]
        %v661 = vld [vmem:[%s556 + $0x74] sm:$0xf]
        %v662 = vld [vmem:[%s556 + $0x78] sm:$0xf]
        %v663 = vld [vmem:[%s556 + $0x7c] sm:$0xf]
        %v664 = vld [vmem:[%s556 + $0x80] sm:$0xf]
        %v665 = vld [vmem:[%s556 + $0x84] sm:$0xf]
        %v666 = vld [vmem:[%s556 + $0x88] sm:$0xf]
        %v667 = vld [vmem:[%s556 + $0x8c] sm:$0xf]
        %v668 = vld [vmem:[%s556 + $0x90] sm:$0xf]
        %v669 = vld [vmem:[%s556 + $0x94] sm:$0xf]
        %v670 = vld [vmem:[%s556 + $0x98] sm:$0xf]
        %v671 = vld [vmem:[%s556 + $0x9c] sm:$0xf]
        %v672 = vld [vmem:[%s556 + $0xa0] sm:$0xf]
        %v673 = vld [vmem:[%s556 + $0xa4] sm:$0xf]
        %v674 = vld [vmem:[%s556 + $0xa8] sm:$0xf]
        %v675 = vld [vmem:[%s556 + $0xac] sm:$0xf]
        %v676 = vld [vmem:[%s556 + $0xb0] sm:$0xf]
        %v677 = vld [vmem:[%s556 + $0xb4] sm:$0xf]
        %v678 = vld [vmem:[%s556 + $0xb8] sm:$0xf]
        %v679 = vld [vmem:[%s556 + $0xbc] sm:$0xf]
        %v680 = vld [vmem:[%s556 + $0xc0] sm:$0xf]
        %v681 = vld [vmem:[%s556 + $0xc4] sm:$0xf]
        %v682 = vld [vmem:[%s556 + $0xc8] sm:$0xf]
        %v683 = vld [vmem:[%s556 + $0xcc] sm:$0xf]
        %v684 = vld [vmem:[%s556 + $0xd0] sm:$0xf]
        %v685 = vld [vmem:[%s556 + $0xd4] sm:$0xf]
        %v686 = vld [vmem:[%s556 + $0xd8] sm:$0xf]
        %v687 = vld [vmem:[%s556 + $0xdc] sm:$0xf]
        %v688 = vld [vmem:[%s556 + $0xe0] sm:$0xf]
        %v689 = vld [vmem:[%s556 + $0xe4] sm:$0xf]
        %v690 = vld [vmem:[%s556 + $0xe8] sm:$0xf]
        %v691 = vld [vmem:[%s556 + $0xec] sm:$0xf]
        %v692 = vld [vmem:[%s556 + $0xf0] sm:$0xf]
        %v693 = vld [vmem:[%s556 + $0xf4] sm:$0xf]
        %v694 = vld [vmem:[%s556 + $0xf8] sm:$0xf]
        %v695 = vld [vmem:[%s556 + $0xfc] sm:$0xf]
        %v696 = vld [vmem:[#allocation2] sm:$0x3]
        %v697 = vld [vmem:[%s607] sm:$0xf]
        %v700 = vunpack.c.l.s4 1966171168
        %v701 = vunpack.c.0.s8 %v700
        %v702 = vlaneseq
        %v703 = vshrl.u32 %v702, 7
        %v704 = vsub.s32 %v701, %v703
        %v705 = vrot.slane %v697, %v704
        %v706 = vcombine.high %v705, %v705
        %v708 = vunpack.c.l.s4 1966171168
        %v709 = vunpack.c.0.s8 %v708
        %v710 = vlaneseq
        %v711 = vshrl.u32 %v710, 7
        %v712 = vsub.s32 %v709, %v711
        %v713 = vrot.slane %v705, %v712
        %v715 = vunpack.c.l.s4 1966171168
        %v716 = vunpack.c.0.s8 %v715
        %v717 = vlaneseq
        %v718 = vshrl.u32 %v717, 7
        %v719 = vsub.s32 %v716, %v718
        %v720 = vrot.slane %v706, %v719
        %v721 = vcombine.high %v713, %v713
        %v722 = vcombine.high %v720, %v720
        %v791 = vunpack.c.l.b16 %v632
        %v792 = vunpack.c.l.b16 %v633
        %v793 = vunpack.c.l.b16 %v634
        %v794 = vunpack.c.l.b16 %v635
        %v795 = vunpack.c.l.b16 %v636
        %v796 = vunpack.c.l.b16 %v637
        %v797 = vunpack.c.l.b16 %v638
        %v798 = vunpack.c.l.b16 %v639
        %v799 = vunpack.c.l.b16 %v640
        %v800 = vunpack.c.l.b16 %v641
        %v801 = vunpack.c.l.b16 %v642
        %v802 = vunpack.c.l.b16 %v643
        %v803 = vunpack.c.l.b16 %v644
        %v804 = vunpack.c.l.b16 %v645
        %v805 = vunpack.c.l.b16 %v646
        %v806 = vunpack.c.l.b16 %v647
        %v807 = vunpack.c.l.b16 %v648
        %v808 = vunpack.c.l.b16 %v649
        %v809 = vunpack.c.l.b16 %v650
        %v810 = vunpack.c.l.b16 %v651
        %v811 = vunpack.c.l.b16 %v652
        %v812 = vunpack.c.l.b16 %v653
        %v813 = vunpack.c.l.b16 %v654
        %v814 = vunpack.c.l.b16 %v655
        %v815 = vunpack.c.l.b16 %v656
        %v816 = vunpack.c.l.b16 %v657
        %v817 = vunpack.c.l.b16 %v658
        %v818 = vunpack.c.l.b16 %v659
        %v819 = vunpack.c.l.b16 %v660
        %v820 = vunpack.c.l.b16 %v661
        %v821 = vunpack.c.l.b16 %v662
        %v822 = vunpack.c.l.b16 %v663
        %v823 = vunpack.c.l.b16 %v664
        %v824 = vunpack.c.l.b16 %v665
        %v825 = vunpack.c.l.b16 %v666
        %v826 = vunpack.c.l.b16 %v667
        %v827 = vunpack.c.l.b16 %v668
        %v828 = vunpack.c.l.b16 %v669
        %v829 = vunpack.c.l.b16 %v670
        %v830 = vunpack.c.l.b16 %v671
        %v831 = vunpack.c.l.b16 %v672
        %v832 = vunpack.c.l.b16 %v673
        %v833 = vunpack.c.l.b16 %v674
        %v834 = vunpack.c.l.b16 %v675
        %v835 = vunpack.c.l.b16 %v676
        %v836 = vunpack.c.l.b16 %v677
        %v837 = vunpack.c.l.b16 %v678
        %v838 = vunpack.c.l.b16 %v679
        %v839 = vunpack.c.l.b16 %v680
        %v840 = vunpack.c.l.b16 %v681
        %v841 = vunpack.c.l.b16 %v682
        %v842 = vunpack.c.l.b16 %v683
        %v843 = vunpack.c.l.b16 %v684
        %v844 = vunpack.c.l.b16 %v685
        %v845 = vunpack.c.l.b16 %v686
        %v846 = vunpack.c.l.b16 %v687
        %v847 = vunpack.c.l.b16 %v688
        %v848 = vunpack.c.l.b16 %v689
        %v849 = vunpack.c.l.b16 %v690
        %v850 = vunpack.c.l.b16 %v691
        %v851 = vunpack.c.l.b16 %v692
        %v852 = vunpack.c.l.b16 %v693
        %v853 = vunpack.c.l.b16 %v694
        %v854 = vunpack.c.l.b16 %v695
        %v855 = vpack.c.b16 %v792, %v791
        %v856 = vpack.c.b16 %v794, %v793
        %v857 = vpack.c.b16 %v796, %v795
        %v858 = vpack.c.b16 %v798, %v797
        %v859 = vpack.c.b16 %v800, %v799
        %v860 = vpack.c.b16 %v802, %v801
        %v861 = vpack.c.b16 %v804, %v803
        %v862 = vpack.c.b16 %v806, %v805
        %v863 = vpack.c.b16 %v808, %v807
        %v864 = vpack.c.b16 %v810, %v809
        %v865 = vpack.c.b16 %v812, %v811
        %v866 = vpack.c.b16 %v814, %v813
        %v867 = vpack.c.b16 %v816, %v815
        %v868 = vpack.c.b16 %v818, %v817
        %v869 = vpack.c.b16 %v820, %v819
        %v870 = vpack.c.b16 %v822, %v821
        %v871 = vpack.c.b16 %v824, %v823
        %v872 = vpack.c.b16 %v826, %v825
        %v873 = vpack.c.b16 %v828, %v827
        %v874 = vpack.c.b16 %v830, %v829
        %v875 = vpack.c.b16 %v832, %v831
        %v876 = vpack.c.b16 %v834, %v833
        %v877 = vpack.c.b16 %v836, %v835
        %v878 = vpack.c.b16 %v838, %v837
        %v879 = vpack.c.b16 %v840, %v839
        %v880 = vpack.c.b16 %v842, %v841
        %v881 = vpack.c.b16 %v844, %v843
        %v882 = vpack.c.b16 %v846, %v845
        %v883 = vpack.c.b16 %v848, %v847
        %v884 = vpack.c.b16 %v850, %v849
        %v885 = vpack.c.b16 %v852, %v851
        %v886 = vpack.c.b16 %v854, %v853
        %919 = vmatprep.subr.bf16.mxu0 0
        %920 = vmatpush1.bf16.msra.mxu0 %v862
        %921 = vmatprep.subr.bf16.mxu0 0
        %922 = vmatpush1.bf16.msra.mxu0 %v861
        %923 = vmatprep.subr.bf16.mxu0 0
        %924 = vmatpush1.bf16.msra.mxu0 %v860
        %925 = vmatprep.subr.bf16.mxu0 0
        %926 = vmatpush1.bf16.msra.mxu0 %v859
        %927 = vmatprep.subr.bf16.mxu0 0
        %928 = vmatpush1.bf16.msra.mxu0 %v858
        %929 = vmatprep.subr.bf16.mxu0 0
        %930 = vmatpush1.bf16.msra.mxu0 %v857
        %931 = vmatprep.subr.bf16.mxu0 0
        %932 = vmatpush1.bf16.msra.mxu0 %v856
        %933 = vmatprep.subr.bf16.mxu0 0
        %934 = vmatpush1.bf16.msra.mxu0 %v855
        %935 = vmatprep.subr.bf16.mxu0 0
        %936 = vmatpush2.bf16.msra.mxu0 %v870
        %937 = vmatprep.subr.bf16.mxu0 0
        %938 = vmatpush2.bf16.msra.mxu0 %v869
        %939 = vmatprep.subr.bf16.mxu0 0
        %940 = vmatpush2.bf16.msra.mxu0 %v868
        %941 = vmatprep.subr.bf16.mxu0 0
        %942 = vmatpush2.bf16.msra.mxu0 %v867
        %943 = vmatprep.subr.bf16.mxu0 0
        %944 = vmatpush2.bf16.msra.mxu0 %v866
        %945 = vmatprep.subr.bf16.mxu0 0
        %946 = vmatpush2.bf16.msra.mxu0 %v865
        %947 = vmatprep.subr.bf16.mxu0 0
        %948 = vmatpush2.bf16.msra.mxu0 %v864
        %949 = vmatprep.subr.bf16.mxu0 0
        %950 = vmatpush2.bf16.msra.mxu0 %v863
        %951 = vmatprep.mubr.bf16.mxu0 %v720
        %952 = vmatmul.mubr.bf16.gmra.mxu0 %v713
        %v953 = vpop.f32.mrf.mxu0
        %v954 = vadd.f32 0.0, %v953
        %v955 = vpop.f32.mrf.mxu0
        %v956 = vpop.f32.mrf.mxu0
        %v957 = vpop.f32.mrf.mxu0
        %958 = vdwg.mxu0
        %959 = vmatprep.subr.bf16.mxu0 0
        %960 = vmatpush1.bf16.msra.mxu0 %v878
        %961 = vmatprep.subr.bf16.mxu0 0
        %962 = vmatpush1.bf16.msra.mxu0 %v877
        %963 = vmatprep.subr.bf16.mxu0 0
        %964 = vmatpush1.bf16.msra.mxu0 %v876
        %965 = vmatprep.subr.bf16.mxu0 0
        %966 = vmatpush1.bf16.msra.mxu0 %v875
        %967 = vmatprep.subr.bf16.mxu0 0
        %968 = vmatpush1.bf16.msra.mxu0 %v874
        %969 = vmatprep.subr.bf16.mxu0 0
        %970 = vmatpush1.bf16.msra.mxu0 %v873
        %971 = vmatprep.subr.bf16.mxu0 0
        %972 = vmatpush1.bf16.msra.mxu0 %v872
        %973 = vmatprep.subr.bf16.mxu0 0
        %974 = vmatpush1.bf16.msra.mxu0 %v871
        %975 = vmatprep.subr.bf16.mxu0 0
        %976 = vmatpush2.bf16.msra.mxu0 %v886
        %977 = vmatprep.subr.bf16.mxu0 0
        %978 = vmatpush2.bf16.msra.mxu0 %v885
        %979 = vmatprep.subr.bf16.mxu0 0
        %980 = vmatpush2.bf16.msra.mxu0 %v884
        %981 = vmatprep.subr.bf16.mxu0 0
        %982 = vmatpush2.bf16.msra.mxu0 %v883
        %983 = vmatprep.subr.bf16.mxu0 0
        %984 = vmatpush2.bf16.msra.mxu0 %v882
        %985 = vmatprep.subr.bf16.mxu0 0
        %986 = vmatpush2.bf16.msra.mxu0 %v881
        %987 = vmatprep.subr.bf16.mxu0 0
        %988 = vmatpush2.bf16.msra.mxu0 %v880
        %989 = vmatprep.subr.bf16.mxu0 0
        %990 = vmatpush2.bf16.msra.mxu0 %v879
        %991 = vmatprep.mubr.bf16.mxu0 %v722
        %992 = vmatmul.mubr.bf16.gmra.mxu0 %v721
        %v993 = vpop.f32.mrf.mxu0
        %v994 = vadd.f32 %v954, %v993
        %v995 = vpop.f32.mrf.mxu0
        %v996 = vpop.f32.mrf.mxu0
        %v997 = vpop.f32.mrf.mxu0
        %998 = vdwg.mxu0
        %v999 = vadd.f32 %v696, %v994
        %1000 = vst [vmem:[#allocation2] sm:$0x3] %v999
        // Predicated region
        $region86: #{forward.8} parent=76 // pred_check
          %p1001 = pneg %p627
        $region87: #{forward.8} parent=76 // pred_check_branch
          %1003 = sbr.rel (%p1001) target = $region89
        $region88: #{forward.8} parent=76 // pred_region
          %v1004 = vld [vmem:[%s612] sm:$0x1]
          %v1005 = vld [vmem:[%s615] sm:$0x1]
          %v1006 = vld [vmem:[%s618] sm:$0x1]
          %v1007 = vld [vmem:[#allocation2] sm:$0x3]
          %v1009 = vlaneseq
          %v1010 = vshrl.u32 %v1009, 7
          %v1011 = vsub.s32 0, %v1010
          %v1012 = vrot.slane %v1004, %v1011
          %v1014 = vadd.f32 %v1007, %v1012
          %v1015 = vmax.f32 %v1014, 0.0
          %v1017 = vlaneseq
          %v1018 = vshrl.u32 %v1017, 7
          %v1019 = vsub.s32 0, %v1018
          %v1020 = vrot.slane %v1005, %v1019
          %v1022 = vmul.f32 %v1015, %v1020
          %v1024 = vlaneseq
          %v1025 = vshrl.u32 %v1024, 7
          %v1026 = vsub.s32 0, %v1025
          %v1027 = vrot.slane %v1006, %v1026
          %v1029 = vadd.f32 %v1022, %v1027
          %v1030 = vpack.c.bf16 %v1029, %v1029
          %1031 = vst [vmem:[%s625] sm:$0x1] %v1030
        $region89: #{forward.8} parent=76 // pred_fallthru
          _
        %p1032 = scmp.lt.s32.totalorder %s21, 0
        %s1033 = scalar_select %p1032, %s21, 0
        %p1034 = scmp.lt.s32.totalorder %s22, 1
        %s1035 = scalar_select %p1034, %s22, 1
        %s1036 = smul.addr %s1033, 2
        %s1037 = sadd.s32 %s1035, %s1036
        %s1038 = scalar_lea.vmem %s5, %s1037
        // Predicated region
        $region90: #{forward.8} parent=76 // pred_check
          %p1039 = pneg %p189
        $region91: #{forward.8} parent=76 // pred_check_branch
          %1041 = sbr.rel (%p1039) target = $region93
        $region92: #{forward.8} parent=76 // pred_region
          _
        $region93: #{forward.8} parent=76 // pred_fallthru
          _
      $region77: #{forward.8} parent=5 // pred_fallthru
        _
      %p1042 = scmp.le.s32.totalorder 2, %s11
      // Predicated region
      $region94: #{forward.8} parent=5 // pred_check
        %p1043 = pneg %p1042
      $region95: #{forward.8} parent=5 // pred_check_branch
        %1045 = sbr.rel (%p1043) target = $region97
      $region96: #{forward.8} parent=5 // pred_region
        %s1046 = ssub.s32 %s11, 2
        // Predicated region
        $region98: #{forward.8} parent=96 // pred_check
          %p1047 = pneg %p195
        $region99: #{forward.8} parent=96 // pred_check_branch
          %1049 = sbr.rel (%p1047) target = $region101
        $region100: #{forward.8} parent=96 // pred_region
          %p1050 = scmp.lt.s32.totalorder %s24, 0
          %s1051 = scalar_select %p1050, %s24, 0
          %p1052 = scmp.lt.s32.totalorder %s25, 1
          %s1053 = scalar_select %p1052, %s25, 1
          %s1054 = smul.addr %s1051, 2
          %s1055 = sadd.s32 %s1053, %s1054
          %s1056 = scalar_lea.vmem %s5, %s1055
        $region101: #{forward.8} parent=96 // pred_fallthru
          _
      $region97: #{forward.8} parent=5 // pred_fallthru
        _
    $region6: #{forward.8} parent=1 // loop_footer
      %s15 = sadd.s32 1, %s11
    $region7: #{forward.8} parent=1 // loop_footer_branch
      %10 = sbr.rel target = $region3
    $region8: #{forward.8} parent=1 // loop_exit
      _

// kernel: forward.6
$region0: #{forward.6}
  #allocation0 [shape = 'u32[]', space=smem, size = 0x4, offset = 0x4, fixed_abs, tag = 'smem constant byte address 0x4 - core index']
  #allocation1 [shape = 'u32[144,128]{1,0:T(1,128)}', space=vmem, size = 0x12000, scoped, tag = 'internal scratch']
  #allocation2 [shape = 'f32[4,32,128]{2,1,0:T(8,128)}', space=vmem, size = 0x10000, scoped, tag = 'scratch operand']
  %s0 = inlined_call_operand.vmem [shape: bf16[4,32,1600], index: 0, kind: input, shape index: {}]
  %s1 = inlined_call_operand.vmem [shape: bf16[1600,128], index: 1, kind: input, shape index: {}]
  %s2 = inlined_call_operand.vmem [shape: f32[1,128], index: 2, kind: input, shape index: {}]
  %s3 = inlined_call_operand.vmem [shape: f32[1,128], index: 3, kind: input, shape index: {}]
  %s4 = inlined_call_operand.vmem [shape: f32[1,128], index: 4, kind: input, shape index: {}]
  %s5 = inlined_call_operand.vmem [shape: bf16[32,128], index: 5, kind: output, shape index: {}]
  %s6 = sld [smem:[#allocation0]]
  $region38: #{forward.6} parent=0
    _
  %s8 = ssub.s32 1, %s6
  %s9 = scalar_select 0, %s8, %s6
  // Predicated region
  $region2: #{forward.6} parent=0 // pred_check
    _
  $region3: #{forward.6} parent=0 // pred_check_branch
    %11 = sbr.rel (0) target = $region5
  $region4: #{forward.6} parent=0 // pred_region
    _
  $region5: #{forward.6} parent=0 // pred_fallthru
    _
  // Predicated region
  $region6: #{forward.6} parent=0 // pred_check
    _
  $region7: #{forward.6} parent=0 // pred_check_branch
    %13 = sbr.rel (0) target = $region9
  $region8: #{forward.6} parent=0 // pred_region
    _
  $region9: #{forward.6} parent=0 // pred_fallthru
    _
  // Predicated region
  $region10: #{forward.6} parent=0 // pred_check
    _
  $region11: #{forward.6} parent=0 // pred_check_branch
    %15 = sbr.rel (0) target = $region13
  $region12: #{forward.6} parent=0 // pred_region
    _
  $region13: #{forward.6} parent=0 // pred_fallthru
    _
  // Predicated region
  $region14: #{forward.6} parent=0 // pred_check
    _
  $region15: #{forward.6} parent=0 // pred_check_branch
    %17 = sbr.rel (0) target = $region17
  $region16: #{forward.6} parent=0 // pred_region
    _
  $region17: #{forward.6} parent=0 // pred_fallthru
    _
  // Predicated region
  $region18: #{forward.6} parent=0 // pred_check
    _
  $region19: #{forward.6} parent=0 // pred_check_branch
    %19 = sbr.rel (0) target = $region21
  $region20: #{forward.6} parent=0 // pred_region
    _
  $region21: #{forward.6} parent=0 // pred_fallthru
    _
  %p21 = scmp.eq.s32.totalorder 0, 0
  // Predicated region
  $region22: #{forward.6} parent=0 // pred_check
    %p22 = pneg %p21
  $region23: #{forward.6} parent=0 // pred_check_branch
    %24 = sbr.rel (%p22) target = $region25
  $region24: #{forward.6} parent=0 // pred_region
    %25 = vst [vmem:[#allocation2] sm:$0xff] 0.0
    %26 = vst [vmem:[#allocation2 + $0x8] sm:$0xff] 0.0
    %27 = vst [vmem:[#allocation2 + $0x10] sm:$0xff] 0.0
    %28 = vst [vmem:[#allocation2 + $0x18] sm:$0xff] 0.0
    %29 = vst [vmem:[#allocation2 + $0x20] sm:$0xff] 0.0
    %30 = vst [vmem:[#allocation2 + $0x28] sm:$0xff] 0.0
    %31 = vst [vmem:[#allocation2 + $0x30] sm:$0xff] 0.0
    %32 = vst [vmem:[#allocation2 + $0x38] sm:$0xff] 0.0
    %33 = vst [vmem:[#allocation2 + $0x40] sm:$0xff] 0.0
    %34 = vst [vmem:[#allocation2 + $0x48] sm:$0xff] 0.0
    %35 = vst [vmem:[#allocation2 + $0x50] sm:$0xff] 0.0
    %36 = vst [vmem:[#allocation2 + $0x58] sm:$0xff] 0.0
    %37 = vst [vmem:[#allocation2 + $0x60] sm:$0xff] 0.0
    %38 = vst [vmem:[#allocation2 + $0x68] sm:$0xff] 0.0
    %39 = vst [vmem:[#allocation2 + $0x70] sm:$0xff] 0.0
    %40 = vst [vmem:[#allocation2 + $0x78] sm:$0xff] 0.0
  $region25: #{forward.6} parent=0 // pred_fallthru
    _
  %v41 = vld [vmem:[%s1] sm:$0xf]
  %v42 = vld [vmem:[%s1 + $0x4] sm:$0xf]
  %v43 = vld [vmem:[%s1 + $0x8] sm:$0xf]
  %v44 = vld [vmem:[%s1 + $0xc] sm:$0xf]
  %v45 = vld [vmem:[%s1 + $0x10] sm:$0xf]
  %v46 = vld [vmem:[%s1 + $0x14] sm:$0xf]
  %v47 = vld [vmem:[%s1 + $0x18] sm:$0xf]
  %v48 = vld [vmem:[%s1 + $0x1c] sm:$0xf]
  %v49 = vld [vmem:[%s1 + $0x20] sm:$0xf]
  %v50 = vld [vmem:[%s1 + $0x24] sm:$0xf]
  %v51 = vld [vmem:[%s1 + $0x28] sm:$0xf]
  %v52 = vld [vmem:[%s1 + $0x2c] sm:$0xf]
  %v53 = vld [vmem:[%s1 + $0x30] sm:$0xf]
  %v54 = vld [vmem:[%s1 + $0x34] sm:$0xf]
  %v55 = vld [vmem:[%s1 + $0x38] sm:$0xf]
  %v56 = vld [vmem:[%s1 + $0x3c] sm:$0xf]
  %v57 = vld [vmem:[%s1 + $0x40] sm:$0xf]
  %v58 = vld [vmem:[%s1 + $0x44] sm:$0xf]
  %v59 = vld [vmem:[%s1 + $0x48] sm:$0xf]
  %v60 = vld [vmem:[%s1 + $0x4c] sm:$0xf]
  %v61 = vld [vmem:[%s1 + $0x50] sm:$0xf]
  %v62 = vld [vmem:[%s1 + $0x54] sm:$0xf]
  %v63 = vld [vmem:[%s1 + $0x58] sm:$0xf]
  %v64 = vld [vmem:[%s1 + $0x5c] sm:$0xf]
  %v65 = vld [vmem:[%s1 + $0x60] sm:$0xf]
  %v66 = vld [vmem:[%s1 + $0x64] sm:$0xf]
  %v67 = vld [vmem:[%s1 + $0x68] sm:$0xf]
  %v68 = vld [vmem:[%s1 + $0x6c] sm:$0xf]
  %v69 = vld [vmem:[%s1 + $0x70] sm:$0xf]
  %v70 = vld [vmem:[%s1 + $0x74] sm:$0xf]
  %v71 = vld [vmem:[%s1 + $0x78] sm:$0xf]
  %v72 = vld [vmem:[%s1 + $0x7c] sm:$0xf]
  %v73 = vld [vmem:[%s1 + $0x80] sm:$0xf]
  %v74 = vld [vmem:[%s1 + $0x84] sm:$0xf]
  %v75 = vld [vmem:[%s1 + $0x88] sm:$0xf]
  %v76 = vld [vmem:[%s1 + $0x8c] sm:$0xf]
  %v77 = vld [vmem:[%s1 + $0x90] sm:$0xf]
  %v78 = vld [vmem:[%s1 + $0x94] sm:$0xf]
  %v79 = vld [vmem:[%s1 + $0x98] sm:$0xf]
  %v80 = vld [vmem:[%s1 + $0x9c] sm:$0xf]
  %v81 = vld [vmem:[%s1 + $0xa0] sm:$0xf]
  %v82 = vld [vmem:[%s1 + $0xa4] sm:$0xf]
  %v83 = vld [vmem:[%s1 + $0xa8] sm:$0xf]
  %v84 = vld [vmem:[%s1 + $0xac] sm:$0xf]
  %v85 = vld [vmem:[%s1 + $0xb0] sm:$0xf]
  %v86 = vld [vmem:[%s1 + $0xb4] sm:$0xf]
  %v87 = vld [vmem:[%s1 + $0xb8] sm:$0xf]
  %v88 = vld [vmem:[%s1 + $0xbc] sm:$0xf]
  %v89 = vld [vmem:[%s1 + $0xc0] sm:$0xf]
  %v90 = vld [vmem:[%s1 + $0xc4] sm:$0xf]
  %v91 = vld [vmem:[%s1 + $0xc8] sm:$0xf]
  %v92 = vld [vmem:[%s1 + $0xcc] sm:$0xf]
  %v93 = vld [vmem:[%s1 + $0xd0] sm:$0xf]
  %v94 = vld [vmem:[%s1 + $0xd4] sm:$0xf]
  %v95 = vld [vmem:[%s1 + $0xd8] sm:$0xf]
  %v96 = vld [vmem:[%s1 + $0xdc] sm:$0xf]
  %v97 = vld [vmem:[%s1 + $0xe0] sm:$0xf]
  %v98 = vld [vmem:[%s1 + $0xe4] sm:$0xf]
  %v99 = vld [vmem:[%s1 + $0xe8] sm:$0xf]
  %v100 = vld [vmem:[%s1 + $0xec] sm:$0xf]
  %v101 = vld [vmem:[%s1 + $0xf0] sm:$0xf]
  %v102 = vld [vmem:[%s1 + $0xf4] sm:$0xf]
  %v103 = vld [vmem:[%s1 + $0xf8] sm:$0xf]
  %v104 = vld [vmem:[%s1 + $0xfc] sm:$0xf]
  %v105 = vld [vmem:[%s1 + $0x100] sm:$0xf]
  %v106 = vld [vmem:[%s1 + $0x104] sm:$0xf]
  %v107 = vld [vmem:[%s1 + $0x108] sm:$0xf]
  %v108 = vld [vmem:[%s1 + $0x10c] sm:$0xf]
  %v109 = vld [vmem:[%s1 + $0x110] sm:$0xf]
  %v110 = vld [vmem:[%s1 + $0x114] sm:$0xf]
  %v111 = vld [vmem:[%s1 + $0x118] sm:$0xf]
  %v112 = vld [vmem:[%s1 + $0x11c] sm:$0xf]
  %v113 = vld [vmem:[%s1 + $0x120] sm:$0xf]
  %v114 = vld [vmem:[%s1 + $0x124] sm:$0xf]
  %v115 = vld [vmem:[%s1 + $0x128] sm:$0xf]
  %v116 = vld [vmem:[%s1 + $0x12c] sm:$0xf]
  %v117 = vld [vmem:[%s1 + $0x130] sm:$0xf]
  %v118 = vld [vmem:[%s1 + $0x134] sm:$0xf]
  %v119 = vld [vmem:[%s1 + $0x138] sm:$0xf]
  %v120 = vld [vmem:[%s1 + $0x13c] sm:$0xf]
  %v121 = vld [vmem:[%s1 + $0x140] sm:$0xf]
  %v122 = vld [vmem:[%s1 + $0x144] sm:$0xf]
  %v123 = vld [vmem:[%s1 + $0x148] sm:$0xf]
  %v124 = vld [vmem:[%s1 + $0x14c] sm:$0xf]
  %v125 = vld [vmem:[%s1 + $0x150] sm:$0xf]
  %v126 = vld [vmem:[%s1 + $0x154] sm:$0xf]
  %v127 = vld [vmem:[%s1 + $0x158] sm:$0xf]
  %v128 = vld [vmem:[%s1 + $0x15c] sm:$0xf]
  %v129 = vld [vmem:[%s1 + $0x160] sm:$0xf]
  %v130 = vld [vmem:[%s1 + $0x164] sm:$0xf]
  %v131 = vld [vmem:[%s1 + $0x168] sm:$0xf]
  %v132 = vld [vmem:[%s1 + $0x16c] sm:$0xf]
  %v133 = vld [vmem:[%s1 + $0x170] sm:$0xf]
  %v134 = vld [vmem:[%s1 + $0x174] sm:$0xf]
  %v135 = vld [vmem:[%s1 + $0x178] sm:$0xf]
  %v136 = vld [vmem:[%s1 + $0x17c] sm:$0xf]
  %v137 = vld [vmem:[%s1 + $0x180] sm:$0xf]
  %v138 = vld [vmem:[%s1 + $0x184] sm:$0xf]
  %v139 = vld [vmem:[%s1 + $0x188] sm:$0xf]
  %v140 = vld [vmem:[%s1 + $0x18c] sm:$0xf]
  %v141 = vld [vmem:[%s1 + $0x190] sm:$0xf]
  %v142 = vld [vmem:[%s1 + $0x194] sm:$0xf]
  %v143 = vld [vmem:[%s1 + $0x198] sm:$0xf]
  %v144 = vld [vmem:[%s1 + $0x19c] sm:$0xf]
  %v145 = vld [vmem:[%s1 + $0x1a0] sm:$0xf]
  %v146 = vld [vmem:[%s1 + $0x1a4] sm:$0xf]
  %v147 = vld [vmem:[%s1 + $0x1a8] sm:$0xf]
  %v148 = vld [vmem:[%s1 + $0x1ac] sm:$0xf]
  %v149 = vld [vmem:[%s1 + $0x1b0] sm:$0xf]
  %v150 = vld [vmem:[%s1 + $0x1b4] sm:$0xf]
  %v151 = vld [vmem:[%s1 + $0x1b8] sm:$0xf]
  %v152 = vld [vmem:[%s1 + $0x1bc] sm:$0xf]
  %v153 = vld [vmem:[%s1 + $0x1c0] sm:$0xf]
  %v154 = vld [vmem:[%s1 + $0x1c4] sm:$0xf]
  %v155 = vld [vmem:[%s1 + $0x1c8] sm:$0xf]
  %v156 = vld [vmem:[%s1 + $0x1cc] sm:$0xf]
  %v157 = vld [vmem:[%s1 + $0x1d0] sm:$0xf]
  %v158 = vld [vmem:[%s1 + $0x1d4] sm:$0xf]
  %v159 = vld [vmem:[%s1 + $0x1d8] sm:$0xf]
  %v160 = vld [vmem:[%s1 + $0x1dc] sm:$0xf]
  %v161 = vld [vmem:[%s1 + $0x1e0] sm:$0xf]
  %v162 = vld [vmem:[%s1 + $0x1e4] sm:$0xf]
  %v163 = vld [vmem:[%s1 + $0x1e8] sm:$0xf]
  %v164 = vld [vmem:[%s1 + $0x1ec] sm:$0xf]
  %v165 = vld [vmem:[%s1 + $0x1f0] sm:$0xf]
  %v166 = vld [vmem:[%s1 + $0x1f4] sm:$0xf]
  %v167 = vld [vmem:[%s1 + $0x1f8] sm:$0xf]
  %v168 = vld [vmem:[%s1 + $0x1fc] sm:$0xf]
  %v169 = vld [vmem:[%s1 + $0x200] sm:$0xf]
  %v170 = vld [vmem:[%s1 + $0x204] sm:$0xf]
  %v171 = vld [vmem:[%s1 + $0x208] sm:$0xf]
  %v172 = vld [vmem:[%s1 + $0x20c] sm:$0xf]
  %v173 = vld [vmem:[%s1 + $0x210] sm:$0xf]
  %v174 = vld [vmem:[%s1 + $0x214] sm:$0xf]
  %v175 = vld [vmem:[%s1 + $0x218] sm:$0xf]
  %v176 = vld [vmem:[%s1 + $0x21c] sm:$0xf]
  %v177 = vld [vmem:[%s1 + $0x220] sm:$0xf]
  %v178 = vld [vmem:[%s1 + $0x224] sm:$0xf]
  %v179 = vld [vmem:[%s1 + $0x228] sm:$0xf]
  %v180 = vld [vmem:[%s1 + $0x22c] sm:$0xf]
  %v181 = vld [vmem:[%s1 + $0x230] sm:$0xf]
  %v182 = vld [vmem:[%s1 + $0x234] sm:$0xf]
  %v183 = vld [vmem:[%s1 + $0x238] sm:$0xf]
  %v184 = vld [vmem:[%s1 + $0x23c] sm:$0xf]
  %v185 = vld [vmem:[%s1 + $0x240] sm:$0xf]
  %v186 = vld [vmem:[%s1 + $0x244] sm:$0xf]
  %v187 = vld [vmem:[%s1 + $0x248] sm:$0xf]
  %v188 = vld [vmem:[%s1 + $0x24c] sm:$0xf]
  %v189 = vld [vmem:[%s1 + $0x250] sm:$0xf]
  %v190 = vld [vmem:[%s1 + $0x254] sm:$0xf]
  %v191 = vld [vmem:[%s1 + $0x258] sm:$0xf]
  %v192 = vld [vmem:[%s1 + $0x25c] sm:$0xf]
  %v193 = vld [vmem:[%s1 + $0x260] sm:$0xf]
  %v194 = vld [vmem:[%s1 + $0x264] sm:$0xf]
  %v195 = vld [vmem:[%s1 + $0x268] sm:$0xf]
  %v196 = vld [vmem:[%s1 + $0x26c] sm:$0xf]
  %v197 = vld [vmem:[%s1 + $0x270] sm:$0xf]
  %v198 = vld [vmem:[%s1 + $0x274] sm:$0xf]
  %v199 = vld [vmem:[%s1 + $0x278] sm:$0xf]
  %v200 = vld [vmem:[%s1 + $0x27c] sm:$0xf]
  %v201 = vld [vmem:[%s1 + $0x280] sm:$0xf]
  %v202 = vld [vmem:[%s1 + $0x284] sm:$0xf]
  %v203 = vld [vmem:[%s1 + $0x288] sm:$0xf]
  %v204 = vld [vmem:[%s1 + $0x28c] sm:$0xf]
  %v205 = vld [vmem:[%s1 + $0x290] sm:$0xf]
  %v206 = vld [vmem:[%s1 + $0x294] sm:$0xf]
  %v207 = vld [vmem:[%s1 + $0x298] sm:$0xf]
  %v208 = vld [vmem:[%s1 + $0x29c] sm:$0xf]
  %v209 = vld [vmem:[%s1 + $0x2a0] sm:$0xf]
  %v210 = vld [vmem:[%s1 + $0x2a4] sm:$0xf]
  %v211 = vld [vmem:[%s1 + $0x2a8] sm:$0xf]
  %v212 = vld [vmem:[%s1 + $0x2ac] sm:$0xf]
  %v213 = vld [vmem:[%s1 + $0x2b0] sm:$0xf]
  %v214 = vld [vmem:[%s1 + $0x2b4] sm:$0xf]
  %v215 = vld [vmem:[%s1 + $0x2b8] sm:$0xf]
  %v216 = vld [vmem:[%s1 + $0x2bc] sm:$0xf]
  %v217 = vld [vmem:[%s1 + $0x2c0] sm:$0xf]
  %v218 = vld [vmem:[%s1 + $0x2c4] sm:$0xf]
  %v219 = vld [vmem:[%s1 + $0x2c8] sm:$0xf]
  %v220 = vld [vmem:[%s1 + $0x2cc] sm:$0xf]
  %v221 = vld [vmem:[%s1 + $0x2d0] sm:$0xf]
  %v222 = vld [vmem:[%s1 + $0x2d4] sm:$0xf]
  %v223 = vld [vmem:[%s1 + $0x2d8] sm:$0xf]
  %v224 = vld [vmem:[%s1 + $0x2dc] sm:$0xf]
  %v225 = vld [vmem:[%s1 + $0x2e0] sm:$0xf]
  %v226 = vld [vmem:[%s1 + $0x2e4] sm:$0xf]
  %v227 = vld [vmem:[%s1 + $0x2e8] sm:$0xf]
  %v228 = vld [vmem:[%s1 + $0x2ec] sm:$0xf]
  %v229 = vld [vmem:[%s1 + $0x2f0] sm:$0xf]
  %v230 = vld [vmem:[%s1 + $0x2f4] sm:$0xf]
  %v231 = vld [vmem:[%s1 + $0x2f8] sm:$0xf]
  %v232 = vld [vmem:[%s1 + $0x2fc] sm:$0xf]
  %v233 = vld [vmem:[%s1 + $0x300] sm:$0xf]
  %v234 = vld [vmem:[%s1 + $0x304] sm:$0xf]
  %v235 = vld [vmem:[%s1 + $0x308] sm:$0xf]
  %v236 = vld [vmem:[%s1 + $0x30c] sm:$0xf]
  %v237 = vld [vmem:[%s1 + $0x310] sm:$0xf]
  %v238 = vld [vmem:[%s1 + $0x314] sm:$0xf]
  %v239 = vld [vmem:[%s1 + $0x318] sm:$0xf]
  %v240 = vld [vmem:[%s1 + $0x31c] sm:$0xf]
  %v241 = vld [vmem:[#allocation2] sm:$0xff]
  %v242 = vld [vmem:[#allocation2 + $0x8] sm:$0xff]
  %v243 = vld [vmem:[#allocation2 + $0x10] sm:$0xff]
  %v244 = vld [vmem:[#allocation2 + $0x18] sm:$0xff]
  %v245 = vld [vmem:[%s0] sm:$0xff]
  %v246 = vld [vmem:[%s0 + $0x8] sm:$0xff]
  %v247 = vld [vmem:[%s0 + $0x10] sm:$0xff]
  %v248 = vld [vmem:[%s0 + $0x18] sm:$0xff]
  %v249 = vld [vmem:[%s0 + $0x20] sm:$0xff]
  %v250 = vld [vmem:[%s0 + $0x28] sm:$0xff]
  %v251 = vld [vmem:[%s0 + $0x30] sm:$0xf]
  %v252 = vld [vmem:[%s0 + $0x34] sm:$0xff]
  %v253 = vld [vmem:[%s0 + $0x3c] sm:$0xff]
  %v254 = vld [vmem:[%s0 + $0x44] sm:$0xff]
  %v255 = vld [vmem:[%s0 + $0x4c] sm:$0xff]
  %v256 = vld [vmem:[%s0 + $0x54] sm:$0xff]
  %v257 = vld [vmem:[%s0 + $0x5c] sm:$0xff]
  %v258 = vld [vmem:[%s0 + $0x64] sm:$0xf]
  %v259 = vld [vmem:[%s0 + $0x68] sm:$0xff]
  %v260 = vld [vmem:[%s0 + $0x70] sm:$0xff]
  %v261 = vld [vmem:[%s0 + $0x78] sm:$0xff]
  %v262 = vld [vmem:[%s0 + $0x80] sm:$0xff]
  %v263 = vld [vmem:[%s0 + $0x88] sm:$0xff]
  %v264 = vld [vmem:[%s0 + $0x90] sm:$0xff]
  %v265 = vld [vmem:[%s0 + $0x98] sm:$0xf]
  %v266 = vld [vmem:[%s0 + $0x9c] sm:$0xff]
  %v267 = vld [vmem:[%s0 + $0xa4] sm:$0xff]
  %v268 = vld [vmem:[%s0 + $0xac] sm:$0xff]
  %v269 = vld [vmem:[%s0 + $0xb4] sm:$0xff]
  %v270 = vld [vmem:[%s0 + $0xbc] sm:$0xff]
  %v271 = vld [vmem:[%s0 + $0xc4] sm:$0xff]
  %v272 = vld [vmem:[%s0 + $0xcc] sm:$0xf]
  %v301 = vunpack.c.l.b16 %v245
  %v302 = vunpack.c.h.b16 %v245
  %v303 = vunpack.c.l.b16 %v246
  %v304 = vunpack.c.h.b16 %v246
  %v305 = vunpack.c.l.b16 %v247
  %v306 = vunpack.c.h.b16 %v247
  %v307 = vunpack.c.l.b16 %v248
  %v308 = vunpack.c.h.b16 %v248
  %v309 = vunpack.c.l.b16 %v249
  %v310 = vunpack.c.h.b16 %v249
  %v311 = vunpack.c.l.b16 %v250
  %v312 = vunpack.c.h.b16 %v250
  %v313 = vunpack.c.l.b16 %v251
  %v314 = vunpack.c.l.b16 %v252
  %v315 = vunpack.c.h.b16 %v252
  %v316 = vunpack.c.l.b16 %v253
  %v317 = vunpack.c.h.b16 %v253
  %v318 = vunpack.c.l.b16 %v254
  %v319 = vunpack.c.h.b16 %v254
  %v320 = vunpack.c.l.b16 %v255
  %v321 = vunpack.c.h.b16 %v255
  %v322 = vunpack.c.l.b16 %v256
  %v323 = vunpack.c.h.b16 %v256
  %v324 = vunpack.c.l.b16 %v257
  %v325 = vunpack.c.h.b16 %v257
  %v326 = vunpack.c.l.b16 %v258
  %v327 = vunpack.c.l.b16 %v259
  %v328 = vunpack.c.h.b16 %v259
  %v329 = vunpack.c.l.b16 %v260
  %v330 = vunpack.c.h.b16 %v260
  %v331 = vunpack.c.l.b16 %v261
  %v332 = vunpack.c.h.b16 %v261
  %v333 = vunpack.c.l.b16 %v262
  %v334 = vunpack.c.h.b16 %v262
  %v335 = vunpack.c.l.b16 %v263
  %v336 = vunpack.c.h.b16 %v263
  %v337 = vunpack.c.l.b16 %v264
  %v338 = vunpack.c.h.b16 %v264
  %v339 = vunpack.c.l.b16 %v265
  %v340 = vunpack.c.l.b16 %v266
  %v341 = vunpack.c.h.b16 %v266
  %v342 = vunpack.c.l.b16 %v267
  %v343 = vunpack.c.h.b16 %v267
  %v344 = vunpack.c.l.b16 %v268
  %v345 = vunpack.c.h.b16 %v268
  %v346 = vunpack.c.l.b16 %v269
  %v347 = vunpack.c.h.b16 %v269
  %v348 = vunpack.c.l.b16 %v270
  %v349 = vunpack.c.h.b16 %v270
  %v350 = vunpack.c.l.b16 %v271
  %v351 = vunpack.c.h.b16 %v271
  %v352 = vunpack.c.l.b16 %v272
  %v353 = vpack.c.b16 %v314, %v301
  %v354 = vpack.c.b16 %v315, %v302
  %v355 = vpack.c.b16 %v316, %v303
  %v356 = vpack.c.b16 %v317, %v304
  %v357 = vpack.c.b16 %v318, %v305
  %v358 = vpack.c.b16 %v319, %v306
  %v359 = vpack.c.b16 %v320, %v307
  %v360 = vpack.c.b16 %v321, %v308
  %v361 = vpack.c.b16 %v322, %v309
  %v362 = vpack.c.b16 %v323, %v310
  %v363 = vpack.c.b16 %v324, %v311
  %v364 = vpack.c.b16 %v325, %v312
  %v365 = vpack.c.b16 %v326, %v313
  %v366 = vpack.c.b16 %v340, %v327
  %v367 = vpack.c.b16 %v341, %v328
  %v368 = vpack.c.b16 %v342, %v329
  %v369 = vpack.c.b16 %v343, %v330
  %v370 = vpack.c.b16 %v344, %v331
  %v371 = vpack.c.b16 %v345, %v332
  %v372 = vpack.c.b16 %v346, %v333
  %v373 = vpack.c.b16 %v347, %v334
  %v374 = vpack.c.b16 %v348, %v335
  %v375 = vpack.c.b16 %v349, %v336
  %v376 = vpack.c.b16 %v350, %v337
  %v377 = vpack.c.b16 %v351, %v338
  %v378 = vpack.c.b16 %v352, %v339
  %v603 = vunpack.c.l.b16 %v41
  %v604 = vunpack.c.l.b16 %v42
  %v605 = vunpack.c.l.b16 %v43
  %v606 = vunpack.c.l.b16 %v44
  %v607 = vunpack.c.l.b16 %v45
  %v608 = vunpack.c.l.b16 %v46
  %v609 = vunpack.c.l.b16 %v47
  %v610 = vunpack.c.l.b16 %v48
  %v611 = vunpack.c.l.b16 %v49
  %v612 = vunpack.c.l.b16 %v50
  %v613 = vunpack.c.l.b16 %v51
  %v614 = vunpack.c.l.b16 %v52
  %v615 = vunpack.c.l.b16 %v53
  %v616 = vunpack.c.l.b16 %v54
  %v617 = vunpack.c.l.b16 %v55
  %v618 = vunpack.c.l.b16 %v56
  %v619 = vunpack.c.l.b16 %v57
  %v620 = vunpack.c.l.b16 %v58
  %v621 = vunpack.c.l.b16 %v59
  %v622 = vunpack.c.l.b16 %v60
  %v623 = vunpack.c.l.b16 %v61
  %v624 = vunpack.c.l.b16 %v62
  %v625 = vunpack.c.l.b16 %v63
  %v626 = vunpack.c.l.b16 %v64
  %v627 = vunpack.c.l.b16 %v65
  %v628 = vunpack.c.l.b16 %v66
  %v629 = vunpack.c.l.b16 %v67
  %v630 = vunpack.c.l.b16 %v68
  %v631 = vunpack.c.l.b16 %v69
  %v632 = vunpack.c.l.b16 %v70
  %v633 = vunpack.c.l.b16 %v71
  %v634 = vunpack.c.l.b16 %v72
  %v635 = vunpack.c.l.b16 %v73
  %v636 = vunpack.c.l.b16 %v74
  %v637 = vunpack.c.l.b16 %v75
  %v638 = vunpack.c.l.b16 %v76
  %v639 = vunpack.c.l.b16 %v77
  %v640 = vunpack.c.l.b16 %v78
  %v641 = vunpack.c.l.b16 %v79
  %v642 = vunpack.c.l.b16 %v80
  %v643 = vunpack.c.l.b16 %v81
  %v644 = vunpack.c.l.b16 %v82
  %v645 = vunpack.c.l.b16 %v83
  %v646 = vunpack.c.l.b16 %v84
  %v647 = vunpack.c.l.b16 %v85
  %v648 = vunpack.c.l.b16 %v86
  %v649 = vunpack.c.l.b16 %v87
  %v650 = vunpack.c.l.b16 %v88
  %v651 = vunpack.c.l.b16 %v89
  %v652 = vunpack.c.l.b16 %v90
  %v653 = vunpack.c.l.b16 %v91
  %v654 = vunpack.c.l.b16 %v92
  %v655 = vunpack.c.l.b16 %v93
  %v656 = vunpack.c.l.b16 %v94
  %v657 = vunpack.c.l.b16 %v95
  %v658 = vunpack.c.l.b16 %v96
  %v659 = vunpack.c.l.b16 %v97
  %v660 = vunpack.c.l.b16 %v98
  %v661 = vunpack.c.l.b16 %v99
  %v662 = vunpack.c.l.b16 %v100
  %v663 = vunpack.c.l.b16 %v101
  %v664 = vunpack.c.l.b16 %v102
  %v665 = vunpack.c.l.b16 %v103
  %v666 = vunpack.c.l.b16 %v104
  %v667 = vunpack.c.l.b16 %v105
  %v668 = vunpack.c.l.b16 %v106
  %v669 = vunpack.c.l.b16 %v107
  %v670 = vunpack.c.l.b16 %v108
  %v671 = vunpack.c.l.b16 %v109
  %v672 = vunpack.c.l.b16 %v110
  %v673 = vunpack.c.l.b16 %v111
  %v674 = vunpack.c.l.b16 %v112
  %v675 = vunpack.c.l.b16 %v113
  %v676 = vunpack.c.l.b16 %v114
  %v677 = vunpack.c.l.b16 %v115
  %v678 = vunpack.c.l.b16 %v116
  %v679 = vunpack.c.l.b16 %v117
  %v680 = vunpack.c.l.b16 %v118
  %v681 = vunpack.c.l.b16 %v119
  %v682 = vunpack.c.l.b16 %v120
  %v683 = vunpack.c.l.b16 %v121
  %v684 = vunpack.c.l.b16 %v122
  %v685 = vunpack.c.l.b16 %v123
  %v686 = vunpack.c.l.b16 %v124
  %v687 = vunpack.c.l.b16 %v125
  %v688 = vunpack.c.l.b16 %v126
  %v689 = vunpack.c.l.b16 %v127
  %v690 = vunpack.c.l.b16 %v128
  %v691 = vunpack.c.l.b16 %v129
  %v692 = vunpack.c.l.b16 %v130
  %v693 = vunpack.c.l.b16 %v131
  %v694 = vunpack.c.l.b16 %v132
  %v695 = vunpack.c.l.b16 %v133
  %v696 = vunpack.c.l.b16 %v134
  %v697 = vunpack.c.l.b16 %v135
  %v698 = vunpack.c.l.b16 %v136
  %v699 = vunpack.c.l.b16 %v137
  %v700 = vunpack.c.l.b16 %v138
  %v701 = vunpack.c.l.b16 %v139
  %v702 = vunpack.c.l.b16 %v140
  %v703 = vunpack.c.l.b16 %v141
  %v704 = vunpack.c.l.b16 %v142
  %v705 = vunpack.c.l.b16 %v143
  %v706 = vunpack.c.l.b16 %v144
  %v707 = vunpack.c.l.b16 %v145
  %v708 = vunpack.c.l.b16 %v146
  %v709 = vunpack.c.l.b16 %v147
  %v710 = vunpack.c.l.b16 %v148
  %v711 = vunpack.c.l.b16 %v149
  %v712 = vunpack.c.l.b16 %v150
  %v713 = vunpack.c.l.b16 %v151
  %v714 = vunpack.c.l.b16 %v152
  %v715 = vunpack.c.l.b16 %v153
  %v716 = vunpack.c.l.b16 %v154
  %v717 = vunpack.c.l.b16 %v155
  %v718 = vunpack.c.l.b16 %v156
  %v719 = vunpack.c.l.b16 %v157
  %v720 = vunpack.c.l.b16 %v158
  %v721 = vunpack.c.l.b16 %v159
  %v722 = vunpack.c.l.b16 %v160
  %v723 = vunpack.c.l.b16 %v161
  %v724 = vunpack.c.l.b16 %v162
  %v725 = vunpack.c.l.b16 %v163
  %v726 = vunpack.c.l.b16 %v164
  %v727 = vunpack.c.l.b16 %v165
  %v728 = vunpack.c.l.b16 %v166
  %v729 = vunpack.c.l.b16 %v167
  %v730 = vunpack.c.l.b16 %v168
  %v731 = vunpack.c.l.b16 %v169
  %v732 = vunpack.c.l.b16 %v170
  %v733 = vunpack.c.l.b16 %v171
  %v734 = vunpack.c.l.b16 %v172
  %v735 = vunpack.c.l.b16 %v173
  %v736 = vunpack.c.l.b16 %v174
  %v737 = vunpack.c.l.b16 %v175
  %v738 = vunpack.c.l.b16 %v176
  %v739 = vunpack.c.l.b16 %v177
  %v740 = vunpack.c.l.b16 %v178
  %v741 = vunpack.c.l.b16 %v179
  %v742 = vunpack.c.l.b16 %v180
  %v743 = vunpack.c.l.b16 %v181
  %v744 = vunpack.c.l.b16 %v182
  %v745 = vunpack.c.l.b16 %v183
  %v746 = vunpack.c.l.b16 %v184
  %v747 = vunpack.c.l.b16 %v185
  %v748 = vunpack.c.l.b16 %v186
  %v749 = vunpack.c.l.b16 %v187
  %v750 = vunpack.c.l.b16 %v188
  %v751 = vunpack.c.l.b16 %v189
  %v752 = vunpack.c.l.b16 %v190
  %v753 = vunpack.c.l.b16 %v191
  %v754 = vunpack.c.l.b16 %v192
  %v755 = vunpack.c.l.b16 %v193
  %v756 = vunpack.c.l.b16 %v194
  %v757 = vunpack.c.l.b16 %v195
  %v758 = vunpack.c.l.b16 %v196
  %v759 = vunpack.c.l.b16 %v197
  %v760 = vunpack.c.l.b16 %v198
  %v761 = vunpack.c.l.b16 %v199
  %v762 = vunpack.c.l.b16 %v200
  %v763 = vunpack.c.l.b16 %v201
  %v764 = vunpack.c.l.b16 %v202
  %v765 = vunpack.c.l.b16 %v203
  %v766 = vunpack.c.l.b16 %v204
  %v767 = vunpack.c.l.b16 %v205
  %v768 = vunpack.c.l.b16 %v206
  %v769 = vunpack.c.l.b16 %v207
  %v770 = vunpack.c.l.b16 %v208
  %v771 = vunpack.c.l.b16 %v209
  %v772 = vunpack.c.l.b16 %v210
  %v773 = vunpack.c.l.b16 %v211
  %v774 = vunpack.c.l.b16 %v212
  %v775 = vunpack.c.l.b16 %v213
  %v776 = vunpack.c.l.b16 %v214
  %v777 = vunpack.c.l.b16 %v215
  %v778 = vunpack.c.l.b16 %v216
  %v779 = vunpack.c.l.b16 %v217
  %v780 = vunpack.c.l.b16 %v218
  %v781 = vunpack.c.l.b16 %v219
  %v782 = vunpack.c.l.b16 %v220
  %v783 = vunpack.c.l.b16 %v221
  %v784 = vunpack.c.l.b16 %v222
  %v785 = vunpack.c.l.b16 %v223
  %v786 = vunpack.c.l.b16 %v224
  %v787 = vunpack.c.l.b16 %v225
  %v788 = vunpack.c.l.b16 %v226
  %v789 = vunpack.c.l.b16 %v227
  %v790 = vunpack.c.l.b16 %v228
  %v791 = vunpack.c.l.b16 %v229
  %v792 = vunpack.c.l.b16 %v230
  %v793 = vunpack.c.l.b16 %v231
  %v794 = vunpack.c.l.b16 %v232
  %v795 = vunpack.c.l.b16 %v233
  %v796 = vunpack.c.l.b16 %v234
  %v797 = vunpack.c.l.b16 %v235
  %v798 = vunpack.c.l.b16 %v236
  %v799 = vunpack.c.l.b16 %v237
  %v800 = vunpack.c.l.b16 %v238
  %v801 = vunpack.c.l.b16 %v239
  %v802 = vunpack.c.l.b16 %v240
  %v803 = vpack.c.b16 %v604, %v603
  %v804 = vpack.c.b16 %v606, %v605
  %v805 = vpack.c.b16 %v608, %v607
  %v806 = vpack.c.b16 %v610, %v609
  %v807 = vpack.c.b16 %v612, %v611
  %v808 = vpack.c.b16 %v614, %v613
  %v809 = vpack.c.b16 %v616, %v615
  %v810 = vpack.c.b16 %v618, %v617
  %v811 = vpack.c.b16 %v620, %v619
  %v812 = vpack.c.b16 %v622, %v621
  %v813 = vpack.c.b16 %v624, %v623
  %v814 = vpack.c.b16 %v626, %v625
  %v815 = vpack.c.b16 %v628, %v627
  %v816 = vpack.c.b16 %v630, %v629
  %v817 = vpack.c.b16 %v632, %v631
  %v818 = vpack.c.b16 %v634, %v633
  %v819 = vpack.c.b16 %v636, %v635
  %v820 = vpack.c.b16 %v638, %v637
  %v821 = vpack.c.b16 %v640, %v639
  %v822 = vpack.c.b16 %v642, %v641
  %v823 = vpack.c.b16 %v644, %v643
  %v824 = vpack.c.b16 %v646, %v645
  %v825 = vpack.c.b16 %v648, %v647
  %v826 = vpack.c.b16 %v650, %v649
  %v827 = vpack.c.b16 %v652, %v651
  %v828 = vpack.c.b16 %v654, %v653
  %v829 = vpack.c.b16 %v656, %v655
  %v830 = vpack.c.b16 %v658, %v657
  %v831 = vpack.c.b16 %v660, %v659
  %v832 = vpack.c.b16 %v662, %v661
  %v833 = vpack.c.b16 %v664, %v663
  %v834 = vpack.c.b16 %v666, %v665
  %v835 = vpack.c.b16 %v668, %v667
  %v836 = vpack.c.b16 %v670, %v669
  %v837 = vpack.c.b16 %v672, %v671
  %v838 = vpack.c.b16 %v674, %v673
  %v839 = vpack.c.b16 %v676, %v675
  %v840 = vpack.c.b16 %v678, %v677
  %v841 = vpack.c.b16 %v680, %v679
  %v842 = vpack.c.b16 %v682, %v681
  %v843 = vpack.c.b16 %v684, %v683
  %v844 = vpack.c.b16 %v686, %v685
  %v845 = vpack.c.b16 %v688, %v687
  %v846 = vpack.c.b16 %v690, %v689
  %v847 = vpack.c.b16 %v692, %v691
  %v848 = vpack.c.b16 %v694, %v693
  %v849 = vpack.c.b16 %v696, %v695
  %v850 = vpack.c.b16 %v698, %v697
  %v851 = vpack.c.b16 %v700, %v699
  %v852 = vpack.c.b16 %v702, %v701
  %v853 = vpack.c.b16 %v704, %v703
  %v854 = vpack.c.b16 %v706, %v705
  %v855 = vpack.c.b16 %v708, %v707
  %v856 = vpack.c.b16 %v710, %v709
  %v857 = vpack.c.b16 %v712, %v711
  %v858 = vpack.c.b16 %v714, %v713
  %v859 = vpack.c.b16 %v716, %v715
  %v860 = vpack.c.b16 %v718, %v717
  %v861 = vpack.c.b16 %v720, %v719
  %v862 = vpack.c.b16 %v722, %v721
  %v863 = vpack.c.b16 %v724, %v723
  %v864 = vpack.c.b16 %v726, %v725
  %v865 = vpack.c.b16 %v728, %v727
  %v866 = vpack.c.b16 %v730, %v729
  %v867 = vpack.c.b16 %v732, %v731
  %v868 = vpack.c.b16 %v734, %v733
  %v869 = vpack.c.b16 %v736, %v735
  %v870 = vpack.c.b16 %v738, %v737
  %v871 = vpack.c.b16 %v740, %v739
  %v872 = vpack.c.b16 %v742, %v741
  %v873 = vpack.c.b16 %v744, %v743
  %v874 = vpack.c.b16 %v746, %v745
  %v875 = vpack.c.b16 %v748, %v747
  %v876 = vpack.c.b16 %v750, %v749
  %v877 = vpack.c.b16 %v752, %v751
  %v878 = vpack.c.b16 %v754, %v753
  %v879 = vpack.c.b16 %v756, %v755
  %v880 = vpack.c.b16 %v758, %v757
  %v881 = vpack.c.b16 %v760, %v759
  %v882 = vpack.c.b16 %v762, %v761
  %v883 = vpack.c.b16 %v764, %v763
  %v884 = vpack.c.b16 %v766, %v765
  %v885 = vpack.c.b16 %v768, %v767
  %v886 = vpack.c.b16 %v770, %v769
  %v887 = vpack.c.b16 %v772, %v771
  %v888 = vpack.c.b16 %v774, %v773
  %v889 = vpack.c.b16 %v776, %v775
  %v890 = vpack.c.b16 %v778, %v777
  %v891 = vpack.c.b16 %v780, %v779
  %v892 = vpack.c.b16 %v782, %v781
  %v893 = vpack.c.b16 %v784, %v783
  %v894 = vpack.c.b16 %v786, %v785
  %v895 = vpack.c.b16 %v788, %v787
  %v896 = vpack.c.b16 %v790, %v789
  %v897 = vpack.c.b16 %v792, %v791
  %v898 = vpack.c.b16 %v794, %v793
  %v899 = vpack.c.b16 %v796, %v795
  %v900 = vpack.c.b16 %v798, %v797
  %v901 = vpack.c.b16 %v800, %v799
  %v902 = vpack.c.b16 %v802, %v801
  %vm1003 = vcmask 523264
  %v1005 = vsel %vm1003, %v365, 0
  %v1008 = vsel %vm1003, %v378, 0
  %1010 = vmatprep.subr.bf16.mxu0 0
  %1011 = vmatpush1.bf16.msra.mxu0 %v810
  %1012 = vmatprep.subr.bf16.mxu0 0
  %1013 = vmatpush1.bf16.msra.mxu0 %v809
  %1014 = vmatprep.subr.bf16.mxu0 0
  %1015 = vmatpush1.bf16.msra.mxu0 %v808
  %1016 = vmatprep.subr.bf16.mxu0 0
  %1017 = vmatpush1.bf16.msra.mxu0 %v807
  %1018 = vmatprep.subr.bf16.mxu0 0
  %1019 = vmatpush1.bf16.msra.mxu0 %v806
  %1020 = vmatprep.subr.bf16.mxu0 0
  %1021 = vmatpush1.bf16.msra.mxu0 %v805
  %1022 = vmatprep.subr.bf16.mxu0 0
  %1023 = vmatpush1.bf16.msra.mxu0 %v804
  %1024 = vmatprep.subr.bf16.mxu0 0
  %1025 = vmatpush1.bf16.msra.mxu0 %v803
  %1026 = vmatprep.subr.bf16.mxu0 0
  %1027 = vmatpush2.bf16.msra.mxu0 %v818
  %1028 = vmatprep.subr.bf16.mxu0 0
  %1029 = vmatpush2.bf16.msra.mxu0 %v817
  %1030 = vmatprep.subr.bf16.mxu0 0
  %1031 = vmatpush2.bf16.msra.mxu0 %v816
  %1032 = vmatprep.subr.bf16.mxu0 0
  %1033 = vmatpush2.bf16.msra.mxu0 %v815
  %1034 = vmatprep.subr.bf16.mxu0 0
  %1035 = vmatpush2.bf16.msra.mxu0 %v814
  %1036 = vmatprep.subr.bf16.mxu0 0
  %1037 = vmatpush2.bf16.msra.mxu0 %v813
  %1038 = vmatprep.subr.bf16.mxu0 0
  %1039 = vmatpush2.bf16.msra.mxu0 %v812
  %1040 = vmatprep.subr.bf16.mxu0 0
  %1041 = vmatpush2.bf16.msra.mxu0 %v811
  %1042 = vmatprep.mubr.bf16.mxu0 %v354
  %1043 = vmatmul.mubr.bf16.gmra.mxu0 %v353
  %v1044 = vpop.f32.mrf.mxu0
  %v1045 = vadd.f32 0.0, %v1044
  %v1046 = vpop.f32.mrf.mxu0
  %v1047 = vpop.f32.mrf.mxu0
  %v1048 = vadd.f32 0.0, %v1047
  %v1049 = vpop.f32.mrf.mxu0
  %1050 = vmatprep.mubr.bf16.mxu0 %v367
  %1051 = vmatmul.mubr.bf16.gmra.mxu0 %v366
  %v1052 = vpop.f32.mrf.mxu0
  %v1053 = vadd.f32 0.0, %v1052
  %v1054 = vpop.f32.mrf.mxu0
  %v1055 = vpop.f32.mrf.mxu0
  %v1056 = vadd.f32 0.0, %v1055
  %v1057 = vpop.f32.mrf.mxu0
  %1058 = vdwg.mxu0
  %1059 = vmatprep.subr.bf16.mxu0 0
  %1060 = vmatpush1.bf16.msra.mxu0 %v826
  %1061 = vmatprep.subr.bf16.mxu0 0
  %1062 = vmatpush1.bf16.msra.mxu0 %v825
  %1063 = vmatprep.subr.bf16.mxu0 0
  %1064 = vmatpush1.bf16.msra.mxu0 %v824
  %1065 = vmatprep.subr.bf16.mxu0 0
  %1066 = vmatpush1.bf16.msra.mxu0 %v823
  %1067 = vmatprep.subr.bf16.mxu0 0
  %1068 = vmatpush1.bf16.msra.mxu0 %v822
  %1069 = vmatprep.subr.bf16.mxu0 0
  %1070 = vmatpush1.bf16.msra.mxu0 %v821
  %1071 = vmatprep.subr.bf16.mxu0 0
  %1072 = vmatpush1.bf16.msra.mxu0 %v820
  %1073 = vmatprep.subr.bf16.mxu0 0
  %1074 = vmatpush1.bf16.msra.mxu0 %v819
  %1075 = vmatprep.subr.bf16.mxu0 0
  %1076 = vmatpush2.bf16.msra.mxu0 %v834
  %1077 = vmatprep.subr.bf16.mxu0 0
  %1078 = vmatpush2.bf16.msra.mxu0 %v833
  %1079 = vmatprep.subr.bf16.mxu0 0
  %1080 = vmatpush2.bf16.msra.mxu0 %v832
  %1081 = vmatprep.subr.bf16.mxu0 0
  %1082 = vmatpush2.bf16.msra.mxu0 %v831
  %1083 = vmatprep.subr.bf16.mxu0 0
  %1084 = vmatpush2.bf16.msra.mxu0 %v830
  %1085 = vmatprep.subr.bf16.mxu0 0
  %1086 = vmatpush2.bf16.msra.mxu0 %v829
  %1087 = vmatprep.subr.bf16.mxu0 0
  %1088 = vmatpush2.bf16.msra.mxu0 %v828
  %1089 = vmatprep.subr.bf16.mxu0 0
  %1090 = vmatpush2.bf16.msra.mxu0 %v827
  %1091 = vmatprep.mubr.bf16.mxu0 %v356
  %1092 = vmatmul.mubr.bf16.gmra.mxu0 %v355
  %v1093 = vpop.f32.mrf.mxu0
  %v1094 = vadd.f32 %v1045, %v1093
  %v1095 = vpop.f32.mrf.mxu0
  %v1096 = vpop.f32.mrf.mxu0
  %v1097 = vadd.f32 %v1048, %v1096
  %v1098 = vpop.f32.mrf.mxu0
  %1099 = vmatprep.mubr.bf16.mxu0 %v369
  %1100 = vmatmul.mubr.bf16.gmra.mxu0 %v368
  %v1101 = vpop.f32.mrf.mxu0
  %v1102 = vadd.f32 %v1053, %v1101
  %v1103 = vpop.f32.mrf.mxu0
  %v1104 = vpop.f32.mrf.mxu0
  %v1105 = vadd.f32 %v1056, %v1104
  %v1106 = vpop.f32.mrf.mxu0
  %1107 = vdwg.mxu0
  %1108 = vmatprep.subr.bf16.mxu0 0
  %1109 = vmatpush1.bf16.msra.mxu0 %v842
  %1110 = vmatprep.subr.bf16.mxu0 0
  %1111 = vmatpush1.bf16.msra.mxu0 %v841
  %1112 = vmatprep.subr.bf16.mxu0 0
  %1113 = vmatpush1.bf16.msra.mxu0 %v840
  %1114 = vmatprep.subr.bf16.mxu0 0
  %1115 = vmatpush1.bf16.msra.mxu0 %v839
  %1116 = vmatprep.subr.bf16.mxu0 0
  %1117 = vmatpush1.bf16.msra.mxu0 %v838
  %1118 = vmatprep.subr.bf16.mxu0 0
  %1119 = vmatpush1.bf16.msra.mxu0 %v837
  %1120 = vmatprep.subr.bf16.mxu0 0
  %1121 = vmatpush1.bf16.msra.mxu0 %v836
  %1122 = vmatprep.subr.bf16.mxu0 0
  %1123 = vmatpush1.bf16.msra.mxu0 %v835
  %1124 = vmatprep.subr.bf16.mxu0 0
  %1125 = vmatpush2.bf16.msra.mxu0 %v850
  %1126 = vmatprep.subr.bf16.mxu0 0
  %1127 = vmatpush2.bf16.msra.mxu0 %v849
  %1128 = vmatprep.subr.bf16.mxu0 0
  %1129 = vmatpush2.bf16.msra.mxu0 %v848
  %1130 = vmatprep.subr.bf16.mxu0 0
  %1131 = vmatpush2.bf16.msra.mxu0 %v847
  %1132 = vmatprep.subr.bf16.mxu0 0
  %1133 = vmatpush2.bf16.msra.mxu0 %v846
  %1134 = vmatprep.subr.bf16.mxu0 0
  %1135 = vmatpush2.bf16.msra.mxu0 %v845
  %1136 = vmatprep.subr.bf16.mxu0 0
  %1137 = vmatpush2.bf16.msra.mxu0 %v844
  %1138 = vmatprep.subr.bf16.mxu0 0
  %1139 = vmatpush2.bf16.msra.mxu0 %v843
  %1140 = vmatprep.mubr.bf16.mxu0 %v358
  %1141 = vmatmul.mubr.bf16.gmra.mxu0 %v357
  %v1142 = vpop.f32.mrf.mxu0
  %v1143 = vadd.f32 %v1094, %v1142
  %v1144 = vpop.f32.mrf.mxu0
  %v1145 = vpop.f32.mrf.mxu0
  %v1146 = vadd.f32 %v1097, %v1145
  %v1147 = vpop.f32.mrf.mxu0
  %1148 = vmatprep.mubr.bf16.mxu0 %v371
  %1149 = vmatmul.mubr.bf16.gmra.mxu0 %v370
  %v1150 = vpop.f32.mrf.mxu0
  %v1151 = vadd.f32 %v1102, %v1150
  %v1152 = vpop.f32.mrf.mxu0
  %v1153 = vpop.f32.mrf.mxu0
  %v1154 = vadd.f32 %v1105, %v1153
  %v1155 = vpop.f32.mrf.mxu0
  %1156 = vdwg.mxu0
  %1157 = vmatprep.subr.bf16.mxu0 0
  %1158 = vmatpush1.bf16.msra.mxu0 %v858
  %1159 = vmatprep.subr.bf16.mxu0 0
  %1160 = vmatpush1.bf16.msra.mxu0 %v857
  %1161 = vmatprep.subr.bf16.mxu0 0
  %1162 = vmatpush1.bf16.msra.mxu0 %v856
  %1163 = vmatprep.subr.bf16.mxu0 0
  %1164 = vmatpush1.bf16.msra.mxu0 %v855
  %1165 = vmatprep.subr.bf16.mxu0 0
  %1166 = vmatpush1.bf16.msra.mxu0 %v854
  %1167 = vmatprep.subr.bf16.mxu0 0
  %1168 = vmatpush1.bf16.msra.mxu0 %v853
  %1169 = vmatprep.subr.bf16.mxu0 0
  %1170 = vmatpush1.bf16.msra.mxu0 %v852
  %1171 = vmatprep.subr.bf16.mxu0 0
  %1172 = vmatpush1.bf16.msra.mxu0 %v851
  %1173 = vmatprep.subr.bf16.mxu0 0
  %1174 = vmatpush2.bf16.msra.mxu0 %v866
  %1175 = vmatprep.subr.bf16.mxu0 0
  %1176 = vmatpush2.bf16.msra.mxu0 %v865
  %1177 = vmatprep.subr.bf16.mxu0 0
  %1178 = vmatpush2.bf16.msra.mxu0 %v864
  %1179 = vmatprep.subr.bf16.mxu0 0
  %1180 = vmatpush2.bf16.msra.mxu0 %v863
  %1181 = vmatprep.subr.bf16.mxu0 0
  %1182 = vmatpush2.bf16.msra.mxu0 %v862
  %1183 = vmatprep.subr.bf16.mxu0 0
  %1184 = vmatpush2.bf16.msra.mxu0 %v861
  %1185 = vmatprep.subr.bf16.mxu0 0
  %1186 = vmatpush2.bf16.msra.mxu0 %v860
  %1187 = vmatprep.subr.bf16.mxu0 0
  %1188 = vmatpush2.bf16.msra.mxu0 %v859
  %1189 = vmatprep.mubr.bf16.mxu0 %v360
  %1190 = vmatmul.mubr.bf16.gmra.mxu0 %v359
  %v1191 = vpop.f32.mrf.mxu0
  %v1192 = vadd.f32 %v1143, %v1191
  %v1193 = vpop.f32.mrf.mxu0
  %v1194 = vpop.f32.mrf.mxu0
  %v1195 = vadd.f32 %v1146, %v1194
  %v1196 = vpop.f32.mrf.mxu0
  %1197 = vmatprep.mubr.bf16.mxu0 %v373
  %1198 = vmatmul.mubr.bf16.gmra.mxu0 %v372
  %v1199 = vpop.f32.mrf.mxu0
  %v1200 = vadd.f32 %v1151, %v1199
  %v1201 = vpop.f32.mrf.mxu0
  %v1202 = vpop.f32.mrf.mxu0
  %v1203 = vadd.f32 %v1154, %v1202
  %v1204 = vpop.f32.mrf.mxu0
  %1205 = vdwg.mxu0
  %1206 = vmatprep.subr.bf16.mxu0 0
  %1207 = vmatpush1.bf16.msra.mxu0 %v874
  %1208 = vmatprep.subr.bf16.mxu0 0
  %1209 = vmatpush1.bf16.msra.mxu0 %v873
  %1210 = vmatprep.subr.bf16.mxu0 0
  %1211 = vmatpush1.bf16.msra.mxu0 %v872
  %1212 = vmatprep.subr.bf16.mxu0 0
  %1213 = vmatpush1.bf16.msra.mxu0 %v871
  %1214 = vmatprep.subr.bf16.mxu0 0
  %1215 = vmatpush1.bf16.msra.mxu0 %v870
  %1216 = vmatprep.subr.bf16.mxu0 0
  %1217 = vmatpush1.bf16.msra.mxu0 %v869
  %1218 = vmatprep.subr.bf16.mxu0 0
  %1219 = vmatpush1.bf16.msra.mxu0 %v868
  %1220 = vmatprep.subr.bf16.mxu0 0
  %1221 = vmatpush1.bf16.msra.mxu0 %v867
  %1222 = vmatprep.subr.bf16.mxu0 0
  %1223 = vmatpush2.bf16.msra.mxu0 %v882
  %1224 = vmatprep.subr.bf16.mxu0 0
  %1225 = vmatpush2.bf16.msra.mxu0 %v881
  %1226 = vmatprep.subr.bf16.mxu0 0
  %1227 = vmatpush2.bf16.msra.mxu0 %v880
  %1228 = vmatprep.subr.bf16.mxu0 0
  %1229 = vmatpush2.bf16.msra.mxu0 %v879
  %1230 = vmatprep.subr.bf16.mxu0 0
  %1231 = vmatpush2.bf16.msra.mxu0 %v878
  %1232 = vmatprep.subr.bf16.mxu0 0
  %1233 = vmatpush2.bf16.msra.mxu0 %v877
  %1234 = vmatprep.subr.bf16.mxu0 0
  %1235 = vmatpush2.bf16.msra.mxu0 %v876
  %1236 = vmatprep.subr.bf16.mxu0 0
  %1237 = vmatpush2.bf16.msra.mxu0 %v875
  %1238 = vmatprep.mubr.bf16.mxu0 %v362
  %1239 = vmatmul.mubr.bf16.gmra.mxu0 %v361
  %v1240 = vpop.f32.mrf.mxu0
  %v1241 = vadd.f32 %v1192, %v1240
  %v1242 = vpop.f32.mrf.mxu0
  %v1243 = vpop.f32.mrf.mxu0
  %v1244 = vadd.f32 %v1195, %v1243
  %v1245 = vpop.f32.mrf.mxu0
  %1246 = vmatprep.mubr.bf16.mxu0 %v375
  %1247 = vmatmul.mubr.bf16.gmra.mxu0 %v374
  %v1248 = vpop.f32.mrf.mxu0
  %v1249 = vadd.f32 %v1200, %v1248
  %v1250 = vpop.f32.mrf.mxu0
  %v1251 = vpop.f32.mrf.mxu0
  %v1252 = vadd.f32 %v1203, %v1251
  %v1253 = vpop.f32.mrf.mxu0
  %1254 = vdwg.mxu0
  %1255 = vmatprep.subr.bf16.mxu0 0
  %1256 = vmatpush1.bf16.msra.mxu0 %v890
  %1257 = vmatprep.subr.bf16.mxu0 0
  %1258 = vmatpush1.bf16.msra.mxu0 %v889
  %1259 = vmatprep.subr.bf16.mxu0 0
  %1260 = vmatpush1.bf16.msra.mxu0 %v888
  %1261 = vmatprep.subr.bf16.mxu0 0
  %1262 = vmatpush1.bf16.msra.mxu0 %v887
  %1263 = vmatprep.subr.bf16.mxu0 0
  %1264 = vmatpush1.bf16.msra.mxu0 %v886
  %1265 = vmatprep.subr.bf16.mxu0 0
  %1266 = vmatpush1.bf16.msra.mxu0 %v885
  %1267 = vmatprep.subr.bf16.mxu0 0
  %1268 = vmatpush1.bf16.msra.mxu0 %v884
  %1269 = vmatprep.subr.bf16.mxu0 0
  %1270 = vmatpush1.bf16.msra.mxu0 %v883
  %1271 = vmatprep.subr.bf16.mxu0 0
  %1272 = vmatpush2.bf16.msra.mxu0 %v898
  %1273 = vmatprep.subr.bf16.mxu0 0
  %1274 = vmatpush2.bf16.msra.mxu0 %v897
  %1275 = vmatprep.subr.bf16.mxu0 0
  %1276 = vmatpush2.bf16.msra.mxu0 %v896
  %1277 = vmatprep.subr.bf16.mxu0 0
  %1278 = vmatpush2.bf16.msra.mxu0 %v895
  %1279 = vmatprep.subr.bf16.mxu0 0
  %1280 = vmatpush2.bf16.msra.mxu0 %v894
  %1281 = vmatprep.subr.bf16.mxu0 0
  %1282 = vmatpush2.bf16.msra.mxu0 %v893
  %1283 = vmatprep.subr.bf16.mxu0 0
  %1284 = vmatpush2.bf16.msra.mxu0 %v892
  %1285 = vmatprep.subr.bf16.mxu0 0
  %1286 = vmatpush2.bf16.msra.mxu0 %v891
  %1287 = vmatprep.mubr.bf16.mxu0 %v364
  %1288 = vmatmul.mubr.bf16.gmra.mxu0 %v363
  %v1289 = vpop.f32.mrf.mxu0
  %v1290 = vadd.f32 %v1241, %v1289
  %v1291 = vpop.f32.mrf.mxu0
  %v1292 = vpop.f32.mrf.mxu0
  %v1293 = vadd.f32 %v1244, %v1292
  %v1294 = vpop.f32.mrf.mxu0
  %1295 = vmatprep.mubr.bf16.mxu0 %v377
  %1296 = vmatmul.mubr.bf16.gmra.mxu0 %v376
  %v1297 = vpop.f32.mrf.mxu0
  %v1298 = vadd.f32 %v1249, %v1297
  %v1299 = vpop.f32.mrf.mxu0
  %v1300 = vpop.f32.mrf.mxu0
  %v1301 = vadd.f32 %v1252, %v1300
  %v1302 = vpop.f32.mrf.mxu0
  %1303 = vdwg.mxu0
  %1304 = vmatprep.subr.bf16.mxu0 0
  %1305 = vmatpush1.bf16.msra.mxu0 0
  %1306 = vmatprep.subr.bf16.mxu0 0
  %1307 = vmatpush1.bf16.msra.mxu0 0
  %1308 = vmatprep.subr.bf16.mxu0 0
  %1309 = vmatpush1.bf16.msra.mxu0 0
  %1310 = vmatprep.subr.bf16.mxu0 0
  %1311 = vmatpush1.bf16.msra.mxu0 0
  %1312 = vmatprep.subr.bf16.mxu0 0
  %1313 = vmatpush1.bf16.msra.mxu0 %v902
  %1314 = vmatprep.subr.bf16.mxu0 0
  %1315 = vmatpush1.bf16.msra.mxu0 %v901
  %1316 = vmatprep.subr.bf16.mxu0 0
  %1317 = vmatpush1.bf16.msra.mxu0 %v900
  %1318 = vmatprep.subr.bf16.mxu0 0
  %1319 = vmatpush1.bf16.msra.mxu0 %v899
  %1320 = vmatprep.subr.bf16.mxu0 0
  %1321 = vmatpush2.bf16.msra.mxu0 0
  %1322 = vmatprep.subr.bf16.mxu0 0
  %1323 = vmatpush2.bf16.msra.mxu0 0
  %1324 = vmatprep.subr.bf16.mxu0 0
  %1325 = vmatpush2.bf16.msra.mxu0 0
  %1326 = vmatprep.subr.bf16.mxu0 0
  %1327 = vmatpush2.bf16.msra.mxu0 0
  %1328 = vmatprep.subr.bf16.mxu0 0
  %1329 = vmatpush2.bf16.msra.mxu0 0
  %1330 = vmatprep.subr.bf16.mxu0 0
  %1331 = vmatpush2.bf16.msra.mxu0 0
  %1332 = vmatprep.subr.bf16.mxu0 0
  %1333 = vmatpush2.bf16.msra.mxu0 0
  %1334 = vmatprep.subr.bf16.mxu0 0
  %1335 = vmatpush2.bf16.msra.mxu0 0
  %1336 = vmatprep.mubr.bf16.mxu0 0
  %1337 = vmatmul.mubr.bf16.gmra.mxu0 %v1005
  %v1338 = vpop.f32.mrf.mxu0
  %v1339 = vadd.f32 %v1290, %v1338
  %v1340 = vpop.f32.mrf.mxu0
  %v1341 = vpop.f32.mrf.mxu0
  %v1342 = vadd.f32 %v1293, %v1341
  %v1343 = vpop.f32.mrf.mxu0
  %1344 = vmatprep.mubr.bf16.mxu0 0
  %1345 = vmatmul.mubr.bf16.gmra.mxu0 %v1008
  %v1346 = vpop.f32.mrf.mxu0
  %v1347 = vadd.f32 %v1298, %v1346
  %v1348 = vpop.f32.mrf.mxu0
  %v1349 = vpop.f32.mrf.mxu0
  %v1350 = vadd.f32 %v1301, %v1349
  %v1351 = vpop.f32.mrf.mxu0
  %1352 = vdwg.mxu0
  %v1353 = vadd.f32 %v241, %v1339
  %v1354 = vadd.f32 %v242, %v1342
  %v1355 = vadd.f32 %v243, %v1347
  %v1356 = vadd.f32 %v244, %v1350
  %1357 = vst [vmem:[#allocation2] sm:$0xff] %v1353
  %1358 = vst [vmem:[#allocation2 + $0x8] sm:$0xff] %v1354
  %1359 = vst [vmem:[#allocation2 + $0x10] sm:$0xff] %v1355
  %1360 = vst [vmem:[#allocation2 + $0x18] sm:$0xff] %v1356
  %s1361 = scalar_lea.vmem [#allocation2], 32
  %v1362 = vld [vmem:[%s1361] sm:$0xff]
  %v1363 = vld [vmem:[%s1361 + $0x8] sm:$0xff]
  %v1364 = vld [vmem:[%s1361 + $0x10] sm:$0xff]
  %v1365 = vld [vmem:[%s1361 + $0x18] sm:$0xff]
  %s1366 = scalar_lea.vmem %s0, 208
  %v1367 = vld [vmem:[%s1366] sm:$0xff]
  %v1368 = vld [vmem:[%s1366 + $0x8] sm:$0xff]
  %v1369 = vld [vmem:[%s1366 + $0x10] sm:$0xff]
  %v1370 = vld [vmem:[%s1366 + $0x18] sm:$0xff]
  %v1371 = vld [vmem:[%s1366 + $0x20] sm:$0xff]
  %v1372 = vld [vmem:[%s1366 + $0x28] sm:$0xff]
  %v1373 = vld [vmem:[%s1366 + $0x30] sm:$0xf]
  %v1374 = vld [vmem:[%s1366 + $0x34] sm:$0xff]
  %v1375 = vld [vmem:[%s1366 + $0x3c] sm:$0xff]
  %v1376 = vld [vmem:[%s1366 + $0x44] sm:$0xff]
  %v1377 = vld [vmem:[%s1366 + $0x4c] sm:$0xff]
  %v1378 = vld [vmem:[%s1366 + $0x54] sm:$0xff]
  %v1379 = vld [vmem:[%s1366 + $0x5c] sm:$0xff]
  %v1380 = vld [vmem:[%s1366 + $0x64] sm:$0xf]
  %v1381 = vld [vmem:[%s1366 + $0x68] sm:$0xff]
  %v1382 = vld [vmem:[%s1366 + $0x70] sm:$0xff]
  %v1383 = vld [vmem:[%s1366 + $0x78] sm:$0xff]
  %v1384 = vld [vmem:[%s1366 + $0x80] sm:$0xff]
  %v1385 = vld [vmem:[%s1366 + $0x88] sm:$0xff]
  %v1386 = vld [vmem:[%s1366 + $0x90] sm:$0xff]
  %v1387 = vld [vmem:[%s1366 + $0x98] sm:$0xf]
  %v1388 = vld [vmem:[%s1366 + $0x9c] sm:$0xff]
  %v1389 = vld [vmem:[%s1366 + $0xa4] sm:$0xff]
  %v1390 = vld [vmem:[%s1366 + $0xac] sm:$0xff]
  %v1391 = vld [vmem:[%s1366 + $0xb4] sm:$0xff]
  %v1392 = vld [vmem:[%s1366 + $0xbc] sm:$0xff]
  %v1393 = vld [vmem:[%s1366 + $0xc4] sm:$0xff]
  %v1394 = vld [vmem:[%s1366 + $0xcc] sm:$0xf]
  %v1423 = vunpack.c.l.b16 %v1367
  %v1424 = vunpack.c.h.b16 %v1367
  %v1425 = vunpack.c.l.b16 %v1368
  %v1426 = vunpack.c.h.b16 %v1368
  %v1427 = vunpack.c.l.b16 %v1369
  %v1428 = vunpack.c.h.b16 %v1369
  %v1429 = vunpack.c.l.b16 %v1370
  %v1430 = vunpack.c.h.b16 %v1370
  %v1431 = vunpack.c.l.b16 %v1371
  %v1432 = vunpack.c.h.b16 %v1371
  %v1433 = vunpack.c.l.b16 %v1372
  %v1434 = vunpack.c.h.b16 %v1372
  %v1435 = vunpack.c.l.b16 %v1373
  %v1436 = vunpack.c.l.b16 %v1374
  %v1437 = vunpack.c.h.b16 %v1374
  %v1438 = vunpack.c.l.b16 %v1375
  %v1439 = vunpack.c.h.b16 %v1375
  %v1440 = vunpack.c.l.b16 %v1376
  %v1441 = vunpack.c.h.b16 %v1376
  %v1442 = vunpack.c.l.b16 %v1377
  %v1443 = vunpack.c.h.b16 %v1377
  %v1444 = vunpack.c.l.b16 %v1378
  %v1445 = vunpack.c.h.b16 %v1378
  %v1446 = vunpack.c.l.b16 %v1379
  %v1447 = vunpack.c.h.b16 %v1379
  %v1448 = vunpack.c.l.b16 %v1380
  %v1449 = vunpack.c.l.b16 %v1381
  %v1450 = vunpack.c.h.b16 %v1381
  %v1451 = vunpack.c.l.b16 %v1382
  %v1452 = vunpack.c.h.b16 %v1382
  %v1453 = vunpack.c.l.b16 %v1383
  %v1454 = vunpack.c.h.b16 %v1383
  %v1455 = vunpack.c.l.b16 %v1384
  %v1456 = vunpack.c.h.b16 %v1384
  %v1457 = vunpack.c.l.b16 %v1385
  %v1458 = vunpack.c.h.b16 %v1385
  %v1459 = vunpack.c.l.b16 %v1386
  %v1460 = vunpack.c.h.b16 %v1386
  %v1461 = vunpack.c.l.b16 %v1387
  %v1462 = vunpack.c.l.b16 %v1388
  %v1463 = vunpack.c.h.b16 %v1388
  %v1464 = vunpack.c.l.b16 %v1389
  %v1465 = vunpack.c.h.b16 %v1389
  %v1466 = vunpack.c.l.b16 %v1390
  %v1467 = vunpack.c.h.b16 %v1390
  %v1468 = vunpack.c.l.b16 %v1391
  %v1469 = vunpack.c.h.b16 %v1391
  %v1470 = vunpack.c.l.b16 %v1392
  %v1471 = vunpack.c.h.b16 %v1392
  %v1472 = vunpack.c.l.b16 %v1393
  %v1473 = vunpack.c.h.b16 %v1393
  %v1474 = vunpack.c.l.b16 %v1394
  %v1475 = vpack.c.b16 %v1436, %v1423
  %v1476 = vpack.c.b16 %v1437, %v1424
  %v1477 = vpack.c.b16 %v1438, %v1425
  %v1478 = vpack.c.b16 %v1439, %v1426
  %v1479 = vpack.c.b16 %v1440, %v1427
  %v1480 = vpack.c.b16 %v1441, %v1428
  %v1481 = vpack.c.b16 %v1442, %v1429
  %v1482 = vpack.c.b16 %v1443, %v1430
  %v1483 = vpack.c.b16 %v1444, %v1431
  %v1484 = vpack.c.b16 %v1445, %v1432
  %v1485 = vpack.c.b16 %v1446, %v1433
  %v1486 = vpack.c.b16 %v1447, %v1434
  %v1487 = vpack.c.b16 %v1448, %v1435
  %v1488 = vpack.c.b16 %v1462, %v1449
  %v1489 = vpack.c.b16 %v1463, %v1450
  %v1490 = vpack.c.b16 %v1464, %v1451
  %v1491 = vpack.c.b16 %v1465, %v1452
  %v1492 = vpack.c.b16 %v1466, %v1453
  %v1493 = vpack.c.b16 %v1467, %v1454
  %v1494 = vpack.c.b16 %v1468, %v1455
  %v1495 = vpack.c.b16 %v1469, %v1456
  %v1496 = vpack.c.b16 %v1470, %v1457
  %v1497 = vpack.c.b16 %v1471, %v1458
  %v1498 = vpack.c.b16 %v1472, %v1459
  %v1499 = vpack.c.b16 %v1473, %v1460
  %v1500 = vpack.c.b16 %v1474, %v1461
  %v1526 = vsel %vm1003, %v1487, 0
  %v1529 = vsel %vm1003, %v1500, 0
  %1531 = vmatprep.subr.bf16.mxu0 0
  %1532 = vmatpush1.bf16.msra.mxu0 %v810
  %1533 = vmatprep.subr.bf16.mxu0 0
  %1534 = vmatpush1.bf16.msra.mxu0 %v809
  %1535 = vmatprep.subr.bf16.mxu0 0
  %1536 = vmatpush1.bf16.msra.mxu0 %v808
  %1537 = vmatprep.subr.bf16.mxu0 0
  %1538 = vmatpush1.bf16.msra.mxu0 %v807
  %1539 = vmatprep.subr.bf16.mxu0 0
  %1540 = vmatpush1.bf16.msra.mxu0 %v806
  %1541 = vmatprep.subr.bf16.mxu0 0
  %1542 = vmatpush1.bf16.msra.mxu0 %v805
  %1543 = vmatprep.subr.bf16.mxu0 0
  %1544 = vmatpush1.bf16.msra.mxu0 %v804
  %1545 = vmatprep.subr.bf16.mxu0 0
  %1546 = vmatpush1.bf16.msra.mxu0 %v803
  %1547 = vmatprep.subr.bf16.mxu0 0
  %1548 = vmatpush2.bf16.msra.mxu0 %v818
  %1549 = vmatprep.subr.bf16.mxu0 0
  %1550 = vmatpush2.bf16.msra.mxu0 %v817
  %1551 = vmatprep.subr.bf16.mxu0 0
  %1552 = vmatpush2.bf16.msra.mxu0 %v816
  %1553 = vmatprep.subr.bf16.mxu0 0
  %1554 = vmatpush2.bf16.msra.mxu0 %v815
  %1555 = vmatprep.subr.bf16.mxu0 0
  %1556 = vmatpush2.bf16.msra.mxu0 %v814
  %1557 = vmatprep.subr.bf16.mxu0 0
  %1558 = vmatpush2.bf16.msra.mxu0 %v813
  %1559 = vmatprep.subr.bf16.mxu0 0
  %1560 = vmatpush2.bf16.msra.mxu0 %v812
  %1561 = vmatprep.subr.bf16.mxu0 0
  %1562 = vmatpush2.bf16.msra.mxu0 %v811
  %1563 = vmatprep.mubr.bf16.mxu0 %v1476
  %1564 = vmatmul.mubr.bf16.gmra.mxu0 %v1475
  %v1565 = vpop.f32.mrf.mxu0
  %v1566 = vadd.f32 0.0, %v1565
  %v1567 = vpop.f32.mrf.mxu0
  %v1568 = vpop.f32.mrf.mxu0
  %v1569 = vadd.f32 0.0, %v1568
  %v1570 = vpop.f32.mrf.mxu0
  %1571 = vmatprep.mubr.bf16.mxu0 %v1489
  %1572 = vmatmul.mubr.bf16.gmra.mxu0 %v1488
  %v1573 = vpop.f32.mrf.mxu0
  %v1574 = vadd.f32 0.0, %v1573
  %v1575 = vpop.f32.mrf.mxu0
  %v1576 = vpop.f32.mrf.mxu0
  %v1577 = vadd.f32 0.0, %v1576
  %v1578 = vpop.f32.mrf.mxu0
  %1579 = vdwg.mxu0
  %1580 = vmatprep.subr.bf16.mxu0 0
  %1581 = vmatpush1.bf16.msra.mxu0 %v826
  %1582 = vmatprep.subr.bf16.mxu0 0
  %1583 = vmatpush1.bf16.msra.mxu0 %v825
  %1584 = vmatprep.subr.bf16.mxu0 0
  %1585 = vmatpush1.bf16.msra.mxu0 %v824
  %1586 = vmatprep.subr.bf16.mxu0 0
  %1587 = vmatpush1.bf16.msra.mxu0 %v823
  %1588 = vmatprep.subr.bf16.mxu0 0
  %1589 = vmatpush1.bf16.msra.mxu0 %v822
  %1590 = vmatprep.subr.bf16.mxu0 0
  %1591 = vmatpush1.bf16.msra.mxu0 %v821
  %1592 = vmatprep.subr.bf16.mxu0 0
  %1593 = vmatpush1.bf16.msra.mxu0 %v820
  %1594 = vmatprep.subr.bf16.mxu0 0
  %1595 = vmatpush1.bf16.msra.mxu0 %v819
  %1596 = vmatprep.subr.bf16.mxu0 0
  %1597 = vmatpush2.bf16.msra.mxu0 %v834
  %1598 = vmatprep.subr.bf16.mxu0 0
  %1599 = vmatpush2.bf16.msra.mxu0 %v833
  %1600 = vmatprep.subr.bf16.mxu0 0
  %1601 = vmatpush2.bf16.msra.mxu0 %v832
  %1602 = vmatprep.subr.bf16.mxu0 0
  %1603 = vmatpush2.bf16.msra.mxu0 %v831
  %1604 = vmatprep.subr.bf16.mxu0 0
  %1605 = vmatpush2.bf16.msra.mxu0 %v830
  %1606 = vmatprep.subr.bf16.mxu0 0
  %1607 = vmatpush2.bf16.msra.mxu0 %v829
  %1608 = vmatprep.subr.bf16.mxu0 0
  %1609 = vmatpush2.bf16.msra.mxu0 %v828
  %1610 = vmatprep.subr.bf16.mxu0 0
  %1611 = vmatpush2.bf16.msra.mxu0 %v827
  %1612 = vmatprep.mubr.bf16.mxu0 %v1478
  %1613 = vmatmul.mubr.bf16.gmra.mxu0 %v1477
  %v1614 = vpop.f32.mrf.mxu0
  %v1615 = vadd.f32 %v1566, %v1614
  %v1616 = vpop.f32.mrf.mxu0
  %v1617 = vpop.f32.mrf.mxu0
  %v1618 = vadd.f32 %v1569, %v1617
  %v1619 = vpop.f32.mrf.mxu0
  %1620 = vmatprep.mubr.bf16.mxu0 %v1491
  %1621 = vmatmul.mubr.bf16.gmra.mxu0 %v1490
  %v1622 = vpop.f32.mrf.mxu0
  %v1623 = vadd.f32 %v1574, %v1622
  %v1624 = vpop.f32.mrf.mxu0
  %v1625 = vpop.f32.mrf.mxu0
  %v1626 = vadd.f32 %v1577, %v1625
  %v1627 = vpop.f32.mrf.mxu0
  %1628 = vdwg.mxu0
  %1629 = vmatprep.subr.bf16.mxu0 0
  %1630 = vmatpush1.bf16.msra.mxu0 %v842
  %1631 = vmatprep.subr.bf16.mxu0 0
  %1632 = vmatpush1.bf16.msra.mxu0 %v841
  %1633 = vmatprep.subr.bf16.mxu0 0
  %1634 = vmatpush1.bf16.msra.mxu0 %v840
  %1635 = vmatprep.subr.bf16.mxu0 0
  %1636 = vmatpush1.bf16.msra.mxu0 %v839
  %1637 = vmatprep.subr.bf16.mxu0 0
  %1638 = vmatpush1.bf16.msra.mxu0 %v838
  %1639 = vmatprep.subr.bf16.mxu0 0
  %1640 = vmatpush1.bf16.msra.mxu0 %v837
  %1641 = vmatprep.subr.bf16.mxu0 0
  %1642 = vmatpush1.bf16.msra.mxu0 %v836
  %1643 = vmatprep.subr.bf16.mxu0 0
  %1644 = vmatpush1.bf16.msra.mxu0 %v835
  %1645 = vmatprep.subr.bf16.mxu0 0
  %1646 = vmatpush2.bf16.msra.mxu0 %v850
  %1647 = vmatprep.subr.bf16.mxu0 0
  %1648 = vmatpush2.bf16.msra.mxu0 %v849
  %1649 = vmatprep.subr.bf16.mxu0 0
  %1650 = vmatpush2.bf16.msra.mxu0 %v848
  %1651 = vmatprep.subr.bf16.mxu0 0
  %1652 = vmatpush2.bf16.msra.mxu0 %v847
  %1653 = vmatprep.subr.bf16.mxu0 0
  %1654 = vmatpush2.bf16.msra.mxu0 %v846
  %1655 = vmatprep.subr.bf16.mxu0 0
  %1656 = vmatpush2.bf16.msra.mxu0 %v845
  %1657 = vmatprep.subr.bf16.mxu0 0
  %1658 = vmatpush2.bf16.msra.mxu0 %v844
  %1659 = vmatprep.subr.bf16.mxu0 0
  %1660 = vmatpush2.bf16.msra.mxu0 %v843
  %1661 = vmatprep.mubr.bf16.mxu0 %v1480
  %1662 = vmatmul.mubr.bf16.gmra.mxu0 %v1479
  %v1663 = vpop.f32.mrf.mxu0
  %v1664 = vadd.f32 %v1615, %v1663
  %v1665 = vpop.f32.mrf.mxu0
  %v1666 = vpop.f32.mrf.mxu0
  %v1667 = vadd.f32 %v1618, %v1666
  %v1668 = vpop.f32.mrf.mxu0
  %1669 = vmatprep.mubr.bf16.mxu0 %v1493
  %1670 = vmatmul.mubr.bf16.gmra.mxu0 %v1492
  %v1671 = vpop.f32.mrf.mxu0
  %v1672 = vadd.f32 %v1623, %v1671
  %v1673 = vpop.f32.mrf.mxu0
  %v1674 = vpop.f32.mrf.mxu0
  %v1675 = vadd.f32 %v1626, %v1674
  %v1676 = vpop.f32.mrf.mxu0
  %1677 = vdwg.mxu0
  %1678 = vmatprep.subr.bf16.mxu0 0
  %1679 = vmatpush1.bf16.msra.mxu0 %v858
  %1680 = vmatprep.subr.bf16.mxu0 0
  %1681 = vmatpush1.bf16.msra.mxu0 %v857
  %1682 = vmatprep.subr.bf16.mxu0 0
  %1683 = vmatpush1.bf16.msra.mxu0 %v856
  %1684 = vmatprep.subr.bf16.mxu0 0
  %1685 = vmatpush1.bf16.msra.mxu0 %v855
  %1686 = vmatprep.subr.bf16.mxu0 0
  %1687 = vmatpush1.bf16.msra.mxu0 %v854
  %1688 = vmatprep.subr.bf16.mxu0 0
  %1689 = vmatpush1.bf16.msra.mxu0 %v853
  %1690 = vmatprep.subr.bf16.mxu0 0
  %1691 = vmatpush1.bf16.msra.mxu0 %v852
  %1692 = vmatprep.subr.bf16.mxu0 0
  %1693 = vmatpush1.bf16.msra.mxu0 %v851
  %1694 = vmatprep.subr.bf16.mxu0 0
  %1695 = vmatpush2.bf16.msra.mxu0 %v866
  %1696 = vmatprep.subr.bf16.mxu0 0
  %1697 = vmatpush2.bf16.msra.mxu0 %v865
  %1698 = vmatprep.subr.bf16.mxu0 0
  %1699 = vmatpush2.bf16.msra.mxu0 %v864
  %1700 = vmatprep.subr.bf16.mxu0 0
  %1701 = vmatpush2.bf16.msra.mxu0 %v863
  %1702 = vmatprep.subr.bf16.mxu0 0
  %1703 = vmatpush2.bf16.msra.mxu0 %v862
  %1704 = vmatprep.subr.bf16.mxu0 0
  %1705 = vmatpush2.bf16.msra.mxu0 %v861
  %1706 = vmatprep.subr.bf16.mxu0 0
  %1707 = vmatpush2.bf16.msra.mxu0 %v860
  %1708 = vmatprep.subr.bf16.mxu0 0
  %1709 = vmatpush2.bf16.msra.mxu0 %v859
  %1710 = vmatprep.mubr.bf16.mxu0 %v1482
  %1711 = vmatmul.mubr.bf16.gmra.mxu0 %v1481
  %v1712 = vpop.f32.mrf.mxu0
  %v1713 = vadd.f32 %v1664, %v1712
  %v1714 = vpop.f32.mrf.mxu0
  %v1715 = vpop.f32.mrf.mxu0
  %v1716 = vadd.f32 %v1667, %v1715
  %v1717 = vpop.f32.mrf.mxu0
  %1718 = vmatprep.mubr.bf16.mxu0 %v1495
  %1719 = vmatmul.mubr.bf16.gmra.mxu0 %v1494
  %v1720 = vpop.f32.mrf.mxu0
  %v1721 = vadd.f32 %v1672, %v1720
  %v1722 = vpop.f32.mrf.mxu0
  %v1723 = vpop.f32.mrf.mxu0
  %v1724 = vadd.f32 %v1675, %v1723
  %v1725 = vpop.f32.mrf.mxu0
  %1726 = vdwg.mxu0
  %1727 = vmatprep.subr.bf16.mxu0 0
  %1728 = vmatpush1.bf16.msra.mxu0 %v874
  %1729 = vmatprep.subr.bf16.mxu0 0
  %1730 = vmatpush1.bf16.msra.mxu0 %v873
  %1731 = vmatprep.subr.bf16.mxu0 0
  %1732 = vmatpush1.bf16.msra.mxu0 %v872
  %1733 = vmatprep.subr.bf16.mxu0 0
  %1734 = vmatpush1.bf16.msra.mxu0 %v871
  %1735 = vmatprep.subr.bf16.mxu0 0
  %1736 = vmatpush1.bf16.msra.mxu0 %v870
  %1737 = vmatprep.subr.bf16.mxu0 0
  %1738 = vmatpush1.bf16.msra.mxu0 %v869
  %1739 = vmatprep.subr.bf16.mxu0 0
  %1740 = vmatpush1.bf16.msra.mxu0 %v868
  %1741 = vmatprep.subr.bf16.mxu0 0
  %1742 = vmatpush1.bf16.msra.mxu0 %v867
  %1743 = vmatprep.subr.bf16.mxu0 0
  %1744 = vmatpush2.bf16.msra.mxu0 %v882
  %1745 = vmatprep.subr.bf16.mxu0 0
  %1746 = vmatpush2.bf16.msra.mxu0 %v881
  %1747 = vmatprep.subr.bf16.mxu0 0
  %1748 = vmatpush2.bf16.msra.mxu0 %v880
  %1749 = vmatprep.subr.bf16.mxu0 0
  %1750 = vmatpush2.bf16.msra.mxu0 %v879
  %1751 = vmatprep.subr.bf16.mxu0 0
  %1752 = vmatpush2.bf16.msra.mxu0 %v878
  %1753 = vmatprep.subr.bf16.mxu0 0
  %1754 = vmatpush2.bf16.msra.mxu0 %v877
  %1755 = vmatprep.subr.bf16.mxu0 0
  %1756 = vmatpush2.bf16.msra.mxu0 %v876
  %1757 = vmatprep.subr.bf16.mxu0 0
  %1758 = vmatpush2.bf16.msra.mxu0 %v875
  %1759 = vmatprep.mubr.bf16.mxu0 %v1484
  %1760 = vmatmul.mubr.bf16.gmra.mxu0 %v1483
  %v1761 = vpop.f32.mrf.mxu0
  %v1762 = vadd.f32 %v1713, %v1761
  %v1763 = vpop.f32.mrf.mxu0
  %v1764 = vpop.f32.mrf.mxu0
  %v1765 = vadd.f32 %v1716, %v1764
  %v1766 = vpop.f32.mrf.mxu0
  %1767 = vmatprep.mubr.bf16.mxu0 %v1497
  %1768 = vmatmul.mubr.bf16.gmra.mxu0 %v1496
  %v1769 = vpop.f32.mrf.mxu0
  %v1770 = vadd.f32 %v1721, %v1769
  %v1771 = vpop.f32.mrf.mxu0
  %v1772 = vpop.f32.mrf.mxu0
  %v1773 = vadd.f32 %v1724, %v1772
  %v1774 = vpop.f32.mrf.mxu0
  %1775 = vdwg.mxu0
  %1776 = vmatprep.subr.bf16.mxu0 0
  %1777 = vmatpush1.bf16.msra.mxu0 %v890
  %1778 = vmatprep.subr.bf16.mxu0 0
  %1779 = vmatpush1.bf16.msra.mxu0 %v889
  %1780 = vmatprep.subr.bf16.mxu0 0
  %1781 = vmatpush1.bf16.msra.mxu0 %v888
  %1782 = vmatprep.subr.bf16.mxu0 0
  %1783 = vmatpush1.bf16.msra.mxu0 %v887
  %1784 = vmatprep.subr.bf16.mxu0 0
  %1785 = vmatpush1.bf16.msra.mxu0 %v886
  %1786 = vmatprep.subr.bf16.mxu0 0
  %1787 = vmatpush1.bf16.msra.mxu0 %v885
  %1788 = vmatprep.subr.bf16.mxu0 0
  %1789 = vmatpush1.bf16.msra.mxu0 %v884
  %1790 = vmatprep.subr.bf16.mxu0 0
  %1791 = vmatpush1.bf16.msra.mxu0 %v883
  %1792 = vmatprep.subr.bf16.mxu0 0
  %1793 = vmatpush2.bf16.msra.mxu0 %v898
  %1794 = vmatprep.subr.bf16.mxu0 0
  %1795 = vmatpush2.bf16.msra.mxu0 %v897
  %1796 = vmatprep.subr.bf16.mxu0 0
  %1797 = vmatpush2.bf16.msra.mxu0 %v896
  %1798 = vmatprep.subr.bf16.mxu0 0
  %1799 = vmatpush2.bf16.msra.mxu0 %v895
  %1800 = vmatprep.subr.bf16.mxu0 0
  %1801 = vmatpush2.bf16.msra.mxu0 %v894
  %1802 = vmatprep.subr.bf16.mxu0 0
  %1803 = vmatpush2.bf16.msra.mxu0 %v893
  %1804 = vmatprep.subr.bf16.mxu0 0
  %1805 = vmatpush2.bf16.msra.mxu0 %v892
  %1806 = vmatprep.subr.bf16.mxu0 0
  %1807 = vmatpush2.bf16.msra.mxu0 %v891
  %1808 = vmatprep.mubr.bf16.mxu0 %v1486
  %1809 = vmatmul.mubr.bf16.gmra.mxu0 %v1485
  %v1810 = vpop.f32.mrf.mxu0
  %v1811 = vadd.f32 %v1762, %v1810
  %v1812 = vpop.f32.mrf.mxu0
  %v1813 = vpop.f32.mrf.mxu0
  %v1814 = vadd.f32 %v1765, %v1813
  %v1815 = vpop.f32.mrf.mxu0
  %1816 = vmatprep.mubr.bf16.mxu0 %v1499
  %1817 = vmatmul.mubr.bf16.gmra.mxu0 %v1498
  %v1818 = vpop.f32.mrf.mxu0
  %v1819 = vadd.f32 %v1770, %v1818
  %v1820 = vpop.f32.mrf.mxu0
  %v1821 = vpop.f32.mrf.mxu0
  %v1822 = vadd.f32 %v1773, %v1821
  %v1823 = vpop.f32.mrf.mxu0
  %1824 = vdwg.mxu0
  %1825 = vmatprep.subr.bf16.mxu0 0
  %1826 = vmatpush1.bf16.msra.mxu0 0
  %1827 = vmatprep.subr.bf16.mxu0 0
  %1828 = vmatpush1.bf16.msra.mxu0 0
  %1829 = vmatprep.subr.bf16.mxu0 0
  %1830 = vmatpush1.bf16.msra.mxu0 0
  %1831 = vmatprep.subr.bf16.mxu0 0
  %1832 = vmatpush1.bf16.msra.mxu0 0
  %1833 = vmatprep.subr.bf16.mxu0 0
  %1834 = vmatpush1.bf16.msra.mxu0 %v902
  %1835 = vmatprep.subr.bf16.mxu0 0
  %1836 = vmatpush1.bf16.msra.mxu0 %v901
  %1837 = vmatprep.subr.bf16.mxu0 0
  %1838 = vmatpush1.bf16.msra.mxu0 %v900
  %1839 = vmatprep.subr.bf16.mxu0 0
  %1840 = vmatpush1.bf16.msra.mxu0 %v899
  %1841 = vmatprep.subr.bf16.mxu0 0
  %1842 = vmatpush2.bf16.msra.mxu0 0
  %1843 = vmatprep.subr.bf16.mxu0 0
  %1844 = vmatpush2.bf16.msra.mxu0 0
  %1845 = vmatprep.subr.bf16.mxu0 0
  %1846 = vmatpush2.bf16.msra.mxu0 0
  %1847 = vmatprep.subr.bf16.mxu0 0
  %1848 = vmatpush2.bf16.msra.mxu0 0
  %1849 = vmatprep.subr.bf16.mxu0 0
  %1850 = vmatpush2.bf16.msra.mxu0 0
  %1851 = vmatprep.subr.bf16.mxu0 0
  %1852 = vmatpush2.bf16.msra.mxu0 0
  %1853 = vmatprep.subr.bf16.mxu0 0
  %1854 = vmatpush2.bf16.msra.mxu0 0
  %1855 = vmatprep.subr.bf16.mxu0 0
  %1856 = vmatpush2.bf16.msra.mxu0 0
  %1857 = vmatprep.mubr.bf16.mxu0 0
  %1858 = vmatmul.mubr.bf16.gmra.mxu0 %v1526
  %v1859 = vpop.f32.mrf.mxu0
  %v1860 = vadd.f32 %v1811, %v1859
  %v1861 = vpop.f32.mrf.mxu0
  %v1862 = vpop.f32.mrf.mxu0
  %v1863 = vadd.f32 %v1814, %v1862
  %v1864 = vpop.f32.mrf.mxu0
  %1865 = vmatprep.mubr.bf16.mxu0 0
  %1866 = vmatmul.mubr.bf16.gmra.mxu0 %v1529
  %v1867 = vpop.f32.mrf.mxu0
  %v1868 = vadd.f32 %v1819, %v1867
  %v1869 = vpop.f32.mrf.mxu0
  %v1870 = vpop.f32.mrf.mxu0
  %v1871 = vadd.f32 %v1822, %v1870
  %v1872 = vpop.f32.mrf.mxu0
  %1873 = vdwg.mxu0
  %v1874 = vadd.f32 %v1362, %v1860
  %v1875 = vadd.f32 %v1363, %v1863
  %v1876 = vadd.f32 %v1364, %v1868
  %v1877 = vadd.f32 %v1365, %v1871
  %1878 = vst [vmem:[%s1361] sm:$0xff] %v1874
  %1879 = vst [vmem:[%s1361 + $0x8] sm:$0xff] %v1875
  %1880 = vst [vmem:[%s1361 + $0x10] sm:$0xff] %v1876
  %1881 = vst [vmem:[%s1361 + $0x18] sm:$0xff] %v1877
  %s1882 = scalar_lea.vmem [#allocation2], 64
  %v1883 = vld [vmem:[%s1882] sm:$0xff]
  %v1884 = vld [vmem:[%s1882 + $0x8] sm:$0xff]
  %v1885 = vld [vmem:[%s1882 + $0x10] sm:$0xff]
  %v1886 = vld [vmem:[%s1882 + $0x18] sm:$0xff]
  %s1887 = scalar_lea.vmem %s0, 416
  %v1888 = vld [vmem:[%s1887] sm:$0xff]
  %v1889 = vld [vmem:[%s1887 + $0x8] sm:$0xff]
  %v1890 = vld [vmem:[%s1887 + $0x10] sm:$0xff]
  %v1891 = vld [vmem:[%s1887 + $0x18] sm:$0xff]
  %v1892 = vld [vmem:[%s1887 + $0x20] sm:$0xff]
  %v1893 = vld [vmem:[%s1887 + $0x28] sm:$0xff]
  %v1894 = vld [vmem:[%s1887 + $0x30] sm:$0xf]
  %v1895 = vld [vmem:[%s1887 + $0x34] sm:$0xff]
  %v1896 = vld [vmem:[%s1887 + $0x3c] sm:$0xff]
  %v1897 = vld [vmem:[%s1887 + $0x44] sm:$0xff]
  %v1898 = vld [vmem:[%s1887 + $0x4c] sm:$0xff]
  %v1899 = vld [vmem:[%s1887 + $0x54] sm:$0xff]
  %v1900 = vld [vmem:[%s1887 + $0x5c] sm:$0xff]
  %v1901 = vld [vmem:[%s1887 + $0x64] sm:$0xf]
  %v1902 = vld [vmem:[%s1887 + $0x68] sm:$0xff]
  %v1903 = vld [vmem:[%s1887 + $0x70] sm:$0xff]
  %v1904 = vld [vmem:[%s1887 + $0x78] sm:$0xff]
  %v1905 = vld [vmem:[%s1887 + $0x80] sm:$0xff]
  %v1906 = vld [vmem:[%s1887 + $0x88] sm:$0xff]
  %v1907 = vld [vmem:[%s1887 + $0x90] sm:$0xff]
  %v1908 = vld [vmem:[%s1887 + $0x98] sm:$0xf]
  %v1909 = vld [vmem:[%s1887 + $0x9c] sm:$0xff]
  %v1910 = vld [vmem:[%s1887 + $0xa4] sm:$0xff]
  %v1911 = vld [vmem:[%s1887 + $0xac] sm:$0xff]
  %v1912 = vld [vmem:[%s1887 + $0xb4] sm:$0xff]
  %v1913 = vld [vmem:[%s1887 + $0xbc] sm:$0xff]
  %v1914 = vld [vmem:[%s1887 + $0xc4] sm:$0xff]
  %v1915 = vld [vmem:[%s1887 + $0xcc] sm:$0xf]
  %v1944 = vunpack.c.l.b16 %v1888
  %v1945 = vunpack.c.h.b16 %v1888
  %v1946 = vunpack.c.l.b16 %v1889
  %v1947 = vunpack.c.h.b16 %v1889
  %v1948 = vunpack.c.l.b16 %v1890
  %v1949 = vunpack.c.h.b16 %v1890
  %v1950 = vunpack.c.l.b16 %v1891
  %v1951 = vunpack.c.h.b16 %v1891
  %v1952 = vunpack.c.l.b16 %v1892
  %v1953 = vunpack.c.h.b16 %v1892
  %v1954 = vunpack.c.l.b16 %v1893
  %v1955 = vunpack.c.h.b16 %v1893
  %v1956 = vunpack.c.l.b16 %v1894
  %v1957 = vunpack.c.l.b16 %v1895
  %v1958 = vunpack.c.h.b16 %v1895
  %v1959 = vunpack.c.l.b16 %v1896
  %v1960 = vunpack.c.h.b16 %v1896
  %v1961 = vunpack.c.l.b16 %v1897
  %v1962 = vunpack.c.h.b16 %v1897
  %v1963 = vunpack.c.l.b16 %v1898
  %v1964 = vunpack.c.h.b16 %v1898
  %v1965 = vunpack.c.l.b16 %v1899
  %v1966 = vunpack.c.h.b16 %v1899
  %v1967 = vunpack.c.l.b16 %v1900
  %v1968 = vunpack.c.h.b16 %v1900
  %v1969 = vunpack.c.l.b16 %v1901
  %v1970 = vunpack.c.l.b16 %v1902
  %v1971 = vunpack.c.h.b16 %v1902
  %v1972 = vunpack.c.l.b16 %v1903
  %v1973 = vunpack.c.h.b16 %v1903
  %v1974 = vunpack.c.l.b16 %v1904
  %v1975 = vunpack.c.h.b16 %v1904
  %v1976 = vunpack.c.l.b16 %v1905
  %v1977 = vunpack.c.h.b16 %v1905
  %v1978 = vunpack.c.l.b16 %v1906
  %v1979 = vunpack.c.h.b16 %v1906
  %v1980 = vunpack.c.l.b16 %v1907
  %v1981 = vunpack.c.h.b16 %v1907
  %v1982 = vunpack.c.l.b16 %v1908
  %v1983 = vunpack.c.l.b16 %v1909
  %v1984 = vunpack.c.h.b16 %v1909
  %v1985 = vunpack.c.l.b16 %v1910
  %v1986 = vunpack.c.h.b16 %v1910
  %v1987 = vunpack.c.l.b16 %v1911
  %v1988 = vunpack.c.h.b16 %v1911
  %v1989 = vunpack.c.l.b16 %v1912
  %v1990 = vunpack.c.h.b16 %v1912
  %v1991 = vunpack.c.l.b16 %v1913
  %v1992 = vunpack.c.h.b16 %v1913
  %v1993 = vunpack.c.l.b16 %v1914
  %v1994 = vunpack.c.h.b16 %v1914
  %v1995 = vunpack.c.l.b16 %v1915
  %v1996 = vpack.c.b16 %v1957, %v1944
  %v1997 = vpack.c.b16 %v1958, %v1945
  %v1998 = vpack.c.b16 %v1959, %v1946
  %v1999 = vpack.c.b16 %v1960, %v1947
  %v2000 = vpack.c.b16 %v1961, %v1948
  %v2001 = vpack.c.b16 %v1962, %v1949
  %v2002 = vpack.c.b16 %v1963, %v1950
  %v2003 = vpack.c.b16 %v1964, %v1951
  %v2004 = vpack.c.b16 %v1965, %v1952
  %v2005 = vpack.c.b16 %v1966, %v1953
  %v2006 = vpack.c.b16 %v1967, %v1954
  %v2007 = vpack.c.b16 %v1968, %v1955
  %v2008 = vpack.c.b16 %v1969, %v1956
  %v2009 = vpack.c.b16 %v1983, %v1970
  %v2010 = vpack.c.b16 %v1984, %v1971
  %v2011 = vpack.c.b16 %v1985, %v1972
  %v2012 = vpack.c.b16 %v1986, %v1973
  %v2013 = vpack.c.b16 %v1987, %v1974
  %v2014 = vpack.c.b16 %v1988, %v1975
  %v2015 = vpack.c.b16 %v1989, %v1976
  %v2016 = vpack.c.b16 %v1990, %v1977
  %v2017 = vpack.c.b16 %v1991, %v1978
  %v2018 = vpack.c.b16 %v1992, %v1979
  %v2019 = vpack.c.b16 %v1993, %v1980
  %v2020 = vpack.c.b16 %v1994, %v1981
  %v2021 = vpack.c.b16 %v1995, %v1982
  %v2047 = vsel %vm1003, %v2008, 0
  %v2050 = vsel %vm1003, %v2021, 0
  %2052 = vmatprep.subr.bf16.mxu0 0
  %2053 = vmatpush1.bf16.msra.mxu0 %v810
  %2054 = vmatprep.subr.bf16.mxu0 0
  %2055 = vmatpush1.bf16.msra.mxu0 %v809
  %2056 = vmatprep.subr.bf16.mxu0 0
  %2057 = vmatpush1.bf16.msra.mxu0 %v808
  %2058 = vmatprep.subr.bf16.mxu0 0
  %2059 = vmatpush1.bf16.msra.mxu0 %v807
  %2060 = vmatprep.subr.bf16.mxu0 0
  %2061 = vmatpush1.bf16.msra.mxu0 %v806
  %2062 = vmatprep.subr.bf16.mxu0 0
  %2063 = vmatpush1.bf16.msra.mxu0 %v805
  %2064 = vmatprep.subr.bf16.mxu0 0
  %2065 = vmatpush1.bf16.msra.mxu0 %v804
  %2066 = vmatprep.subr.bf16.mxu0 0
  %2067 = vmatpush1.bf16.msra.mxu0 %v803
  %2068 = vmatprep.subr.bf16.mxu0 0
  %2069 = vmatpush2.bf16.msra.mxu0 %v818
  %2070 = vmatprep.subr.bf16.mxu0 0
  %2071 = vmatpush2.bf16.msra.mxu0 %v817
  %2072 = vmatprep.subr.bf16.mxu0 0
  %2073 = vmatpush2.bf16.msra.mxu0 %v816
  %2074 = vmatprep.subr.bf16.mxu0 0
  %2075 = vmatpush2.bf16.msra.mxu0 %v815
  %2076 = vmatprep.subr.bf16.mxu0 0
  %2077 = vmatpush2.bf16.msra.mxu0 %v814
  %2078 = vmatprep.subr.bf16.mxu0 0
  %2079 = vmatpush2.bf16.msra.mxu0 %v813
  %2080 = vmatprep.subr.bf16.mxu0 0
  %2081 = vmatpush2.bf16.msra.mxu0 %v812
  %2082 = vmatprep.subr.bf16.mxu0 0
  %2083 = vmatpush2.bf16.msra.mxu0 %v811
  %2084 = vmatprep.mubr.bf16.mxu0 %v1997
  %2085 = vmatmul.mubr.bf16.gmra.mxu0 %v1996
  %v2086 = vpop.f32.mrf.mxu0
  %v2087 = vadd.f32 0.0, %v2086
  %v2088 = vpop.f32.mrf.mxu0
  %v2089 = vpop.f32.mrf.mxu0
  %v2090 = vadd.f32 0.0, %v2089
  %v2091 = vpop.f32.mrf.mxu0
  %2092 = vmatprep.mubr.bf16.mxu0 %v2010
  %2093 = vmatmul.mubr.bf16.gmra.mxu0 %v2009
  %v2094 = vpop.f32.mrf.mxu0
  %v2095 = vadd.f32 0.0, %v2094
  %v2096 = vpop.f32.mrf.mxu0
  %v2097 = vpop.f32.mrf.mxu0
  %v2098 = vadd.f32 0.0, %v2097
  %v2099 = vpop.f32.mrf.mxu0
  %2100 = vdwg.mxu0
  %2101 = vmatprep.subr.bf16.mxu0 0
  %2102 = vmatpush1.bf16.msra.mxu0 %v826
  %2103 = vmatprep.subr.bf16.mxu0 0
  %2104 = vmatpush1.bf16.msra.mxu0 %v825
  %2105 = vmatprep.subr.bf16.mxu0 0
  %2106 = vmatpush1.bf16.msra.mxu0 %v824
  %2107 = vmatprep.subr.bf16.mxu0 0
  %2108 = vmatpush1.bf16.msra.mxu0 %v823
  %2109 = vmatprep.subr.bf16.mxu0 0
  %2110 = vmatpush1.bf16.msra.mxu0 %v822
  %2111 = vmatprep.subr.bf16.mxu0 0
  %2112 = vmatpush1.bf16.msra.mxu0 %v821
  %2113 = vmatprep.subr.bf16.mxu0 0
  %2114 = vmatpush1.bf16.msra.mxu0 %v820
  %2115 = vmatprep.subr.bf16.mxu0 0
  %2116 = vmatpush1.bf16.msra.mxu0 %v819
  %2117 = vmatprep.subr.bf16.mxu0 0
  %2118 = vmatpush2.bf16.msra.mxu0 %v834
  %2119 = vmatprep.subr.bf16.mxu0 0
  %2120 = vmatpush2.bf16.msra.mxu0 %v833
  %2121 = vmatprep.subr.bf16.mxu0 0
  %2122 = vmatpush2.bf16.msra.mxu0 %v832
  %2123 = vmatprep.subr.bf16.mxu0 0
  %2124 = vmatpush2.bf16.msra.mxu0 %v831
  %2125 = vmatprep.subr.bf16.mxu0 0
  %2126 = vmatpush2.bf16.msra.mxu0 %v830
  %2127 = vmatprep.subr.bf16.mxu0 0
  %2128 = vmatpush2.bf16.msra.mxu0 %v829
  %2129 = vmatprep.subr.bf16.mxu0 0
  %2130 = vmatpush2.bf16.msra.mxu0 %v828
  %2131 = vmatprep.subr.bf16.mxu0 0
  %2132 = vmatpush2.bf16.msra.mxu0 %v827
  %2133 = vmatprep.mubr.bf16.mxu0 %v1999
  %2134 = vmatmul.mubr.bf16.gmra.mxu0 %v1998
  %v2135 = vpop.f32.mrf.mxu0
  %v2136 = vadd.f32 %v2087, %v2135
  %v2137 = vpop.f32.mrf.mxu0
  %v2138 = vpop.f32.mrf.mxu0
  %v2139 = vadd.f32 %v2090, %v2138
  %v2140 = vpop.f32.mrf.mxu0
  %2141 = vmatprep.mubr.bf16.mxu0 %v2012
  %2142 = vmatmul.mubr.bf16.gmra.mxu0 %v2011
  %v2143 = vpop.f32.mrf.mxu0
  %v2144 = vadd.f32 %v2095, %v2143
  %v2145 = vpop.f32.mrf.mxu0
  %v2146 = vpop.f32.mrf.mxu0
  %v2147 = vadd.f32 %v2098, %v2146
  %v2148 = vpop.f32.mrf.mxu0
  %2149 = vdwg.mxu0
  %2150 = vmatprep.subr.bf16.mxu0 0
  %2151 = vmatpush1.bf16.msra.mxu0 %v842
  %2152 = vmatprep.subr.bf16.mxu0 0
  %2153 = vmatpush1.bf16.msra.mxu0 %v841
  %2154 = vmatprep.subr.bf16.mxu0 0
  %2155 = vmatpush1.bf16.msra.mxu0 %v840
  %2156 = vmatprep.subr.bf16.mxu0 0
  %2157 = vmatpush1.bf16.msra.mxu0 %v839
  %2158 = vmatprep.subr.bf16.mxu0 0
  %2159 = vmatpush1.bf16.msra.mxu0 %v838
  %2160 = vmatprep.subr.bf16.mxu0 0
  %2161 = vmatpush1.bf16.msra.mxu0 %v837
  %2162 = vmatprep.subr.bf16.mxu0 0
  %2163 = vmatpush1.bf16.msra.mxu0 %v836
  %2164 = vmatprep.subr.bf16.mxu0 0
  %2165 = vmatpush1.bf16.msra.mxu0 %v835
  %2166 = vmatprep.subr.bf16.mxu0 0
  %2167 = vmatpush2.bf16.msra.mxu0 %v850
  %2168 = vmatprep.subr.bf16.mxu0 0
  %2169 = vmatpush2.bf16.msra.mxu0 %v849
  %2170 = vmatprep.subr.bf16.mxu0 0
  %2171 = vmatpush2.bf16.msra.mxu0 %v848
  %2172 = vmatprep.subr.bf16.mxu0 0
  %2173 = vmatpush2.bf16.msra.mxu0 %v847
  %2174 = vmatprep.subr.bf16.mxu0 0
  %2175 = vmatpush2.bf16.msra.mxu0 %v846
  %2176 = vmatprep.subr.bf16.mxu0 0
  %2177 = vmatpush2.bf16.msra.mxu0 %v845
  %2178 = vmatprep.subr.bf16.mxu0 0
  %2179 = vmatpush2.bf16.msra.mxu0 %v844
  %2180 = vmatprep.subr.bf16.mxu0 0
  %2181 = vmatpush2.bf16.msra.mxu0 %v843
  %2182 = vmatprep.mubr.bf16.mxu0 %v2001
  %2183 = vmatmul.mubr.bf16.gmra.mxu0 %v2000
  %v2184 = vpop.f32.mrf.mxu0
  %v2185 = vadd.f32 %v2136, %v2184
  %v2186 = vpop.f32.mrf.mxu0
  %v2187 = vpop.f32.mrf.mxu0
  %v2188 = vadd.f32 %v2139, %v2187
  %v2189 = vpop.f32.mrf.mxu0
  %2190 = vmatprep.mubr.bf16.mxu0 %v2014
  %2191 = vmatmul.mubr.bf16.gmra.mxu0 %v2013
  %v2192 = vpop.f32.mrf.mxu0
  %v2193 = vadd.f32 %v2144, %v2192
  %v2194 = vpop.f32.mrf.mxu0
  %v2195 = vpop.f32.mrf.mxu0
  %v2196 = vadd.f32 %v2147, %v2195
  %v2197 = vpop.f32.mrf.mxu0
  %2198 = vdwg.mxu0
  %2199 = vmatprep.subr.bf16.mxu0 0
  %2200 = vmatpush1.bf16.msra.mxu0 %v858
  %2201 = vmatprep.subr.bf16.mxu0 0
  %2202 = vmatpush1.bf16.msra.mxu0 %v857
  %2203 = vmatprep.subr.bf16.mxu0 0
  %2204 = vmatpush1.bf16.msra.mxu0 %v856
  %2205 = vmatprep.subr.bf16.mxu0 0
  %2206 = vmatpush1.bf16.msra.mxu0 %v855
  %2207 = vmatprep.subr.bf16.mxu0 0
  %2208 = vmatpush1.bf16.msra.mxu0 %v854
  %2209 = vmatprep.subr.bf16.mxu0 0
  %2210 = vmatpush1.bf16.msra.mxu0 %v853
  %2211 = vmatprep.subr.bf16.mxu0 0
  %2212 = vmatpush1.bf16.msra.mxu0 %v852
  %2213 = vmatprep.subr.bf16.mxu0 0
  %2214 = vmatpush1.bf16.msra.mxu0 %v851
  %2215 = vmatprep.subr.bf16.mxu0 0
  %2216 = vmatpush2.bf16.msra.mxu0 %v866
  %2217 = vmatprep.subr.bf16.mxu0 0
  %2218 = vmatpush2.bf16.msra.mxu0 %v865
  %2219 = vmatprep.subr.bf16.mxu0 0
  %2220 = vmatpush2.bf16.msra.mxu0 %v864
  %2221 = vmatprep.subr.bf16.mxu0 0
  %2222 = vmatpush2.bf16.msra.mxu0 %v863
  %2223 = vmatprep.subr.bf16.mxu0 0
  %2224 = vmatpush2.bf16.msra.mxu0 %v862
  %2225 = vmatprep.subr.bf16.mxu0 0
  %2226 = vmatpush2.bf16.msra.mxu0 %v861
  %2227 = vmatprep.subr.bf16.mxu0 0
  %2228 = vmatpush2.bf16.msra.mxu0 %v860
  %2229 = vmatprep.subr.bf16.mxu0 0
  %2230 = vmatpush2.bf16.msra.mxu0 %v859
  %2231 = vmatprep.mubr.bf16.mxu0 %v2003
  %2232 = vmatmul.mubr.bf16.gmra.mxu0 %v2002
  %v2233 = vpop.f32.mrf.mxu0
  %v2234 = vadd.f32 %v2185, %v2233
  %v2235 = vpop.f32.mrf.mxu0
  %v2236 = vpop.f32.mrf.mxu0
  %v2237 = vadd.f32 %v2188, %v2236
  %v2238 = vpop.f32.mrf.mxu0
  %2239 = vmatprep.mubr.bf16.mxu0 %v2016
  %2240 = vmatmul.mubr.bf16.gmra.mxu0 %v2015
  %v2241 = vpop.f32.mrf.mxu0
  %v2242 = vadd.f32 %v2193, %v2241
  %v2243 = vpop.f32.mrf.mxu0
  %v2244 = vpop.f32.mrf.mxu0
  %v2245 = vadd.f32 %v2196, %v2244
  %v2246 = vpop.f32.mrf.mxu0
  %2247 = vdwg.mxu0
  %2248 = vmatprep.subr.bf16.mxu0 0
  %2249 = vmatpush1.bf16.msra.mxu0 %v874
  %2250 = vmatprep.subr.bf16.mxu0 0
  %2251 = vmatpush1.bf16.msra.mxu0 %v873
  %2252 = vmatprep.subr.bf16.mxu0 0
  %2253 = vmatpush1.bf16.msra.mxu0 %v872
  %2254 = vmatprep.subr.bf16.mxu0 0
  %2255 = vmatpush1.bf16.msra.mxu0 %v871
  %2256 = vmatprep.subr.bf16.mxu0 0
  %2257 = vmatpush1.bf16.msra.mxu0 %v870
  %2258 = vmatprep.subr.bf16.mxu0 0
  %2259 = vmatpush1.bf16.msra.mxu0 %v869
  %2260 = vmatprep.subr.bf16.mxu0 0
  %2261 = vmatpush1.bf16.msra.mxu0 %v868
  %2262 = vmatprep.subr.bf16.mxu0 0
  %2263 = vmatpush1.bf16.msra.mxu0 %v867
  %2264 = vmatprep.subr.bf16.mxu0 0
  %2265 = vmatpush2.bf16.msra.mxu0 %v882
  %2266 = vmatprep.subr.bf16.mxu0 0
  %2267 = vmatpush2.bf16.msra.mxu0 %v881
  %2268 = vmatprep.subr.bf16.mxu0 0
  %2269 = vmatpush2.bf16.msra.mxu0 %v880
  %2270 = vmatprep.subr.bf16.mxu0 0
  %2271 = vmatpush2.bf16.msra.mxu0 %v879
  %2272 = vmatprep.subr.bf16.mxu0 0
  %2273 = vmatpush2.bf16.msra.mxu0 %v878
  %2274 = vmatprep.subr.bf16.mxu0 0
  %2275 = vmatpush2.bf16.msra.mxu0 %v877
  %2276 = vmatprep.subr.bf16.mxu0 0
  %2277 = vmatpush2.bf16.msra.mxu0 %v876
  %2278 = vmatprep.subr.bf16.mxu0 0
  %2279 = vmatpush2.bf16.msra.mxu0 %v875
  %2280 = vmatprep.mubr.bf16.mxu0 %v2005
  %2281 = vmatmul.mubr.bf16.gmra.mxu0 %v2004
  %v2282 = vpop.f32.mrf.mxu0
  %v2283 = vadd.f32 %v2234, %v2282
  %v2284 = vpop.f32.mrf.mxu0
  %v2285 = vpop.f32.mrf.mxu0
  %v2286 = vadd.f32 %v2237, %v2285
  %v2287 = vpop.f32.mrf.mxu0
  %2288 = vmatprep.mubr.bf16.mxu0 %v2018
  %2289 = vmatmul.mubr.bf16.gmra.mxu0 %v2017
  %v2290 = vpop.f32.mrf.mxu0
  %v2291 = vadd.f32 %v2242, %v2290
  %v2292 = vpop.f32.mrf.mxu0
  %v2293 = vpop.f32.mrf.mxu0
  %v2294 = vadd.f32 %v2245, %v2293
  %v2295 = vpop.f32.mrf.mxu0
  %2296 = vdwg.mxu0
  %2297 = vmatprep.subr.bf16.mxu0 0
  %2298 = vmatpush1.bf16.msra.mxu0 %v890
  %2299 = vmatprep.subr.bf16.mxu0 0
  %2300 = vmatpush1.bf16.msra.mxu0 %v889
  %2301 = vmatprep.subr.bf16.mxu0 0
  %2302 = vmatpush1.bf16.msra.mxu0 %v888
  %2303 = vmatprep.subr.bf16.mxu0 0
  %2304 = vmatpush1.bf16.msra.mxu0 %v887
  %2305 = vmatprep.subr.bf16.mxu0 0
  %2306 = vmatpush1.bf16.msra.mxu0 %v886
  %2307 = vmatprep.subr.bf16.mxu0 0
  %2308 = vmatpush1.bf16.msra.mxu0 %v885
  %2309 = vmatprep.subr.bf16.mxu0 0
  %2310 = vmatpush1.bf16.msra.mxu0 %v884
  %2311 = vmatprep.subr.bf16.mxu0 0
  %2312 = vmatpush1.bf16.msra.mxu0 %v883
  %2313 = vmatprep.subr.bf16.mxu0 0
  %2314 = vmatpush2.bf16.msra.mxu0 %v898
  %2315 = vmatprep.subr.bf16.mxu0 0
  %2316 = vmatpush2.bf16.msra.mxu0 %v897
  %2317 = vmatprep.subr.bf16.mxu0 0
  %2318 = vmatpush2.bf16.msra.mxu0 %v896
  %2319 = vmatprep.subr.bf16.mxu0 0
  %2320 = vmatpush2.bf16.msra.mxu0 %v895
  %2321 = vmatprep.subr.bf16.mxu0 0
  %2322 = vmatpush2.bf16.msra.mxu0 %v894
  %2323 = vmatprep.subr.bf16.mxu0 0
  %2324 = vmatpush2.bf16.msra.mxu0 %v893
  %2325 = vmatprep.subr.bf16.mxu0 0
  %2326 = vmatpush2.bf16.msra.mxu0 %v892
  %2327 = vmatprep.subr.bf16.mxu0 0
  %2328 = vmatpush2.bf16.msra.mxu0 %v891
  %2329 = vmatprep.mubr.bf16.mxu0 %v2007
  %2330 = vmatmul.mubr.bf16.gmra.mxu0 %v2006
  %v2331 = vpop.f32.mrf.mxu0
  %v2332 = vadd.f32 %v2283, %v2331
  %v2333 = vpop.f32.mrf.mxu0
  %v2334 = vpop.f32.mrf.mxu0
  %v2335 = vadd.f32 %v2286, %v2334
  %v2336 = vpop.f32.mrf.mxu0
  %2337 = vmatprep.mubr.bf16.mxu0 %v2020
  %2338 = vmatmul.mubr.bf16.gmra.mxu0 %v2019
  %v2339 = vpop.f32.mrf.mxu0
  %v2340 = vadd.f32 %v2291, %v2339
  %v2341 = vpop.f32.mrf.mxu0
  %v2342 = vpop.f32.mrf.mxu0
  %v2343 = vadd.f32 %v2294, %v2342
  %v2344 = vpop.f32.mrf.mxu0
  %2345 = vdwg.mxu0
  %2346 = vmatprep.subr.bf16.mxu0 0
  %2347 = vmatpush1.bf16.msra.mxu0 0
  %2348 = vmatprep.subr.bf16.mxu0 0
  %2349 = vmatpush1.bf16.msra.mxu0 0
  %2350 = vmatprep.subr.bf16.mxu0 0
  %2351 = vmatpush1.bf16.msra.mxu0 0
  %2352 = vmatprep.subr.bf16.mxu0 0
  %2353 = vmatpush1.bf16.msra.mxu0 0
  %2354 = vmatprep.subr.bf16.mxu0 0
  %2355 = vmatpush1.bf16.msra.mxu0 %v902
  %2356 = vmatprep.subr.bf16.mxu0 0
  %2357 = vmatpush1.bf16.msra.mxu0 %v901
  %2358 = vmatprep.subr.bf16.mxu0 0
  %2359 = vmatpush1.bf16.msra.mxu0 %v900
  %2360 = vmatprep.subr.bf16.mxu0 0
  %2361 = vmatpush1.bf16.msra.mxu0 %v899
  %2362 = vmatprep.subr.bf16.mxu0 0
  %2363 = vmatpush2.bf16.msra.mxu0 0
  %2364 = vmatprep.subr.bf16.mxu0 0
  %2365 = vmatpush2.bf16.msra.mxu0 0
  %2366 = vmatprep.subr.bf16.mxu0 0
  %2367 = vmatpush2.bf16.msra.mxu0 0
  %2368 = vmatprep.subr.bf16.mxu0 0
  %2369 = vmatpush2.bf16.msra.mxu0 0
  %2370 = vmatprep.subr.bf16.mxu0 0
  %2371 = vmatpush2.bf16.msra.mxu0 0
  %2372 = vmatprep.subr.bf16.mxu0 0
  %2373 = vmatpush2.bf16.msra.mxu0 0
  %2374 = vmatprep.subr.bf16.mxu0 0
  %2375 = vmatpush2.bf16.msra.mxu0 0
  %2376 = vmatprep.subr.bf16.mxu0 0
  %2377 = vmatpush2.bf16.msra.mxu0 0
  %2378 = vmatprep.mubr.bf16.mxu0 0
  %2379 = vmatmul.mubr.bf16.gmra.mxu0 %v2047
  %v2380 = vpop.f32.mrf.mxu0
  %v2381 = vadd.f32 %v2332, %v2380
  %v2382 = vpop.f32.mrf.mxu0
  %v2383 = vpop.f32.mrf.mxu0
  %v2384 = vadd.f32 %v2335, %v2383
  %v2385 = vpop.f32.mrf.mxu0
  %2386 = vmatprep.mubr.bf16.mxu0 0
  %2387 = vmatmul.mubr.bf16.gmra.mxu0 %v2050
  %v2388 = vpop.f32.mrf.mxu0
  %v2389 = vadd.f32 %v2340, %v2388
  %v2390 = vpop.f32.mrf.mxu0
  %v2391 = vpop.f32.mrf.mxu0
  %v2392 = vadd.f32 %v2343, %v2391
  %v2393 = vpop.f32.mrf.mxu0
  %2394 = vdwg.mxu0
  %v2395 = vadd.f32 %v1883, %v2381
  %v2396 = vadd.f32 %v1884, %v2384
  %v2397 = vadd.f32 %v1885, %v2389
  %v2398 = vadd.f32 %v1886, %v2392
  %2399 = vst [vmem:[%s1882] sm:$0xff] %v2395
  %2400 = vst [vmem:[%s1882 + $0x8] sm:$0xff] %v2396
  %2401 = vst [vmem:[%s1882 + $0x10] sm:$0xff] %v2397
  %2402 = vst [vmem:[%s1882 + $0x18] sm:$0xff] %v2398
  %s2403 = scalar_lea.vmem [#allocation2], 96
  %v2404 = vld [vmem:[%s2403] sm:$0xff]
  %v2405 = vld [vmem:[%s2403 + $0x8] sm:$0xff]
  %v2406 = vld [vmem:[%s2403 + $0x10] sm:$0xff]
  %v2407 = vld [vmem:[%s2403 + $0x18] sm:$0xff]
  %s2408 = scalar_lea.vmem %s0, 624
  %v2409 = vld [vmem:[%s2408] sm:$0xff]
  %v2410 = vld [vmem:[%s2408 + $0x8] sm:$0xff]
  %v2411 = vld [vmem:[%s2408 + $0x10] sm:$0xff]
  %v2412 = vld [vmem:[%s2408 + $0x18] sm:$0xff]
  %v2413 = vld [vmem:[%s2408 + $0x20] sm:$0xff]
  %v2414 = vld [vmem:[%s2408 + $0x28] sm:$0xff]
  %v2415 = vld [vmem:[%s2408 + $0x30] sm:$0xf]
  %v2416 = vld [vmem:[%s2408 + $0x34] sm:$0xff]
  %v2417 = vld [vmem:[%s2408 + $0x3c] sm:$0xff]
  %v2418 = vld [vmem:[%s2408 + $0x44] sm:$0xff]
  %v2419 = vld [vmem:[%s2408 + $0x4c] sm:$0xff]
  %v2420 = vld [vmem:[%s2408 + $0x54] sm:$0xff]
  %v2421 = vld [vmem:[%s2408 + $0x5c] sm:$0xff]
  %v2422 = vld [vmem:[%s2408 + $0x64] sm:$0xf]
  %v2423 = vld [vmem:[%s2408 + $0x68] sm:$0xff]
  %v2424 = vld [vmem:[%s2408 + $0x70] sm:$0xff]
  %v2425 = vld [vmem:[%s2408 + $0x78] sm:$0xff]
  %v2426 = vld [vmem:[%s2408 + $0x80] sm:$0xff]
  %v2427 = vld [vmem:[%s2408 + $0x88] sm:$0xff]
  %v2428 = vld [vmem:[%s2408 + $0x90] sm:$0xff]
  %v2429 = vld [vmem:[%s2408 + $0x98] sm:$0xf]
  %v2430 = vld [vmem:[%s2408 + $0x9c] sm:$0xff]
  %v2431 = vld [vmem:[%s2408 + $0xa4] sm:$0xff]
  %v2432 = vld [vmem:[%s2408 + $0xac] sm:$0xff]
  %v2433 = vld [vmem:[%s2408 + $0xb4] sm:$0xff]
  %v2434 = vld [vmem:[%s2408 + $0xbc] sm:$0xff]
  %v2435 = vld [vmem:[%s2408 + $0xc4] sm:$0xff]
  %v2436 = vld [vmem:[%s2408 + $0xcc] sm:$0xf]
  %v2465 = vunpack.c.l.b16 %v2409
  %v2466 = vunpack.c.h.b16 %v2409
  %v2467 = vunpack.c.l.b16 %v2410
  %v2468 = vunpack.c.h.b16 %v2410
  %v2469 = vunpack.c.l.b16 %v2411
  %v2470 = vunpack.c.h.b16 %v2411
  %v2471 = vunpack.c.l.b16 %v2412
  %v2472 = vunpack.c.h.b16 %v2412
  %v2473 = vunpack.c.l.b16 %v2413
  %v2474 = vunpack.c.h.b16 %v2413
  %v2475 = vunpack.c.l.b16 %v2414
  %v2476 = vunpack.c.h.b16 %v2414
  %v2477 = vunpack.c.l.b16 %v2415
  %v2478 = vunpack.c.l.b16 %v2416
  %v2479 = vunpack.c.h.b16 %v2416
  %v2480 = vunpack.c.l.b16 %v2417
  %v2481 = vunpack.c.h.b16 %v2417
  %v2482 = vunpack.c.l.b16 %v2418
  %v2483 = vunpack.c.h.b16 %v2418
  %v2484 = vunpack.c.l.b16 %v2419
  %v2485 = vunpack.c.h.b16 %v2419
  %v2486 = vunpack.c.l.b16 %v2420
  %v2487 = vunpack.c.h.b16 %v2420
  %v2488 = vunpack.c.l.b16 %v2421
  %v2489 = vunpack.c.h.b16 %v2421
  %v2490 = vunpack.c.l.b16 %v2422
  %v2491 = vunpack.c.l.b16 %v2423
  %v2492 = vunpack.c.h.b16 %v2423
  %v2493 = vunpack.c.l.b16 %v2424
  %v2494 = vunpack.c.h.b16 %v2424
  %v2495 = vunpack.c.l.b16 %v2425
  %v2496 = vunpack.c.h.b16 %v2425
  %v2497 = vunpack.c.l.b16 %v2426
  %v2498 = vunpack.c.h.b16 %v2426
  %v2499 = vunpack.c.l.b16 %v2427
  %v2500 = vunpack.c.h.b16 %v2427
  %v2501 = vunpack.c.l.b16 %v2428
  %v2502 = vunpack.c.h.b16 %v2428
  %v2503 = vunpack.c.l.b16 %v2429
  %v2504 = vunpack.c.l.b16 %v2430
  %v2505 = vunpack.c.h.b16 %v2430
  %v2506 = vunpack.c.l.b16 %v2431
  %v2507 = vunpack.c.h.b16 %v2431
  %v2508 = vunpack.c.l.b16 %v2432
  %v2509 = vunpack.c.h.b16 %v2432
  %v2510 = vunpack.c.l.b16 %v2433
  %v2511 = vunpack.c.h.b16 %v2433
  %v2512 = vunpack.c.l.b16 %v2434
  %v2513 = vunpack.c.h.b16 %v2434
  %v2514 = vunpack.c.l.b16 %v2435
  %v2515 = vunpack.c.h.b16 %v2435
  %v2516 = vunpack.c.l.b16 %v2436
  %v2517 = vpack.c.b16 %v2478, %v2465
  %v2518 = vpack.c.b16 %v2479, %v2466
  %v2519 = vpack.c.b16 %v2480, %v2467
  %v2520 = vpack.c.b16 %v2481, %v2468
  %v2521 = vpack.c.b16 %v2482, %v2469
  %v2522 = vpack.c.b16 %v2483, %v2470
  %v2523 = vpack.c.b16 %v2484, %v2471
  %v2524 = vpack.c.b16 %v2485, %v2472
  %v2525 = vpack.c.b16 %v2486, %v2473
  %v2526 = vpack.c.b16 %v2487, %v2474
  %v2527 = vpack.c.b16 %v2488, %v2475
  %v2528 = vpack.c.b16 %v2489, %v2476
  %v2529 = vpack.c.b16 %v2490, %v2477
  %v2530 = vpack.c.b16 %v2504, %v2491
  %v2531 = vpack.c.b16 %v2505, %v2492
  %v2532 = vpack.c.b16 %v2506, %v2493
  %v2533 = vpack.c.b16 %v2507, %v2494
  %v2534 = vpack.c.b16 %v2508, %v2495
  %v2535 = vpack.c.b16 %v2509, %v2496
  %v2536 = vpack.c.b16 %v2510, %v2497
  %v2537 = vpack.c.b16 %v2511, %v2498
  %v2538 = vpack.c.b16 %v2512, %v2499
  %v2539 = vpack.c.b16 %v2513, %v2500
  %v2540 = vpack.c.b16 %v2514, %v2501
  %v2541 = vpack.c.b16 %v2515, %v2502
  %v2542 = vpack.c.b16 %v2516, %v2503
  %v2568 = vsel %vm1003, %v2529, 0
  %v2571 = vsel %vm1003, %v2542, 0
  %2573 = vmatprep.subr.bf16.mxu0 0
  %2574 = vmatpush1.bf16.msra.mxu0 %v810
  %2575 = vmatprep.subr.bf16.mxu0 0
  %2576 = vmatpush1.bf16.msra.mxu0 %v809
  %2577 = vmatprep.subr.bf16.mxu0 0
  %2578 = vmatpush1.bf16.msra.mxu0 %v808
  %2579 = vmatprep.subr.bf16.mxu0 0
  %2580 = vmatpush1.bf16.msra.mxu0 %v807
  %2581 = vmatprep.subr.bf16.mxu0 0
  %2582 = vmatpush1.bf16.msra.mxu0 %v806
  %2583 = vmatprep.subr.bf16.mxu0 0
  %2584 = vmatpush1.bf16.msra.mxu0 %v805
  %2585 = vmatprep.subr.bf16.mxu0 0
  %2586 = vmatpush1.bf16.msra.mxu0 %v804
  %2587 = vmatprep.subr.bf16.mxu0 0
  %2588 = vmatpush1.bf16.msra.mxu0 %v803
  %2589 = vmatprep.subr.bf16.mxu0 0
  %2590 = vmatpush2.bf16.msra.mxu0 %v818
  %2591 = vmatprep.subr.bf16.mxu0 0
  %2592 = vmatpush2.bf16.msra.mxu0 %v817
  %2593 = vmatprep.subr.bf16.mxu0 0
  %2594 = vmatpush2.bf16.msra.mxu0 %v816
  %2595 = vmatprep.subr.bf16.mxu0 0
  %2596 = vmatpush2.bf16.msra.mxu0 %v815
  %2597 = vmatprep.subr.bf16.mxu0 0
  %2598 = vmatpush2.bf16.msra.mxu0 %v814
  %2599 = vmatprep.subr.bf16.mxu0 0
  %2600 = vmatpush2.bf16.msra.mxu0 %v813
  %2601 = vmatprep.subr.bf16.mxu0 0
  %2602 = vmatpush2.bf16.msra.mxu0 %v812
  %2603 = vmatprep.subr.bf16.mxu0 0
  %2604 = vmatpush2.bf16.msra.mxu0 %v811
  %2605 = vmatprep.mubr.bf16.mxu0 %v2518
  %2606 = vmatmul.mubr.bf16.gmra.mxu0 %v2517
  %v2607 = vpop.f32.mrf.mxu0
  %v2608 = vadd.f32 0.0, %v2607
  %v2609 = vpop.f32.mrf.mxu0
  %v2610 = vpop.f32.mrf.mxu0
  %v2611 = vadd.f32 0.0, %v2610
  %v2612 = vpop.f32.mrf.mxu0
  %2613 = vmatprep.mubr.bf16.mxu0 %v2531
  %2614 = vmatmul.mubr.bf16.gmra.mxu0 %v2530
  %v2615 = vpop.f32.mrf.mxu0
  %v2616 = vadd.f32 0.0, %v2615
  %v2617 = vpop.f32.mrf.mxu0
  %v2618 = vpop.f32.mrf.mxu0
  %v2619 = vadd.f32 0.0, %v2618
  %v2620 = vpop.f32.mrf.mxu0
  %2621 = vdwg.mxu0
  %2622 = vmatprep.subr.bf16.mxu0 0
  %2623 = vmatpush1.bf16.msra.mxu0 %v826
  %2624 = vmatprep.subr.bf16.mxu0 0
  %2625 = vmatpush1.bf16.msra.mxu0 %v825
  %2626 = vmatprep.subr.bf16.mxu0 0
  %2627 = vmatpush1.bf16.msra.mxu0 %v824
  %2628 = vmatprep.subr.bf16.mxu0 0
  %2629 = vmatpush1.bf16.msra.mxu0 %v823
  %2630 = vmatprep.subr.bf16.mxu0 0
  %2631 = vmatpush1.bf16.msra.mxu0 %v822
  %2632 = vmatprep.subr.bf16.mxu0 0
  %2633 = vmatpush1.bf16.msra.mxu0 %v821
  %2634 = vmatprep.subr.bf16.mxu0 0
  %2635 = vmatpush1.bf16.msra.mxu0 %v820
  %2636 = vmatprep.subr.bf16.mxu0 0
  %2637 = vmatpush1.bf16.msra.mxu0 %v819
  %2638 = vmatprep.subr.bf16.mxu0 0
  %2639 = vmatpush2.bf16.msra.mxu0 %v834
  %2640 = vmatprep.subr.bf16.mxu0 0
  %2641 = vmatpush2.bf16.msra.mxu0 %v833
  %2642 = vmatprep.subr.bf16.mxu0 0
  %2643 = vmatpush2.bf16.msra.mxu0 %v832
  %2644 = vmatprep.subr.bf16.mxu0 0
  %2645 = vmatpush2.bf16.msra.mxu0 %v831
  %2646 = vmatprep.subr.bf16.mxu0 0
  %2647 = vmatpush2.bf16.msra.mxu0 %v830
  %2648 = vmatprep.subr.bf16.mxu0 0
  %2649 = vmatpush2.bf16.msra.mxu0 %v829
  %2650 = vmatprep.subr.bf16.mxu0 0
  %2651 = vmatpush2.bf16.msra.mxu0 %v828
  %2652 = vmatprep.subr.bf16.mxu0 0
  %2653 = vmatpush2.bf16.msra.mxu0 %v827
  %2654 = vmatprep.mubr.bf16.mxu0 %v2520
  %2655 = vmatmul.mubr.bf16.gmra.mxu0 %v2519
  %v2656 = vpop.f32.mrf.mxu0
  %v2657 = vadd.f32 %v2608, %v2656
  %v2658 = vpop.f32.mrf.mxu0
  %v2659 = vpop.f32.mrf.mxu0
  %v2660 = vadd.f32 %v2611, %v2659
  %v2661 = vpop.f32.mrf.mxu0
  %2662 = vmatprep.mubr.bf16.mxu0 %v2533
  %2663 = vmatmul.mubr.bf16.gmra.mxu0 %v2532
  %v2664 = vpop.f32.mrf.mxu0
  %v2665 = vadd.f32 %v2616, %v2664
  %v2666 = vpop.f32.mrf.mxu0
  %v2667 = vpop.f32.mrf.mxu0
  %v2668 = vadd.f32 %v2619, %v2667
  %v2669 = vpop.f32.mrf.mxu0
  %2670 = vdwg.mxu0
  %2671 = vmatprep.subr.bf16.mxu0 0
  %2672 = vmatpush1.bf16.msra.mxu0 %v842
  %2673 = vmatprep.subr.bf16.mxu0 0
  %2674 = vmatpush1.bf16.msra.mxu0 %v841
  %2675 = vmatprep.subr.bf16.mxu0 0
  %2676 = vmatpush1.bf16.msra.mxu0 %v840
  %2677 = vmatprep.subr.bf16.mxu0 0
  %2678 = vmatpush1.bf16.msra.mxu0 %v839
  %2679 = vmatprep.subr.bf16.mxu0 0
  %2680 = vmatpush1.bf16.msra.mxu0 %v838
  %2681 = vmatprep.subr.bf16.mxu0 0
  %2682 = vmatpush1.bf16.msra.mxu0 %v837
  %2683 = vmatprep.subr.bf16.mxu0 0
  %2684 = vmatpush1.bf16.msra.mxu0 %v836
  %2685 = vmatprep.subr.bf16.mxu0 0
  %2686 = vmatpush1.bf16.msra.mxu0 %v835
  %2687 = vmatprep.subr.bf16.mxu0 0
  %2688 = vmatpush2.bf16.msra.mxu0 %v850
  %2689 = vmatprep.subr.bf16.mxu0 0
  %2690 = vmatpush2.bf16.msra.mxu0 %v849
  %2691 = vmatprep.subr.bf16.mxu0 0
  %2692 = vmatpush2.bf16.msra.mxu0 %v848
  %2693 = vmatprep.subr.bf16.mxu0 0
  %2694 = vmatpush2.bf16.msra.mxu0 %v847
  %2695 = vmatprep.subr.bf16.mxu0 0
  %2696 = vmatpush2.bf16.msra.mxu0 %v846
  %2697 = vmatprep.subr.bf16.mxu0 0
  %2698 = vmatpush2.bf16.msra.mxu0 %v845
  %2699 = vmatprep.subr.bf16.mxu0 0
  %2700 = vmatpush2.bf16.msra.mxu0 %v844
  %2701 = vmatprep.subr.bf16.mxu0 0
  %2702 = vmatpush2.bf16.msra.mxu0 %v843
  %2703 = vmatprep.mubr.bf16.mxu0 %v2522
  %2704 = vmatmul.mubr.bf16.gmra.mxu0 %v2521
  %v2705 = vpop.f32.mrf.mxu0
  %v2706 = vadd.f32 %v2657, %v2705
  %v2707 = vpop.f32.mrf.mxu0
  %v2708 = vpop.f32.mrf.mxu0
  %v2709 = vadd.f32 %v2660, %v2708
  %v2710 = vpop.f32.mrf.mxu0
  %2711 = vmatprep.mubr.bf16.mxu0 %v2535
  %2712 = vmatmul.mubr.bf16.gmra.mxu0 %v2534
  %v2713 = vpop.f32.mrf.mxu0
  %v2714 = vadd.f32 %v2665, %v2713
  %v2715 = vpop.f32.mrf.mxu0
  %v2716 = vpop.f32.mrf.mxu0
  %v2717 = vadd.f32 %v2668, %v2716
  %v2718 = vpop.f32.mrf.mxu0
  %2719 = vdwg.mxu0
  %2720 = vmatprep.subr.bf16.mxu0 0
  %2721 = vmatpush1.bf16.msra.mxu0 %v858
  %2722 = vmatprep.subr.bf16.mxu0 0
  %2723 = vmatpush1.bf16.msra.mxu0 %v857
  %2724 = vmatprep.subr.bf16.mxu0 0
  %2725 = vmatpush1.bf16.msra.mxu0 %v856
  %2726 = vmatprep.subr.bf16.mxu0 0
  %2727 = vmatpush1.bf16.msra.mxu0 %v855
  %2728 = vmatprep.subr.bf16.mxu0 0
  %2729 = vmatpush1.bf16.msra.mxu0 %v854
  %2730 = vmatprep.subr.bf16.mxu0 0
  %2731 = vmatpush1.bf16.msra.mxu0 %v853
  %2732 = vmatprep.subr.bf16.mxu0 0
  %2733 = vmatpush1.bf16.msra.mxu0 %v852
  %2734 = vmatprep.subr.bf16.mxu0 0
  %2735 = vmatpush1.bf16.msra.mxu0 %v851
  %2736 = vmatprep.subr.bf16.mxu0 0
  %2737 = vmatpush2.bf16.msra.mxu0 %v866
  %2738 = vmatprep.subr.bf16.mxu0 0
  %2739 = vmatpush2.bf16.msra.mxu0 %v865
  %2740 = vmatprep.subr.bf16.mxu0 0
  %2741 = vmatpush2.bf16.msra.mxu0 %v864
  %2742 = vmatprep.subr.bf16.mxu0 0
  %2743 = vmatpush2.bf16.msra.mxu0 %v863
  %2744 = vmatprep.subr.bf16.mxu0 0
  %2745 = vmatpush2.bf16.msra.mxu0 %v862
  %2746 = vmatprep.subr.bf16.mxu0 0
  %2747 = vmatpush2.bf16.msra.mxu0 %v861
  %2748 = vmatprep.subr.bf16.mxu0 0
  %2749 = vmatpush2.bf16.msra.mxu0 %v860
  %2750 = vmatprep.subr.bf16.mxu0 0
  %2751 = vmatpush2.bf16.msra.mxu0 %v859
  %2752 = vmatprep.mubr.bf16.mxu0 %v2524
  %2753 = vmatmul.mubr.bf16.gmra.mxu0 %v2523
  %v2754 = vpop.f32.mrf.mxu0
  %v2755 = vadd.f32 %v2706, %v2754
  %v2756 = vpop.f32.mrf.mxu0
  %v2757 = vpop.f32.mrf.mxu0
  %v2758 = vadd.f32 %v2709, %v2757
  %v2759 = vpop.f32.mrf.mxu0
  %2760 = vmatprep.mubr.bf16.mxu0 %v2537
  %2761 = vmatmul.mubr.bf16.gmra.mxu0 %v2536
  %v2762 = vpop.f32.mrf.mxu0
  %v2763 = vadd.f32 %v2714, %v2762
  %v2764 = vpop.f32.mrf.mxu0
  %v2765 = vpop.f32.mrf.mxu0
  %v2766 = vadd.f32 %v2717, %v2765
  %v2767 = vpop.f32.mrf.mxu0
  %2768 = vdwg.mxu0
  %2769 = vmatprep.subr.bf16.mxu0 0
  %2770 = vmatpush1.bf16.msra.mxu0 %v874
  %2771 = vmatprep.subr.bf16.mxu0 0
  %2772 = vmatpush1.bf16.msra.mxu0 %v873
  %2773 = vmatprep.subr.bf16.mxu0 0
  %2774 = vmatpush1.bf16.msra.mxu0 %v872
  %2775 = vmatprep.subr.bf16.mxu0 0
  %2776 = vmatpush1.bf16.msra.mxu0 %v871
  %2777 = vmatprep.subr.bf16.mxu0 0
  %2778 = vmatpush1.bf16.msra.mxu0 %v870
  %2779 = vmatprep.subr.bf16.mxu0 0
  %2780 = vmatpush1.bf16.msra.mxu0 %v869
  %2781 = vmatprep.subr.bf16.mxu0 0
  %2782 = vmatpush1.bf16.msra.mxu0 %v868
  %2783 = vmatprep.subr.bf16.mxu0 0
  %2784 = vmatpush1.bf16.msra.mxu0 %v867
  %2785 = vmatprep.subr.bf16.mxu0 0
  %2786 = vmatpush2.bf16.msra.mxu0 %v882
  %2787 = vmatprep.subr.bf16.mxu0 0
  %2788 = vmatpush2.bf16.msra.mxu0 %v881
  %2789 = vmatprep.subr.bf16.mxu0 0
  %2790 = vmatpush2.bf16.msra.mxu0 %v880
  %2791 = vmatprep.subr.bf16.mxu0 0
  %2792 = vmatpush2.bf16.msra.mxu0 %v879
  %2793 = vmatprep.subr.bf16.mxu0 0
  %2794 = vmatpush2.bf16.msra.mxu0 %v878
  %2795 = vmatprep.subr.bf16.mxu0 0
  %2796 = vmatpush2.bf16.msra.mxu0 %v877
  %2797 = vmatprep.subr.bf16.mxu0 0
  %2798 = vmatpush2.bf16.msra.mxu0 %v876
  %2799 = vmatprep.subr.bf16.mxu0 0
  %2800 = vmatpush2.bf16.msra.mxu0 %v875
  %2801 = vmatprep.mubr.bf16.mxu0 %v2526
  %2802 = vmatmul.mubr.bf16.gmra.mxu0 %v2525
  %v2803 = vpop.f32.mrf.mxu0
  %v2804 = vadd.f32 %v2755, %v2803
  %v2805 = vpop.f32.mrf.mxu0
  %v2806 = vpop.f32.mrf.mxu0
  %v2807 = vadd.f32 %v2758, %v2806
  %v2808 = vpop.f32.mrf.mxu0
  %2809 = vmatprep.mubr.bf16.mxu0 %v2539
  %2810 = vmatmul.mubr.bf16.gmra.mxu0 %v2538
  %v2811 = vpop.f32.mrf.mxu0
  %v2812 = vadd.f32 %v2763, %v2811
  %v2813 = vpop.f32.mrf.mxu0
  %v2814 = vpop.f32.mrf.mxu0
  %v2815 = vadd.f32 %v2766, %v2814
  %v2816 = vpop.f32.mrf.mxu0
  %2817 = vdwg.mxu0
  %2818 = vmatprep.subr.bf16.mxu0 0
  %2819 = vmatpush1.bf16.msra.mxu0 %v890
  %2820 = vmatprep.subr.bf16.mxu0 0
  %2821 = vmatpush1.bf16.msra.mxu0 %v889
  %2822 = vmatprep.subr.bf16.mxu0 0
  %2823 = vmatpush1.bf16.msra.mxu0 %v888
  %2824 = vmatprep.subr.bf16.mxu0 0
  %2825 = vmatpush1.bf16.msra.mxu0 %v887
  %2826 = vmatprep.subr.bf16.mxu0 0
  %2827 = vmatpush1.bf16.msra.mxu0 %v886
  %2828 = vmatprep.subr.bf16.mxu0 0
  %2829 = vmatpush1.bf16.msra.mxu0 %v885
  %2830 = vmatprep.subr.bf16.mxu0 0
  %2831 = vmatpush1.bf16.msra.mxu0 %v884
  %2832 = vmatprep.subr.bf16.mxu0 0
  %2833 = vmatpush1.bf16.msra.mxu0 %v883
  %2834 = vmatprep.subr.bf16.mxu0 0
  %2835 = vmatpush2.bf16.msra.mxu0 %v898
  %2836 = vmatprep.subr.bf16.mxu0 0
  %2837 = vmatpush2.bf16.msra.mxu0 %v897
  %2838 = vmatprep.subr.bf16.mxu0 0
  %2839 = vmatpush2.bf16.msra.mxu0 %v896
  %2840 = vmatprep.subr.bf16.mxu0 0
  %2841 = vmatpush2.bf16.msra.mxu0 %v895
  %2842 = vmatprep.subr.bf16.mxu0 0
  %2843 = vmatpush2.bf16.msra.mxu0 %v894
  %2844 = vmatprep.subr.bf16.mxu0 0
  %2845 = vmatpush2.bf16.msra.mxu0 %v893
  %2846 = vmatprep.subr.bf16.mxu0 0
  %2847 = vmatpush2.bf16.msra.mxu0 %v892
  %2848 = vmatprep.subr.bf16.mxu0 0
  %2849 = vmatpush2.bf16.msra.mxu0 %v891
  %2850 = vmatprep.mubr.bf16.mxu0 %v2528
  %2851 = vmatmul.mubr.bf16.gmra.mxu0 %v2527
  %v2852 = vpop.f32.mrf.mxu0
  %v2853 = vadd.f32 %v2804, %v2852
  %v2854 = vpop.f32.mrf.mxu0
  %v2855 = vpop.f32.mrf.mxu0
  %v2856 = vadd.f32 %v2807, %v2855
  %v2857 = vpop.f32.mrf.mxu0
  %2858 = vmatprep.mubr.bf16.mxu0 %v2541
  %2859 = vmatmul.mubr.bf16.gmra.mxu0 %v2540
  %v2860 = vpop.f32.mrf.mxu0
  %v2861 = vadd.f32 %v2812, %v2860
  %v2862 = vpop.f32.mrf.mxu0
  %v2863 = vpop.f32.mrf.mxu0
  %v2864 = vadd.f32 %v2815, %v2863
  %v2865 = vpop.f32.mrf.mxu0
  %2866 = vdwg.mxu0
  %2867 = vmatprep.subr.bf16.mxu0 0
  %2868 = vmatpush1.bf16.msra.mxu0 0
  %2869 = vmatprep.subr.bf16.mxu0 0
  %2870 = vmatpush1.bf16.msra.mxu0 0
  %2871 = vmatprep.subr.bf16.mxu0 0
  %2872 = vmatpush1.bf16.msra.mxu0 0
  %2873 = vmatprep.subr.bf16.mxu0 0
  %2874 = vmatpush1.bf16.msra.mxu0 0
  %2875 = vmatprep.subr.bf16.mxu0 0
  %2876 = vmatpush1.bf16.msra.mxu0 %v902
  %2877 = vmatprep.subr.bf16.mxu0 0
  %2878 = vmatpush1.bf16.msra.mxu0 %v901
  %2879 = vmatprep.subr.bf16.mxu0 0
  %2880 = vmatpush1.bf16.msra.mxu0 %v900
  %2881 = vmatprep.subr.bf16.mxu0 0
  %2882 = vmatpush1.bf16.msra.mxu0 %v899
  %2883 = vmatprep.subr.bf16.mxu0 0
  %2884 = vmatpush2.bf16.msra.mxu0 0
  %2885 = vmatprep.subr.bf16.mxu0 0
  %2886 = vmatpush2.bf16.msra.mxu0 0
  %2887 = vmatprep.subr.bf16.mxu0 0
  %2888 = vmatpush2.bf16.msra.mxu0 0
  %2889 = vmatprep.subr.bf16.mxu0 0
  %2890 = vmatpush2.bf16.msra.mxu0 0
  %2891 = vmatprep.subr.bf16.mxu0 0
  %2892 = vmatpush2.bf16.msra.mxu0 0
  %2893 = vmatprep.subr.bf16.mxu0 0
  %2894 = vmatpush2.bf16.msra.mxu0 0
  %2895 = vmatprep.subr.bf16.mxu0 0
  %2896 = vmatpush2.bf16.msra.mxu0 0
  %2897 = vmatprep.subr.bf16.mxu0 0
  %2898 = vmatpush2.bf16.msra.mxu0 0
  %2899 = vmatprep.mubr.bf16.mxu0 0
  %2900 = vmatmul.mubr.bf16.gmra.mxu0 %v2568
  %v2901 = vpop.f32.mrf.mxu0
  %v2902 = vadd.f32 %v2853, %v2901
  %v2903 = vpop.f32.mrf.mxu0
  %v2904 = vpop.f32.mrf.mxu0
  %v2905 = vadd.f32 %v2856, %v2904
  %v2906 = vpop.f32.mrf.mxu0
  %2907 = vmatprep.mubr.bf16.mxu0 0
  %2908 = vmatmul.mubr.bf16.gmra.mxu0 %v2571
  %v2909 = vpop.f32.mrf.mxu0
  %v2910 = vadd.f32 %v2861, %v2909
  %v2911 = vpop.f32.mrf.mxu0
  %v2912 = vpop.f32.mrf.mxu0
  %v2913 = vadd.f32 %v2864, %v2912
  %v2914 = vpop.f32.mrf.mxu0
  %2915 = vdwg.mxu0
  %v2916 = vadd.f32 %v2404, %v2902
  %v2917 = vadd.f32 %v2405, %v2905
  %v2918 = vadd.f32 %v2406, %v2910
  %v2919 = vadd.f32 %v2407, %v2913
  %2920 = vst [vmem:[%s2403] sm:$0xff] %v2916
  %2921 = vst [vmem:[%s2403 + $0x8] sm:$0xff] %v2917
  %2922 = vst [vmem:[%s2403 + $0x10] sm:$0xff] %v2918
  %2923 = vst [vmem:[%s2403 + $0x18] sm:$0xff] %v2919
  // Predicated region
  $region26: #{forward.6} parent=0 // pred_check
    %p2924 = pneg %p21
  $region27: #{forward.6} parent=0 // pred_check_branch
    %2926 = sbr.rel (%p2924) target = $region29
  $region28: #{forward.6} parent=0 // pred_region
    %v2927 = vld [vmem:[%s2] sm:$0x1]
    %v2928 = vld [vmem:[%s3] sm:$0x1]
    %v2929 = vld [vmem:[%s4] sm:$0x1]
    %v2930 = vld [vmem:[#allocation2] sm:$0xff]
    %v2931 = vld [vmem:[#allocation2 + $0x8] sm:$0xff]
    %v2932 = vld [vmem:[#allocation2 + $0x10] sm:$0xff]
    %v2933 = vld [vmem:[#allocation2 + $0x18] sm:$0xff]
    %v2935 = vlaneseq
    %v2936 = vshrl.u32 %v2935, 7
    %v2937 = vsub.s32 0, %v2936
    %v2938 = vrot.slane %v2927, %v2937
    %v2940 = vadd.f32 %v2930, %v2938
    %v2941 = vadd.f32 %v2931, %v2938
    %v2942 = vadd.f32 %v2932, %v2938
    %v2943 = vadd.f32 %v2933, %v2938
    %v2944 = vmax.f32 %v2940, 0.0
    %v2945 = vmax.f32 %v2941, 0.0
    %v2946 = vmax.f32 %v2942, 0.0
    %v2947 = vmax.f32 %v2943, 0.0
    %v2949 = vlaneseq
    %v2950 = vshrl.u32 %v2949, 7
    %v2951 = vsub.s32 0, %v2950
    %v2952 = vrot.slane %v2928, %v2951
    %v2954 = vmul.f32 %v2944, %v2952
    %v2955 = vmul.f32 %v2945, %v2952
    %v2956 = vmul.f32 %v2946, %v2952
    %v2957 = vmul.f32 %v2947, %v2952
    %v2959 = vlaneseq
    %v2960 = vshrl.u32 %v2959, 7
    %v2961 = vsub.s32 0, %v2960
    %v2962 = vrot.slane %v2929, %v2961
    %v2964 = vadd.f32 %v2954, %v2962
    %v2965 = vadd.f32 %v2955, %v2962
    %v2966 = vadd.f32 %v2956, %v2962
    %v2967 = vadd.f32 %v2957, %v2962
    %v2968 = vld [vmem:[%s1361] sm:$0xff]
    %v2969 = vld [vmem:[%s1361 + $0x8] sm:$0xff]
    %v2970 = vld [vmem:[%s1361 + $0x10] sm:$0xff]
    %v2971 = vld [vmem:[%s1361 + $0x18] sm:$0xff]
    %v2972 = vadd.f32 %v2968, %v2938
    %v2973 = vadd.f32 %v2969, %v2938
    %v2974 = vadd.f32 %v2970, %v2938
    %v2975 = vadd.f32 %v2971, %v2938
    %v2976 = vmax.f32 %v2972, 0.0
    %v2977 = vmax.f32 %v2973, 0.0
    %v2978 = vmax.f32 %v2974, 0.0
    %v2979 = vmax.f32 %v2975, 0.0
    %v2980 = vmul.f32 %v2976, %v2952
    %v2981 = vmul.f32 %v2977, %v2952
    %v2982 = vmul.f32 %v2978, %v2952
    %v2983 = vmul.f32 %v2979, %v2952
    %v2984 = vadd.f32 %v2980, %v2962
    %v2985 = vadd.f32 %v2981, %v2962
    %v2986 = vadd.f32 %v2982, %v2962
    %v2987 = vadd.f32 %v2983, %v2962
    %v2988 = vmax.f32 %v2964, %v2984
    %v2989 = vmax.f32 %v2965, %v2985
    %v2990 = vmax.f32 %v2966, %v2986
    %v2991 = vmax.f32 %v2967, %v2987
    %v2992 = vld [vmem:[%s1882] sm:$0xff]
    %v2993 = vld [vmem:[%s1882 + $0x8] sm:$0xff]
    %v2994 = vld [vmem:[%s1882 + $0x10] sm:$0xff]
    %v2995 = vld [vmem:[%s1882 + $0x18] sm:$0xff]
    %v2996 = vadd.f32 %v2992, %v2938
    %v2997 = vadd.f32 %v2993, %v2938
    %v2998 = vadd.f32 %v2994, %v2938
    %v2999 = vadd.f32 %v2995, %v2938
    %v3000 = vmax.f32 %v2996, 0.0
    %v3001 = vmax.f32 %v2997, 0.0
    %v3002 = vmax.f32 %v2998, 0.0
    %v3003 = vmax.f32 %v2999, 0.0
    %v3004 = vmul.f32 %v3000, %v2952
    %v3005 = vmul.f32 %v3001, %v2952
    %v3006 = vmul.f32 %v3002, %v2952
    %v3007 = vmul.f32 %v3003, %v2952
    %v3008 = vadd.f32 %v3004, %v2962
    %v3009 = vadd.f32 %v3005, %v2962
    %v3010 = vadd.f32 %v3006, %v2962
    %v3011 = vadd.f32 %v3007, %v2962
    %v3012 = vmax.f32 %v2988, %v3008
    %v3013 = vmax.f32 %v2989, %v3009
    %v3014 = vmax.f32 %v2990, %v3010
    %v3015 = vmax.f32 %v2991, %v3011
    %v3016 = vld [vmem:[%s2403] sm:$0xff]
    %v3017 = vld [vmem:[%s2403 + $0x8] sm:$0xff]
    %v3018 = vld [vmem:[%s2403 + $0x10] sm:$0xff]
    %v3019 = vld [vmem:[%s2403 + $0x18] sm:$0xff]
    %v3020 = vadd.f32 %v3016, %v2938
    %v3021 = vadd.f32 %v3017, %v2938
    %v3022 = vadd.f32 %v3018, %v2938
    %v3023 = vadd.f32 %v3019, %v2938
    %v3024 = vmax.f32 %v3020, 0.0
    %v3025 = vmax.f32 %v3021, 0.0
    %v3026 = vmax.f32 %v3022, 0.0
    %v3027 = vmax.f32 %v3023, 0.0
    %v3028 = vmul.f32 %v3024, %v2952
    %v3029 = vmul.f32 %v3025, %v2952
    %v3030 = vmul.f32 %v3026, %v2952
    %v3031 = vmul.f32 %v3027, %v2952
    %v3032 = vadd.f32 %v3028, %v2962
    %v3033 = vadd.f32 %v3029, %v2962
    %v3034 = vadd.f32 %v3030, %v2962
    %v3035 = vadd.f32 %v3031, %v2962
    %v3036 = vmax.f32 %v3012, %v3032
    %v3037 = vmax.f32 %v3013, %v3033
    %v3038 = vmax.f32 %v3014, %v3034
    %v3039 = vmax.f32 %v3015, %v3035
    %v3040 = vpack.c.bf16 %v3037, %v3036
    %v3041 = vpack.c.bf16 %v3039, %v3038
    %v3044 = vunpack.c.l.b16 %v3040
    %v3045 = vunpack.c.h.b16 %v3040
    %v3046 = vunpack.c.l.b16 %v3041
    %v3047 = vunpack.c.h.b16 %v3041
    %v3048 = vpack.c.b16 %v3044, %v3044
    %v3049 = vpack.c.b16 %v3045, %v3045
    %v3050 = vpack.c.b16 %v3046, %v3046
    %v3051 = vpack.c.b16 %v3047, %v3047
    %3056 = vst [vmem:[%s5] sm:$0xf] %v3048
    %3057 = vst [vmem:[%s5 + $0x4] sm:$0xf] %v3049
    %3058 = vst [vmem:[%s5 + $0x8] sm:$0xf] %v3050
    %3059 = vst [vmem:[%s5 + $0xc] sm:$0xf] %v3051
  $region29: #{forward.6} parent=0 // pred_fallthru
    _
  // Predicated region
  $region30: #{forward.6} parent=0 // pred_check
    _
  $region31: #{forward.6} parent=0 // pred_check_branch
    %3061 = sbr.rel (0) target = $region33
  $region32: #{forward.6} parent=0 // pred_region
    _
  $region33: #{forward.6} parent=0 // pred_fallthru
    _
  // Predicated region
  $region34: #{forward.6} parent=0 // pred_check
    _
  $region35: #{forward.6} parent=0 // pred_check_branch
    %3063 = sbr.rel (0) target = $region37
  $region36: #{forward.6} parent=0 // pred_region
    _
  $region37: #{forward.6} parent=0 // pred_fallthru
    _

// kernel: forward.9
$region0: #{forward.9}
  #allocation0 [shape = 'u32[]', space=smem, size = 0x4, offset = 0x4, fixed_abs, tag = 'smem constant byte address 0x4 - core index']
  #allocation1 [shape = 'u32[144,128]{1,0:T(1,128)}', space=vmem, size = 0x12000, scoped, tag = 'internal scratch']
  #allocation2 [shape = 'f32[1,2,128]{2,1,0:T(2,128)}', space=vmem, size = 0x400, scoped, tag = 'scratch operand']
  %s0 = inlined_call_operand.vmem [shape: bf16[1,2,256], index: 0, kind: input, shape index: {}]
  %s1 = inlined_call_operand.vmem [shape: bf16[256,128], index: 1, kind: input, shape index: {}]
  %s2 = inlined_call_operand.vmem [shape: f32[1,128], index: 2, kind: input, shape index: {}]
  %s3 = inlined_call_operand.vmem [shape: f32[1,128], index: 3, kind: input, shape index: {}]
  %s4 = inlined_call_operand.vmem [shape: f32[1,128], index: 4, kind: input, shape index: {}]
  %s5 = inlined_call_operand.hbm [shape: f32[2,128], index: 5, kind: output, shape index: {}]
  %s6 = sld [smem:[#allocation0]]
  $region38: #{forward.9} parent=0
    _
  %s8 = ssub.s32 1, %s6
  %s9 = scalar_select 0, %s8, %s6
  $region1: #{forward.9} parent=0
    #allocation3 [shape = 'u8[1024]{0}', space=vmem, size = 0x400, scoped, tag = 'output window, operand 0, single buffered']
    #allocation4 [shape = 's32[1]{0}', space=sflag, size = 0x4, scoped, tag = 'scoped memory for forward.9']
    %10 = vsyncpa [#allocation4], 0
    // Predicated region
    $region2: #{forward.9} parent=1 // pred_check
      _
    $region3: #{forward.9} parent=1 // pred_check_branch
      %12 = sbr.rel (0) target = $region5
    $region4: #{forward.9} parent=1 // pred_region
      _
    $region5: #{forward.9} parent=1 // pred_fallthru
      _
    // Predicated region
    $region6: #{forward.9} parent=1 // pred_check
      _
    $region7: #{forward.9} parent=1 // pred_check_branch
      %14 = sbr.rel (0) target = $region9
    $region8: #{forward.9} parent=1 // pred_region
      _
    $region9: #{forward.9} parent=1 // pred_fallthru
      _
    // Predicated region
    $region10: #{forward.9} parent=1 // pred_check
      _
    $region11: #{forward.9} parent=1 // pred_check_branch
      %16 = sbr.rel (0) target = $region13
    $region12: #{forward.9} parent=1 // pred_region
      _
    $region13: #{forward.9} parent=1 // pred_fallthru
      _
    // Predicated region
    $region14: #{forward.9} parent=1 // pred_check
      _
    $region15: #{forward.9} parent=1 // pred_check_branch
      %18 = sbr.rel (0) target = $region17
    $region16: #{forward.9} parent=1 // pred_region
      _
    $region17: #{forward.9} parent=1 // pred_fallthru
      _
    // Predicated region
    $region18: #{forward.9} parent=1 // pred_check
      _
    $region19: #{forward.9} parent=1 // pred_check_branch
      %20 = sbr.rel (0) target = $region21
    $region20: #{forward.9} parent=1 // pred_region
      _
    $region21: #{forward.9} parent=1 // pred_fallthru
      _
    %p22 = scmp.eq.s32.totalorder 0, 0
    // Predicated region
    $region22: #{forward.9} parent=1 // pred_check
      %p23 = pneg %p22
    $region23: #{forward.9} parent=1 // pred_check_branch
      %25 = sbr.rel (%p23) target = $region25
    $region24: #{forward.9} parent=1 // pred_region
      %26 = vst [vmem:[#allocation2] sm:$0x3] 0.0
    $region25: #{forward.9} parent=1 // pred_fallthru
      _
    %v27 = vld [vmem:[%s1] sm:$0xf]
    %v28 = vld [vmem:[%s1 + $0x4] sm:$0xf]
    %v29 = vld [vmem:[%s1 + $0x8] sm:$0xf]
    %v30 = vld [vmem:[%s1 + $0xc] sm:$0xf]
    %v31 = vld [vmem:[%s1 + $0x10] sm:$0xf]
    %v32 = vld [vmem:[%s1 + $0x14] sm:$0xf]
    %v33 = vld [vmem:[%s1 + $0x18] sm:$0xf]
    %v34 = vld [vmem:[%s1 + $0x1c] sm:$0xf]
    %v35 = vld [vmem:[%s1 + $0x20] sm:$0xf]
    %v36 = vld [vmem:[%s1 + $0x24] sm:$0xf]
    %v37 = vld [vmem:[%s1 + $0x28] sm:$0xf]
    %v38 = vld [vmem:[%s1 + $0x2c] sm:$0xf]
    %v39 = vld [vmem:[%s1 + $0x30] sm:$0xf]
    %v40 = vld [vmem:[%s1 + $0x34] sm:$0xf]
    %v41 = vld [vmem:[%s1 + $0x38] sm:$0xf]
    %v42 = vld [vmem:[%s1 + $0x3c] sm:$0xf]
    %v43 = vld [vmem:[%s1 + $0x40] sm:$0xf]
    %v44 = vld [vmem:[%s1 + $0x44] sm:$0xf]
    %v45 = vld [vmem:[%s1 + $0x48] sm:$0xf]
    %v46 = vld [vmem:[%s1 + $0x4c] sm:$0xf]
    %v47 = vld [vmem:[%s1 + $0x50] sm:$0xf]
    %v48 = vld [vmem:[%s1 + $0x54] sm:$0xf]
    %v49 = vld [vmem:[%s1 + $0x58] sm:$0xf]
    %v50 = vld [vmem:[%s1 + $0x5c] sm:$0xf]
    %v51 = vld [vmem:[%s1 + $0x60] sm:$0xf]
    %v52 = vld [vmem:[%s1 + $0x64] sm:$0xf]
    %v53 = vld [vmem:[%s1 + $0x68] sm:$0xf]
    %v54 = vld [vmem:[%s1 + $0x6c] sm:$0xf]
    %v55 = vld [vmem:[%s1 + $0x70] sm:$0xf]
    %v56 = vld [vmem:[%s1 + $0x74] sm:$0xf]
    %v57 = vld [vmem:[%s1 + $0x78] sm:$0xf]
    %v58 = vld [vmem:[%s1 + $0x7c] sm:$0xf]
    %v59 = vld [vmem:[#allocation2] sm:$0x3]
    %v60 = vld [vmem:[%s0] sm:$0x3]
    %v63 = vunpack.c.l.s4 1966171168
    %v64 = vunpack.c.0.s8 %v63
    %v65 = vlaneseq
    %v66 = vshrl.u32 %v65, 7
    %v67 = vsub.s32 %v64, %v66
    %v68 = vrot.slane %v60, %v67
    %v69 = vcombine.high %v68, %v68
    %v71 = vunpack.c.l.s4 1966171168
    %v72 = vunpack.c.0.s8 %v71
    %v73 = vlaneseq
    %v74 = vshrl.u32 %v73, 7
    %v75 = vsub.s32 %v72, %v74
    %v76 = vrot.slane %v68, %v75
    %v78 = vunpack.c.l.s4 1966171168
    %v79 = vunpack.c.0.s8 %v78
    %v80 = vlaneseq
    %v81 = vshrl.u32 %v80, 7
    %v82 = vsub.s32 %v79, %v81
    %v83 = vrot.slane %v69, %v82
    %v118 = vunpack.c.l.b16 %v27
    %v119 = vunpack.c.l.b16 %v28
    %v120 = vunpack.c.l.b16 %v29
    %v121 = vunpack.c.l.b16 %v30
    %v122 = vunpack.c.l.b16 %v31
    %v123 = vunpack.c.l.b16 %v32
    %v124 = vunpack.c.l.b16 %v33
    %v125 = vunpack.c.l.b16 %v34
    %v126 = vunpack.c.l.b16 %v35
    %v127 = vunpack.c.l.b16 %v36
    %v128 = vunpack.c.l.b16 %v37
    %v129 = vunpack.c.l.b16 %v38
    %v130 = vunpack.c.l.b16 %v39
    %v131 = vunpack.c.l.b16 %v40
    %v132 = vunpack.c.l.b16 %v41
    %v133 = vunpack.c.l.b16 %v42
    %v134 = vunpack.c.l.b16 %v43
    %v135 = vunpack.c.l.b16 %v44
    %v136 = vunpack.c.l.b16 %v45
    %v137 = vunpack.c.l.b16 %v46
    %v138 = vunpack.c.l.b16 %v47
    %v139 = vunpack.c.l.b16 %v48
    %v140 = vunpack.c.l.b16 %v49
    %v141 = vunpack.c.l.b16 %v50
    %v142 = vunpack.c.l.b16 %v51
    %v143 = vunpack.c.l.b16 %v52
    %v144 = vunpack.c.l.b16 %v53
    %v145 = vunpack.c.l.b16 %v54
    %v146 = vunpack.c.l.b16 %v55
    %v147 = vunpack.c.l.b16 %v56
    %v148 = vunpack.c.l.b16 %v57
    %v149 = vunpack.c.l.b16 %v58
    %v150 = vpack.c.b16 %v119, %v118
    %v151 = vpack.c.b16 %v121, %v120
    %v152 = vpack.c.b16 %v123, %v122
    %v153 = vpack.c.b16 %v125, %v124
    %v154 = vpack.c.b16 %v127, %v126
    %v155 = vpack.c.b16 %v129, %v128
    %v156 = vpack.c.b16 %v131, %v130
    %v157 = vpack.c.b16 %v133, %v132
    %v158 = vpack.c.b16 %v135, %v134
    %v159 = vpack.c.b16 %v137, %v136
    %v160 = vpack.c.b16 %v139, %v138
    %v161 = vpack.c.b16 %v141, %v140
    %v162 = vpack.c.b16 %v143, %v142
    %v163 = vpack.c.b16 %v145, %v144
    %v164 = vpack.c.b16 %v147, %v146
    %v165 = vpack.c.b16 %v149, %v148
    %182 = vmatprep.subr.bf16.mxu0 0
    %183 = vmatpush1.bf16.msra.mxu0 %v157
    %184 = vmatprep.subr.bf16.mxu0 0
    %185 = vmatpush1.bf16.msra.mxu0 %v156
    %186 = vmatprep.subr.bf16.mxu0 0
    %187 = vmatpush1.bf16.msra.mxu0 %v155
    %188 = vmatprep.subr.bf16.mxu0 0
    %189 = vmatpush1.bf16.msra.mxu0 %v154
    %190 = vmatprep.subr.bf16.mxu0 0
    %191 = vmatpush1.bf16.msra.mxu0 %v153
    %192 = vmatprep.subr.bf16.mxu0 0
    %193 = vmatpush1.bf16.msra.mxu0 %v152
    %194 = vmatprep.subr.bf16.mxu0 0
    %195 = vmatpush1.bf16.msra.mxu0 %v151
    %196 = vmatprep.subr.bf16.mxu0 0
    %197 = vmatpush1.bf16.msra.mxu0 %v150
    %198 = vmatprep.subr.bf16.mxu0 0
    %199 = vmatpush2.bf16.msra.mxu0 %v165
    %200 = vmatprep.subr.bf16.mxu0 0
    %201 = vmatpush2.bf16.msra.mxu0 %v164
    %202 = vmatprep.subr.bf16.mxu0 0
    %203 = vmatpush2.bf16.msra.mxu0 %v163
    %204 = vmatprep.subr.bf16.mxu0 0
    %205 = vmatpush2.bf16.msra.mxu0 %v162
    %206 = vmatprep.subr.bf16.mxu0 0
    %207 = vmatpush2.bf16.msra.mxu0 %v161
    %208 = vmatprep.subr.bf16.mxu0 0
    %209 = vmatpush2.bf16.msra.mxu0 %v160
    %210 = vmatprep.subr.bf16.mxu0 0
    %211 = vmatpush2.bf16.msra.mxu0 %v159
    %212 = vmatprep.subr.bf16.mxu0 0
    %213 = vmatpush2.bf16.msra.mxu0 %v158
    %214 = vmatprep.mubr.bf16.mxu0 %v83
    %215 = vmatmul.mubr.bf16.gmra.mxu0 %v76
    %v216 = vpop.f32.mrf.mxu0
    %v217 = vadd.f32 0.0, %v216
    %v218 = vpop.f32.mrf.mxu0
    %v219 = vpop.f32.mrf.mxu0
    %v220 = vpop.f32.mrf.mxu0
    %221 = vdwg.mxu0
    %v222 = vadd.f32 %v59, %v217
    %223 = vst [vmem:[#allocation2] sm:$0x3] %v222
    // Predicated region
    $region26: #{forward.9} parent=1 // pred_check
      %p224 = pneg %p22
    $region27: #{forward.9} parent=1 // pred_check_branch
      %226 = sbr.rel (%p224) target = $region29
    $region28: #{forward.9} parent=1 // pred_region
      %v227 = vld [vmem:[%s2] sm:$0x1]
      %v228 = vld [vmem:[%s3] sm:$0x1]
      %v229 = vld [vmem:[%s4] sm:$0x1]
      %v230 = vld [vmem:[#allocation2] sm:$0x3]
      %v232 = vlaneseq
      %v233 = vshrl.u32 %v232, 7
      %v234 = vsub.s32 0, %v233
      %v235 = vrot.slane %v227, %v234
      %v237 = vadd.f32 %v230, %v235
      %v239 = vlaneseq
      %v240 = vshrl.u32 %v239, 7
      %v241 = vsub.s32 0, %v240
      %v242 = vrot.slane %v228, %v241
      %v244 = vmul.f32 %v237, %v242
      %v246 = vlaneseq
      %v247 = vshrl.u32 %v246, 7
      %v248 = vsub.s32 0, %v247
      %v249 = vrot.slane %v229, %v248
      %v251 = vadd.f32 %v244, %v249
      %252 = vst [vmem:[#allocation3] sm:$0x3] %v251
    $region29: #{forward.9} parent=1 // pred_fallthru
      _
    // Predicated region
    $region30: #{forward.9} parent=1 // pred_check
      _
    $region31: #{forward.9} parent=1 // pred_check_branch
      %254 = sbr.rel (0) target = $region33
    $region32: #{forward.9} parent=1 // pred_region
      %s256 = ssub.s32 32, 32
      %257 = vsyncadd [#allocation4], %s256
      %s259 = sshll.u32 [#allocation3], 4
      %s260 = int_to_ptr.vmem [resolvable:$true] %s259
      %262 = dma.vmem_to_hbm [thread:$0]  %s260, 32, %s5, [#allocation4]
    $region33: #{forward.9} parent=1 // pred_fallthru
      _
    // Predicated region
    $region34: #{forward.9} parent=1 // pred_check
      _
    $region35: #{forward.9} parent=1 // pred_check_branch
      %264 = sbr.rel (0) target = $region37
    $region36: #{forward.9} parent=1 // pred_region
      %265 = dma.done [#allocation4], 32
    $region37: #{forward.9} parent=1 // pred_fallthru
      _
    %266 = vsyncpa [#allocation4], 1

</llo_original>
